<compile_context>
chip_gen: v7x
topology: tpu7x:2x2x1
jax: 0.10.0
libtpu: 0.0.40
codegen_flags: <defaults>
</compile_context>

<pallas_src>
import functools
import math

import jax
import jax.numpy as jnp
from jax.experimental import pallas as pl
from jax.experimental.pallas import tpu as pltpu


# ----------------------------------------------------------------------------
# Fused kernel
# ----------------------------------------------------------------------------
def _layernorm(y, g, b, eps=1e-5):
    m = jnp.mean(y, axis=-1, keepdims=True)
    v = jnp.mean((y - m) ** 2, axis=-1, keepdims=True)
    return (y - m) * jax.lax.rsqrt(v + eps) * g + b


def _fused_kernel(offs, dims,
                  cols1_ref, w1c_ref, w2c_ref, w3c_ref, wp2_ref, wp3_ref,
                  pvec_ref, wd1_hbm, wf_hbm,
                  out_ref, proj_ref, latent_ref,
                  wd1_v, wf_v, dma_sem):
    B, L1, L2, L3, K2, K3, NCPAD = dims
    C1 = w1c_ref.shape[1]
    C2 = w2c_ref.shape[1]
    C3 = w3c_ref.shape[1]
    D1 = wd1_v.shape[1]          # latent dim (1024)
    P = L1                        # per-sample row stride of flattened activations
    M2 = (B - 1) * P + L2
    M3 = (B - 1) * P + L3

    # Start the late-stage weight DMAs immediately so they overlap the conv
    # stack (this call is grid-less => no auto-pipelining of inputs).
    cp_d1 = pltpu.make_async_copy(wd1_hbm, wd1_v, dma_sem.at[0])
    cp_wf = pltpu.make_async_copy(wf_hbm, wf_v, dma_sem.at[1])
    cp_d1.start()
    cp_wf.start()

    # Packed bias / LayerNorm parameters (lane-aligned static offsets).
    def seg(i, n):
        return pvec_ref[:, offs[i]:offs[i] + n]           # (1, n)

    cb1, cb2, cb3 = seg(0, C1), seg(1, C2), seg(2, C3)
    b1 = seg(3, D1)
    b2p = seg(4, NCPAD)                                   # dense2 bias, zero-padded
    bp1, g1, be1 = seg(5, 256), seg(6, 256), seg(7, 256)
    Dp2 = wp2_ref.shape[1]
    bp2, g2, be2 = seg(8, Dp2), seg(9, Dp2), seg(10, Dp2)
    bp3 = seg(11, wp3_ref.shape[1])

    # --- conv1: im2col done host-side -> ONE batched matmul ------------------
    h1 = jnp.dot(cols1_ref[...], w1c_ref[...],
                 preferred_element_type=jnp.float32) + cb1
    h1 = jnp.maximum(h1, 0.0)                             # (B*L1, C1), stride P/sample

    # --- conv2 / conv3: weight-stationary accumulation over kernel taps ------
    # out[i] = sum_k h[i + k] @ W_k.  The per-sample stride P is preserved, so
    # ONE sublane-offset slice per tap covers the whole batch; rows between
    # samples' valid regions are garbage and are never read by valid outputs.
    def conv_ws(h, K, m_out, w_ref, bias):
        cin = h.shape[-1]
        acc = jnp.dot(h[0:m_out, :], w_ref[0:cin, :],
                      preferred_element_type=jnp.float32) + bias
        for k in range(1, K):
            acc = acc + jnp.dot(h[k:k + m_out, :],
                                w_ref[k * cin:(k + 1) * cin, :],
                                preferred_element_type=jnp.float32)
        return jnp.maximum(acc, 0.0)

    h2 = conv_ws(h1, K2, M2, w2c_ref, cb2)                # (M2, C2)
    h3 = conv_ws(h2, K3, M3, w3c_ref, cb3)                # (M3, C3)

    # --- global max pool (per sample, valid rows only) ------------------------
    pooled = jnp.concatenate(
        [jnp.max(h3[b * P:b * P + L3, :], axis=0, keepdims=True)
         for b in range(B)], axis=0)                      # (B, C3)

    # --- dense1 + ReLU -> latent features -------------------------------------
    cp_d1.wait()
    latent = jnp.dot(pooled, wd1_v[...],
                     preferred_element_type=jnp.float32) + b1
    latent = jnp.maximum(latent, 0.0)                     # (B, D1)
    latent_ref[...] = latent

    # torch.mean / torch.std over ALL elements (std unbiased, /(n-1)).
    n_l = latent.size
    l_mean = jnp.sum(latent) / jnp.float32(n_l)
    l_std = jnp.sqrt(jnp.sum((latent - l_mean) ** 2) / jnp.float32(n_l - 1))

    # --- fused [projection_layer[0] | dense2] matmul (shared LHS, one RHS) ----
    cp_wf.wait()
    fused = jnp.dot(latent, wf_v[...],
                    preferred_element_type=jnp.float32)   # (B, 256 + NCPAD)
    out_ref[...] = fused[:, 256:256 + NCPAD] + b2p        # dense2 (lane-dense slab)

    # projection MLP: (Linear) -> LN -> ReLU -> Linear -> LN -> ReLU -> Linear
    p = fused[:, :256] + bp1
    p = jnp.maximum(_layernorm(p, g1, be1), 0.0)
    p = jnp.dot(p, wp2_ref[...], preferred_element_type=jnp.float32) + bp2
    p = jnp.maximum(_layernorm(p, g2, be2), 0.0)
    p = jnp.dot(p, wp3_ref[...], preferred_element_type=jnp.float32) + bp3   # (B, 2)

    n_p = p.size
    p_mean = jnp.sum(p) / jnp.float32(n_p)
    p_std = jnp.sqrt(jnp.sum((p - p_mean) ** 2) / jnp.float32(n_p - 1))
    proj_ref[...] = (p - p_mean) / (p_std + 1e-8) * l_std + l_mean


# ----------------------------------------------------------------------------
# Host-side wrapper
# ----------------------------------------------------------------------------
def _pack_params_vector(vecs):
    """Pack 1-D params into one (1, P) buffer, each segment 128-lane aligned."""
    parts, offsets, off = [], [], 0
    for v in vecs:
        v = jnp.asarray(v, jnp.float32).reshape(1, -1)
        n = v.shape[1]
        pad = (-n) % 128
        parts.append(jnp.pad(v, ((0, 0), (0, pad))))
        offsets.append(off)
        off += n + pad
    return jnp.concatenate(parts, axis=1), tuple(offsets)


@functools.partial(jax.jit, static_argnames=("num_classes",))
def cnn_pamap2_forward(x, params, num_classes):
    """x: (B, T, in_size) — same as the PyTorch module's input before permute."""
    B, T, Cin = x.shape
    C1 = params["cw1"].shape[1]
    C2 = params["cw2"].shape[1]
    C3 = params["cw3"].shape[1]
    K1 = params["cw1"].shape[0] // Cin
    K2 = params["cw2"].shape[0] // C1
    K3 = params["cw3"].shape[0] // C2
    L1 = T - K1 + 1
    L2 = L1 - K2 + 1
    L3 = L2 - K3 + 1
    latent_dim = params["w1"].shape[1]
    proj_dim = params["wp3"].shape[1]
    ncpad = ((num_classes + 127) // 128) * 128

    # conv1 im2col on the host (XLA): cols1[b*L1 + t, k*Cin + c] = x[b, t+k, c]
    cols1 = jnp.concatenate([x[:, k:k + L1, :] for k in range(K1)], axis=-1)
    cols1 = cols1.reshape(B * L1, K1 * Cin)

    # Fuse projection_layer[0] and dense2 into one lane-padded RHS.
    wfused = jnp.concatenate(
        [params["wp1"],
         jnp.pad(params["w2"], ((0, 0), (0, ncpad - num_classes)))], axis=1)

    pvec, offs = _pack_params_vector([
        params["cb1"], params["cb2"], params["cb3"],
        params["b1"], params["b2"],
        params["bp1"], params["g1"], params["be1"],
        params["bp2"], params["g2"], params["be2"],
        params["bp3"],
    ])

    dims = (B, L1, L2, L3, K2, K3, ncpad)

    out_shapes = (
        jax.ShapeDtypeStruct((B, ncpad), jnp.float32),       # dense2 (lane-padded)
        jax.ShapeDtypeStruct((B, proj_dim), jnp.float32),    # projected_2d
        jax.ShapeDtypeStruct((B, latent_dim), jnp.float32),  # latent_features
    )
    vmem = pl.BlockSpec(memory_space=pltpu.MemorySpace.VMEM)
    hbm = pl.BlockSpec(memory_space=pl.ANY)

    out_pad, proj, latent = pl.pallas_call(
        functools.partial(_fused_kernel, offs, dims),
        out_shape=out_shapes,
        in_specs=[vmem] * 7 + [hbm, hbm],
        out_specs=(vmem, vmem, vmem),
        scratch_shapes=[
            pltpu.VMEM((C3, latent_dim), jnp.float32),           # dense1 weight
            pltpu.VMEM((latent_dim, 256 + ncpad), jnp.float32),  # fused [wp1 | w2]
            pltpu.SemaphoreType.DMA((2,)),
        ],
        compiler_params=pltpu.CompilerParams(vmem_limit_bytes=32 * 1024 * 1024),
    )(cols1,
      params["cw1"], params["cw2"], params["cw3"],
      params["wp2"], params["wp3"], pvec,
      params["w1"], wfused)

    return out_pad[:, :num_classes], proj, latent


# ----------------------------------------------------------------------------
# Parameter construction (deterministic, PyTorch-like init / shapes)
# ----------------------------------------------------------------------------
def init_params(key, in_size, num_classes):
    hidden = (32, 64, 128, 1024)
    k1, k2, k3 = 24, 16, 8
    keys = jax.random.split(key, 8)

    def lin(k, fan_in, fan_out):
        bound = 1.0 / math.sqrt(fan_in)
        kw, kb = jax.random.split(k)
        w = jax.random.uniform(kw, (fan_in, fan_out), jnp.float32, -bound, bound)
        b = jax.random.uniform(kb, (fan_out,), jnp.float32, -bound, bound)
        return w, b

    def conv(k, cin, cout, ksize):
        # im2col layout: row index = kpos*cin + c
        # (from a PyTorch Conv1d weight W (cout,cin,K): W.transpose(2,1,0).reshape(K*cin,cout))
        bound = 1.0 / math.sqrt(cin * ksize)
        kw, kb = jax.random.split(k)
        w = jax.random.uniform(kw, (ksize * cin, cout), jnp.float32, -bound, bound)
        b = jax.random.uniform(kb, (cout,), jnp.float32, -bound, bound)
        return w, b

    p = {}
    p["cw1"], p["cb1"] = conv(keys[0], in_size, hidden[0], k1)
    p["cw2"], p["cb2"] = conv(keys[1], hidden[0], hidden[1], k2)
    p["cw3"], p["cb3"] = conv(keys[2], hidden[1], hidden[2], k3)
    p["w1"], p["b1"] = lin(keys[3], hidden[2], hidden[3])        # dense1
    p["w2"], p["b2"] = lin(keys[4], hidden[3], num_classes)      # dense2
    p["wp1"], p["bp1"] = lin(keys[5], hidden[3], 256)            # projection_layer[0]
    p["wp2"], p["bp2"] = lin(keys[6], 256, 64)                   # projection_layer[3]
    p["wp3"], p["bp3"] = lin(keys[7], 64, 2)                     # projection_layer[6]
    # LayerNorm affine params (PyTorch default: ones / zeros).
    p["g1"], p["be1"] = jnp.ones((256,), jnp.float32), jnp.zeros((256,), jnp.float32)
    p["g2"], p["be2"] = jnp.ones((64,), jnp.float32), jnp.zeros((64,), jnp.float32)
    # NOTE: self.scale (=10.0) and projection1/2/3 are unused by forward(); omitted.
    return p


# ----------------------------------------------------------------------------
# Pure-JAX reference (mirrors the PyTorch forward; used for validation)
# ----------------------------------------------------------------------------
def _reference_forward(x, params):
    def conv_relu(h, w_col, b):
        cin = h.shape[-1]
        K = w_col.shape[0] // cin
        L = h.shape[1] - K + 1
        cols = jnp.concatenate([h[:, k:k + L, :] for k in range(K)], axis=-1)
        return jax.nn.relu(jnp.einsum('blk,ko->blo', cols, w_col) + b)

    def ln(y, g, b, eps=1e-5):
        m = jnp.mean(y, axis=-1, keepdims=True)
        v = jnp.mean((y - m) ** 2, axis=-1, keepdims=True)
        return (y - m) / jnp.sqrt(v + eps) * g + b

    h = conv_relu(x, params["cw1"], params["cb1"])
    h = conv_relu(h, params["cw2"], params["cb2"])
    h = conv_relu(h, params["cw3"], params["cb3"])
    pooled = jnp.max(h, axis=1)
    latent = jax.nn.relu(pooled @ params["w1"] + params["b1"])
    l_mean = jnp.mean(latent)
    l_std = jnp.std(latent, ddof=1)
    p = latent @ params["wp1"] + params["bp1"]
    p = jax.nn.relu(ln(p, params["g1"], params["be1"]))
    p = p @ params["wp2"] + params["bp2"]
    p = jax.nn.relu(ln(p, params["g2"], params["be2"]))
    p = p @ params["wp3"] + params["bp3"]
    p = (p - jnp.mean(p)) / (jnp.std(p, ddof=1) + 1e-8)
    p = p * l_std + l_mean
    out = latent @ params["w2"] + params["b2"]
    return out, p, latent


if __name__ == "__main__":
    B, T, IN_SIZE, NUM_CLASSES = 2, 64, 4, 6
    key = jax.random.PRNGKey(0)
    kx, kp = jax.random.split(key)
    x = jax.random.normal(kx, (B, T, IN_SIZE), jnp.float32)
    params = init_params(kp, IN_SIZE, NUM_CLASSES)

    output, projected_2d, latent = cnn_pamap2_forward(x, params, NUM_CLASSES)
    jax.block_until_ready((output, projected_2d, latent))

    assert output.shape == (B, NUM_CLASSES)
    assert projected_2d.shape == (B, 2)
    assert latent.shape == (B, 1024)
    assert bool(jnp.all(jnp.isfinite(output)))
    assert bool(jnp.all(jnp.isfinite(projected_2d)))
    assert bool(jnp.all(jnp.isfinite(latent)))

    ref_out, ref_proj, ref_lat = _reference_forward(x, params)
    assert bool(jnp.allclose(latent, ref_lat, rtol=2e-3, atol=2e-3))
    assert bool(jnp.allclose(output, ref_out, rtol=2e-3, atol=2e-3))
    assert bool(jnp.allclose(projected_2d, ref_proj, rtol=2e-3, atol=2e-3))

    print("KERNEL_OK")
</pallas_src>

<mosaic_0001>
module attributes {stable_mosaic.version = 11 : i64} {
  func.func @_fused_kernel(%arg0: memref<82x96xf32, #tpu.memory_space<vmem>>, %arg1: memref<96x32xf32, #tpu.memory_space<vmem>>, %arg2: memref<512x64xf32, #tpu.memory_space<vmem>>, %arg3: memref<512x128xf32, #tpu.memory_space<vmem>>, %arg4: memref<256x64xf32, #tpu.memory_space<vmem>>, %arg5: memref<64x2xf32, #tpu.memory_space<vmem>>, %arg6: memref<1x2816xf32, #tpu.memory_space<vmem>>, %arg7: memref<128x1024xf32, #tpu.memory_space<any>>, %arg8: memref<1024x384xf32, #tpu.memory_space<any>>, %arg9: memref<2x128xf32, #tpu.memory_space<vmem>>, %arg10: memref<2x2xf32, #tpu.memory_space<vmem>>, %arg11: memref<2x1024xf32, #tpu.memory_space<vmem>>, %arg12: memref<128x1024xf32, #tpu.memory_space<vmem>>, %arg13: memref<1024x384xf32, #tpu.memory_space<vmem>>, %arg14: memref<2x!tpu.dma_semaphore, #tpu.memory_space<semaphore_mem>>) attributes {dimension_semantics = [], scalar_prefetch = 0 : i64, scratch_operands = 3 : i64, tpu.core_type = #tpu.core_type<tc>} {
    %c0_i32 = arith.constant 0 : i32
    %0 = tpu.memref_slice %arg14[%c0_i32] : memref<2x!tpu.dma_semaphore, #tpu.memory_space<semaphore_mem>> -> memref<1x!tpu.dma_semaphore, #tpu.memory_space<semaphore_mem>>
    %1 = tpu.memref_squeeze %0 : memref<1x!tpu.dma_semaphore, #tpu.memory_space<semaphore_mem>> -> memref<!tpu.dma_semaphore, #tpu.memory_space<semaphore_mem>>
    tpu.enqueue_dma source(%arg7 : memref<128x1024xf32, #tpu.memory_space<any>>) target(%arg12 : memref<128x1024xf32, #tpu.memory_space<vmem>>) target_semaphore(%1 : memref<!tpu.dma_semaphore, #tpu.memory_space<semaphore_mem>>)
    %c1_i32 = arith.constant 1 : i32
    %2 = tpu.memref_slice %arg14[%c1_i32] : memref<2x!tpu.dma_semaphore, #tpu.memory_space<semaphore_mem>> -> memref<1x!tpu.dma_semaphore, #tpu.memory_space<semaphore_mem>>
    %3 = tpu.memref_squeeze %2 : memref<1x!tpu.dma_semaphore, #tpu.memory_space<semaphore_mem>> -> memref<!tpu.dma_semaphore, #tpu.memory_space<semaphore_mem>>
    tpu.enqueue_dma source(%arg8 : memref<1024x384xf32, #tpu.memory_space<any>>) target(%arg13 : memref<1024x384xf32, #tpu.memory_space<vmem>>) target_semaphore(%3 : memref<!tpu.dma_semaphore, #tpu.memory_space<semaphore_mem>>)
    %c0 = arith.constant 0 : index
    %c0_0 = arith.constant 0 : index
    %4 = vector.load %arg6[%c0, %c0_0] : memref<1x2816xf32, #tpu.memory_space<vmem>>, vector<1x32xf32>
    %c0_1 = arith.constant 0 : index
    %c128 = arith.constant 128 : index
    %5 = vector.load %arg6[%c0_1, %c128] : memref<1x2816xf32, #tpu.memory_space<vmem>>, vector<1x64xf32>
    %c0_2 = arith.constant 0 : index
    %c256 = arith.constant 256 : index
    %6 = vector.load %arg6[%c0_2, %c256] : memref<1x2816xf32, #tpu.memory_space<vmem>>, vector<1x128xf32>
    %c0_3 = arith.constant 0 : index
    %c384 = arith.constant 384 : index
    %7 = vector.load %arg6[%c0_3, %c384] : memref<1x2816xf32, #tpu.memory_space<vmem>>, vector<1x1024xf32>
    %c0_4 = arith.constant 0 : index
    %c1408 = arith.constant 1408 : index
    %8 = vector.load %arg6[%c0_4, %c1408] : memref<1x2816xf32, #tpu.memory_space<vmem>>, vector<1x128xf32>
    %c0_5 = arith.constant 0 : index
    %c1536 = arith.constant 1536 : index
    %9 = vector.load %arg6[%c0_5, %c1536] : memref<1x2816xf32, #tpu.memory_space<vmem>>, vector<1x256xf32>
    %c0_6 = arith.constant 0 : index
    %c1792 = arith.constant 1792 : index
    %10 = vector.load %arg6[%c0_6, %c1792] : memref<1x2816xf32, #tpu.memory_space<vmem>>, vector<1x256xf32>
    %c0_7 = arith.constant 0 : index
    %c2048 = arith.constant 2048 : index
    %11 = vector.load %arg6[%c0_7, %c2048] : memref<1x2816xf32, #tpu.memory_space<vmem>>, vector<1x256xf32>
    %c0_8 = arith.constant 0 : index
    %c2304 = arith.constant 2304 : index
    %12 = vector.load %arg6[%c0_8, %c2304] : memref<1x2816xf32, #tpu.memory_space<vmem>>, vector<1x64xf32>
    %c0_9 = arith.constant 0 : index
    %c2432 = arith.constant 2432 : index
    %13 = vector.load %arg6[%c0_9, %c2432] : memref<1x2816xf32, #tpu.memory_space<vmem>>, vector<1x64xf32>
    %c0_10 = arith.constant 0 : index
    %c2560 = arith.constant 2560 : index
    %14 = vector.load %arg6[%c0_10, %c2560] : memref<1x2816xf32, #tpu.memory_space<vmem>>, vector<1x64xf32>
    %c0_11 = arith.constant 0 : index
    %c2688 = arith.constant 2688 : index
    %15 = vector.load %arg6[%c0_11, %c2688] : memref<1x2816xf32, #tpu.memory_space<vmem>>, vector<1x2xf32>
    %c0_12 = arith.constant 0 : index
    %c0_13 = arith.constant 0 : index
    %16 = vector.load %arg0[%c0_12, %c0_13] : memref<82x96xf32, #tpu.memory_space<vmem>>, vector<82x96xf32>
    %c0_14 = arith.constant 0 : index
    %c0_15 = arith.constant 0 : index
    %17 = vector.load %arg1[%c0_14, %c0_15] : memref<96x32xf32, #tpu.memory_space<vmem>>, vector<96x32xf32>
    %cst = arith.constant dense<0.000000e+00> : vector<82x32xf32>
    %18 = tpu.matmul %16, %17, %cst {dimension_numbers = #tpu.dot_dimension_numbers<[1], [0], [0], [1], [0, 0, 1, 1], [], []>} : vector<82x96xf32>, vector<96x32xf32>, vector<82x32xf32> -> vector<82x32xf32>
    %19 = vector.broadcast %4 : vector<1x32xf32> to vector<82x32xf32>
    %20 = arith.addf %18, %19 : vector<82x32xf32>
    %cst_16 = arith.constant 0.000000e+00 : f32
    %21 = vector.broadcast %cst_16 : f32 to vector<82x32xf32>
    %22 = arith.maximumf %20, %21 : vector<82x32xf32>
    %23 = vector.extract_strided_slice %22 {offsets = [0, 0], sizes = [67, 32], strides = [1, 1]} : vector<82x32xf32> to vector<67x32xf32>
    %c0_17 = arith.constant 0 : index
    %c0_18 = arith.constant 0 : index
    %24 = vector.load %arg2[%c0_17, %c0_18] : memref<512x64xf32, #tpu.memory_space<vmem>>, vector<32x64xf32>
    %cst_19 = arith.constant dense<0.000000e+00> : vector<67x64xf32>
    %25 = tpu.matmul %23, %24, %cst_19 {dimension_numbers = #tpu.dot_dimension_numbers<[1], [0], [0], [1], [0, 0, 1, 1], [], []>} : vector<67x32xf32>, vector<32x64xf32>, vector<67x64xf32> -> vector<67x64xf32>
    %26 = vector.broadcast %5 : vector<1x64xf32> to vector<67x64xf32>
    %27 = arith.addf %25, %26 : vector<67x64xf32>
    %28 = vector.extract_strided_slice %22 {offsets = [1, 0], sizes = [67, 32], strides = [1, 1]} : vector<82x32xf32> to vector<67x32xf32>
    %c32 = arith.constant 32 : index
    %c0_20 = arith.constant 0 : index
    %29 = vector.load %arg2[%c32, %c0_20] : memref<512x64xf32, #tpu.memory_space<vmem>>, vector<32x64xf32>
    %cst_21 = arith.constant dense<0.000000e+00> : vector<67x64xf32>
    %30 = tpu.matmul %28, %29, %cst_21 {dimension_numbers = #tpu.dot_dimension_numbers<[1], [0], [0], [1], [0, 0, 1, 1], [], []>} : vector<67x32xf32>, vector<32x64xf32>, vector<67x64xf32> -> vector<67x64xf32>
    %31 = arith.addf %27, %30 : vector<67x64xf32>
    %32 = vector.extract_strided_slice %22 {offsets = [2, 0], sizes = [67, 32], strides = [1, 1]} : vector<82x32xf32> to vector<67x32xf32>
    %c64 = arith.constant 64 : index
    %c0_22 = arith.constant 0 : index
    %33 = vector.load %arg2[%c64, %c0_22] : memref<512x64xf32, #tpu.memory_space<vmem>>, vector<32x64xf32>
    %cst_23 = arith.constant dense<0.000000e+00> : vector<67x64xf32>
    %34 = tpu.matmul %32, %33, %cst_23 {dimension_numbers = #tpu.dot_dimension_numbers<[1], [0], [0], [1], [0, 0, 1, 1], [], []>} : vector<67x32xf32>, vector<32x64xf32>, vector<67x64xf32> -> vector<67x64xf32>
    %35 = arith.addf %31, %34 : vector<67x64xf32>
    %36 = vector.extract_strided_slice %22 {offsets = [3, 0], sizes = [67, 32], strides = [1, 1]} : vector<82x32xf32> to vector<67x32xf32>
    %c96 = arith.constant 96 : index
    %c0_24 = arith.constant 0 : index
    %37 = vector.load %arg2[%c96, %c0_24] : memref<512x64xf32, #tpu.memory_space<vmem>>, vector<32x64xf32>
    %cst_25 = arith.constant dense<0.000000e+00> : vector<67x64xf32>
    %38 = tpu.matmul %36, %37, %cst_25 {dimension_numbers = #tpu.dot_dimension_numbers<[1], [0], [0], [1], [0, 0, 1, 1], [], []>} : vector<67x32xf32>, vector<32x64xf32>, vector<67x64xf32> -> vector<67x64xf32>
    %39 = arith.addf %35, %38 : vector<67x64xf32>
    %40 = vector.extract_strided_slice %22 {offsets = [4, 0], sizes = [67, 32], strides = [1, 1]} : vector<82x32xf32> to vector<67x32xf32>
    %c128_26 = arith.constant 128 : index
    %c0_27 = arith.constant 0 : index
    %41 = vector.load %arg2[%c128_26, %c0_27] : memref<512x64xf32, #tpu.memory_space<vmem>>, vector<32x64xf32>
    %cst_28 = arith.constant dense<0.000000e+00> : vector<67x64xf32>
    %42 = tpu.matmul %40, %41, %cst_28 {dimension_numbers = #tpu.dot_dimension_numbers<[1], [0], [0], [1], [0, 0, 1, 1], [], []>} : vector<67x32xf32>, vector<32x64xf32>, vector<67x64xf32> -> vector<67x64xf32>
    %43 = arith.addf %39, %42 : vector<67x64xf32>
    %44 = vector.extract_strided_slice %22 {offsets = [5, 0], sizes = [67, 32], strides = [1, 1]} : vector<82x32xf32> to vector<67x32xf32>
    %c160 = arith.constant 160 : index
    %c0_29 = arith.constant 0 : index
    %45 = vector.load %arg2[%c160, %c0_29] : memref<512x64xf32, #tpu.memory_space<vmem>>, vector<32x64xf32>
    %cst_30 = arith.constant dense<0.000000e+00> : vector<67x64xf32>
    %46 = tpu.matmul %44, %45, %cst_30 {dimension_numbers = #tpu.dot_dimension_numbers<[1], [0], [0], [1], [0, 0, 1, 1], [], []>} : vector<67x32xf32>, vector<32x64xf32>, vector<67x64xf32> -> vector<67x64xf32>
    %47 = arith.addf %43, %46 : vector<67x64xf32>
    %48 = vector.extract_strided_slice %22 {offsets = [6, 0], sizes = [67, 32], strides = [1, 1]} : vector<82x32xf32> to vector<67x32xf32>
    %c192 = arith.constant 192 : index
    %c0_31 = arith.constant 0 : index
    %49 = vector.load %arg2[%c192, %c0_31] : memref<512x64xf32, #tpu.memory_space<vmem>>, vector<32x64xf32>
    %cst_32 = arith.constant dense<0.000000e+00> : vector<67x64xf32>
    %50 = tpu.matmul %48, %49, %cst_32 {dimension_numbers = #tpu.dot_dimension_numbers<[1], [0], [0], [1], [0, 0, 1, 1], [], []>} : vector<67x32xf32>, vector<32x64xf32>, vector<67x64xf32> -> vector<67x64xf32>
    %51 = arith.addf %47, %50 : vector<67x64xf32>
    %52 = vector.extract_strided_slice %22 {offsets = [7, 0], sizes = [67, 32], strides = [1, 1]} : vector<82x32xf32> to vector<67x32xf32>
    %c224 = arith.constant 224 : index
    %c0_33 = arith.constant 0 : index
    %53 = vector.load %arg2[%c224, %c0_33] : memref<512x64xf32, #tpu.memory_space<vmem>>, vector<32x64xf32>
    %cst_34 = arith.constant dense<0.000000e+00> : vector<67x64xf32>
    %54 = tpu.matmul %52, %53, %cst_34 {dimension_numbers = #tpu.dot_dimension_numbers<[1], [0], [0], [1], [0, 0, 1, 1], [], []>} : vector<67x32xf32>, vector<32x64xf32>, vector<67x64xf32> -> vector<67x64xf32>
    %55 = arith.addf %51, %54 : vector<67x64xf32>
    %56 = vector.extract_strided_slice %22 {offsets = [8, 0], sizes = [67, 32], strides = [1, 1]} : vector<82x32xf32> to vector<67x32xf32>
    %c256_35 = arith.constant 256 : index
    %c0_36 = arith.constant 0 : index
    %57 = vector.load %arg2[%c256_35, %c0_36] : memref<512x64xf32, #tpu.memory_space<vmem>>, vector<32x64xf32>
    %cst_37 = arith.constant dense<0.000000e+00> : vector<67x64xf32>
    %58 = tpu.matmul %56, %57, %cst_37 {dimension_numbers = #tpu.dot_dimension_numbers<[1], [0], [0], [1], [0, 0, 1, 1], [], []>} : vector<67x32xf32>, vector<32x64xf32>, vector<67x64xf32> -> vector<67x64xf32>
    %59 = arith.addf %55, %58 : vector<67x64xf32>
    %60 = vector.extract_strided_slice %22 {offsets = [9, 0], sizes = [67, 32], strides = [1, 1]} : vector<82x32xf32> to vector<67x32xf32>
    %c288 = arith.constant 288 : index
    %c0_38 = arith.constant 0 : index
    %61 = vector.load %arg2[%c288, %c0_38] : memref<512x64xf32, #tpu.memory_space<vmem>>, vector<32x64xf32>
    %cst_39 = arith.constant dense<0.000000e+00> : vector<67x64xf32>
    %62 = tpu.matmul %60, %61, %cst_39 {dimension_numbers = #tpu.dot_dimension_numbers<[1], [0], [0], [1], [0, 0, 1, 1], [], []>} : vector<67x32xf32>, vector<32x64xf32>, vector<67x64xf32> -> vector<67x64xf32>
    %63 = arith.addf %59, %62 : vector<67x64xf32>
    %64 = vector.extract_strided_slice %22 {offsets = [10, 0], sizes = [67, 32], strides = [1, 1]} : vector<82x32xf32> to vector<67x32xf32>
    %c320 = arith.constant 320 : index
    %c0_40 = arith.constant 0 : index
    %65 = vector.load %arg2[%c320, %c0_40] : memref<512x64xf32, #tpu.memory_space<vmem>>, vector<32x64xf32>
    %cst_41 = arith.constant dense<0.000000e+00> : vector<67x64xf32>
    %66 = tpu.matmul %64, %65, %cst_41 {dimension_numbers = #tpu.dot_dimension_numbers<[1], [0], [0], [1], [0, 0, 1, 1], [], []>} : vector<67x32xf32>, vector<32x64xf32>, vector<67x64xf32> -> vector<67x64xf32>
    %67 = arith.addf %63, %66 : vector<67x64xf32>
    %68 = vector.extract_strided_slice %22 {offsets = [11, 0], sizes = [67, 32], strides = [1, 1]} : vector<82x32xf32> to vector<67x32xf32>
    %c352 = arith.constant 352 : index
    %c0_42 = arith.constant 0 : index
    %69 = vector.load %arg2[%c352, %c0_42] : memref<512x64xf32, #tpu.memory_space<vmem>>, vector<32x64xf32>
    %cst_43 = arith.constant dense<0.000000e+00> : vector<67x64xf32>
    %70 = tpu.matmul %68, %69, %cst_43 {dimension_numbers = #tpu.dot_dimension_numbers<[1], [0], [0], [1], [0, 0, 1, 1], [], []>} : vector<67x32xf32>, vector<32x64xf32>, vector<67x64xf32> -> vector<67x64xf32>
    %71 = arith.addf %67, %70 : vector<67x64xf32>
    %72 = vector.extract_strided_slice %22 {offsets = [12, 0], sizes = [67, 32], strides = [1, 1]} : vector<82x32xf32> to vector<67x32xf32>
    %c384_44 = arith.constant 384 : index
    %c0_45 = arith.constant 0 : index
    %73 = vector.load %arg2[%c384_44, %c0_45] : memref<512x64xf32, #tpu.memory_space<vmem>>, vector<32x64xf32>
    %cst_46 = arith.constant dense<0.000000e+00> : vector<67x64xf32>
    %74 = tpu.matmul %72, %73, %cst_46 {dimension_numbers = #tpu.dot_dimension_numbers<[1], [0], [0], [1], [0, 0, 1, 1], [], []>} : vector<67x32xf32>, vector<32x64xf32>, vector<67x64xf32> -> vector<67x64xf32>
    %75 = arith.addf %71, %74 : vector<67x64xf32>
    %76 = vector.extract_strided_slice %22 {offsets = [13, 0], sizes = [67, 32], strides = [1, 1]} : vector<82x32xf32> to vector<67x32xf32>
    %c416 = arith.constant 416 : index
    %c0_47 = arith.constant 0 : index
    %77 = vector.load %arg2[%c416, %c0_47] : memref<512x64xf32, #tpu.memory_space<vmem>>, vector<32x64xf32>
    %cst_48 = arith.constant dense<0.000000e+00> : vector<67x64xf32>
    %78 = tpu.matmul %76, %77, %cst_48 {dimension_numbers = #tpu.dot_dimension_numbers<[1], [0], [0], [1], [0, 0, 1, 1], [], []>} : vector<67x32xf32>, vector<32x64xf32>, vector<67x64xf32> -> vector<67x64xf32>
    %79 = arith.addf %75, %78 : vector<67x64xf32>
    %80 = vector.extract_strided_slice %22 {offsets = [14, 0], sizes = [67, 32], strides = [1, 1]} : vector<82x32xf32> to vector<67x32xf32>
    %c448 = arith.constant 448 : index
    %c0_49 = arith.constant 0 : index
    %81 = vector.load %arg2[%c448, %c0_49] : memref<512x64xf32, #tpu.memory_space<vmem>>, vector<32x64xf32>
    %cst_50 = arith.constant dense<0.000000e+00> : vector<67x64xf32>
    %82 = tpu.matmul %80, %81, %cst_50 {dimension_numbers = #tpu.dot_dimension_numbers<[1], [0], [0], [1], [0, 0, 1, 1], [], []>} : vector<67x32xf32>, vector<32x64xf32>, vector<67x64xf32> -> vector<67x64xf32>
    %83 = arith.addf %79, %82 : vector<67x64xf32>
    %84 = vector.extract_strided_slice %22 {offsets = [15, 0], sizes = [67, 32], strides = [1, 1]} : vector<82x32xf32> to vector<67x32xf32>
    %c480 = arith.constant 480 : index
    %c0_51 = arith.constant 0 : index
    %85 = vector.load %arg2[%c480, %c0_51] : memref<512x64xf32, #tpu.memory_space<vmem>>, vector<32x64xf32>
    %cst_52 = arith.constant dense<0.000000e+00> : vector<67x64xf32>
    %86 = tpu.matmul %84, %85, %cst_52 {dimension_numbers = #tpu.dot_dimension_numbers<[1], [0], [0], [1], [0, 0, 1, 1], [], []>} : vector<67x32xf32>, vector<32x64xf32>, vector<67x64xf32> -> vector<67x64xf32>
    %87 = arith.addf %83, %86 : vector<67x64xf32>
    %cst_53 = arith.constant 0.000000e+00 : f32
    %88 = vector.broadcast %cst_53 : f32 to vector<67x64xf32>
    %89 = arith.maximumf %87, %88 : vector<67x64xf32>
    %90 = vector.extract_strided_slice %89 {offsets = [0, 0], sizes = [60, 64], strides = [1, 1]} : vector<67x64xf32> to vector<60x64xf32>
    %c0_54 = arith.constant 0 : index
    %c0_55 = arith.constant 0 : index
    %91 = vector.load %arg3[%c0_54, %c0_55] : memref<512x128xf32, #tpu.memory_space<vmem>>, vector<64x128xf32>
    %cst_56 = arith.constant dense<0.000000e+00> : vector<60x128xf32>
    %92 = tpu.matmul %90, %91, %cst_56 {dimension_numbers = #tpu.dot_dimension_numbers<[1], [0], [0], [1], [0, 0, 1, 1], [], []>} : vector<60x64xf32>, vector<64x128xf32>, vector<60x128xf32> -> vector<60x128xf32>
    %93 = vector.broadcast %6 : vector<1x128xf32> to vector<60x128xf32>
    %94 = arith.addf %92, %93 : vector<60x128xf32>
    %95 = vector.extract_strided_slice %89 {offsets = [1, 0], sizes = [60, 64], strides = [1, 1]} : vector<67x64xf32> to vector<60x64xf32>
    %c64_57 = arith.constant 64 : index
    %c0_58 = arith.constant 0 : index
    %96 = vector.load %arg3[%c64_57, %c0_58] : memref<512x128xf32, #tpu.memory_space<vmem>>, vector<64x128xf32>
    %cst_59 = arith.constant dense<0.000000e+00> : vector<60x128xf32>
    %97 = tpu.matmul %95, %96, %cst_59 {dimension_numbers = #tpu.dot_dimension_numbers<[1], [0], [0], [1], [0, 0, 1, 1], [], []>} : vector<60x64xf32>, vector<64x128xf32>, vector<60x128xf32> -> vector<60x128xf32>
    %98 = arith.addf %94, %97 : vector<60x128xf32>
    %99 = vector.extract_strided_slice %89 {offsets = [2, 0], sizes = [60, 64], strides = [1, 1]} : vector<67x64xf32> to vector<60x64xf32>
    %c128_60 = arith.constant 128 : index
    %c0_61 = arith.constant 0 : index
    %100 = vector.load %arg3[%c128_60, %c0_61] : memref<512x128xf32, #tpu.memory_space<vmem>>, vector<64x128xf32>
    %cst_62 = arith.constant dense<0.000000e+00> : vector<60x128xf32>
    %101 = tpu.matmul %99, %100, %cst_62 {dimension_numbers = #tpu.dot_dimension_numbers<[1], [0], [0], [1], [0, 0, 1, 1], [], []>} : vector<60x64xf32>, vector<64x128xf32>, vector<60x128xf32> -> vector<60x128xf32>
    %102 = arith.addf %98, %101 : vector<60x128xf32>
    %103 = vector.extract_strided_slice %89 {offsets = [3, 0], sizes = [60, 64], strides = [1, 1]} : vector<67x64xf32> to vector<60x64xf32>
    %c192_63 = arith.constant 192 : index
    %c0_64 = arith.constant 0 : index
    %104 = vector.load %arg3[%c192_63, %c0_64] : memref<512x128xf32, #tpu.memory_space<vmem>>, vector<64x128xf32>
    %cst_65 = arith.constant dense<0.000000e+00> : vector<60x128xf32>
    %105 = tpu.matmul %103, %104, %cst_65 {dimension_numbers = #tpu.dot_dimension_numbers<[1], [0], [0], [1], [0, 0, 1, 1], [], []>} : vector<60x64xf32>, vector<64x128xf32>, vector<60x128xf32> -> vector<60x128xf32>
    %106 = arith.addf %102, %105 : vector<60x128xf32>
    %107 = vector.extract_strided_slice %89 {offsets = [4, 0], sizes = [60, 64], strides = [1, 1]} : vector<67x64xf32> to vector<60x64xf32>
    %c256_66 = arith.constant 256 : index
    %c0_67 = arith.constant 0 : index
    %108 = vector.load %arg3[%c256_66, %c0_67] : memref<512x128xf32, #tpu.memory_space<vmem>>, vector<64x128xf32>
    %cst_68 = arith.constant dense<0.000000e+00> : vector<60x128xf32>
    %109 = tpu.matmul %107, %108, %cst_68 {dimension_numbers = #tpu.dot_dimension_numbers<[1], [0], [0], [1], [0, 0, 1, 1], [], []>} : vector<60x64xf32>, vector<64x128xf32>, vector<60x128xf32> -> vector<60x128xf32>
    %110 = arith.addf %106, %109 : vector<60x128xf32>
    %111 = vector.extract_strided_slice %89 {offsets = [5, 0], sizes = [60, 64], strides = [1, 1]} : vector<67x64xf32> to vector<60x64xf32>
    %c320_69 = arith.constant 320 : index
    %c0_70 = arith.constant 0 : index
    %112 = vector.load %arg3[%c320_69, %c0_70] : memref<512x128xf32, #tpu.memory_space<vmem>>, vector<64x128xf32>
    %cst_71 = arith.constant dense<0.000000e+00> : vector<60x128xf32>
    %113 = tpu.matmul %111, %112, %cst_71 {dimension_numbers = #tpu.dot_dimension_numbers<[1], [0], [0], [1], [0, 0, 1, 1], [], []>} : vector<60x64xf32>, vector<64x128xf32>, vector<60x128xf32> -> vector<60x128xf32>
    %114 = arith.addf %110, %113 : vector<60x128xf32>
    %115 = vector.extract_strided_slice %89 {offsets = [6, 0], sizes = [60, 64], strides = [1, 1]} : vector<67x64xf32> to vector<60x64xf32>
    %c384_72 = arith.constant 384 : index
    %c0_73 = arith.constant 0 : index
    %116 = vector.load %arg3[%c384_72, %c0_73] : memref<512x128xf32, #tpu.memory_space<vmem>>, vector<64x128xf32>
    %cst_74 = arith.constant dense<0.000000e+00> : vector<60x128xf32>
    %117 = tpu.matmul %115, %116, %cst_74 {dimension_numbers = #tpu.dot_dimension_numbers<[1], [0], [0], [1], [0, 0, 1, 1], [], []>} : vector<60x64xf32>, vector<64x128xf32>, vector<60x128xf32> -> vector<60x128xf32>
    %118 = arith.addf %114, %117 : vector<60x128xf32>
    %119 = vector.extract_strided_slice %89 {offsets = [7, 0], sizes = [60, 64], strides = [1, 1]} : vector<67x64xf32> to vector<60x64xf32>
    %c448_75 = arith.constant 448 : index
    %c0_76 = arith.constant 0 : index
    %120 = vector.load %arg3[%c448_75, %c0_76] : memref<512x128xf32, #tpu.memory_space<vmem>>, vector<64x128xf32>
    %cst_77 = arith.constant dense<0.000000e+00> : vector<60x128xf32>
    %121 = tpu.matmul %119, %120, %cst_77 {dimension_numbers = #tpu.dot_dimension_numbers<[1], [0], [0], [1], [0, 0, 1, 1], [], []>} : vector<60x64xf32>, vector<64x128xf32>, vector<60x128xf32> -> vector<60x128xf32>
    %122 = arith.addf %118, %121 : vector<60x128xf32>
    %cst_78 = arith.constant 0.000000e+00 : f32
    %123 = vector.broadcast %cst_78 : f32 to vector<60x128xf32>
    %124 = arith.maximumf %122, %123 : vector<60x128xf32>
    %125 = vector.extract_strided_slice %124 {offsets = [0, 0], sizes = [19, 128], strides = [1, 1]} : vector<60x128xf32> to vector<19x128xf32>
    %cst_79 = arith.constant dense<0xFF800000> : vector<128xf32>
    %126 = vector.multi_reduction <maximumf>, %125, %cst_79 [0] : vector<19x128xf32> to vector<128xf32>
    %127 = vector.shape_cast %126 : vector<128xf32> to vector<1x128xf32>
    %128 = vector.extract_strided_slice %124 {offsets = [41, 0], sizes = [19, 128], strides = [1, 1]} : vector<60x128xf32> to vector<19x128xf32>
    %cst_80 = arith.constant dense<0xFF800000> : vector<128xf32>
    %129 = vector.multi_reduction <maximumf>, %128, %cst_80 [0] : vector<19x128xf32> to vector<128xf32>
    %130 = vector.shape_cast %129 : vector<128xf32> to vector<1x128xf32>
    %131 = tpu.concatenate %127, %130 in 0 : vector<1x128xf32>, vector<1x128xf32> -> vector<2x128xf32>
    %c0_i32_81 = arith.constant 0 : i32
    %132 = tpu.memref_slice %arg14[%c0_i32_81] : memref<2x!tpu.dma_semaphore, #tpu.memory_space<semaphore_mem>> -> memref<1x!tpu.dma_semaphore, #tpu.memory_space<semaphore_mem>>
    %133 = tpu.memref_squeeze %132 : memref<1x!tpu.dma_semaphore, #tpu.memory_space<semaphore_mem>> -> memref<!tpu.dma_semaphore, #tpu.memory_space<semaphore_mem>>
    tpu.wait_dma2 semaphore(%133 : memref<!tpu.dma_semaphore, #tpu.memory_space<semaphore_mem>>) src(%arg7 : memref<128x1024xf32, #tpu.memory_space<any>>) dst(%arg12 : memref<128x1024xf32, #tpu.memory_space<vmem>>)
    %c0_82 = arith.constant 0 : index
    %c0_83 = arith.constant 0 : index
    %134 = vector.load %arg12[%c0_82, %c0_83] : memref<128x1024xf32, #tpu.memory_space<vmem>>, vector<128x1024xf32>
    %cst_84 = arith.constant dense<0.000000e+00> : vector<2x1024xf32>
    %135 = tpu.matmul %131, %134, %cst_84 {dimension_numbers = #tpu.dot_dimension_numbers<[1], [0], [0], [1], [0, 0, 1, 1], [], []>} : vector<2x128xf32>, vector<128x1024xf32>, vector<2x1024xf32> -> vector<2x1024xf32>
    %136 = vector.broadcast %7 : vector<1x1024xf32> to vector<2x1024xf32>
    %137 = arith.addf %135, %136 : vector<2x1024xf32>
    %cst_85 = arith.constant 0.000000e+00 : f32
    %138 = vector.broadcast %cst_85 : f32 to vector<2x1024xf32>
    %139 = arith.maximumf %137, %138 : vector<2x1024xf32>
    %c0_86 = arith.constant 0 : index
    %c0_87 = arith.constant 0 : index
    %140 = vector.load %arg11[%c0_86, %c0_87] : memref<2x1024xf32, #tpu.memory_space<vmem>>, vector<2x1024xf32>
    tpu.vector_store %arg11[%c0_86, %c0_87], %139 {strides = array<i32>} : memref<2x1024xf32, #tpu.memory_space<vmem>>, vector<2x1024xf32>,
    %141 = vector.shape_cast %139 : vector<2x1024xf32> to vector<1x2x1024xf32>
    %cst_88 = arith.constant dense<0.000000e+00> : vector<1xf32>
    %142 = vector.multi_reduction <add>, %141, %cst_88 [1, 2] : vector<1x2x1024xf32> to vector<1xf32>
    %143 = vector.shape_cast %142 : vector<1xf32> to vector<1x1x1xf32>
    %144 = vector.extract %143[0, 0, 0] : f32 from vector<1x1x1xf32>
    %cst_89 = arith.constant 2.048000e+03 : f32
    %145 = arith.divf %144, %cst_89 : f32
    %146 = vector.broadcast %145 : f32 to vector<2x1024xf32>
    %147 = arith.subf %139, %146 : vector<2x1024xf32>
    %148 = arith.mulf %147, %147 : vector<2x1024xf32>
    %149 = vector.shape_cast %148 : vector<2x1024xf32> to vector<1x2x1024xf32>
    %cst_90 = arith.constant dense<0.000000e+00> : vector<1xf32>
    %150 = vector.multi_reduction <add>, %149, %cst_90 [1, 2] : vector<1x2x1024xf32> to vector<1xf32>
    %151 = vector.shape_cast %150 : vector<1xf32> to vector<1x1x1xf32>
    %152 = vector.extract %151[0, 0, 0] : f32 from vector<1x1x1xf32>
    %cst_91 = arith.constant 2.047000e+03 : f32
    %153 = arith.divf %152, %cst_91 : f32
    %154 = math.sqrt %153 : f32
    %c1_i32_92 = arith.constant 1 : i32
    %155 = tpu.memref_slice %arg14[%c1_i32_92] : memref<2x!tpu.dma_semaphore, #tpu.memory_space<semaphore_mem>> -> memref<1x!tpu.dma_semaphore, #tpu.memory_space<semaphore_mem>>
    %156 = tpu.memref_squeeze %155 : memref<1x!tpu.dma_semaphore, #tpu.memory_space<semaphore_mem>> -> memref<!tpu.dma_semaphore, #tpu.memory_space<semaphore_mem>>
    tpu.wait_dma2 semaphore(%156 : memref<!tpu.dma_semaphore, #tpu.memory_space<semaphore_mem>>) src(%arg8 : memref<1024x384xf32, #tpu.memory_space<any>>) dst(%arg13 : memref<1024x384xf32, #tpu.memory_space<vmem>>)
    %c0_93 = arith.constant 0 : index
    %c0_94 = arith.constant 0 : index
    %157 = vector.load %arg13[%c0_93, %c0_94] : memref<1024x384xf32, #tpu.memory_space<vmem>>, vector<1024x384xf32>
    %cst_95 = arith.constant dense<0.000000e+00> : vector<2x384xf32>
    %158 = tpu.matmul %139, %157, %cst_95 {dimension_numbers = #tpu.dot_dimension_numbers<[1], [0], [0], [1], [0, 0, 1, 1], [], []>} : vector<2x1024xf32>, vector<1024x384xf32>, vector<2x384xf32> -> vector<2x384xf32>
    %159 = vector.extract_strided_slice %158 {offsets = [0, 256], sizes = [2, 128], strides = [1, 1]} : vector<2x384xf32> to vector<2x128xf32>
    %160 = vector.broadcast %8 : vector<1x128xf32> to vector<2x128xf32>
    %161 = arith.addf %159, %160 : vector<2x128xf32>
    %c0_96 = arith.constant 0 : index
    %c0_97 = arith.constant 0 : index
    %162 = vector.load %arg9[%c0_96, %c0_97] : memref<2x128xf32, #tpu.memory_space<vmem>>, vector<2x128xf32>
    tpu.vector_store %arg9[%c0_96, %c0_97], %161 {strides = array<i32>} : memref<2x128xf32, #tpu.memory_space<vmem>>, vector<2x128xf32>,
    %163 = vector.extract_strided_slice %158 {offsets = [0, 0], sizes = [2, 256], strides = [1, 1]} : vector<2x384xf32> to vector<2x256xf32>
    %164 = vector.broadcast %9 : vector<1x256xf32> to vector<2x256xf32>
    %165 = arith.addf %163, %164 : vector<2x256xf32>
    %cst_98 = arith.constant dense<0.000000e+00> : vector<2xf32>
    %166 = vector.multi_reduction <add>, %165, %cst_98 [1] : vector<2x256xf32> to vector<2xf32>
    %167 = vector.shape_cast %166 : vector<2xf32> to vector<2x1xf32>
    %cst_99 = arith.constant 2.560000e+02 : f32
    %168 = vector.broadcast %cst_99 : f32 to vector<2x1xf32>
    %169 = arith.divf %167, %168 : vector<2x1xf32>
    %170 = vector.broadcast %169 : vector<2x1xf32> to vector<2x256xf32>
    %171 = arith.subf %165, %170 : vector<2x256xf32>
    %172 = arith.mulf %171, %171 : vector<2x256xf32>
    %cst_100 = arith.constant dense<0.000000e+00> : vector<2xf32>
    %173 = vector.multi_reduction <add>, %172, %cst_100 [1] : vector<2x256xf32> to vector<2xf32>
    %174 = vector.shape_cast %173 : vector<2xf32> to vector<2x1xf32>
    %cst_101 = arith.constant 2.560000e+02 : f32
    %175 = vector.broadcast %cst_101 : f32 to vector<2x1xf32>
    %176 = arith.divf %174, %175 : vector<2x1xf32>
    %177 = vector.broadcast %169 : vector<2x1xf32> to vector<2x256xf32>
    %178 = arith.subf %165, %177 : vector<2x256xf32>
    %cst_102 = arith.constant 9.99999974E-6 : f32
    %179 = vector.broadcast %cst_102 : f32 to vector<2x1xf32>
    %180 = arith.addf %176, %179 : vector<2x1xf32>
    %181 = math.rsqrt %180 : vector<2x1xf32>
    %182 = vector.broadcast %181 : vector<2x1xf32> to vector<2x256xf32>
    %183 = arith.mulf %178, %182 : vector<2x256xf32>
    %184 = vector.broadcast %10 : vector<1x256xf32> to vector<2x256xf32>
    %185 = arith.mulf %183, %184 : vector<2x256xf32>
    %186 = vector.broadcast %11 : vector<1x256xf32> to vector<2x256xf32>
    %187 = arith.addf %185, %186 : vector<2x256xf32>
    %cst_103 = arith.constant 0.000000e+00 : f32
    %188 = vector.broadcast %cst_103 : f32 to vector<2x256xf32>
    %189 = arith.maximumf %187, %188 : vector<2x256xf32>
    %c0_104 = arith.constant 0 : index
    %c0_105 = arith.constant 0 : index
    %190 = vector.load %arg4[%c0_104, %c0_105] : memref<256x64xf32, #tpu.memory_space<vmem>>, vector<256x64xf32>
    %cst_106 = arith.constant dense<0.000000e+00> : vector<2x64xf32>
    %191 = tpu.matmul %189, %190, %cst_106 {dimension_numbers = #tpu.dot_dimension_numbers<[1], [0], [0], [1], [0, 0, 1, 1], [], []>} : vector<2x256xf32>, vector<256x64xf32>, vector<2x64xf32> -> vector<2x64xf32>
    %192 = vector.broadcast %12 : vector<1x64xf32> to vector<2x64xf32>
    %193 = arith.addf %191, %192 : vector<2x64xf32>
    %cst_107 = arith.constant dense<0.000000e+00> : vector<2xf32>
    %194 = vector.multi_reduction <add>, %193, %cst_107 [1] : vector<2x64xf32> to vector<2xf32>
    %195 = vector.shape_cast %194 : vector<2xf32> to vector<2x1xf32>
    %cst_108 = arith.constant 6.400000e+01 : f32
    %196 = vector.broadcast %cst_108 : f32 to vector<2x1xf32>
    %197 = arith.divf %195, %196 : vector<2x1xf32>
    %198 = vector.broadcast %197 : vector<2x1xf32> to vector<2x64xf32>
    %199 = arith.subf %193, %198 : vector<2x64xf32>
    %200 = arith.mulf %199, %199 : vector<2x64xf32>
    %cst_109 = arith.constant dense<0.000000e+00> : vector<2xf32>
    %201 = vector.multi_reduction <add>, %200, %cst_109 [1] : vector<2x64xf32> to vector<2xf32>
    %202 = vector.shape_cast %201 : vector<2xf32> to vector<2x1xf32>
    %cst_110 = arith.constant 6.400000e+01 : f32
    %203 = vector.broadcast %cst_110 : f32 to vector<2x1xf32>
    %204 = arith.divf %202, %203 : vector<2x1xf32>
    %205 = vector.broadcast %197 : vector<2x1xf32> to vector<2x64xf32>
    %206 = arith.subf %193, %205 : vector<2x64xf32>
    %cst_111 = arith.constant 9.99999974E-6 : f32
    %207 = vector.broadcast %cst_111 : f32 to vector<2x1xf32>
    %208 = arith.addf %204, %207 : vector<2x1xf32>
    %209 = math.rsqrt %208 : vector<2x1xf32>
    %210 = vector.broadcast %209 : vector<2x1xf32> to vector<2x64xf32>
    %211 = arith.mulf %206, %210 : vector<2x64xf32>
    %212 = vector.broadcast %13 : vector<1x64xf32> to vector<2x64xf32>
    %213 = arith.mulf %211, %212 : vector<2x64xf32>
    %214 = vector.broadcast %14 : vector<1x64xf32> to vector<2x64xf32>
    %215 = arith.addf %213, %214 : vector<2x64xf32>
    %cst_112 = arith.constant 0.000000e+00 : f32
    %216 = vector.broadcast %cst_112 : f32 to vector<2x64xf32>
    %217 = arith.maximumf %215, %216 : vector<2x64xf32>
    %c0_113 = arith.constant 0 : index
    %c0_114 = arith.constant 0 : index
    %218 = vector.load %arg5[%c0_113, %c0_114] : memref<64x2xf32, #tpu.memory_space<vmem>>, vector<64x2xf32>
    %cst_115 = arith.constant dense<0.000000e+00> : vector<2x2xf32>
    %219 = tpu.matmul %217, %218, %cst_115 {dimension_numbers = #tpu.dot_dimension_numbers<[1], [0], [0], [1], [0, 0, 1, 1], [], []>} : vector<2x64xf32>, vector<64x2xf32>, vector<2x2xf32> -> vector<2x2xf32>
    %220 = vector.broadcast %15 : vector<1x2xf32> to vector<2x2xf32>
    %221 = arith.addf %219, %220 : vector<2x2xf32>
    %222 = vector.shape_cast %221 : vector<2x2xf32> to vector<1x2x2xf32>
    %cst_116 = arith.constant dense<0.000000e+00> : vector<1xf32>
    %223 = vector.multi_reduction <add>, %222, %cst_116 [1, 2] : vector<1x2x2xf32> to vector<1xf32>
    %224 = vector.shape_cast %223 : vector<1xf32> to vector<1x1x1xf32>
    %225 = vector.extract %224[0, 0, 0] : f32 from vector<1x1x1xf32>
    %cst_117 = arith.constant 4.000000e+00 : f32
    %226 = arith.divf %225, %cst_117 : f32
    %227 = vector.broadcast %226 : f32 to vector<2x2xf32>
    %228 = arith.subf %221, %227 : vector<2x2xf32>
    %229 = arith.mulf %228, %228 : vector<2x2xf32>
    %230 = vector.shape_cast %229 : vector<2x2xf32> to vector<1x2x2xf32>
    %cst_118 = arith.constant dense<0.000000e+00> : vector<1xf32>
    %231 = vector.multi_reduction <add>, %230, %cst_118 [1, 2] : vector<1x2x2xf32> to vector<1xf32>
    %232 = vector.shape_cast %231 : vector<1xf32> to vector<1x1x1xf32>
    %233 = vector.extract %232[0, 0, 0] : f32 from vector<1x1x1xf32>
    %cst_119 = arith.constant 3.000000e+00 : f32
    %234 = arith.divf %233, %cst_119 : f32
    %235 = math.sqrt %234 : f32
    %236 = vector.broadcast %226 : f32 to vector<2x2xf32>
    %237 = arith.subf %221, %236 : vector<2x2xf32>
    %cst_120 = arith.constant 9.99999993E-9 : f32
    %238 = arith.addf %235, %cst_120 : f32
    %239 = vector.broadcast %238 : f32 to vector<2x2xf32>
    %240 = arith.divf %237, %239 : vector<2x2xf32>
    %241 = vector.broadcast %154 : f32 to vector<2x2xf32>
    %242 = arith.mulf %240, %241 : vector<2x2xf32>
    %243 = vector.broadcast %145 : f32 to vector<2x2xf32>
    %244 = arith.addf %242, %243 : vector<2x2xf32>
    %c0_121 = arith.constant 0 : index
    %c0_122 = arith.constant 0 : index
    %245 = vector.load %arg10[%c0_121, %c0_122] : memref<2x2xf32, #tpu.memory_space<vmem>>, vector<2x2xf32>
    tpu.vector_store %arg10[%c0_121, %c0_122], %244 {strides = array<i32>} : memref<2x2xf32, #tpu.memory_space<vmem>>, vector<2x2xf32>,
    return
  }
}

</mosaic_0001>

<llo_original>
// kernel: cnn_pamap2_forward.1
$region0: #{cnn_pamap2_forward.1}
  #allocation0 [shape = 'u32[]', space=smem, size = 0x4, offset = 0x4, fixed_abs, tag = 'smem constant byte address 0x4 - core index']
  #allocation1 [shape = 'u32[144,128]{1,0:T(1,128)}', space=vmem, size = 0x12000, scoped, tag = 'internal scratch']
  #allocation2 [shape = 'f32[128,1024]{1,0:T(8,128)}', space=vmem, size = 0x80000, scoped, tag = 'scratch operand']
  #allocation3 [shape = 'f32[1024,384]{1,0:T(8,128)}', space=vmem, size = 0x180000, scoped, tag = 'scratch operand']
  #allocation4 [shape = 's32[2]{0}', space=sflag, size = 0x8, scoped, tag = 'scratch operand']
  #allocation10 [shape = 's32[]', space=sflag, size = 0x4, offset = 0, fixed_abs, tag = 'sflag constant byte address 0x0 - dummy sync flag']
  #allocation11 [shape = 's32[]', space=sflag, size = 0x4, offset = 0, fixed_abs, tag = 'sflag constant byte address 0x0 - dummy sync flag']
  %s0 = inlined_call_operand.vmem [shape: f32[82,96], index: 0, kind: input, shape index: {}]
  %s1 = inlined_call_operand.vmem [shape: f32[96,32], index: 1, kind: input, shape index: {}]
  %s2 = inlined_call_operand.vmem [shape: f32[512,64], index: 2, kind: input, shape index: {}]
  %s3 = inlined_call_operand.vmem [shape: f32[512,128], index: 3, kind: input, shape index: {}]
  %s4 = inlined_call_operand.vmem [shape: f32[256,64], index: 4, kind: input, shape index: {}]
  %s5 = inlined_call_operand.vmem [shape: f32[64,2], index: 5, kind: input, shape index: {}]
  %s6 = inlined_call_operand.vmem [shape: f32[1,2816], index: 6, kind: input, shape index: {}]
  %s7 = inlined_call_operand.vmem [shape: f32[128,1024], index: 7, kind: input, shape index: {}]
  %s8 = inlined_call_operand.vmem [shape: f32[1024,384], index: 8, kind: input, shape index: {}]
  %s9 = inlined_call_operand.hbm [shape: f32[2,128], index: 9, kind: output, shape index: {0}]
  %s10 = inlined_call_operand.hbm [shape: f32[2,2], index: 10, kind: output, shape index: {1}]
  %s11 = inlined_call_operand.hbm [shape: f32[2,1024], index: 11, kind: output, shape index: {2}]
  %12 = xla_tuple %s9, %s10, %s11
  %s13 = sld [smem:[#allocation0]]
  $region122: #{cnn_pamap2_forward.1} parent=0
    _
  %s15 = ssub.s32 1, %s13
  %s16 = scalar_select 0, %s15, %s13
  $region1: #{cnn_pamap2_forward.1} parent=0
    #allocation5 [shape = 'u8[1024]{0}', space=vmem, size = 0x400, scoped, tag = 'output window, operand 0, single buffered']
    #allocation6 [shape = 's32[1]{0}', space=sflag, size = 0x4, scoped, tag = 'scoped memory for cnn_pamap2_forward.1']
    #allocation7 [shape = 'u8[1024]{0}', space=vmem, size = 0x400, scoped, tag = 'output window, operand 1, single buffered']
    #allocation8 [shape = 's32[1]{0}', space=sflag, size = 0x4, scoped, tag = 'scoped memory for cnn_pamap2_forward.1']
    #allocation9 [shape = 'u8[8192]{0}', space=vmem, size = 0x2000, scoped, tag = 'output window, operand 2, single buffered']
    %17 = vsyncpa [#allocation6], 0
    %18 = vsyncpa [#allocation8], 0
    // Predicated region
    $region2: #{cnn_pamap2_forward.1} parent=1 // pred_check
      _
    $region3: #{cnn_pamap2_forward.1} parent=1 // pred_check_branch
      %20 = sbr.rel (0) target = $region5
    $region4: #{cnn_pamap2_forward.1} parent=1 // pred_region
      _
    $region5: #{cnn_pamap2_forward.1} parent=1 // pred_fallthru
      _
    // Predicated region
    $region6: #{cnn_pamap2_forward.1} parent=1 // pred_check
      _
    $region7: #{cnn_pamap2_forward.1} parent=1 // pred_check_branch
      %22 = sbr.rel (0) target = $region9
    $region8: #{cnn_pamap2_forward.1} parent=1 // pred_region
      _
    $region9: #{cnn_pamap2_forward.1} parent=1 // pred_fallthru
      _
    // Predicated region
    $region10: #{cnn_pamap2_forward.1} parent=1 // pred_check
      _
    $region11: #{cnn_pamap2_forward.1} parent=1 // pred_check_branch
      %24 = sbr.rel (0) target = $region13
    $region12: #{cnn_pamap2_forward.1} parent=1 // pred_region
      _
    $region13: #{cnn_pamap2_forward.1} parent=1 // pred_fallthru
      _
    // Predicated region
    $region14: #{cnn_pamap2_forward.1} parent=1 // pred_check
      _
    $region15: #{cnn_pamap2_forward.1} parent=1 // pred_check_branch
      %26 = sbr.rel (0) target = $region17
    $region16: #{cnn_pamap2_forward.1} parent=1 // pred_region
      _
    $region17: #{cnn_pamap2_forward.1} parent=1 // pred_fallthru
      _
    // Predicated region
    $region18: #{cnn_pamap2_forward.1} parent=1 // pred_check
      _
    $region19: #{cnn_pamap2_forward.1} parent=1 // pred_check_branch
      %28 = sbr.rel (0) target = $region21
    $region20: #{cnn_pamap2_forward.1} parent=1 // pred_region
      _
    $region21: #{cnn_pamap2_forward.1} parent=1 // pred_fallthru
      _
    // Predicated region
    $region22: #{cnn_pamap2_forward.1} parent=1 // pred_check
      _
    $region23: #{cnn_pamap2_forward.1} parent=1 // pred_check_branch
      %30 = sbr.rel (0) target = $region25
    $region24: #{cnn_pamap2_forward.1} parent=1 // pred_region
      _
    $region25: #{cnn_pamap2_forward.1} parent=1 // pred_fallthru
      _
    // Predicated region
    $region26: #{cnn_pamap2_forward.1} parent=1 // pred_check
      _
    $region27: #{cnn_pamap2_forward.1} parent=1 // pred_check_branch
      %32 = sbr.rel (0) target = $region29
    $region28: #{cnn_pamap2_forward.1} parent=1 // pred_region
      _
    $region29: #{cnn_pamap2_forward.1} parent=1 // pred_fallthru
      _
    %p34 = scmp.lt.u32.totalorder 1024, 8
    %p35 = pneg %p34
    // Predicated region
    $region30: #{cnn_pamap2_forward.1} parent=1 // pred_check
      _
    $region31: #{cnn_pamap2_forward.1} parent=1 // pred_check_branch
      %37 = sbr.rel (%p34) target = $region33
    $region32: #{cnn_pamap2_forward.1} parent=1 // pred_region
      %s52 = sand.u32 1024, 7
      %p53 = scmp.eq.s32.totalorder %s52, 0
      // Predicated region
      $region45: #{cnn_pamap2_forward.1} parent=32 // pred_check
        %p54 = pneg %p53
      $region46: #{cnn_pamap2_forward.1} parent=32 // pred_check_branch
        %56 = sbr.rel (%p54) target = $region48
      $region47: #{cnn_pamap2_forward.1} parent=32 // pred_region
        loop: start=0, step=1, limit=1
        $region49: #{cnn_pamap2_forward.1} parent=47 // loop_pre_header
          _
        $region50: #{cnn_pamap2_forward.1} parent=47 // loop_header
          %s58 = sphi 0, %s62
          %p59 = scmp.ge.s32.totalorder %s58, 1
          %s63 = sphi %s7, %s7
          %s64 = sphi [#allocation2], [#allocation2]
        $region51: #{cnn_pamap2_forward.1} parent=47 // loop_header_branch
          %61 = sbr.rel (%p59) target = $region55
        $region52: #{cnn_pamap2_forward.1} parent=47 // loop_body
          %v65 = vld [vmem:[%s63] sm:$0xff]
          %66 = vst [vmem:[%s64] sm:$0xff] %v65
          %v67 = vld [vmem:[%s63 + $0x8] sm:$0xff]
          %68 = vst [vmem:[%s64 + $0x8] sm:$0xff] %v67
          %v69 = vld [vmem:[%s63 + $0x10] sm:$0xff]
          %70 = vst [vmem:[%s64 + $0x10] sm:$0xff] %v69
          %v71 = vld [vmem:[%s63 + $0x18] sm:$0xff]
          %72 = vst [vmem:[%s64 + $0x18] sm:$0xff] %v71
          %v73 = vld [vmem:[%s63 + $0x20] sm:$0xff]
          %74 = vst [vmem:[%s64 + $0x20] sm:$0xff] %v73
          %v75 = vld [vmem:[%s63 + $0x28] sm:$0xff]
          %76 = vst [vmem:[%s64 + $0x28] sm:$0xff] %v75
          %v77 = vld [vmem:[%s63 + $0x30] sm:$0xff]
          %78 = vst [vmem:[%s64 + $0x30] sm:$0xff] %v77
          %v79 = vld [vmem:[%s63 + $0x38] sm:$0xff]
          %80 = vst [vmem:[%s64 + $0x38] sm:$0xff] %v79
          %v81 = vld [vmem:[%s63 + $0x40] sm:$0xff]
          %82 = vst [vmem:[%s64 + $0x40] sm:$0xff] %v81
          %v83 = vld [vmem:[%s63 + $0x48] sm:$0xff]
          %84 = vst [vmem:[%s64 + $0x48] sm:$0xff] %v83
          %v85 = vld [vmem:[%s63 + $0x50] sm:$0xff]
          %86 = vst [vmem:[%s64 + $0x50] sm:$0xff] %v85
          %v87 = vld [vmem:[%s63 + $0x58] sm:$0xff]
          %88 = vst [vmem:[%s64 + $0x58] sm:$0xff] %v87
          %v89 = vld [vmem:[%s63 + $0x60] sm:$0xff]
          %90 = vst [vmem:[%s64 + $0x60] sm:$0xff] %v89
          %v91 = vld [vmem:[%s63 + $0x68] sm:$0xff]
          %92 = vst [vmem:[%s64 + $0x68] sm:$0xff] %v91
          %v93 = vld [vmem:[%s63 + $0x70] sm:$0xff]
          %94 = vst [vmem:[%s64 + $0x70] sm:$0xff] %v93
          %v95 = vld [vmem:[%s63 + $0x78] sm:$0xff]
          %96 = vst [vmem:[%s64 + $0x78] sm:$0xff] %v95
          %v97 = vld [vmem:[%s63 + $0x80] sm:$0xff]
          %98 = vst [vmem:[%s64 + $0x80] sm:$0xff] %v97
          %v99 = vld [vmem:[%s63 + $0x88] sm:$0xff]
          %100 = vst [vmem:[%s64 + $0x88] sm:$0xff] %v99
          %v101 = vld [vmem:[%s63 + $0x90] sm:$0xff]
          %102 = vst [vmem:[%s64 + $0x90] sm:$0xff] %v101
          %v103 = vld [vmem:[%s63 + $0x98] sm:$0xff]
          %104 = vst [vmem:[%s64 + $0x98] sm:$0xff] %v103
          %v105 = vld [vmem:[%s63 + $0xa0] sm:$0xff]
          %106 = vst [vmem:[%s64 + $0xa0] sm:$0xff] %v105
          %v107 = vld [vmem:[%s63 + $0xa8] sm:$0xff]
          %108 = vst [vmem:[%s64 + $0xa8] sm:$0xff] %v107
          %v109 = vld [vmem:[%s63 + $0xb0] sm:$0xff]
          %110 = vst [vmem:[%s64 + $0xb0] sm:$0xff] %v109
          %v111 = vld [vmem:[%s63 + $0xb8] sm:$0xff]
          %112 = vst [vmem:[%s64 + $0xb8] sm:$0xff] %v111
          %v113 = vld [vmem:[%s63 + $0xc0] sm:$0xff]
          %114 = vst [vmem:[%s64 + $0xc0] sm:$0xff] %v113
          %v115 = vld [vmem:[%s63 + $0xc8] sm:$0xff]
          %116 = vst [vmem:[%s64 + $0xc8] sm:$0xff] %v115
          %v117 = vld [vmem:[%s63 + $0xd0] sm:$0xff]
          %118 = vst [vmem:[%s64 + $0xd0] sm:$0xff] %v117
          %v119 = vld [vmem:[%s63 + $0xd8] sm:$0xff]
          %120 = vst [vmem:[%s64 + $0xd8] sm:$0xff] %v119
          %v121 = vld [vmem:[%s63 + $0xe0] sm:$0xff]
          %122 = vst [vmem:[%s64 + $0xe0] sm:$0xff] %v121
          %v123 = vld [vmem:[%s63 + $0xe8] sm:$0xff]
          %124 = vst [vmem:[%s64 + $0xe8] sm:$0xff] %v123
          %v125 = vld [vmem:[%s63 + $0xf0] sm:$0xff]
          %126 = vst [vmem:[%s64 + $0xf0] sm:$0xff] %v125
          %v127 = vld [vmem:[%s63 + $0xf8] sm:$0xff]
          %128 = vst [vmem:[%s64 + $0xf8] sm:$0xff] %v127
          %v129 = vld [vmem:[%s63 + $0x100] sm:$0xff]
          %130 = vst [vmem:[%s64 + $0x100] sm:$0xff] %v129
          %v131 = vld [vmem:[%s63 + $0x108] sm:$0xff]
          %132 = vst [vmem:[%s64 + $0x108] sm:$0xff] %v131
          %v133 = vld [vmem:[%s63 + $0x110] sm:$0xff]
          %134 = vst [vmem:[%s64 + $0x110] sm:$0xff] %v133
          %v135 = vld [vmem:[%s63 + $0x118] sm:$0xff]
          %136 = vst [vmem:[%s64 + $0x118] sm:$0xff] %v135
          %v137 = vld [vmem:[%s63 + $0x120] sm:$0xff]
          %138 = vst [vmem:[%s64 + $0x120] sm:$0xff] %v137
          %v139 = vld [vmem:[%s63 + $0x128] sm:$0xff]
          %140 = vst [vmem:[%s64 + $0x128] sm:$0xff] %v139
          %v141 = vld [vmem:[%s63 + $0x130] sm:$0xff]
          %142 = vst [vmem:[%s64 + $0x130] sm:$0xff] %v141
          %v143 = vld [vmem:[%s63 + $0x138] sm:$0xff]
          %144 = vst [vmem:[%s64 + $0x138] sm:$0xff] %v143
          %v145 = vld [vmem:[%s63 + $0x140] sm:$0xff]
          %146 = vst [vmem:[%s64 + $0x140] sm:$0xff] %v145
          %v147 = vld [vmem:[%s63 + $0x148] sm:$0xff]
          %148 = vst [vmem:[%s64 + $0x148] sm:$0xff] %v147
          %v149 = vld [vmem:[%s63 + $0x150] sm:$0xff]
          %150 = vst [vmem:[%s64 + $0x150] sm:$0xff] %v149
          %v151 = vld [vmem:[%s63 + $0x158] sm:$0xff]
          %152 = vst [vmem:[%s64 + $0x158] sm:$0xff] %v151
          %v153 = vld [vmem:[%s63 + $0x160] sm:$0xff]
          %154 = vst [vmem:[%s64 + $0x160] sm:$0xff] %v153
          %v155 = vld [vmem:[%s63 + $0x168] sm:$0xff]
          %156 = vst [vmem:[%s64 + $0x168] sm:$0xff] %v155
          %v157 = vld [vmem:[%s63 + $0x170] sm:$0xff]
          %158 = vst [vmem:[%s64 + $0x170] sm:$0xff] %v157
          %v159 = vld [vmem:[%s63 + $0x178] sm:$0xff]
          %160 = vst [vmem:[%s64 + $0x178] sm:$0xff] %v159
          %v161 = vld [vmem:[%s63 + $0x180] sm:$0xff]
          %162 = vst [vmem:[%s64 + $0x180] sm:$0xff] %v161
          %v163 = vld [vmem:[%s63 + $0x188] sm:$0xff]
          %164 = vst [vmem:[%s64 + $0x188] sm:$0xff] %v163
          %v165 = vld [vmem:[%s63 + $0x190] sm:$0xff]
          %166 = vst [vmem:[%s64 + $0x190] sm:$0xff] %v165
          %v167 = vld [vmem:[%s63 + $0x198] sm:$0xff]
          %168 = vst [vmem:[%s64 + $0x198] sm:$0xff] %v167
          %v169 = vld [vmem:[%s63 + $0x1a0] sm:$0xff]
          %170 = vst [vmem:[%s64 + $0x1a0] sm:$0xff] %v169
          %v171 = vld [vmem:[%s63 + $0x1a8] sm:$0xff]
          %172 = vst [vmem:[%s64 + $0x1a8] sm:$0xff] %v171
          %v173 = vld [vmem:[%s63 + $0x1b0] sm:$0xff]
          %174 = vst [vmem:[%s64 + $0x1b0] sm:$0xff] %v173
          %v175 = vld [vmem:[%s63 + $0x1b8] sm:$0xff]
          %176 = vst [vmem:[%s64 + $0x1b8] sm:$0xff] %v175
          %v177 = vld [vmem:[%s63 + $0x1c0] sm:$0xff]
          %178 = vst [vmem:[%s64 + $0x1c0] sm:$0xff] %v177
          %v179 = vld [vmem:[%s63 + $0x1c8] sm:$0xff]
          %180 = vst [vmem:[%s64 + $0x1c8] sm:$0xff] %v179
          %v181 = vld [vmem:[%s63 + $0x1d0] sm:$0xff]
          %182 = vst [vmem:[%s64 + $0x1d0] sm:$0xff] %v181
          %v183 = vld [vmem:[%s63 + $0x1d8] sm:$0xff]
          %184 = vst [vmem:[%s64 + $0x1d8] sm:$0xff] %v183
          %v185 = vld [vmem:[%s63 + $0x1e0] sm:$0xff]
          %186 = vst [vmem:[%s64 + $0x1e0] sm:$0xff] %v185
          %v187 = vld [vmem:[%s63 + $0x1e8] sm:$0xff]
          %188 = vst [vmem:[%s64 + $0x1e8] sm:$0xff] %v187
          %v189 = vld [vmem:[%s63 + $0x1f0] sm:$0xff]
          %190 = vst [vmem:[%s64 + $0x1f0] sm:$0xff] %v189
          %v191 = vld [vmem:[%s63 + $0x1f8] sm:$0xff]
          %192 = vst [vmem:[%s64 + $0x1f8] sm:$0xff] %v191
          %v193 = vld [vmem:[%s63 + $0x200] sm:$0xff]
          %194 = vst [vmem:[%s64 + $0x200] sm:$0xff] %v193
          %v195 = vld [vmem:[%s63 + $0x208] sm:$0xff]
          %196 = vst [vmem:[%s64 + $0x208] sm:$0xff] %v195
          %v197 = vld [vmem:[%s63 + $0x210] sm:$0xff]
          %198 = vst [vmem:[%s64 + $0x210] sm:$0xff] %v197
          %v199 = vld [vmem:[%s63 + $0x218] sm:$0xff]
          %200 = vst [vmem:[%s64 + $0x218] sm:$0xff] %v199
          %v201 = vld [vmem:[%s63 + $0x220] sm:$0xff]
          %202 = vst [vmem:[%s64 + $0x220] sm:$0xff] %v201
          %v203 = vld [vmem:[%s63 + $0x228] sm:$0xff]
          %204 = vst [vmem:[%s64 + $0x228] sm:$0xff] %v203
          %v205 = vld [vmem:[%s63 + $0x230] sm:$0xff]
          %206 = vst [vmem:[%s64 + $0x230] sm:$0xff] %v205
          %v207 = vld [vmem:[%s63 + $0x238] sm:$0xff]
          %208 = vst [vmem:[%s64 + $0x238] sm:$0xff] %v207
          %v209 = vld [vmem:[%s63 + $0x240] sm:$0xff]
          %210 = vst [vmem:[%s64 + $0x240] sm:$0xff] %v209
          %v211 = vld [vmem:[%s63 + $0x248] sm:$0xff]
          %212 = vst [vmem:[%s64 + $0x248] sm:$0xff] %v211
          %v213 = vld [vmem:[%s63 + $0x250] sm:$0xff]
          %214 = vst [vmem:[%s64 + $0x250] sm:$0xff] %v213
          %v215 = vld [vmem:[%s63 + $0x258] sm:$0xff]
          %216 = vst [vmem:[%s64 + $0x258] sm:$0xff] %v215
          %v217 = vld [vmem:[%s63 + $0x260] sm:$0xff]
          %218 = vst [vmem:[%s64 + $0x260] sm:$0xff] %v217
          %v219 = vld [vmem:[%s63 + $0x268] sm:$0xff]
          %220 = vst [vmem:[%s64 + $0x268] sm:$0xff] %v219
          %v221 = vld [vmem:[%s63 + $0x270] sm:$0xff]
          %222 = vst [vmem:[%s64 + $0x270] sm:$0xff] %v221
          %v223 = vld [vmem:[%s63 + $0x278] sm:$0xff]
          %224 = vst [vmem:[%s64 + $0x278] sm:$0xff] %v223
          %v225 = vld [vmem:[%s63 + $0x280] sm:$0xff]
          %226 = vst [vmem:[%s64 + $0x280] sm:$0xff] %v225
          %v227 = vld [vmem:[%s63 + $0x288] sm:$0xff]
          %228 = vst [vmem:[%s64 + $0x288] sm:$0xff] %v227
          %v229 = vld [vmem:[%s63 + $0x290] sm:$0xff]
          %230 = vst [vmem:[%s64 + $0x290] sm:$0xff] %v229
          %v231 = vld [vmem:[%s63 + $0x298] sm:$0xff]
          %232 = vst [vmem:[%s64 + $0x298] sm:$0xff] %v231
          %v233 = vld [vmem:[%s63 + $0x2a0] sm:$0xff]
          %234 = vst [vmem:[%s64 + $0x2a0] sm:$0xff] %v233
          %v235 = vld [vmem:[%s63 + $0x2a8] sm:$0xff]
          %236 = vst [vmem:[%s64 + $0x2a8] sm:$0xff] %v235
          %v237 = vld [vmem:[%s63 + $0x2b0] sm:$0xff]
          %238 = vst [vmem:[%s64 + $0x2b0] sm:$0xff] %v237
          %v239 = vld [vmem:[%s63 + $0x2b8] sm:$0xff]
          %240 = vst [vmem:[%s64 + $0x2b8] sm:$0xff] %v239
          %v241 = vld [vmem:[%s63 + $0x2c0] sm:$0xff]
          %242 = vst [vmem:[%s64 + $0x2c0] sm:$0xff] %v241
          %v243 = vld [vmem:[%s63 + $0x2c8] sm:$0xff]
          %244 = vst [vmem:[%s64 + $0x2c8] sm:$0xff] %v243
          %v245 = vld [vmem:[%s63 + $0x2d0] sm:$0xff]
          %246 = vst [vmem:[%s64 + $0x2d0] sm:$0xff] %v245
          %v247 = vld [vmem:[%s63 + $0x2d8] sm:$0xff]
          %248 = vst [vmem:[%s64 + $0x2d8] sm:$0xff] %v247
          %v249 = vld [vmem:[%s63 + $0x2e0] sm:$0xff]
          %250 = vst [vmem:[%s64 + $0x2e0] sm:$0xff] %v249
          %v251 = vld [vmem:[%s63 + $0x2e8] sm:$0xff]
          %252 = vst [vmem:[%s64 + $0x2e8] sm:$0xff] %v251
          %v253 = vld [vmem:[%s63 + $0x2f0] sm:$0xff]
          %254 = vst [vmem:[%s64 + $0x2f0] sm:$0xff] %v253
          %v255 = vld [vmem:[%s63 + $0x2f8] sm:$0xff]
          %256 = vst [vmem:[%s64 + $0x2f8] sm:$0xff] %v255
          %v257 = vld [vmem:[%s63 + $0x300] sm:$0xff]
          %258 = vst [vmem:[%s64 + $0x300] sm:$0xff] %v257
          %v259 = vld [vmem:[%s63 + $0x308] sm:$0xff]
          %260 = vst [vmem:[%s64 + $0x308] sm:$0xff] %v259
          %v261 = vld [vmem:[%s63 + $0x310] sm:$0xff]
          %262 = vst [vmem:[%s64 + $0x310] sm:$0xff] %v261
          %v263 = vld [vmem:[%s63 + $0x318] sm:$0xff]
          %264 = vst [vmem:[%s64 + $0x318] sm:$0xff] %v263
          %v265 = vld [vmem:[%s63 + $0x320] sm:$0xff]
          %266 = vst [vmem:[%s64 + $0x320] sm:$0xff] %v265
          %v267 = vld [vmem:[%s63 + $0x328] sm:$0xff]
          %268 = vst [vmem:[%s64 + $0x328] sm:$0xff] %v267
          %v269 = vld [vmem:[%s63 + $0x330] sm:$0xff]
          %270 = vst [vmem:[%s64 + $0x330] sm:$0xff] %v269
          %v271 = vld [vmem:[%s63 + $0x338] sm:$0xff]
          %272 = vst [vmem:[%s64 + $0x338] sm:$0xff] %v271
          %v273 = vld [vmem:[%s63 + $0x340] sm:$0xff]
          %274 = vst [vmem:[%s64 + $0x340] sm:$0xff] %v273
          %v275 = vld [vmem:[%s63 + $0x348] sm:$0xff]
          %276 = vst [vmem:[%s64 + $0x348] sm:$0xff] %v275
          %v277 = vld [vmem:[%s63 + $0x350] sm:$0xff]
          %278 = vst [vmem:[%s64 + $0x350] sm:$0xff] %v277
          %v279 = vld [vmem:[%s63 + $0x358] sm:$0xff]
          %280 = vst [vmem:[%s64 + $0x358] sm:$0xff] %v279
          %v281 = vld [vmem:[%s63 + $0x360] sm:$0xff]
          %282 = vst [vmem:[%s64 + $0x360] sm:$0xff] %v281
          %v283 = vld [vmem:[%s63 + $0x368] sm:$0xff]
          %284 = vst [vmem:[%s64 + $0x368] sm:$0xff] %v283
          %v285 = vld [vmem:[%s63 + $0x370] sm:$0xff]
          %286 = vst [vmem:[%s64 + $0x370] sm:$0xff] %v285
          %v287 = vld [vmem:[%s63 + $0x378] sm:$0xff]
          %288 = vst [vmem:[%s64 + $0x378] sm:$0xff] %v287
          %v289 = vld [vmem:[%s63 + $0x380] sm:$0xff]
          %290 = vst [vmem:[%s64 + $0x380] sm:$0xff] %v289
          %v291 = vld [vmem:[%s63 + $0x388] sm:$0xff]
          %292 = vst [vmem:[%s64 + $0x388] sm:$0xff] %v291
          %v293 = vld [vmem:[%s63 + $0x390] sm:$0xff]
          %294 = vst [vmem:[%s64 + $0x390] sm:$0xff] %v293
          %v295 = vld [vmem:[%s63 + $0x398] sm:$0xff]
          %296 = vst [vmem:[%s64 + $0x398] sm:$0xff] %v295
          %v297 = vld [vmem:[%s63 + $0x3a0] sm:$0xff]
          %298 = vst [vmem:[%s64 + $0x3a0] sm:$0xff] %v297
          %v299 = vld [vmem:[%s63 + $0x3a8] sm:$0xff]
          %300 = vst [vmem:[%s64 + $0x3a8] sm:$0xff] %v299
          %v301 = vld [vmem:[%s63 + $0x3b0] sm:$0xff]
          %302 = vst [vmem:[%s64 + $0x3b0] sm:$0xff] %v301
          %v303 = vld [vmem:[%s63 + $0x3b8] sm:$0xff]
          %304 = vst [vmem:[%s64 + $0x3b8] sm:$0xff] %v303
          %v305 = vld [vmem:[%s63 + $0x3c0] sm:$0xff]
          %306 = vst [vmem:[%s64 + $0x3c0] sm:$0xff] %v305
          %v307 = vld [vmem:[%s63 + $0x3c8] sm:$0xff]
          %308 = vst [vmem:[%s64 + $0x3c8] sm:$0xff] %v307
          %v309 = vld [vmem:[%s63 + $0x3d0] sm:$0xff]
          %310 = vst [vmem:[%s64 + $0x3d0] sm:$0xff] %v309
          %v311 = vld [vmem:[%s63 + $0x3d8] sm:$0xff]
          %312 = vst [vmem:[%s64 + $0x3d8] sm:$0xff] %v311
          %v313 = vld [vmem:[%s63 + $0x3e0] sm:$0xff]
          %314 = vst [vmem:[%s64 + $0x3e0] sm:$0xff] %v313
          %v315 = vld [vmem:[%s63 + $0x3e8] sm:$0xff]
          %316 = vst [vmem:[%s64 + $0x3e8] sm:$0xff] %v315
          %v317 = vld [vmem:[%s63 + $0x3f0] sm:$0xff]
          %318 = vst [vmem:[%s64 + $0x3f0] sm:$0xff] %v317
          %v319 = vld [vmem:[%s63 + $0x3f8] sm:$0xff]
          %320 = vst [vmem:[%s64 + $0x3f8] sm:$0xff] %v319
        $region53: #{cnn_pamap2_forward.1} parent=47 // loop_footer
          %s62 = sadd.s32 1, %s58
        $region54: #{cnn_pamap2_forward.1} parent=47 // loop_footer_branch
          %57 = sbr.rel target = $region50
        $region55: #{cnn_pamap2_forward.1} parent=47 // loop_exit
          _
      $region48: #{cnn_pamap2_forward.1} parent=32 // pred_fallthru
        _
      %p321 = pneg %p53
      // Predicated region
      $region56: #{cnn_pamap2_forward.1} parent=32 // pred_check
        _
      $region57: #{cnn_pamap2_forward.1} parent=32 // pred_check_branch
        %323 = sbr.rel (%p53) target = $region59
      $region58: #{cnn_pamap2_forward.1} parent=32 // pred_region
        %s324 = sand.u32 1024, 7
      $region59: #{cnn_pamap2_forward.1} parent=32 // pred_fallthru
        _
    $region33: #{cnn_pamap2_forward.1} parent=1 // pred_fallthru
      _
    // Predicated region
    $region34: #{cnn_pamap2_forward.1} parent=1 // pred_check
      %p38 = pneg %p34
    $region35: #{cnn_pamap2_forward.1} parent=1 // pred_check_branch
      %40 = sbr.rel (%p38) target = $region37
    $region36: #{cnn_pamap2_forward.1} parent=1 // pred_region
      %s41 = sshllo.u32 0, 1024
      loop: start=0, step=1, limit=1
      $region38: #{cnn_pamap2_forward.1} parent=36 // loop_pre_header
        _
      $region39: #{cnn_pamap2_forward.1} parent=36 // loop_header
        %s43 = sphi 0, %s47
        %p44 = scmp.ge.s32.totalorder %s43, 1
        %s48 = sphi %s7, %s7
        %s49 = sphi [#allocation2], [#allocation2]
      $region40: #{cnn_pamap2_forward.1} parent=36 // loop_header_branch
        %46 = sbr.rel (%p44) target = $region44
      $region41: #{cnn_pamap2_forward.1} parent=36 // loop_body
        %v50 = vld [vmem:[%s48] sm:%s41]
        %51 = vst [vmem:[%s49] sm:%s41] %v50
      $region42: #{cnn_pamap2_forward.1} parent=36 // loop_footer
        %s47 = sadd.s32 1, %s43
      $region43: #{cnn_pamap2_forward.1} parent=36 // loop_footer_branch
        %42 = sbr.rel target = $region39
      $region44: #{cnn_pamap2_forward.1} parent=36 // loop_exit
        _
    $region37: #{cnn_pamap2_forward.1} parent=1 // pred_fallthru
      _
    // Predicated region
    $region60: #{cnn_pamap2_forward.1} parent=1 // pred_check
      _
    $region61: #{cnn_pamap2_forward.1} parent=1 // pred_check_branch
      %327 = sbr.rel (0) target = $region63
    $region62: #{cnn_pamap2_forward.1} parent=1 // pred_region
      %328 = vsyncadd [#allocation4], 16384
    $region63: #{cnn_pamap2_forward.1} parent=1 // pred_fallthru
      _
    %s329 = scalar_lea.sflag [#allocation4], 1
    %p331 = scmp.lt.u32.totalorder 3072, 8
    %p332 = pneg %p331
    // Predicated region
    $region64: #{cnn_pamap2_forward.1} parent=1 // pred_check
      _
    $region65: #{cnn_pamap2_forward.1} parent=1 // pred_check_branch
      %334 = sbr.rel (%p331) target = $region67
    $region66: #{cnn_pamap2_forward.1} parent=1 // pred_region
      %s349 = sand.u32 3072, 7
      %p350 = scmp.eq.s32.totalorder %s349, 0
      // Predicated region
      $region79: #{cnn_pamap2_forward.1} parent=66 // pred_check
        %p351 = pneg %p350
      $region80: #{cnn_pamap2_forward.1} parent=66 // pred_check_branch
        %353 = sbr.rel (%p351) target = $region82
      $region81: #{cnn_pamap2_forward.1} parent=66 // pred_region
        loop: start=0, step=1, limit=1
        $region83: #{cnn_pamap2_forward.1} parent=81 // loop_pre_header
          _
        $region84: #{cnn_pamap2_forward.1} parent=81 // loop_header
          %s355 = sphi 0, %s359
          %p356 = scmp.ge.s32.totalorder %s355, 1
          %s360 = sphi %s8, %s8
          %s361 = sphi [#allocation3], [#allocation3]
        $region85: #{cnn_pamap2_forward.1} parent=81 // loop_header_branch
          %358 = sbr.rel (%p356) target = $region89
        $region86: #{cnn_pamap2_forward.1} parent=81 // loop_body
          %v362 = vld [vmem:[%s360] sm:$0xff]
          %363 = vst [vmem:[%s361] sm:$0xff] %v362
          %v364 = vld [vmem:[%s360 + $0x8] sm:$0xff]
          %365 = vst [vmem:[%s361 + $0x8] sm:$0xff] %v364
          %v366 = vld [vmem:[%s360 + $0x10] sm:$0xff]
          %367 = vst [vmem:[%s361 + $0x10] sm:$0xff] %v366
          %v368 = vld [vmem:[%s360 + $0x18] sm:$0xff]
          %369 = vst [vmem:[%s361 + $0x18] sm:$0xff] %v368
          %v370 = vld [vmem:[%s360 + $0x20] sm:$0xff]
          %371 = vst [vmem:[%s361 + $0x20] sm:$0xff] %v370
          %v372 = vld [vmem:[%s360 + $0x28] sm:$0xff]
          %373 = vst [vmem:[%s361 + $0x28] sm:$0xff] %v372
          %v374 = vld [vmem:[%s360 + $0x30] sm:$0xff]
          %375 = vst [vmem:[%s361 + $0x30] sm:$0xff] %v374
          %v376 = vld [vmem:[%s360 + $0x38] sm:$0xff]
          %377 = vst [vmem:[%s361 + $0x38] sm:$0xff] %v376
          %v378 = vld [vmem:[%s360 + $0x40] sm:$0xff]
          %379 = vst [vmem:[%s361 + $0x40] sm:$0xff] %v378
          %v380 = vld [vmem:[%s360 + $0x48] sm:$0xff]
          %381 = vst [vmem:[%s361 + $0x48] sm:$0xff] %v380
          %v382 = vld [vmem:[%s360 + $0x50] sm:$0xff]
          %383 = vst [vmem:[%s361 + $0x50] sm:$0xff] %v382
          %v384 = vld [vmem:[%s360 + $0x58] sm:$0xff]
          %385 = vst [vmem:[%s361 + $0x58] sm:$0xff] %v384
          %v386 = vld [vmem:[%s360 + $0x60] sm:$0xff]
          %387 = vst [vmem:[%s361 + $0x60] sm:$0xff] %v386
          %v388 = vld [vmem:[%s360 + $0x68] sm:$0xff]
          %389 = vst [vmem:[%s361 + $0x68] sm:$0xff] %v388
          %v390 = vld [vmem:[%s360 + $0x70] sm:$0xff]
          %391 = vst [vmem:[%s361 + $0x70] sm:$0xff] %v390
          %v392 = vld [vmem:[%s360 + $0x78] sm:$0xff]
          %393 = vst [vmem:[%s361 + $0x78] sm:$0xff] %v392
          %v394 = vld [vmem:[%s360 + $0x80] sm:$0xff]
          %395 = vst [vmem:[%s361 + $0x80] sm:$0xff] %v394
          %v396 = vld [vmem:[%s360 + $0x88] sm:$0xff]
          %397 = vst [vmem:[%s361 + $0x88] sm:$0xff] %v396
          %v398 = vld [vmem:[%s360 + $0x90] sm:$0xff]
          %399 = vst [vmem:[%s361 + $0x90] sm:$0xff] %v398
          %v400 = vld [vmem:[%s360 + $0x98] sm:$0xff]
          %401 = vst [vmem:[%s361 + $0x98] sm:$0xff] %v400
          %v402 = vld [vmem:[%s360 + $0xa0] sm:$0xff]
          %403 = vst [vmem:[%s361 + $0xa0] sm:$0xff] %v402
          %v404 = vld [vmem:[%s360 + $0xa8] sm:$0xff]
          %405 = vst [vmem:[%s361 + $0xa8] sm:$0xff] %v404
          %v406 = vld [vmem:[%s360 + $0xb0] sm:$0xff]
          %407 = vst [vmem:[%s361 + $0xb0] sm:$0xff] %v406
          %v408 = vld [vmem:[%s360 + $0xb8] sm:$0xff]
          %409 = vst [vmem:[%s361 + $0xb8] sm:$0xff] %v408
          %v410 = vld [vmem:[%s360 + $0xc0] sm:$0xff]
          %411 = vst [vmem:[%s361 + $0xc0] sm:$0xff] %v410
          %v412 = vld [vmem:[%s360 + $0xc8] sm:$0xff]
          %413 = vst [vmem:[%s361 + $0xc8] sm:$0xff] %v412
          %v414 = vld [vmem:[%s360 + $0xd0] sm:$0xff]
          %415 = vst [vmem:[%s361 + $0xd0] sm:$0xff] %v414
          %v416 = vld [vmem:[%s360 + $0xd8] sm:$0xff]
          %417 = vst [vmem:[%s361 + $0xd8] sm:$0xff] %v416
          %v418 = vld [vmem:[%s360 + $0xe0] sm:$0xff]
          %419 = vst [vmem:[%s361 + $0xe0] sm:$0xff] %v418
          %v420 = vld [vmem:[%s360 + $0xe8] sm:$0xff]
          %421 = vst [vmem:[%s361 + $0xe8] sm:$0xff] %v420
          %v422 = vld [vmem:[%s360 + $0xf0] sm:$0xff]
          %423 = vst [vmem:[%s361 + $0xf0] sm:$0xff] %v422
          %v424 = vld [vmem:[%s360 + $0xf8] sm:$0xff]
          %425 = vst [vmem:[%s361 + $0xf8] sm:$0xff] %v424
          %v426 = vld [vmem:[%s360 + $0x100] sm:$0xff]
          %427 = vst [vmem:[%s361 + $0x100] sm:$0xff] %v426
          %v428 = vld [vmem:[%s360 + $0x108] sm:$0xff]
          %429 = vst [vmem:[%s361 + $0x108] sm:$0xff] %v428
          %v430 = vld [vmem:[%s360 + $0x110] sm:$0xff]
          %431 = vst [vmem:[%s361 + $0x110] sm:$0xff] %v430
          %v432 = vld [vmem:[%s360 + $0x118] sm:$0xff]
          %433 = vst [vmem:[%s361 + $0x118] sm:$0xff] %v432
          %v434 = vld [vmem:[%s360 + $0x120] sm:$0xff]
          %435 = vst [vmem:[%s361 + $0x120] sm:$0xff] %v434
          %v436 = vld [vmem:[%s360 + $0x128] sm:$0xff]
          %437 = vst [vmem:[%s361 + $0x128] sm:$0xff] %v436
          %v438 = vld [vmem:[%s360 + $0x130] sm:$0xff]
          %439 = vst [vmem:[%s361 + $0x130] sm:$0xff] %v438
          %v440 = vld [vmem:[%s360 + $0x138] sm:$0xff]
          %441 = vst [vmem:[%s361 + $0x138] sm:$0xff] %v440
          %v442 = vld [vmem:[%s360 + $0x140] sm:$0xff]
          %443 = vst [vmem:[%s361 + $0x140] sm:$0xff] %v442
          %v444 = vld [vmem:[%s360 + $0x148] sm:$0xff]
          %445 = vst [vmem:[%s361 + $0x148] sm:$0xff] %v444
          %v446 = vld [vmem:[%s360 + $0x150] sm:$0xff]
          %447 = vst [vmem:[%s361 + $0x150] sm:$0xff] %v446
          %v448 = vld [vmem:[%s360 + $0x158] sm:$0xff]
          %449 = vst [vmem:[%s361 + $0x158] sm:$0xff] %v448
          %v450 = vld [vmem:[%s360 + $0x160] sm:$0xff]
          %451 = vst [vmem:[%s361 + $0x160] sm:$0xff] %v450
          %v452 = vld [vmem:[%s360 + $0x168] sm:$0xff]
          %453 = vst [vmem:[%s361 + $0x168] sm:$0xff] %v452
          %v454 = vld [vmem:[%s360 + $0x170] sm:$0xff]
          %455 = vst [vmem:[%s361 + $0x170] sm:$0xff] %v454
          %v456 = vld [vmem:[%s360 + $0x178] sm:$0xff]
          %457 = vst [vmem:[%s361 + $0x178] sm:$0xff] %v456
          %v458 = vld [vmem:[%s360 + $0x180] sm:$0xff]
          %459 = vst [vmem:[%s361 + $0x180] sm:$0xff] %v458
          %v460 = vld [vmem:[%s360 + $0x188] sm:$0xff]
          %461 = vst [vmem:[%s361 + $0x188] sm:$0xff] %v460
          %v462 = vld [vmem:[%s360 + $0x190] sm:$0xff]
          %463 = vst [vmem:[%s361 + $0x190] sm:$0xff] %v462
          %v464 = vld [vmem:[%s360 + $0x198] sm:$0xff]
          %465 = vst [vmem:[%s361 + $0x198] sm:$0xff] %v464
          %v466 = vld [vmem:[%s360 + $0x1a0] sm:$0xff]
          %467 = vst [vmem:[%s361 + $0x1a0] sm:$0xff] %v466
          %v468 = vld [vmem:[%s360 + $0x1a8] sm:$0xff]
          %469 = vst [vmem:[%s361 + $0x1a8] sm:$0xff] %v468
          %v470 = vld [vmem:[%s360 + $0x1b0] sm:$0xff]
          %471 = vst [vmem:[%s361 + $0x1b0] sm:$0xff] %v470
          %v472 = vld [vmem:[%s360 + $0x1b8] sm:$0xff]
          %473 = vst [vmem:[%s361 + $0x1b8] sm:$0xff] %v472
          %v474 = vld [vmem:[%s360 + $0x1c0] sm:$0xff]
          %475 = vst [vmem:[%s361 + $0x1c0] sm:$0xff] %v474
          %v476 = vld [vmem:[%s360 + $0x1c8] sm:$0xff]
          %477 = vst [vmem:[%s361 + $0x1c8] sm:$0xff] %v476
          %v478 = vld [vmem:[%s360 + $0x1d0] sm:$0xff]
          %479 = vst [vmem:[%s361 + $0x1d0] sm:$0xff] %v478
          %v480 = vld [vmem:[%s360 + $0x1d8] sm:$0xff]
          %481 = vst [vmem:[%s361 + $0x1d8] sm:$0xff] %v480
          %v482 = vld [vmem:[%s360 + $0x1e0] sm:$0xff]
          %483 = vst [vmem:[%s361 + $0x1e0] sm:$0xff] %v482
          %v484 = vld [vmem:[%s360 + $0x1e8] sm:$0xff]
          %485 = vst [vmem:[%s361 + $0x1e8] sm:$0xff] %v484
          %v486 = vld [vmem:[%s360 + $0x1f0] sm:$0xff]
          %487 = vst [vmem:[%s361 + $0x1f0] sm:$0xff] %v486
          %v488 = vld [vmem:[%s360 + $0x1f8] sm:$0xff]
          %489 = vst [vmem:[%s361 + $0x1f8] sm:$0xff] %v488
          %v490 = vld [vmem:[%s360 + $0x200] sm:$0xff]
          %491 = vst [vmem:[%s361 + $0x200] sm:$0xff] %v490
          %v492 = vld [vmem:[%s360 + $0x208] sm:$0xff]
          %493 = vst [vmem:[%s361 + $0x208] sm:$0xff] %v492
          %v494 = vld [vmem:[%s360 + $0x210] sm:$0xff]
          %495 = vst [vmem:[%s361 + $0x210] sm:$0xff] %v494
          %v496 = vld [vmem:[%s360 + $0x218] sm:$0xff]
          %497 = vst [vmem:[%s361 + $0x218] sm:$0xff] %v496
          %v498 = vld [vmem:[%s360 + $0x220] sm:$0xff]
          %499 = vst [vmem:[%s361 + $0x220] sm:$0xff] %v498
          %v500 = vld [vmem:[%s360 + $0x228] sm:$0xff]
          %501 = vst [vmem:[%s361 + $0x228] sm:$0xff] %v500
          %v502 = vld [vmem:[%s360 + $0x230] sm:$0xff]
          %503 = vst [vmem:[%s361 + $0x230] sm:$0xff] %v502
          %v504 = vld [vmem:[%s360 + $0x238] sm:$0xff]
          %505 = vst [vmem:[%s361 + $0x238] sm:$0xff] %v504
          %v506 = vld [vmem:[%s360 + $0x240] sm:$0xff]
          %507 = vst [vmem:[%s361 + $0x240] sm:$0xff] %v506
          %v508 = vld [vmem:[%s360 + $0x248] sm:$0xff]
          %509 = vst [vmem:[%s361 + $0x248] sm:$0xff] %v508
          %v510 = vld [vmem:[%s360 + $0x250] sm:$0xff]
          %511 = vst [vmem:[%s361 + $0x250] sm:$0xff] %v510
          %v512 = vld [vmem:[%s360 + $0x258] sm:$0xff]
          %513 = vst [vmem:[%s361 + $0x258] sm:$0xff] %v512
          %v514 = vld [vmem:[%s360 + $0x260] sm:$0xff]
          %515 = vst [vmem:[%s361 + $0x260] sm:$0xff] %v514
          %v516 = vld [vmem:[%s360 + $0x268] sm:$0xff]
          %517 = vst [vmem:[%s361 + $0x268] sm:$0xff] %v516
          %v518 = vld [vmem:[%s360 + $0x270] sm:$0xff]
          %519 = vst [vmem:[%s361 + $0x270] sm:$0xff] %v518
          %v520 = vld [vmem:[%s360 + $0x278] sm:$0xff]
          %521 = vst [vmem:[%s361 + $0x278] sm:$0xff] %v520
          %v522 = vld [vmem:[%s360 + $0x280] sm:$0xff]
          %523 = vst [vmem:[%s361 + $0x280] sm:$0xff] %v522
          %v524 = vld [vmem:[%s360 + $0x288] sm:$0xff]
          %525 = vst [vmem:[%s361 + $0x288] sm:$0xff] %v524
          %v526 = vld [vmem:[%s360 + $0x290] sm:$0xff]
          %527 = vst [vmem:[%s361 + $0x290] sm:$0xff] %v526
          %v528 = vld [vmem:[%s360 + $0x298] sm:$0xff]
          %529 = vst [vmem:[%s361 + $0x298] sm:$0xff] %v528
          %v530 = vld [vmem:[%s360 + $0x2a0] sm:$0xff]
          %531 = vst [vmem:[%s361 + $0x2a0] sm:$0xff] %v530
          %v532 = vld [vmem:[%s360 + $0x2a8] sm:$0xff]
          %533 = vst [vmem:[%s361 + $0x2a8] sm:$0xff] %v532
          %v534 = vld [vmem:[%s360 + $0x2b0] sm:$0xff]
          %535 = vst [vmem:[%s361 + $0x2b0] sm:$0xff] %v534
          %v536 = vld [vmem:[%s360 + $0x2b8] sm:$0xff]
          %537 = vst [vmem:[%s361 + $0x2b8] sm:$0xff] %v536
          %v538 = vld [vmem:[%s360 + $0x2c0] sm:$0xff]
          %539 = vst [vmem:[%s361 + $0x2c0] sm:$0xff] %v538
          %v540 = vld [vmem:[%s360 + $0x2c8] sm:$0xff]
          %541 = vst [vmem:[%s361 + $0x2c8] sm:$0xff] %v540
          %v542 = vld [vmem:[%s360 + $0x2d0] sm:$0xff]
          %543 = vst [vmem:[%s361 + $0x2d0] sm:$0xff] %v542
          %v544 = vld [vmem:[%s360 + $0x2d8] sm:$0xff]
          %545 = vst [vmem:[%s361 + $0x2d8] sm:$0xff] %v544
          %v546 = vld [vmem:[%s360 + $0x2e0] sm:$0xff]
          %547 = vst [vmem:[%s361 + $0x2e0] sm:$0xff] %v546
          %v548 = vld [vmem:[%s360 + $0x2e8] sm:$0xff]
          %549 = vst [vmem:[%s361 + $0x2e8] sm:$0xff] %v548
          %v550 = vld [vmem:[%s360 + $0x2f0] sm:$0xff]
          %551 = vst [vmem:[%s361 + $0x2f0] sm:$0xff] %v550
          %v552 = vld [vmem:[%s360 + $0x2f8] sm:$0xff]
          %553 = vst [vmem:[%s361 + $0x2f8] sm:$0xff] %v552
          %v554 = vld [vmem:[%s360 + $0x300] sm:$0xff]
          %555 = vst [vmem:[%s361 + $0x300] sm:$0xff] %v554
          %v556 = vld [vmem:[%s360 + $0x308] sm:$0xff]
          %557 = vst [vmem:[%s361 + $0x308] sm:$0xff] %v556
          %v558 = vld [vmem:[%s360 + $0x310] sm:$0xff]
          %559 = vst [vmem:[%s361 + $0x310] sm:$0xff] %v558
          %v560 = vld [vmem:[%s360 + $0x318] sm:$0xff]
          %561 = vst [vmem:[%s361 + $0x318] sm:$0xff] %v560
          %v562 = vld [vmem:[%s360 + $0x320] sm:$0xff]
          %563 = vst [vmem:[%s361 + $0x320] sm:$0xff] %v562
          %v564 = vld [vmem:[%s360 + $0x328] sm:$0xff]
          %565 = vst [vmem:[%s361 + $0x328] sm:$0xff] %v564
          %v566 = vld [vmem:[%s360 + $0x330] sm:$0xff]
          %567 = vst [vmem:[%s361 + $0x330] sm:$0xff] %v566
          %v568 = vld [vmem:[%s360 + $0x338] sm:$0xff]
          %569 = vst [vmem:[%s361 + $0x338] sm:$0xff] %v568
          %v570 = vld [vmem:[%s360 + $0x340] sm:$0xff]
          %571 = vst [vmem:[%s361 + $0x340] sm:$0xff] %v570
          %v572 = vld [vmem:[%s360 + $0x348] sm:$0xff]
          %573 = vst [vmem:[%s361 + $0x348] sm:$0xff] %v572
          %v574 = vld [vmem:[%s360 + $0x350] sm:$0xff]
          %575 = vst [vmem:[%s361 + $0x350] sm:$0xff] %v574
          %v576 = vld [vmem:[%s360 + $0x358] sm:$0xff]
          %577 = vst [vmem:[%s361 + $0x358] sm:$0xff] %v576
          %v578 = vld [vmem:[%s360 + $0x360] sm:$0xff]
          %579 = vst [vmem:[%s361 + $0x360] sm:$0xff] %v578
          %v580 = vld [vmem:[%s360 + $0x368] sm:$0xff]
          %581 = vst [vmem:[%s361 + $0x368] sm:$0xff] %v580
          %v582 = vld [vmem:[%s360 + $0x370] sm:$0xff]
          %583 = vst [vmem:[%s361 + $0x370] sm:$0xff] %v582
          %v584 = vld [vmem:[%s360 + $0x378] sm:$0xff]
          %585 = vst [vmem:[%s361 + $0x378] sm:$0xff] %v584
          %v586 = vld [vmem:[%s360 + $0x380] sm:$0xff]
          %587 = vst [vmem:[%s361 + $0x380] sm:$0xff] %v586
          %v588 = vld [vmem:[%s360 + $0x388] sm:$0xff]
          %589 = vst [vmem:[%s361 + $0x388] sm:$0xff] %v588
          %v590 = vld [vmem:[%s360 + $0x390] sm:$0xff]
          %591 = vst [vmem:[%s361 + $0x390] sm:$0xff] %v590
          %v592 = vld [vmem:[%s360 + $0x398] sm:$0xff]
          %593 = vst [vmem:[%s361 + $0x398] sm:$0xff] %v592
          %v594 = vld [vmem:[%s360 + $0x3a0] sm:$0xff]
          %595 = vst [vmem:[%s361 + $0x3a0] sm:$0xff] %v594
          %v596 = vld [vmem:[%s360 + $0x3a8] sm:$0xff]
          %597 = vst [vmem:[%s361 + $0x3a8] sm:$0xff] %v596
          %v598 = vld [vmem:[%s360 + $0x3b0] sm:$0xff]
          %599 = vst [vmem:[%s361 + $0x3b0] sm:$0xff] %v598
          %v600 = vld [vmem:[%s360 + $0x3b8] sm:$0xff]
          %601 = vst [vmem:[%s361 + $0x3b8] sm:$0xff] %v600
          %v602 = vld [vmem:[%s360 + $0x3c0] sm:$0xff]
          %603 = vst [vmem:[%s361 + $0x3c0] sm:$0xff] %v602
          %v604 = vld [vmem:[%s360 + $0x3c8] sm:$0xff]
          %605 = vst [vmem:[%s361 + $0x3c8] sm:$0xff] %v604
          %v606 = vld [vmem:[%s360 + $0x3d0] sm:$0xff]
          %607 = vst [vmem:[%s361 + $0x3d0] sm:$0xff] %v606
          %v608 = vld [vmem:[%s360 + $0x3d8] sm:$0xff]
          %609 = vst [vmem:[%s361 + $0x3d8] sm:$0xff] %v608
          %v610 = vld [vmem:[%s360 + $0x3e0] sm:$0xff]
          %611 = vst [vmem:[%s361 + $0x3e0] sm:$0xff] %v610
          %v612 = vld [vmem:[%s360 + $0x3e8] sm:$0xff]
          %613 = vst [vmem:[%s361 + $0x3e8] sm:$0xff] %v612
          %v614 = vld [vmem:[%s360 + $0x3f0] sm:$0xff]
          %615 = vst [vmem:[%s361 + $0x3f0] sm:$0xff] %v614
          %v616 = vld [vmem:[%s360 + $0x3f8] sm:$0xff]
          %617 = vst [vmem:[%s361 + $0x3f8] sm:$0xff] %v616
          %v618 = vld [vmem:[%s360 + $0x400] sm:$0xff]
          %619 = vst [vmem:[%s361 + $0x400] sm:$0xff] %v618
          %v620 = vld [vmem:[%s360 + $0x408] sm:$0xff]
          %621 = vst [vmem:[%s361 + $0x408] sm:$0xff] %v620
          %v622 = vld [vmem:[%s360 + $0x410] sm:$0xff]
          %623 = vst [vmem:[%s361 + $0x410] sm:$0xff] %v622
          %v624 = vld [vmem:[%s360 + $0x418] sm:$0xff]
          %625 = vst [vmem:[%s361 + $0x418] sm:$0xff] %v624
          %v626 = vld [vmem:[%s360 + $0x420] sm:$0xff]
          %627 = vst [vmem:[%s361 + $0x420] sm:$0xff] %v626
          %v628 = vld [vmem:[%s360 + $0x428] sm:$0xff]
          %629 = vst [vmem:[%s361 + $0x428] sm:$0xff] %v628
          %v630 = vld [vmem:[%s360 + $0x430] sm:$0xff]
          %631 = vst [vmem:[%s361 + $0x430] sm:$0xff] %v630
          %v632 = vld [vmem:[%s360 + $0x438] sm:$0xff]
          %633 = vst [vmem:[%s361 + $0x438] sm:$0xff] %v632
          %v634 = vld [vmem:[%s360 + $0x440] sm:$0xff]
          %635 = vst [vmem:[%s361 + $0x440] sm:$0xff] %v634
          %v636 = vld [vmem:[%s360 + $0x448] sm:$0xff]
          %637 = vst [vmem:[%s361 + $0x448] sm:$0xff] %v636
          %v638 = vld [vmem:[%s360 + $0x450] sm:$0xff]
          %639 = vst [vmem:[%s361 + $0x450] sm:$0xff] %v638
          %v640 = vld [vmem:[%s360 + $0x458] sm:$0xff]
          %641 = vst [vmem:[%s361 + $0x458] sm:$0xff] %v640
          %v642 = vld [vmem:[%s360 + $0x460] sm:$0xff]
          %643 = vst [vmem:[%s361 + $0x460] sm:$0xff] %v642
          %v644 = vld [vmem:[%s360 + $0x468] sm:$0xff]
          %645 = vst [vmem:[%s361 + $0x468] sm:$0xff] %v644
          %v646 = vld [vmem:[%s360 + $0x470] sm:$0xff]
          %647 = vst [vmem:[%s361 + $0x470] sm:$0xff] %v646
          %v648 = vld [vmem:[%s360 + $0x478] sm:$0xff]
          %649 = vst [vmem:[%s361 + $0x478] sm:$0xff] %v648
          %v650 = vld [vmem:[%s360 + $0x480] sm:$0xff]
          %651 = vst [vmem:[%s361 + $0x480] sm:$0xff] %v650
          %v652 = vld [vmem:[%s360 + $0x488] sm:$0xff]
          %653 = vst [vmem:[%s361 + $0x488] sm:$0xff] %v652
          %v654 = vld [vmem:[%s360 + $0x490] sm:$0xff]
          %655 = vst [vmem:[%s361 + $0x490] sm:$0xff] %v654
          %v656 = vld [vmem:[%s360 + $0x498] sm:$0xff]
          %657 = vst [vmem:[%s361 + $0x498] sm:$0xff] %v656
          %v658 = vld [vmem:[%s360 + $0x4a0] sm:$0xff]
          %659 = vst [vmem:[%s361 + $0x4a0] sm:$0xff] %v658
          %v660 = vld [vmem:[%s360 + $0x4a8] sm:$0xff]
          %661 = vst [vmem:[%s361 + $0x4a8] sm:$0xff] %v660
          %v662 = vld [vmem:[%s360 + $0x4b0] sm:$0xff]
          %663 = vst [vmem:[%s361 + $0x4b0] sm:$0xff] %v662
          %v664 = vld [vmem:[%s360 + $0x4b8] sm:$0xff]
          %665 = vst [vmem:[%s361 + $0x4b8] sm:$0xff] %v664
          %v666 = vld [vmem:[%s360 + $0x4c0] sm:$0xff]
          %667 = vst [vmem:[%s361 + $0x4c0] sm:$0xff] %v666
          %v668 = vld [vmem:[%s360 + $0x4c8] sm:$0xff]
          %669 = vst [vmem:[%s361 + $0x4c8] sm:$0xff] %v668
          %v670 = vld [vmem:[%s360 + $0x4d0] sm:$0xff]
          %671 = vst [vmem:[%s361 + $0x4d0] sm:$0xff] %v670
          %v672 = vld [vmem:[%s360 + $0x4d8] sm:$0xff]
          %673 = vst [vmem:[%s361 + $0x4d8] sm:$0xff] %v672
          %v674 = vld [vmem:[%s360 + $0x4e0] sm:$0xff]
          %675 = vst [vmem:[%s361 + $0x4e0] sm:$0xff] %v674
          %v676 = vld [vmem:[%s360 + $0x4e8] sm:$0xff]
          %677 = vst [vmem:[%s361 + $0x4e8] sm:$0xff] %v676
          %v678 = vld [vmem:[%s360 + $0x4f0] sm:$0xff]
          %679 = vst [vmem:[%s361 + $0x4f0] sm:$0xff] %v678
          %v680 = vld [vmem:[%s360 + $0x4f8] sm:$0xff]
          %681 = vst [vmem:[%s361 + $0x4f8] sm:$0xff] %v680
          %v682 = vld [vmem:[%s360 + $0x500] sm:$0xff]
          %683 = vst [vmem:[%s361 + $0x500] sm:$0xff] %v682
          %v684 = vld [vmem:[%s360 + $0x508] sm:$0xff]
          %685 = vst [vmem:[%s361 + $0x508] sm:$0xff] %v684
          %v686 = vld [vmem:[%s360 + $0x510] sm:$0xff]
          %687 = vst [vmem:[%s361 + $0x510] sm:$0xff] %v686
          %v688 = vld [vmem:[%s360 + $0x518] sm:$0xff]
          %689 = vst [vmem:[%s361 + $0x518] sm:$0xff] %v688
          %v690 = vld [vmem:[%s360 + $0x520] sm:$0xff]
          %691 = vst [vmem:[%s361 + $0x520] sm:$0xff] %v690
          %v692 = vld [vmem:[%s360 + $0x528] sm:$0xff]
          %693 = vst [vmem:[%s361 + $0x528] sm:$0xff] %v692
          %v694 = vld [vmem:[%s360 + $0x530] sm:$0xff]
          %695 = vst [vmem:[%s361 + $0x530] sm:$0xff] %v694
          %v696 = vld [vmem:[%s360 + $0x538] sm:$0xff]
          %697 = vst [vmem:[%s361 + $0x538] sm:$0xff] %v696
          %v698 = vld [vmem:[%s360 + $0x540] sm:$0xff]
          %699 = vst [vmem:[%s361 + $0x540] sm:$0xff] %v698
          %v700 = vld [vmem:[%s360 + $0x548] sm:$0xff]
          %701 = vst [vmem:[%s361 + $0x548] sm:$0xff] %v700
          %v702 = vld [vmem:[%s360 + $0x550] sm:$0xff]
          %703 = vst [vmem:[%s361 + $0x550] sm:$0xff] %v702
          %v704 = vld [vmem:[%s360 + $0x558] sm:$0xff]
          %705 = vst [vmem:[%s361 + $0x558] sm:$0xff] %v704
          %v706 = vld [vmem:[%s360 + $0x560] sm:$0xff]
          %707 = vst [vmem:[%s361 + $0x560] sm:$0xff] %v706
          %v708 = vld [vmem:[%s360 + $0x568] sm:$0xff]
          %709 = vst [vmem:[%s361 + $0x568] sm:$0xff] %v708
          %v710 = vld [vmem:[%s360 + $0x570] sm:$0xff]
          %711 = vst [vmem:[%s361 + $0x570] sm:$0xff] %v710
          %v712 = vld [vmem:[%s360 + $0x578] sm:$0xff]
          %713 = vst [vmem:[%s361 + $0x578] sm:$0xff] %v712
          %v714 = vld [vmem:[%s360 + $0x580] sm:$0xff]
          %715 = vst [vmem:[%s361 + $0x580] sm:$0xff] %v714
          %v716 = vld [vmem:[%s360 + $0x588] sm:$0xff]
          %717 = vst [vmem:[%s361 + $0x588] sm:$0xff] %v716
          %v718 = vld [vmem:[%s360 + $0x590] sm:$0xff]
          %719 = vst [vmem:[%s361 + $0x590] sm:$0xff] %v718
          %v720 = vld [vmem:[%s360 + $0x598] sm:$0xff]
          %721 = vst [vmem:[%s361 + $0x598] sm:$0xff] %v720
          %v722 = vld [vmem:[%s360 + $0x5a0] sm:$0xff]
          %723 = vst [vmem:[%s361 + $0x5a0] sm:$0xff] %v722
          %v724 = vld [vmem:[%s360 + $0x5a8] sm:$0xff]
          %725 = vst [vmem:[%s361 + $0x5a8] sm:$0xff] %v724
          %v726 = vld [vmem:[%s360 + $0x5b0] sm:$0xff]
          %727 = vst [vmem:[%s361 + $0x5b0] sm:$0xff] %v726
          %v728 = vld [vmem:[%s360 + $0x5b8] sm:$0xff]
          %729 = vst [vmem:[%s361 + $0x5b8] sm:$0xff] %v728
          %v730 = vld [vmem:[%s360 + $0x5c0] sm:$0xff]
          %731 = vst [vmem:[%s361 + $0x5c0] sm:$0xff] %v730
          %v732 = vld [vmem:[%s360 + $0x5c8] sm:$0xff]
          %733 = vst [vmem:[%s361 + $0x5c8] sm:$0xff] %v732
          %v734 = vld [vmem:[%s360 + $0x5d0] sm:$0xff]
          %735 = vst [vmem:[%s361 + $0x5d0] sm:$0xff] %v734
          %v736 = vld [vmem:[%s360 + $0x5d8] sm:$0xff]
          %737 = vst [vmem:[%s361 + $0x5d8] sm:$0xff] %v736
          %v738 = vld [vmem:[%s360 + $0x5e0] sm:$0xff]
          %739 = vst [vmem:[%s361 + $0x5e0] sm:$0xff] %v738
          %v740 = vld [vmem:[%s360 + $0x5e8] sm:$0xff]
          %741 = vst [vmem:[%s361 + $0x5e8] sm:$0xff] %v740
          %v742 = vld [vmem:[%s360 + $0x5f0] sm:$0xff]
          %743 = vst [vmem:[%s361 + $0x5f0] sm:$0xff] %v742
          %v744 = vld [vmem:[%s360 + $0x5f8] sm:$0xff]
          %745 = vst [vmem:[%s361 + $0x5f8] sm:$0xff] %v744
          %v746 = vld [vmem:[%s360 + $0x600] sm:$0xff]
          %747 = vst [vmem:[%s361 + $0x600] sm:$0xff] %v746
          %v748 = vld [vmem:[%s360 + $0x608] sm:$0xff]
          %749 = vst [vmem:[%s361 + $0x608] sm:$0xff] %v748
          %v750 = vld [vmem:[%s360 + $0x610] sm:$0xff]
          %751 = vst [vmem:[%s361 + $0x610] sm:$0xff] %v750
          %v752 = vld [vmem:[%s360 + $0x618] sm:$0xff]
          %753 = vst [vmem:[%s361 + $0x618] sm:$0xff] %v752
          %v754 = vld [vmem:[%s360 + $0x620] sm:$0xff]
          %755 = vst [vmem:[%s361 + $0x620] sm:$0xff] %v754
          %v756 = vld [vmem:[%s360 + $0x628] sm:$0xff]
          %757 = vst [vmem:[%s361 + $0x628] sm:$0xff] %v756
          %v758 = vld [vmem:[%s360 + $0x630] sm:$0xff]
          %759 = vst [vmem:[%s361 + $0x630] sm:$0xff] %v758
          %v760 = vld [vmem:[%s360 + $0x638] sm:$0xff]
          %761 = vst [vmem:[%s361 + $0x638] sm:$0xff] %v760
          %v762 = vld [vmem:[%s360 + $0x640] sm:$0xff]
          %763 = vst [vmem:[%s361 + $0x640] sm:$0xff] %v762
          %v764 = vld [vmem:[%s360 + $0x648] sm:$0xff]
          %765 = vst [vmem:[%s361 + $0x648] sm:$0xff] %v764
          %v766 = vld [vmem:[%s360 + $0x650] sm:$0xff]
          %767 = vst [vmem:[%s361 + $0x650] sm:$0xff] %v766
          %v768 = vld [vmem:[%s360 + $0x658] sm:$0xff]
          %769 = vst [vmem:[%s361 + $0x658] sm:$0xff] %v768
          %v770 = vld [vmem:[%s360 + $0x660] sm:$0xff]
          %771 = vst [vmem:[%s361 + $0x660] sm:$0xff] %v770
          %v772 = vld [vmem:[%s360 + $0x668] sm:$0xff]
          %773 = vst [vmem:[%s361 + $0x668] sm:$0xff] %v772
          %v774 = vld [vmem:[%s360 + $0x670] sm:$0xff]
          %775 = vst [vmem:[%s361 + $0x670] sm:$0xff] %v774
          %v776 = vld [vmem:[%s360 + $0x678] sm:$0xff]
          %777 = vst [vmem:[%s361 + $0x678] sm:$0xff] %v776
          %v778 = vld [vmem:[%s360 + $0x680] sm:$0xff]
          %779 = vst [vmem:[%s361 + $0x680] sm:$0xff] %v778
          %v780 = vld [vmem:[%s360 + $0x688] sm:$0xff]
          %781 = vst [vmem:[%s361 + $0x688] sm:$0xff] %v780
          %v782 = vld [vmem:[%s360 + $0x690] sm:$0xff]
          %783 = vst [vmem:[%s361 + $0x690] sm:$0xff] %v782
          %v784 = vld [vmem:[%s360 + $0x698] sm:$0xff]
          %785 = vst [vmem:[%s361 + $0x698] sm:$0xff] %v784
          %v786 = vld [vmem:[%s360 + $0x6a0] sm:$0xff]
          %787 = vst [vmem:[%s361 + $0x6a0] sm:$0xff] %v786
          %v788 = vld [vmem:[%s360 + $0x6a8] sm:$0xff]
          %789 = vst [vmem:[%s361 + $0x6a8] sm:$0xff] %v788
          %v790 = vld [vmem:[%s360 + $0x6b0] sm:$0xff]
          %791 = vst [vmem:[%s361 + $0x6b0] sm:$0xff] %v790
          %v792 = vld [vmem:[%s360 + $0x6b8] sm:$0xff]
          %793 = vst [vmem:[%s361 + $0x6b8] sm:$0xff] %v792
          %v794 = vld [vmem:[%s360 + $0x6c0] sm:$0xff]
          %795 = vst [vmem:[%s361 + $0x6c0] sm:$0xff] %v794
          %v796 = vld [vmem:[%s360 + $0x6c8] sm:$0xff]
          %797 = vst [vmem:[%s361 + $0x6c8] sm:$0xff] %v796
          %v798 = vld [vmem:[%s360 + $0x6d0] sm:$0xff]
          %799 = vst [vmem:[%s361 + $0x6d0] sm:$0xff] %v798
          %v800 = vld [vmem:[%s360 + $0x6d8] sm:$0xff]
          %801 = vst [vmem:[%s361 + $0x6d8] sm:$0xff] %v800
          %v802 = vld [vmem:[%s360 + $0x6e0] sm:$0xff]
          %803 = vst [vmem:[%s361 + $0x6e0] sm:$0xff] %v802
          %v804 = vld [vmem:[%s360 + $0x6e8] sm:$0xff]
          %805 = vst [vmem:[%s361 + $0x6e8] sm:$0xff] %v804
          %v806 = vld [vmem:[%s360 + $0x6f0] sm:$0xff]
          %807 = vst [vmem:[%s361 + $0x6f0] sm:$0xff] %v806
          %v808 = vld [vmem:[%s360 + $0x6f8] sm:$0xff]
          %809 = vst [vmem:[%s361 + $0x6f8] sm:$0xff] %v808
          %v810 = vld [vmem:[%s360 + $0x700] sm:$0xff]
          %811 = vst [vmem:[%s361 + $0x700] sm:$0xff] %v810
          %v812 = vld [vmem:[%s360 + $0x708] sm:$0xff]
          %813 = vst [vmem:[%s361 + $0x708] sm:$0xff] %v812
          %v814 = vld [vmem:[%s360 + $0x710] sm:$0xff]
          %815 = vst [vmem:[%s361 + $0x710] sm:$0xff] %v814
          %v816 = vld [vmem:[%s360 + $0x718] sm:$0xff]
          %817 = vst [vmem:[%s361 + $0x718] sm:$0xff] %v816
          %v818 = vld [vmem:[%s360 + $0x720] sm:$0xff]
          %819 = vst [vmem:[%s361 + $0x720] sm:$0xff] %v818
          %v820 = vld [vmem:[%s360 + $0x728] sm:$0xff]
          %821 = vst [vmem:[%s361 + $0x728] sm:$0xff] %v820
          %v822 = vld [vmem:[%s360 + $0x730] sm:$0xff]
          %823 = vst [vmem:[%s361 + $0x730] sm:$0xff] %v822
          %v824 = vld [vmem:[%s360 + $0x738] sm:$0xff]
          %825 = vst [vmem:[%s361 + $0x738] sm:$0xff] %v824
          %v826 = vld [vmem:[%s360 + $0x740] sm:$0xff]
          %827 = vst [vmem:[%s361 + $0x740] sm:$0xff] %v826
          %v828 = vld [vmem:[%s360 + $0x748] sm:$0xff]
          %829 = vst [vmem:[%s361 + $0x748] sm:$0xff] %v828
          %v830 = vld [vmem:[%s360 + $0x750] sm:$0xff]
          %831 = vst [vmem:[%s361 + $0x750] sm:$0xff] %v830
          %v832 = vld [vmem:[%s360 + $0x758] sm:$0xff]
          %833 = vst [vmem:[%s361 + $0x758] sm:$0xff] %v832
          %v834 = vld [vmem:[%s360 + $0x760] sm:$0xff]
          %835 = vst [vmem:[%s361 + $0x760] sm:$0xff] %v834
          %v836 = vld [vmem:[%s360 + $0x768] sm:$0xff]
          %837 = vst [vmem:[%s361 + $0x768] sm:$0xff] %v836
          %v838 = vld [vmem:[%s360 + $0x770] sm:$0xff]
          %839 = vst [vmem:[%s361 + $0x770] sm:$0xff] %v838
          %v840 = vld [vmem:[%s360 + $0x778] sm:$0xff]
          %841 = vst [vmem:[%s361 + $0x778] sm:$0xff] %v840
          %v842 = vld [vmem:[%s360 + $0x780] sm:$0xff]
          %843 = vst [vmem:[%s361 + $0x780] sm:$0xff] %v842
          %v844 = vld [vmem:[%s360 + $0x788] sm:$0xff]
          %845 = vst [vmem:[%s361 + $0x788] sm:$0xff] %v844
          %v846 = vld [vmem:[%s360 + $0x790] sm:$0xff]
          %847 = vst [vmem:[%s361 + $0x790] sm:$0xff] %v846
          %v848 = vld [vmem:[%s360 + $0x798] sm:$0xff]
          %849 = vst [vmem:[%s361 + $0x798] sm:$0xff] %v848
          %v850 = vld [vmem:[%s360 + $0x7a0] sm:$0xff]
          %851 = vst [vmem:[%s361 + $0x7a0] sm:$0xff] %v850
          %v852 = vld [vmem:[%s360 + $0x7a8] sm:$0xff]
          %853 = vst [vmem:[%s361 + $0x7a8] sm:$0xff] %v852
          %v854 = vld [vmem:[%s360 + $0x7b0] sm:$0xff]
          %855 = vst [vmem:[%s361 + $0x7b0] sm:$0xff] %v854
          %v856 = vld [vmem:[%s360 + $0x7b8] sm:$0xff]
          %857 = vst [vmem:[%s361 + $0x7b8] sm:$0xff] %v856
          %v858 = vld [vmem:[%s360 + $0x7c0] sm:$0xff]
          %859 = vst [vmem:[%s361 + $0x7c0] sm:$0xff] %v858
          %v860 = vld [vmem:[%s360 + $0x7c8] sm:$0xff]
          %861 = vst [vmem:[%s361 + $0x7c8] sm:$0xff] %v860
          %v862 = vld [vmem:[%s360 + $0x7d0] sm:$0xff]
          %863 = vst [vmem:[%s361 + $0x7d0] sm:$0xff] %v862
          %v864 = vld [vmem:[%s360 + $0x7d8] sm:$0xff]
          %865 = vst [vmem:[%s361 + $0x7d8] sm:$0xff] %v864
          %v866 = vld [vmem:[%s360 + $0x7e0] sm:$0xff]
          %867 = vst [vmem:[%s361 + $0x7e0] sm:$0xff] %v866
          %v868 = vld [vmem:[%s360 + $0x7e8] sm:$0xff]
          %869 = vst [vmem:[%s361 + $0x7e8] sm:$0xff] %v868
          %v870 = vld [vmem:[%s360 + $0x7f0] sm:$0xff]
          %871 = vst [vmem:[%s361 + $0x7f0] sm:$0xff] %v870
          %v872 = vld [vmem:[%s360 + $0x7f8] sm:$0xff]
          %873 = vst [vmem:[%s361 + $0x7f8] sm:$0xff] %v872
          %v874 = vld [vmem:[%s360 + $0x800] sm:$0xff]
          %875 = vst [vmem:[%s361 + $0x800] sm:$0xff] %v874
          %v876 = vld [vmem:[%s360 + $0x808] sm:$0xff]
          %877 = vst [vmem:[%s361 + $0x808] sm:$0xff] %v876
          %v878 = vld [vmem:[%s360 + $0x810] sm:$0xff]
          %879 = vst [vmem:[%s361 + $0x810] sm:$0xff] %v878
          %v880 = vld [vmem:[%s360 + $0x818] sm:$0xff]
          %881 = vst [vmem:[%s361 + $0x818] sm:$0xff] %v880
          %v882 = vld [vmem:[%s360 + $0x820] sm:$0xff]
          %883 = vst [vmem:[%s361 + $0x820] sm:$0xff] %v882
          %v884 = vld [vmem:[%s360 + $0x828] sm:$0xff]
          %885 = vst [vmem:[%s361 + $0x828] sm:$0xff] %v884
          %v886 = vld [vmem:[%s360 + $0x830] sm:$0xff]
          %887 = vst [vmem:[%s361 + $0x830] sm:$0xff] %v886
          %v888 = vld [vmem:[%s360 + $0x838] sm:$0xff]
          %889 = vst [vmem:[%s361 + $0x838] sm:$0xff] %v888
          %v890 = vld [vmem:[%s360 + $0x840] sm:$0xff]
          %891 = vst [vmem:[%s361 + $0x840] sm:$0xff] %v890
          %v892 = vld [vmem:[%s360 + $0x848] sm:$0xff]
          %893 = vst [vmem:[%s361 + $0x848] sm:$0xff] %v892
          %v894 = vld [vmem:[%s360 + $0x850] sm:$0xff]
          %895 = vst [vmem:[%s361 + $0x850] sm:$0xff] %v894
          %v896 = vld [vmem:[%s360 + $0x858] sm:$0xff]
          %897 = vst [vmem:[%s361 + $0x858] sm:$0xff] %v896
          %v898 = vld [vmem:[%s360 + $0x860] sm:$0xff]
          %899 = vst [vmem:[%s361 + $0x860] sm:$0xff] %v898
          %v900 = vld [vmem:[%s360 + $0x868] sm:$0xff]
          %901 = vst [vmem:[%s361 + $0x868] sm:$0xff] %v900
          %v902 = vld [vmem:[%s360 + $0x870] sm:$0xff]
          %903 = vst [vmem:[%s361 + $0x870] sm:$0xff] %v902
          %v904 = vld [vmem:[%s360 + $0x878] sm:$0xff]
          %905 = vst [vmem:[%s361 + $0x878] sm:$0xff] %v904
          %v906 = vld [vmem:[%s360 + $0x880] sm:$0xff]
          %907 = vst [vmem:[%s361 + $0x880] sm:$0xff] %v906
          %v908 = vld [vmem:[%s360 + $0x888] sm:$0xff]
          %909 = vst [vmem:[%s361 + $0x888] sm:$0xff] %v908
          %v910 = vld [vmem:[%s360 + $0x890] sm:$0xff]
          %911 = vst [vmem:[%s361 + $0x890] sm:$0xff] %v910
          %v912 = vld [vmem:[%s360 + $0x898] sm:$0xff]
          %913 = vst [vmem:[%s361 + $0x898] sm:$0xff] %v912
          %v914 = vld [vmem:[%s360 + $0x8a0] sm:$0xff]
          %915 = vst [vmem:[%s361 + $0x8a0] sm:$0xff] %v914
          %v916 = vld [vmem:[%s360 + $0x8a8] sm:$0xff]
          %917 = vst [vmem:[%s361 + $0x8a8] sm:$0xff] %v916
          %v918 = vld [vmem:[%s360 + $0x8b0] sm:$0xff]
          %919 = vst [vmem:[%s361 + $0x8b0] sm:$0xff] %v918
          %v920 = vld [vmem:[%s360 + $0x8b8] sm:$0xff]
          %921 = vst [vmem:[%s361 + $0x8b8] sm:$0xff] %v920
          %v922 = vld [vmem:[%s360 + $0x8c0] sm:$0xff]
          %923 = vst [vmem:[%s361 + $0x8c0] sm:$0xff] %v922
          %v924 = vld [vmem:[%s360 + $0x8c8] sm:$0xff]
          %925 = vst [vmem:[%s361 + $0x8c8] sm:$0xff] %v924
          %v926 = vld [vmem:[%s360 + $0x8d0] sm:$0xff]
          %927 = vst [vmem:[%s361 + $0x8d0] sm:$0xff] %v926
          %v928 = vld [vmem:[%s360 + $0x8d8] sm:$0xff]
          %929 = vst [vmem:[%s361 + $0x8d8] sm:$0xff] %v928
          %v930 = vld [vmem:[%s360 + $0x8e0] sm:$0xff]
          %931 = vst [vmem:[%s361 + $0x8e0] sm:$0xff] %v930
          %v932 = vld [vmem:[%s360 + $0x8e8] sm:$0xff]
          %933 = vst [vmem:[%s361 + $0x8e8] sm:$0xff] %v932
          %v934 = vld [vmem:[%s360 + $0x8f0] sm:$0xff]
          %935 = vst [vmem:[%s361 + $0x8f0] sm:$0xff] %v934
          %v936 = vld [vmem:[%s360 + $0x8f8] sm:$0xff]
          %937 = vst [vmem:[%s361 + $0x8f8] sm:$0xff] %v936
          %v938 = vld [vmem:[%s360 + $0x900] sm:$0xff]
          %939 = vst [vmem:[%s361 + $0x900] sm:$0xff] %v938
          %v940 = vld [vmem:[%s360 + $0x908] sm:$0xff]
          %941 = vst [vmem:[%s361 + $0x908] sm:$0xff] %v940
          %v942 = vld [vmem:[%s360 + $0x910] sm:$0xff]
          %943 = vst [vmem:[%s361 + $0x910] sm:$0xff] %v942
          %v944 = vld [vmem:[%s360 + $0x918] sm:$0xff]
          %945 = vst [vmem:[%s361 + $0x918] sm:$0xff] %v944
          %v946 = vld [vmem:[%s360 + $0x920] sm:$0xff]
          %947 = vst [vmem:[%s361 + $0x920] sm:$0xff] %v946
          %v948 = vld [vmem:[%s360 + $0x928] sm:$0xff]
          %949 = vst [vmem:[%s361 + $0x928] sm:$0xff] %v948
          %v950 = vld [vmem:[%s360 + $0x930] sm:$0xff]
          %951 = vst [vmem:[%s361 + $0x930] sm:$0xff] %v950
          %v952 = vld [vmem:[%s360 + $0x938] sm:$0xff]
          %953 = vst [vmem:[%s361 + $0x938] sm:$0xff] %v952
          %v954 = vld [vmem:[%s360 + $0x940] sm:$0xff]
          %955 = vst [vmem:[%s361 + $0x940] sm:$0xff] %v954
          %v956 = vld [vmem:[%s360 + $0x948] sm:$0xff]
          %957 = vst [vmem:[%s361 + $0x948] sm:$0xff] %v956
          %v958 = vld [vmem:[%s360 + $0x950] sm:$0xff]
          %959 = vst [vmem:[%s361 + $0x950] sm:$0xff] %v958
          %v960 = vld [vmem:[%s360 + $0x958] sm:$0xff]
          %961 = vst [vmem:[%s361 + $0x958] sm:$0xff] %v960
          %v962 = vld [vmem:[%s360 + $0x960] sm:$0xff]
          %963 = vst [vmem:[%s361 + $0x960] sm:$0xff] %v962
          %v964 = vld [vmem:[%s360 + $0x968] sm:$0xff]
          %965 = vst [vmem:[%s361 + $0x968] sm:$0xff] %v964
          %v966 = vld [vmem:[%s360 + $0x970] sm:$0xff]
          %967 = vst [vmem:[%s361 + $0x970] sm:$0xff] %v966
          %v968 = vld [vmem:[%s360 + $0x978] sm:$0xff]
          %969 = vst [vmem:[%s361 + $0x978] sm:$0xff] %v968
          %v970 = vld [vmem:[%s360 + $0x980] sm:$0xff]
          %971 = vst [vmem:[%s361 + $0x980] sm:$0xff] %v970
          %v972 = vld [vmem:[%s360 + $0x988] sm:$0xff]
          %973 = vst [vmem:[%s361 + $0x988] sm:$0xff] %v972
          %v974 = vld [vmem:[%s360 + $0x990] sm:$0xff]
          %975 = vst [vmem:[%s361 + $0x990] sm:$0xff] %v974
          %v976 = vld [vmem:[%s360 + $0x998] sm:$0xff]
          %977 = vst [vmem:[%s361 + $0x998] sm:$0xff] %v976
          %v978 = vld [vmem:[%s360 + $0x9a0] sm:$0xff]
          %979 = vst [vmem:[%s361 + $0x9a0] sm:$0xff] %v978
          %v980 = vld [vmem:[%s360 + $0x9a8] sm:$0xff]
          %981 = vst [vmem:[%s361 + $0x9a8] sm:$0xff] %v980
          %v982 = vld [vmem:[%s360 + $0x9b0] sm:$0xff]
          %983 = vst [vmem:[%s361 + $0x9b0] sm:$0xff] %v982
          %v984 = vld [vmem:[%s360 + $0x9b8] sm:$0xff]
          %985 = vst [vmem:[%s361 + $0x9b8] sm:$0xff] %v984
          %v986 = vld [vmem:[%s360 + $0x9c0] sm:$0xff]
          %987 = vst [vmem:[%s361 + $0x9c0] sm:$0xff] %v986
          %v988 = vld [vmem:[%s360 + $0x9c8] sm:$0xff]
          %989 = vst [vmem:[%s361 + $0x9c8] sm:$0xff] %v988
          %v990 = vld [vmem:[%s360 + $0x9d0] sm:$0xff]
          %991 = vst [vmem:[%s361 + $0x9d0] sm:$0xff] %v990
          %v992 = vld [vmem:[%s360 + $0x9d8] sm:$0xff]
          %993 = vst [vmem:[%s361 + $0x9d8] sm:$0xff] %v992
          %v994 = vld [vmem:[%s360 + $0x9e0] sm:$0xff]
          %995 = vst [vmem:[%s361 + $0x9e0] sm:$0xff] %v994
          %v996 = vld [vmem:[%s360 + $0x9e8] sm:$0xff]
          %997 = vst [vmem:[%s361 + $0x9e8] sm:$0xff] %v996
          %v998 = vld [vmem:[%s360 + $0x9f0] sm:$0xff]
          %999 = vst [vmem:[%s361 + $0x9f0] sm:$0xff] %v998
          %v1000 = vld [vmem:[%s360 + $0x9f8] sm:$0xff]
          %1001 = vst [vmem:[%s361 + $0x9f8] sm:$0xff] %v1000
          %v1002 = vld [vmem:[%s360 + $0xa00] sm:$0xff]
          %1003 = vst [vmem:[%s361 + $0xa00] sm:$0xff] %v1002
          %v1004 = vld [vmem:[%s360 + $0xa08] sm:$0xff]
          %1005 = vst [vmem:[%s361 + $0xa08] sm:$0xff] %v1004
          %v1006 = vld [vmem:[%s360 + $0xa10] sm:$0xff]
          %1007 = vst [vmem:[%s361 + $0xa10] sm:$0xff] %v1006
          %v1008 = vld [vmem:[%s360 + $0xa18] sm:$0xff]
          %1009 = vst [vmem:[%s361 + $0xa18] sm:$0xff] %v1008
          %v1010 = vld [vmem:[%s360 + $0xa20] sm:$0xff]
          %1011 = vst [vmem:[%s361 + $0xa20] sm:$0xff] %v1010
          %v1012 = vld [vmem:[%s360 + $0xa28] sm:$0xff]
          %1013 = vst [vmem:[%s361 + $0xa28] sm:$0xff] %v1012
          %v1014 = vld [vmem:[%s360 + $0xa30] sm:$0xff]
          %1015 = vst [vmem:[%s361 + $0xa30] sm:$0xff] %v1014
          %v1016 = vld [vmem:[%s360 + $0xa38] sm:$0xff]
          %1017 = vst [vmem:[%s361 + $0xa38] sm:$0xff] %v1016
          %v1018 = vld [vmem:[%s360 + $0xa40] sm:$0xff]
          %1019 = vst [vmem:[%s361 + $0xa40] sm:$0xff] %v1018
          %v1020 = vld [vmem:[%s360 + $0xa48] sm:$0xff]
          %1021 = vst [vmem:[%s361 + $0xa48] sm:$0xff] %v1020
          %v1022 = vld [vmem:[%s360 + $0xa50] sm:$0xff]
          %1023 = vst [vmem:[%s361 + $0xa50] sm:$0xff] %v1022
          %v1024 = vld [vmem:[%s360 + $0xa58] sm:$0xff]
          %1025 = vst [vmem:[%s361 + $0xa58] sm:$0xff] %v1024
          %v1026 = vld [vmem:[%s360 + $0xa60] sm:$0xff]
          %1027 = vst [vmem:[%s361 + $0xa60] sm:$0xff] %v1026
          %v1028 = vld [vmem:[%s360 + $0xa68] sm:$0xff]
          %1029 = vst [vmem:[%s361 + $0xa68] sm:$0xff] %v1028
          %v1030 = vld [vmem:[%s360 + $0xa70] sm:$0xff]
          %1031 = vst [vmem:[%s361 + $0xa70] sm:$0xff] %v1030
          %v1032 = vld [vmem:[%s360 + $0xa78] sm:$0xff]
          %1033 = vst [vmem:[%s361 + $0xa78] sm:$0xff] %v1032
          %v1034 = vld [vmem:[%s360 + $0xa80] sm:$0xff]
          %1035 = vst [vmem:[%s361 + $0xa80] sm:$0xff] %v1034
          %v1036 = vld [vmem:[%s360 + $0xa88] sm:$0xff]
          %1037 = vst [vmem:[%s361 + $0xa88] sm:$0xff] %v1036
          %v1038 = vld [vmem:[%s360 + $0xa90] sm:$0xff]
          %1039 = vst [vmem:[%s361 + $0xa90] sm:$0xff] %v1038
          %v1040 = vld [vmem:[%s360 + $0xa98] sm:$0xff]
          %1041 = vst [vmem:[%s361 + $0xa98] sm:$0xff] %v1040
          %v1042 = vld [vmem:[%s360 + $0xaa0] sm:$0xff]
          %1043 = vst [vmem:[%s361 + $0xaa0] sm:$0xff] %v1042
          %v1044 = vld [vmem:[%s360 + $0xaa8] sm:$0xff]
          %1045 = vst [vmem:[%s361 + $0xaa8] sm:$0xff] %v1044
          %v1046 = vld [vmem:[%s360 + $0xab0] sm:$0xff]
          %1047 = vst [vmem:[%s361 + $0xab0] sm:$0xff] %v1046
          %v1048 = vld [vmem:[%s360 + $0xab8] sm:$0xff]
          %1049 = vst [vmem:[%s361 + $0xab8] sm:$0xff] %v1048
          %v1050 = vld [vmem:[%s360 + $0xac0] sm:$0xff]
          %1051 = vst [vmem:[%s361 + $0xac0] sm:$0xff] %v1050
          %v1052 = vld [vmem:[%s360 + $0xac8] sm:$0xff]
          %1053 = vst [vmem:[%s361 + $0xac8] sm:$0xff] %v1052
          %v1054 = vld [vmem:[%s360 + $0xad0] sm:$0xff]
          %1055 = vst [vmem:[%s361 + $0xad0] sm:$0xff] %v1054
          %v1056 = vld [vmem:[%s360 + $0xad8] sm:$0xff]
          %1057 = vst [vmem:[%s361 + $0xad8] sm:$0xff] %v1056
          %v1058 = vld [vmem:[%s360 + $0xae0] sm:$0xff]
          %1059 = vst [vmem:[%s361 + $0xae0] sm:$0xff] %v1058
          %v1060 = vld [vmem:[%s360 + $0xae8] sm:$0xff]
          %1061 = vst [vmem:[%s361 + $0xae8] sm:$0xff] %v1060
          %v1062 = vld [vmem:[%s360 + $0xaf0] sm:$0xff]
          %1063 = vst [vmem:[%s361 + $0xaf0] sm:$0xff] %v1062
          %v1064 = vld [vmem:[%s360 + $0xaf8] sm:$0xff]
          %1065 = vst [vmem:[%s361 + $0xaf8] sm:$0xff] %v1064
          %v1066 = vld [vmem:[%s360 + $0xb00] sm:$0xff]
          %1067 = vst [vmem:[%s361 + $0xb00] sm:$0xff] %v1066
          %v1068 = vld [vmem:[%s360 + $0xb08] sm:$0xff]
          %1069 = vst [vmem:[%s361 + $0xb08] sm:$0xff] %v1068
          %v1070 = vld [vmem:[%s360 + $0xb10] sm:$0xff]
          %1071 = vst [vmem:[%s361 + $0xb10] sm:$0xff] %v1070
          %v1072 = vld [vmem:[%s360 + $0xb18] sm:$0xff]
          %1073 = vst [vmem:[%s361 + $0xb18] sm:$0xff] %v1072
          %v1074 = vld [vmem:[%s360 + $0xb20] sm:$0xff]
          %1075 = vst [vmem:[%s361 + $0xb20] sm:$0xff] %v1074
          %v1076 = vld [vmem:[%s360 + $0xb28] sm:$0xff]
          %1077 = vst [vmem:[%s361 + $0xb28] sm:$0xff] %v1076
          %v1078 = vld [vmem:[%s360 + $0xb30] sm:$0xff]
          %1079 = vst [vmem:[%s361 + $0xb30] sm:$0xff] %v1078
          %v1080 = vld [vmem:[%s360 + $0xb38] sm:$0xff]
          %1081 = vst [vmem:[%s361 + $0xb38] sm:$0xff] %v1080
          %v1082 = vld [vmem:[%s360 + $0xb40] sm:$0xff]
          %1083 = vst [vmem:[%s361 + $0xb40] sm:$0xff] %v1082
          %v1084 = vld [vmem:[%s360 + $0xb48] sm:$0xff]
          %1085 = vst [vmem:[%s361 + $0xb48] sm:$0xff] %v1084
          %v1086 = vld [vmem:[%s360 + $0xb50] sm:$0xff]
          %1087 = vst [vmem:[%s361 + $0xb50] sm:$0xff] %v1086
          %v1088 = vld [vmem:[%s360 + $0xb58] sm:$0xff]
          %1089 = vst [vmem:[%s361 + $0xb58] sm:$0xff] %v1088
          %v1090 = vld [vmem:[%s360 + $0xb60] sm:$0xff]
          %1091 = vst [vmem:[%s361 + $0xb60] sm:$0xff] %v1090
          %v1092 = vld [vmem:[%s360 + $0xb68] sm:$0xff]
          %1093 = vst [vmem:[%s361 + $0xb68] sm:$0xff] %v1092
          %v1094 = vld [vmem:[%s360 + $0xb70] sm:$0xff]
          %1095 = vst [vmem:[%s361 + $0xb70] sm:$0xff] %v1094
          %v1096 = vld [vmem:[%s360 + $0xb78] sm:$0xff]
          %1097 = vst [vmem:[%s361 + $0xb78] sm:$0xff] %v1096
          %v1098 = vld [vmem:[%s360 + $0xb80] sm:$0xff]
          %1099 = vst [vmem:[%s361 + $0xb80] sm:$0xff] %v1098
          %v1100 = vld [vmem:[%s360 + $0xb88] sm:$0xff]
          %1101 = vst [vmem:[%s361 + $0xb88] sm:$0xff] %v1100
          %v1102 = vld [vmem:[%s360 + $0xb90] sm:$0xff]
          %1103 = vst [vmem:[%s361 + $0xb90] sm:$0xff] %v1102
          %v1104 = vld [vmem:[%s360 + $0xb98] sm:$0xff]
          %1105 = vst [vmem:[%s361 + $0xb98] sm:$0xff] %v1104
          %v1106 = vld [vmem:[%s360 + $0xba0] sm:$0xff]
          %1107 = vst [vmem:[%s361 + $0xba0] sm:$0xff] %v1106
          %v1108 = vld [vmem:[%s360 + $0xba8] sm:$0xff]
          %1109 = vst [vmem:[%s361 + $0xba8] sm:$0xff] %v1108
          %v1110 = vld [vmem:[%s360 + $0xbb0] sm:$0xff]
          %1111 = vst [vmem:[%s361 + $0xbb0] sm:$0xff] %v1110
          %v1112 = vld [vmem:[%s360 + $0xbb8] sm:$0xff]
          %1113 = vst [vmem:[%s361 + $0xbb8] sm:$0xff] %v1112
          %v1114 = vld [vmem:[%s360 + $0xbc0] sm:$0xff]
          %1115 = vst [vmem:[%s361 + $0xbc0] sm:$0xff] %v1114
          %v1116 = vld [vmem:[%s360 + $0xbc8] sm:$0xff]
          %1117 = vst [vmem:[%s361 + $0xbc8] sm:$0xff] %v1116
          %v1118 = vld [vmem:[%s360 + $0xbd0] sm:$0xff]
          %1119 = vst [vmem:[%s361 + $0xbd0] sm:$0xff] %v1118
          %v1120 = vld [vmem:[%s360 + $0xbd8] sm:$0xff]
          %1121 = vst [vmem:[%s361 + $0xbd8] sm:$0xff] %v1120
          %v1122 = vld [vmem:[%s360 + $0xbe0] sm:$0xff]
          %1123 = vst [vmem:[%s361 + $0xbe0] sm:$0xff] %v1122
          %v1124 = vld [vmem:[%s360 + $0xbe8] sm:$0xff]
          %1125 = vst [vmem:[%s361 + $0xbe8] sm:$0xff] %v1124
          %v1126 = vld [vmem:[%s360 + $0xbf0] sm:$0xff]
          %1127 = vst [vmem:[%s361 + $0xbf0] sm:$0xff] %v1126
          %v1128 = vld [vmem:[%s360 + $0xbf8] sm:$0xff]
          %1129 = vst [vmem:[%s361 + $0xbf8] sm:$0xff] %v1128
        $region87: #{cnn_pamap2_forward.1} parent=81 // loop_footer
          %s359 = sadd.s32 1, %s355
        $region88: #{cnn_pamap2_forward.1} parent=81 // loop_footer_branch
          %354 = sbr.rel target = $region84
        $region89: #{cnn_pamap2_forward.1} parent=81 // loop_exit
          _
      $region82: #{cnn_pamap2_forward.1} parent=66 // pred_fallthru
        _
      %p1130 = pneg %p350
      // Predicated region
      $region90: #{cnn_pamap2_forward.1} parent=66 // pred_check
        _
      $region91: #{cnn_pamap2_forward.1} parent=66 // pred_check_branch
        %1132 = sbr.rel (%p350) target = $region93
      $region92: #{cnn_pamap2_forward.1} parent=66 // pred_region
        %s1133 = sand.u32 3072, 7
      $region93: #{cnn_pamap2_forward.1} parent=66 // pred_fallthru
        _
    $region67: #{cnn_pamap2_forward.1} parent=1 // pred_fallthru
      _
    // Predicated region
    $region68: #{cnn_pamap2_forward.1} parent=1 // pred_check
      %p335 = pneg %p331
    $region69: #{cnn_pamap2_forward.1} parent=1 // pred_check_branch
      %337 = sbr.rel (%p335) target = $region71
    $region70: #{cnn_pamap2_forward.1} parent=1 // pred_region
      %s338 = sshllo.u32 0, 3072
      loop: start=0, step=1, limit=1
      $region72: #{cnn_pamap2_forward.1} parent=70 // loop_pre_header
        _
      $region73: #{cnn_pamap2_forward.1} parent=70 // loop_header
        %s340 = sphi 0, %s344
        %p341 = scmp.ge.s32.totalorder %s340, 1
        %s345 = sphi %s8, %s8
        %s346 = sphi [#allocation3], [#allocation3]
      $region74: #{cnn_pamap2_forward.1} parent=70 // loop_header_branch
        %343 = sbr.rel (%p341) target = $region78
      $region75: #{cnn_pamap2_forward.1} parent=70 // loop_body
        %v347 = vld [vmem:[%s345] sm:%s338]
        %348 = vst [vmem:[%s346] sm:%s338] %v347
      $region76: #{cnn_pamap2_forward.1} parent=70 // loop_footer
        %s344 = sadd.s32 1, %s340
      $region77: #{cnn_pamap2_forward.1} parent=70 // loop_footer_branch
        %339 = sbr.rel target = $region73
      $region78: #{cnn_pamap2_forward.1} parent=70 // loop_exit
        _
    $region71: #{cnn_pamap2_forward.1} parent=1 // pred_fallthru
      _
    // Predicated region
    $region94: #{cnn_pamap2_forward.1} parent=1 // pred_check
      _
    $region95: #{cnn_pamap2_forward.1} parent=1 // pred_check_branch
      %1136 = sbr.rel (0) target = $region97
    $region96: #{cnn_pamap2_forward.1} parent=1 // pred_region
      %1137 = vsyncadd %s329, 49152
    $region97: #{cnn_pamap2_forward.1} parent=1 // pred_fallthru
      _
    %v1138 = vld [vmem:[%s6] sm:$0x1]
    %v1139 = vld [vmem:[%s6 + $0x1] sm:$0x1]
    %v1140 = vld [vmem:[%s6 + $0x2] sm:$0x1]
    %v1141 = vld [vmem:[%s6 + $0x3] sm:$0xff]
    %v1142 = vld [vmem:[%s6 + $0xb] sm:$0x1]
    %v1143 = vld [vmem:[%s6 + $0xc] sm:$0x3]
    %v1144 = vld [vmem:[%s6 + $0xe] sm:$0x3]
    %v1145 = vld [vmem:[%s6 + $0x10] sm:$0x3]
    %v1146 = vld [vmem:[%s6 + $0x12] sm:$0x1]
    %v1147 = vld [vmem:[%s6 + $0x13] sm:$0x1]
    %v1148 = vld [vmem:[%s6 + $0x14] sm:$0x1]
    %v1149 = vld [vmem:[%s6 + $0x15] sm:$0x1]
    %v1150 = vld [vmem:[%s0] sm:$0xff]
    %v1151 = vld [vmem:[%s0 + $0x8] sm:$0xff]
    %v1152 = vld [vmem:[%s0 + $0x10] sm:$0xff]
    %v1153 = vld [vmem:[%s0 + $0x18] sm:$0xff]
    %v1154 = vld [vmem:[%s0 + $0x20] sm:$0xff]
    %v1155 = vld [vmem:[%s0 + $0x28] sm:$0xff]
    %v1156 = vld [vmem:[%s0 + $0x30] sm:$0xff]
    %v1157 = vld [vmem:[%s0 + $0x38] sm:$0xff]
    %v1158 = vld [vmem:[%s0 + $0x40] sm:$0xff]
    %v1159 = vld [vmem:[%s0 + $0x48] sm:$0xff]
    %v1160 = vld [vmem:[%s0 + $0x50] sm:$0x3]
    %v1161 = vld [vmem:[%s1] sm:$0xff]
    %v1162 = vld [vmem:[%s1 + $0x8] sm:$0xff]
    %v1163 = vld [vmem:[%s1 + $0x10] sm:$0xff]
    %v1164 = vld [vmem:[%s1 + $0x18] sm:$0xff]
    %v1165 = vld [vmem:[%s1 + $0x20] sm:$0xff]
    %v1166 = vld [vmem:[%s1 + $0x28] sm:$0xff]
    %v1167 = vld [vmem:[%s1 + $0x30] sm:$0xff]
    %v1168 = vld [vmem:[%s1 + $0x38] sm:$0xff]
    %v1169 = vld [vmem:[%s1 + $0x40] sm:$0xff]
    %v1170 = vld [vmem:[%s1 + $0x48] sm:$0xff]
    %v1171 = vld [vmem:[%s1 + $0x50] sm:$0xff]
    %v1172 = vld [vmem:[%s1 + $0x58] sm:$0xff]
    %v1174 = vlaneseq
    %v1175 = vshrl.u32 %v1174, 7
    %v1176 = vsub.s32 0, %v1175
    %v1177 = vrot.slane %v1138, %v1176
    %vm1179 = vcmask 785408
    %v1181 = vsel %vm1179, %v1150, 0
    %v1184 = vsel %vm1179, %v1151, 0
    %v1187 = vsel %vm1179, %v1152, 0
    %v1190 = vsel %vm1179, %v1153, 0
    %v1193 = vsel %vm1179, %v1154, 0
    %v1196 = vsel %vm1179, %v1155, 0
    %v1199 = vsel %vm1179, %v1156, 0
    %v1202 = vsel %vm1179, %v1157, 0
    %v1205 = vsel %vm1179, %v1158, 0
    %v1208 = vsel %vm1179, %v1159, 0
    %v1211 = vsel %vm1179, %v1160, 0
    %1213 = vmatprep.subr.mxu0 0.0
    %1214 = vmatpush1.msra.mxu0 %v1161
    %1215 = vmatprep.subr.mxu0 0.0
    %1216 = vmatpush1.msra.mxu0 %v1162
    %1217 = vmatprep.subr.mxu0 0.0
    %1218 = vmatpush1.msra.mxu0 %v1163
    %1219 = vmatprep.subr.mxu0 0.0
    %1220 = vmatpush1.msra.mxu0 %v1164
    %1221 = vmatprep.subr.mxu0 0.0
    %1222 = vmatpush1.msra.mxu0 %v1165
    %1223 = vmatprep.subr.mxu0 0.0
    %1224 = vmatpush1.msra.mxu0 %v1166
    %1225 = vmatprep.subr.mxu0 0.0
    %1226 = vmatpush1.msra.mxu0 %v1167
    %1227 = vmatprep.subr.mxu0 0.0
    %1228 = vmatpush1.msra.mxu0 %v1168
    %1229 = vmatprep.subr.mxu0 0.0
    %1230 = vmatpush1.msra.mxu0 %v1169
    %1231 = vmatprep.subr.mxu0 0.0
    %1232 = vmatpush1.msra.mxu0 %v1170
    %1233 = vmatprep.subr.mxu0 0.0
    %1234 = vmatpush1.msra.mxu0 %v1171
    %1235 = vmatprep.subr.mxu0 0.0
    %1236 = vmatpush1.msra.mxu0 %v1172
    %1237 = vmatprep.subr.mxu0 0.0
    %1238 = vmatpush1.msra.mxu0 0.0
    %1239 = vmatprep.subr.mxu0 0.0
    %1240 = vmatpush1.msra.mxu0 0.0
    %1241 = vmatprep.subr.mxu0 0.0
    %1242 = vmatpush1.msra.mxu0 0.0
    %1243 = vmatprep.subr.mxu0 0.0
    %1244 = vmatpush1.msra.mxu0 0.0
    %1245 = vmatprep.subr.mxu0 0.0
    %1246 = vmatpush1.msra.mxu0 0.0
    %1247 = vmatprep.subr.mxu0 0.0
    %1248 = vmatpush1.msra.mxu0 0.0
    %1249 = vmatprep.subr.mxu0 0.0
    %1250 = vmatpush1.msra.mxu0 0.0
    %1251 = vmatprep.subr.mxu0 0.0
    %1252 = vmatpush1.msra.mxu0 0.0
    %1253 = vmatprep.subr.mxu0 0.0
    %1254 = vmatpush1.msra.mxu0 0.0
    %1255 = vmatprep.subr.mxu0 0.0
    %1256 = vmatpush1.msra.mxu0 0.0
    %1257 = vmatprep.subr.mxu0 0.0
    %1258 = vmatpush1.msra.mxu0 0.0
    %1259 = vmatprep.subr.mxu0 0.0
    %1260 = vmatpush1.msra.mxu0 0.0
    %1261 = vmatprep.subr.mxu0 0.0
    %1262 = vmatpush1.msra.mxu0 0.0
    %1263 = vmatprep.subr.mxu0 0.0
    %1264 = vmatpush1.msra.mxu0 0.0
    %1265 = vmatprep.subr.mxu0 0.0
    %1266 = vmatpush1.msra.mxu0 0.0
    %1267 = vmatprep.subr.mxu0 0.0
    %1268 = vmatpush1.msra.mxu0 0.0
    %1269 = vmatprep.subr.mxu0 0.0
    %1270 = vmatpush1.msra.mxu0 0.0
    %1271 = vmatprep.subr.mxu0 0.0
    %1272 = vmatpush1.msra.mxu0 0.0
    %1273 = vmatprep.subr.mxu0 0.0
    %1274 = vmatpush1.msra.mxu0 0.0
    %1275 = vmatprep.subr.mxu0 0.0
    %1276 = vmatpush1.msra.mxu0 0.0
    %1277 = vmatprep.mubr.f32.mxu0 0.0
    %1278 = vmatmul.mubr.f32.gmra.mrb[0].mxu0 %v1181
    %v1279 = vpop.f32.mrb[0].mxu0
    %v1280 = vadd.f32 %v1177, %v1279
    %v1281 = vpop.f32.mrb[0].mxu0
    %1282 = vmatprep.mubr.f32.mxu0 0.0
    %1283 = vmatmul.mubr.f32.gmra.mrb[0].mxu0 %v1184
    %v1284 = vpop.f32.mrb[0].mxu0
    %v1285 = vadd.f32 %v1177, %v1284
    %v1286 = vpop.f32.mrb[0].mxu0
    %1287 = vmatprep.mubr.f32.mxu0 0.0
    %1288 = vmatmul.mubr.f32.gmra.mrb[0].mxu0 %v1187
    %v1289 = vpop.f32.mrb[0].mxu0
    %v1290 = vadd.f32 %v1177, %v1289
    %v1291 = vpop.f32.mrb[0].mxu0
    %1292 = vmatprep.mubr.f32.mxu0 0.0
    %1293 = vmatmul.mubr.f32.gmra.mrb[0].mxu0 %v1190
    %v1294 = vpop.f32.mrb[0].mxu0
    %v1295 = vadd.f32 %v1177, %v1294
    %v1296 = vpop.f32.mrb[0].mxu0
    %1297 = vmatprep.mubr.f32.mxu0 0.0
    %1298 = vmatmul.mubr.f32.gmra.mrb[0].mxu0 %v1193
    %v1299 = vpop.f32.mrb[0].mxu0
    %v1300 = vadd.f32 %v1177, %v1299
    %v1301 = vpop.f32.mrb[0].mxu0
    %1302 = vmatprep.mubr.f32.mxu0 0.0
    %1303 = vmatmul.mubr.f32.gmra.mrb[0].mxu0 %v1196
    %v1304 = vpop.f32.mrb[0].mxu0
    %v1305 = vadd.f32 %v1177, %v1304
    %v1306 = vpop.f32.mrb[0].mxu0
    %1307 = vmatprep.mubr.f32.mxu0 0.0
    %1308 = vmatmul.mubr.f32.gmra.mrb[0].mxu0 %v1199
    %v1309 = vpop.f32.mrb[0].mxu0
    %v1310 = vadd.f32 %v1177, %v1309
    %v1311 = vpop.f32.mrb[0].mxu0
    %1312 = vmatprep.mubr.f32.mxu0 0.0
    %1313 = vmatmul.mubr.f32.gmra.mrb[0].mxu0 %v1202
    %v1314 = vpop.f32.mrb[0].mxu0
    %v1315 = vadd.f32 %v1177, %v1314
    %v1316 = vpop.f32.mrb[0].mxu0
    %1317 = vmatprep.mubr.f32.mxu0 0.0
    %1318 = vmatmul.mubr.f32.gmra.mrb[0].mxu0 %v1205
    %v1319 = vpop.f32.mrb[0].mxu0
    %v1320 = vadd.f32 %v1177, %v1319
    %v1321 = vpop.f32.mrb[0].mxu0
    %1322 = vmatprep.mubr.f32.mxu0 0.0
    %1323 = vmatmul.mubr.f32.gmra.mrb[0].mxu0 %v1208
    %v1324 = vpop.f32.mrb[0].mxu0
    %v1325 = vadd.f32 %v1177, %v1324
    %v1326 = vpop.f32.mrb[0].mxu0
    %1327 = vmatprep.mubr.f32.mxu0 0.0
    %1328 = vmatmul.mubr.f32.gmra.mrb[0].mxu0 %v1211
    %v1329 = vpop.f32.mrb[0].mxu0
    %v1330 = vadd.f32 %v1177, %v1329
    %v1331 = vpop.f32.mrb[0].mxu0
    %1332 = vdwg.mxu0
    %v1333 = vmax.f32 %v1280, 0.0
    %v1334 = vmax.f32 %v1285, 0.0
    %v1335 = vmax.f32 %v1290, 0.0
    %v1336 = vmax.f32 %v1295, 0.0
    %v1337 = vmax.f32 %v1300, 0.0
    %v1338 = vmax.f32 %v1305, 0.0
    %v1339 = vmax.f32 %v1310, 0.0
    %v1340 = vmax.f32 %v1315, 0.0
    %v1341 = vmax.f32 %v1320, 0.0
    %v1342 = vmax.f32 %v1325, 0.0
    %v1343 = vmax.f32 %v1330, 0.0
    %v1344 = vld [vmem:[%s2] sm:$0xff]
    %v1345 = vld [vmem:[%s2 + $0x8] sm:$0xff]
    %v1346 = vld [vmem:[%s2 + $0x10] sm:$0xff]
    %v1347 = vld [vmem:[%s2 + $0x18] sm:$0xff]
    %v1349 = vlaneseq
    %v1350 = vshrl.u32 %v1349, 7
    %v1351 = vsub.s32 0, %v1350
    %v1352 = vrot.slane %v1139, %v1351
    %vm1354 = vcmask 261120
    %v1356 = vsel %vm1354, %v1333, 0
    %v1359 = vsel %vm1354, %v1334, 0
    %v1362 = vsel %vm1354, %v1335, 0
    %v1365 = vsel %vm1354, %v1336, 0
    %v1368 = vsel %vm1354, %v1337, 0
    %v1371 = vsel %vm1354, %v1338, 0
    %v1374 = vsel %vm1354, %v1339, 0
    %v1377 = vsel %vm1354, %v1340, 0
    %v1380 = vsel %vm1354, %v1341, 0
    %1382 = vmatprep.subr.mxu0 0.0
    %1383 = vmatpush1.msra.mxu0 %v1344
    %1384 = vmatprep.subr.mxu0 0.0
    %1385 = vmatpush1.msra.mxu0 %v1345
    %1386 = vmatprep.subr.mxu0 0.0
    %1387 = vmatpush1.msra.mxu0 %v1346
    %1388 = vmatprep.subr.mxu0 0.0
    %1389 = vmatpush1.msra.mxu0 %v1347
    %1390 = vmatprep.subr.mxu0 0.0
    %1391 = vmatpush1.msra.mxu0 0.0
    %1392 = vmatprep.subr.mxu0 0.0
    %1393 = vmatpush1.msra.mxu0 0.0
    %1394 = vmatprep.subr.mxu0 0.0
    %1395 = vmatpush1.msra.mxu0 0.0
    %1396 = vmatprep.subr.mxu0 0.0
    %1397 = vmatpush1.msra.mxu0 0.0
    %1398 = vmatprep.subr.mxu0 0.0
    %1399 = vmatpush1.msra.mxu0 0.0
    %1400 = vmatprep.subr.mxu0 0.0
    %1401 = vmatpush1.msra.mxu0 0.0
    %1402 = vmatprep.subr.mxu0 0.0
    %1403 = vmatpush1.msra.mxu0 0.0
    %1404 = vmatprep.subr.mxu0 0.0
    %1405 = vmatpush1.msra.mxu0 0.0
    %1406 = vmatprep.subr.mxu0 0.0
    %1407 = vmatpush1.msra.mxu0 0.0
    %1408 = vmatprep.subr.mxu0 0.0
    %1409 = vmatpush1.msra.mxu0 0.0
    %1410 = vmatprep.subr.mxu0 0.0
    %1411 = vmatpush1.msra.mxu0 0.0
    %1412 = vmatprep.subr.mxu0 0.0
    %1413 = vmatpush1.msra.mxu0 0.0
    %1414 = vmatprep.subr.mxu0 0.0
    %1415 = vmatpush1.msra.mxu0 0.0
    %1416 = vmatprep.subr.mxu0 0.0
    %1417 = vmatpush1.msra.mxu0 0.0
    %1418 = vmatprep.subr.mxu0 0.0
    %1419 = vmatpush1.msra.mxu0 0.0
    %1420 = vmatprep.subr.mxu0 0.0
    %1421 = vmatpush1.msra.mxu0 0.0
    %1422 = vmatprep.subr.mxu0 0.0
    %1423 = vmatpush1.msra.mxu0 0.0
    %1424 = vmatprep.subr.mxu0 0.0
    %1425 = vmatpush1.msra.mxu0 0.0
    %1426 = vmatprep.subr.mxu0 0.0
    %1427 = vmatpush1.msra.mxu0 0.0
    %1428 = vmatprep.subr.mxu0 0.0
    %1429 = vmatpush1.msra.mxu0 0.0
    %1430 = vmatprep.subr.mxu0 0.0
    %1431 = vmatpush1.msra.mxu0 0.0
    %1432 = vmatprep.subr.mxu0 0.0
    %1433 = vmatpush1.msra.mxu0 0.0
    %1434 = vmatprep.subr.mxu0 0.0
    %1435 = vmatpush1.msra.mxu0 0.0
    %1436 = vmatprep.subr.mxu0 0.0
    %1437 = vmatpush1.msra.mxu0 0.0
    %1438 = vmatprep.subr.mxu0 0.0
    %1439 = vmatpush1.msra.mxu0 0.0
    %1440 = vmatprep.subr.mxu0 0.0
    %1441 = vmatpush1.msra.mxu0 0.0
    %1442 = vmatprep.subr.mxu0 0.0
    %1443 = vmatpush1.msra.mxu0 0.0
    %1444 = vmatprep.subr.mxu0 0.0
    %1445 = vmatpush1.msra.mxu0 0.0
    %1446 = vmatprep.mubr.f32.mxu0 0.0
    %1447 = vmatmul.mubr.f32.gmra.mrb[0].mxu0 %v1356
    %v1448 = vpop.f32.mrb[0].mxu0
    %v1449 = vadd.f32 %v1352, %v1448
    %v1450 = vpop.f32.mrb[0].mxu0
    %1451 = vmatprep.mubr.f32.mxu0 0.0
    %1452 = vmatmul.mubr.f32.gmra.mrb[0].mxu0 %v1359
    %v1453 = vpop.f32.mrb[0].mxu0
    %v1454 = vadd.f32 %v1352, %v1453
    %v1455 = vpop.f32.mrb[0].mxu0
    %1456 = vmatprep.mubr.f32.mxu0 0.0
    %1457 = vmatmul.mubr.f32.gmra.mrb[0].mxu0 %v1362
    %v1458 = vpop.f32.mrb[0].mxu0
    %v1459 = vadd.f32 %v1352, %v1458
    %v1460 = vpop.f32.mrb[0].mxu0
    %1461 = vmatprep.mubr.f32.mxu0 0.0
    %1462 = vmatmul.mubr.f32.gmra.mrb[0].mxu0 %v1365
    %v1463 = vpop.f32.mrb[0].mxu0
    %v1464 = vadd.f32 %v1352, %v1463
    %v1465 = vpop.f32.mrb[0].mxu0
    %1466 = vmatprep.mubr.f32.mxu0 0.0
    %1467 = vmatmul.mubr.f32.gmra.mrb[0].mxu0 %v1368
    %v1468 = vpop.f32.mrb[0].mxu0
    %v1469 = vadd.f32 %v1352, %v1468
    %v1470 = vpop.f32.mrb[0].mxu0
    %1471 = vmatprep.mubr.f32.mxu0 0.0
    %1472 = vmatmul.mubr.f32.gmra.mrb[0].mxu0 %v1371
    %v1473 = vpop.f32.mrb[0].mxu0
    %v1474 = vadd.f32 %v1352, %v1473
    %v1475 = vpop.f32.mrb[0].mxu0
    %1476 = vmatprep.mubr.f32.mxu0 0.0
    %1477 = vmatmul.mubr.f32.gmra.mrb[0].mxu0 %v1374
    %v1478 = vpop.f32.mrb[0].mxu0
    %v1479 = vadd.f32 %v1352, %v1478
    %v1480 = vpop.f32.mrb[0].mxu0
    %1481 = vmatprep.mubr.f32.mxu0 0.0
    %1482 = vmatmul.mubr.f32.gmra.mrb[0].mxu0 %v1377
    %v1483 = vpop.f32.mrb[0].mxu0
    %v1484 = vadd.f32 %v1352, %v1483
    %v1485 = vpop.f32.mrb[0].mxu0
    %1486 = vmatprep.mubr.f32.mxu0 0.0
    %1487 = vmatmul.mubr.f32.gmra.mrb[0].mxu0 %v1380
    %v1488 = vpop.f32.mrb[0].mxu0
    %v1489 = vadd.f32 %v1352, %v1488
    %v1490 = vpop.f32.mrb[0].mxu0
    %1491 = vdwg.mxu0
    %v1492 = vld [vmem:[%s2 + $0x20] sm:$0xff]
    %v1493 = vld [vmem:[%s2 + $0x28] sm:$0xff]
    %v1494 = vld [vmem:[%s2 + $0x30] sm:$0xff]
    %v1495 = vld [vmem:[%s2 + $0x38] sm:$0xff]
    %vm1496 = vcmask 1046528
    %v1497 = vrot.slane %v1333, 1
    %v1498 = vrot.slane %v1334, 1
    %v1499 = vsel %vm1496, %v1497, %v1498
    %v1500 = vrot.slane %v1335, 1
    %v1501 = vsel %vm1496, %v1498, %v1500
    %v1502 = vrot.slane %v1336, 1
    %v1503 = vsel %vm1496, %v1500, %v1502
    %v1504 = vrot.slane %v1337, 1
    %v1505 = vsel %vm1496, %v1502, %v1504
    %v1506 = vrot.slane %v1338, 1
    %v1507 = vsel %vm1496, %v1504, %v1506
    %v1508 = vrot.slane %v1339, 1
    %v1509 = vsel %vm1496, %v1506, %v1508
    %v1510 = vrot.slane %v1340, 1
    %v1511 = vsel %vm1496, %v1508, %v1510
    %v1512 = vrot.slane %v1341, 1
    %v1513 = vsel %vm1496, %v1510, %v1512
    %v1514 = vsel %vm1354, %v1499, 0
    %v1516 = vsel %vm1354, %v1501, 0
    %v1518 = vsel %vm1354, %v1503, 0
    %v1520 = vsel %vm1354, %v1505, 0
    %v1522 = vsel %vm1354, %v1507, 0
    %v1524 = vsel %vm1354, %v1509, 0
    %v1526 = vsel %vm1354, %v1511, 0
    %v1528 = vsel %vm1354, %v1513, 0
    %v1530 = vsel %vm1354, %v1512, 0
    %1532 = vmatprep.subr.mxu0 0.0
    %1533 = vmatpush1.msra.mxu0 %v1492
    %1534 = vmatprep.subr.mxu0 0.0
    %1535 = vmatpush1.msra.mxu0 %v1493
    %1536 = vmatprep.subr.mxu0 0.0
    %1537 = vmatpush1.msra.mxu0 %v1494
    %1538 = vmatprep.subr.mxu0 0.0
    %1539 = vmatpush1.msra.mxu0 %v1495
    %1540 = vmatprep.subr.mxu0 0.0
    %1541 = vmatpush1.msra.mxu0 0.0
    %1542 = vmatprep.subr.mxu0 0.0
    %1543 = vmatpush1.msra.mxu0 0.0
    %1544 = vmatprep.subr.mxu0 0.0
    %1545 = vmatpush1.msra.mxu0 0.0
    %1546 = vmatprep.subr.mxu0 0.0
    %1547 = vmatpush1.msra.mxu0 0.0
    %1548 = vmatprep.subr.mxu0 0.0
    %1549 = vmatpush1.msra.mxu0 0.0
    %1550 = vmatprep.subr.mxu0 0.0
    %1551 = vmatpush1.msra.mxu0 0.0
    %1552 = vmatprep.subr.mxu0 0.0
    %1553 = vmatpush1.msra.mxu0 0.0
    %1554 = vmatprep.subr.mxu0 0.0
    %1555 = vmatpush1.msra.mxu0 0.0
    %1556 = vmatprep.subr.mxu0 0.0
    %1557 = vmatpush1.msra.mxu0 0.0
    %1558 = vmatprep.subr.mxu0 0.0
    %1559 = vmatpush1.msra.mxu0 0.0
    %1560 = vmatprep.subr.mxu0 0.0
    %1561 = vmatpush1.msra.mxu0 0.0
    %1562 = vmatprep.subr.mxu0 0.0
    %1563 = vmatpush1.msra.mxu0 0.0
    %1564 = vmatprep.subr.mxu0 0.0
    %1565 = vmatpush1.msra.mxu0 0.0
    %1566 = vmatprep.subr.mxu0 0.0
    %1567 = vmatpush1.msra.mxu0 0.0
    %1568 = vmatprep.subr.mxu0 0.0
    %1569 = vmatpush1.msra.mxu0 0.0
    %1570 = vmatprep.subr.mxu0 0.0
    %1571 = vmatpush1.msra.mxu0 0.0
    %1572 = vmatprep.subr.mxu0 0.0
    %1573 = vmatpush1.msra.mxu0 0.0
    %1574 = vmatprep.subr.mxu0 0.0
    %1575 = vmatpush1.msra.mxu0 0.0
    %1576 = vmatprep.subr.mxu0 0.0
    %1577 = vmatpush1.msra.mxu0 0.0
    %1578 = vmatprep.subr.mxu0 0.0
    %1579 = vmatpush1.msra.mxu0 0.0
    %1580 = vmatprep.subr.mxu0 0.0
    %1581 = vmatpush1.msra.mxu0 0.0
    %1582 = vmatprep.subr.mxu0 0.0
    %1583 = vmatpush1.msra.mxu0 0.0
    %1584 = vmatprep.subr.mxu0 0.0
    %1585 = vmatpush1.msra.mxu0 0.0
    %1586 = vmatprep.subr.mxu0 0.0
    %1587 = vmatpush1.msra.mxu0 0.0
    %1588 = vmatprep.subr.mxu0 0.0
    %1589 = vmatpush1.msra.mxu0 0.0
    %1590 = vmatprep.subr.mxu0 0.0
    %1591 = vmatpush1.msra.mxu0 0.0
    %1592 = vmatprep.subr.mxu0 0.0
    %1593 = vmatpush1.msra.mxu0 0.0
    %1594 = vmatprep.subr.mxu0 0.0
    %1595 = vmatpush1.msra.mxu0 0.0
    %1596 = vmatprep.mubr.f32.mxu0 0.0
    %1597 = vmatmul.mubr.f32.gmra.mrb[0].mxu0 %v1514
    %v1598 = vpop.f32.mrb[0].mxu0
    %v1599 = vadd.f32 0.0, %v1598
    %v1600 = vpop.f32.mrb[0].mxu0
    %1601 = vmatprep.mubr.f32.mxu0 0.0
    %1602 = vmatmul.mubr.f32.gmra.mrb[0].mxu0 %v1516
    %v1603 = vpop.f32.mrb[0].mxu0
    %v1604 = vadd.f32 0.0, %v1603
    %v1605 = vpop.f32.mrb[0].mxu0
    %1606 = vmatprep.mubr.f32.mxu0 0.0
    %1607 = vmatmul.mubr.f32.gmra.mrb[0].mxu0 %v1518
    %v1608 = vpop.f32.mrb[0].mxu0
    %v1609 = vadd.f32 0.0, %v1608
    %v1610 = vpop.f32.mrb[0].mxu0
    %1611 = vmatprep.mubr.f32.mxu0 0.0
    %1612 = vmatmul.mubr.f32.gmra.mrb[0].mxu0 %v1520
    %v1613 = vpop.f32.mrb[0].mxu0
    %v1614 = vadd.f32 0.0, %v1613
    %v1615 = vpop.f32.mrb[0].mxu0
    %1616 = vmatprep.mubr.f32.mxu0 0.0
    %1617 = vmatmul.mubr.f32.gmra.mrb[0].mxu0 %v1522
    %v1618 = vpop.f32.mrb[0].mxu0
    %v1619 = vadd.f32 0.0, %v1618
    %v1620 = vpop.f32.mrb[0].mxu0
    %1621 = vmatprep.mubr.f32.mxu0 0.0
    %1622 = vmatmul.mubr.f32.gmra.mrb[0].mxu0 %v1524
    %v1623 = vpop.f32.mrb[0].mxu0
    %v1624 = vadd.f32 0.0, %v1623
    %v1625 = vpop.f32.mrb[0].mxu0
    %1626 = vmatprep.mubr.f32.mxu0 0.0
    %1627 = vmatmul.mubr.f32.gmra.mrb[0].mxu0 %v1526
    %v1628 = vpop.f32.mrb[0].mxu0
    %v1629 = vadd.f32 0.0, %v1628
    %v1630 = vpop.f32.mrb[0].mxu0
    %1631 = vmatprep.mubr.f32.mxu0 0.0
    %1632 = vmatmul.mubr.f32.gmra.mrb[0].mxu0 %v1528
    %v1633 = vpop.f32.mrb[0].mxu0
    %v1634 = vadd.f32 0.0, %v1633
    %v1635 = vpop.f32.mrb[0].mxu0
    %1636 = vmatprep.mubr.f32.mxu0 0.0
    %1637 = vmatmul.mubr.f32.gmra.mrb[0].mxu0 %v1530
    %v1638 = vpop.f32.mrb[0].mxu0
    %v1639 = vadd.f32 0.0, %v1638
    %v1640 = vpop.f32.mrb[0].mxu0
    %1641 = vdwg.mxu0
    %v1642 = vadd.f32 %v1449, %v1599
    %v1643 = vadd.f32 %v1454, %v1604
    %v1644 = vadd.f32 %v1459, %v1609
    %v1645 = vadd.f32 %v1464, %v1614
    %v1646 = vadd.f32 %v1469, %v1619
    %v1647 = vadd.f32 %v1474, %v1624
    %v1648 = vadd.f32 %v1479, %v1629
    %v1649 = vadd.f32 %v1484, %v1634
    %v1650 = vadd.f32 %v1489, %v1639
    %v1651 = vld [vmem:[%s2 + $0x40] sm:$0xff]
    %v1652 = vld [vmem:[%s2 + $0x48] sm:$0xff]
    %v1653 = vld [vmem:[%s2 + $0x50] sm:$0xff]
    %v1654 = vld [vmem:[%s2 + $0x58] sm:$0xff]
    %vm1655 = vcmask 1045504
    %v1656 = vrot.slane %v1333, 2
    %v1657 = vrot.slane %v1334, 2
    %v1658 = vsel %vm1655, %v1656, %v1657
    %v1659 = vrot.slane %v1335, 2
    %v1660 = vsel %vm1655, %v1657, %v1659
    %v1661 = vrot.slane %v1336, 2
    %v1662 = vsel %vm1655, %v1659, %v1661
    %v1663 = vrot.slane %v1337, 2
    %v1664 = vsel %vm1655, %v1661, %v1663
    %v1665 = vrot.slane %v1338, 2
    %v1666 = vsel %vm1655, %v1663, %v1665
    %v1667 = vrot.slane %v1339, 2
    %v1668 = vsel %vm1655, %v1665, %v1667
    %v1669 = vrot.slane %v1340, 2
    %v1670 = vsel %vm1655, %v1667, %v1669
    %v1671 = vrot.slane %v1341, 2
    %v1672 = vsel %vm1655, %v1669, %v1671
    %v1673 = vsel %vm1354, %v1658, 0
    %v1675 = vsel %vm1354, %v1660, 0
    %v1677 = vsel %vm1354, %v1662, 0
    %v1679 = vsel %vm1354, %v1664, 0
    %v1681 = vsel %vm1354, %v1666, 0
    %v1683 = vsel %vm1354, %v1668, 0
    %v1685 = vsel %vm1354, %v1670, 0
    %v1687 = vsel %vm1354, %v1672, 0
    %v1689 = vsel %vm1354, %v1671, 0
    %1691 = vmatprep.subr.mxu0 0.0
    %1692 = vmatpush1.msra.mxu0 %v1651
    %1693 = vmatprep.subr.mxu0 0.0
    %1694 = vmatpush1.msra.mxu0 %v1652
    %1695 = vmatprep.subr.mxu0 0.0
    %1696 = vmatpush1.msra.mxu0 %v1653
    %1697 = vmatprep.subr.mxu0 0.0
    %1698 = vmatpush1.msra.mxu0 %v1654
    %1699 = vmatprep.subr.mxu0 0.0
    %1700 = vmatpush1.msra.mxu0 0.0
    %1701 = vmatprep.subr.mxu0 0.0
    %1702 = vmatpush1.msra.mxu0 0.0
    %1703 = vmatprep.subr.mxu0 0.0
    %1704 = vmatpush1.msra.mxu0 0.0
    %1705 = vmatprep.subr.mxu0 0.0
    %1706 = vmatpush1.msra.mxu0 0.0
    %1707 = vmatprep.subr.mxu0 0.0
    %1708 = vmatpush1.msra.mxu0 0.0
    %1709 = vmatprep.subr.mxu0 0.0
    %1710 = vmatpush1.msra.mxu0 0.0
    %1711 = vmatprep.subr.mxu0 0.0
    %1712 = vmatpush1.msra.mxu0 0.0
    %1713 = vmatprep.subr.mxu0 0.0
    %1714 = vmatpush1.msra.mxu0 0.0
    %1715 = vmatprep.subr.mxu0 0.0
    %1716 = vmatpush1.msra.mxu0 0.0
    %1717 = vmatprep.subr.mxu0 0.0
    %1718 = vmatpush1.msra.mxu0 0.0
    %1719 = vmatprep.subr.mxu0 0.0
    %1720 = vmatpush1.msra.mxu0 0.0
    %1721 = vmatprep.subr.mxu0 0.0
    %1722 = vmatpush1.msra.mxu0 0.0
    %1723 = vmatprep.subr.mxu0 0.0
    %1724 = vmatpush1.msra.mxu0 0.0
    %1725 = vmatprep.subr.mxu0 0.0
    %1726 = vmatpush1.msra.mxu0 0.0
    %1727 = vmatprep.subr.mxu0 0.0
    %1728 = vmatpush1.msra.mxu0 0.0
    %1729 = vmatprep.subr.mxu0 0.0
    %1730 = vmatpush1.msra.mxu0 0.0
    %1731 = vmatprep.subr.mxu0 0.0
    %1732 = vmatpush1.msra.mxu0 0.0
    %1733 = vmatprep.subr.mxu0 0.0
    %1734 = vmatpush1.msra.mxu0 0.0
    %1735 = vmatprep.subr.mxu0 0.0
    %1736 = vmatpush1.msra.mxu0 0.0
    %1737 = vmatprep.subr.mxu0 0.0
    %1738 = vmatpush1.msra.mxu0 0.0
    %1739 = vmatprep.subr.mxu0 0.0
    %1740 = vmatpush1.msra.mxu0 0.0
    %1741 = vmatprep.subr.mxu0 0.0
    %1742 = vmatpush1.msra.mxu0 0.0
    %1743 = vmatprep.subr.mxu0 0.0
    %1744 = vmatpush1.msra.mxu0 0.0
    %1745 = vmatprep.subr.mxu0 0.0
    %1746 = vmatpush1.msra.mxu0 0.0
    %1747 = vmatprep.subr.mxu0 0.0
    %1748 = vmatpush1.msra.mxu0 0.0
    %1749 = vmatprep.subr.mxu0 0.0
    %1750 = vmatpush1.msra.mxu0 0.0
    %1751 = vmatprep.subr.mxu0 0.0
    %1752 = vmatpush1.msra.mxu0 0.0
    %1753 = vmatprep.subr.mxu0 0.0
    %1754 = vmatpush1.msra.mxu0 0.0
    %1755 = vmatprep.mubr.f32.mxu0 0.0
    %1756 = vmatmul.mubr.f32.gmra.mrb[0].mxu0 %v1673
    %v1757 = vpop.f32.mrb[0].mxu0
    %v1758 = vadd.f32 0.0, %v1757
    %v1759 = vpop.f32.mrb[0].mxu0
    %1760 = vmatprep.mubr.f32.mxu0 0.0
    %1761 = vmatmul.mubr.f32.gmra.mrb[0].mxu0 %v1675
    %v1762 = vpop.f32.mrb[0].mxu0
    %v1763 = vadd.f32 0.0, %v1762
    %v1764 = vpop.f32.mrb[0].mxu0
    %1765 = vmatprep.mubr.f32.mxu0 0.0
    %1766 = vmatmul.mubr.f32.gmra.mrb[0].mxu0 %v1677
    %v1767 = vpop.f32.mrb[0].mxu0
    %v1768 = vadd.f32 0.0, %v1767
    %v1769 = vpop.f32.mrb[0].mxu0
    %1770 = vmatprep.mubr.f32.mxu0 0.0
    %1771 = vmatmul.mubr.f32.gmra.mrb[0].mxu0 %v1679
    %v1772 = vpop.f32.mrb[0].mxu0
    %v1773 = vadd.f32 0.0, %v1772
    %v1774 = vpop.f32.mrb[0].mxu0
    %1775 = vmatprep.mubr.f32.mxu0 0.0
    %1776 = vmatmul.mubr.f32.gmra.mrb[0].mxu0 %v1681
    %v1777 = vpop.f32.mrb[0].mxu0
    %v1778 = vadd.f32 0.0, %v1777
    %v1779 = vpop.f32.mrb[0].mxu0
    %1780 = vmatprep.mubr.f32.mxu0 0.0
    %1781 = vmatmul.mubr.f32.gmra.mrb[0].mxu0 %v1683
    %v1782 = vpop.f32.mrb[0].mxu0
    %v1783 = vadd.f32 0.0, %v1782
    %v1784 = vpop.f32.mrb[0].mxu0
    %1785 = vmatprep.mubr.f32.mxu0 0.0
    %1786 = vmatmul.mubr.f32.gmra.mrb[0].mxu0 %v1685
    %v1787 = vpop.f32.mrb[0].mxu0
    %v1788 = vadd.f32 0.0, %v1787
    %v1789 = vpop.f32.mrb[0].mxu0
    %1790 = vmatprep.mubr.f32.mxu0 0.0
    %1791 = vmatmul.mubr.f32.gmra.mrb[0].mxu0 %v1687
    %v1792 = vpop.f32.mrb[0].mxu0
    %v1793 = vadd.f32 0.0, %v1792
    %v1794 = vpop.f32.mrb[0].mxu0
    %1795 = vmatprep.mubr.f32.mxu0 0.0
    %1796 = vmatmul.mubr.f32.gmra.mrb[0].mxu0 %v1689
    %v1797 = vpop.f32.mrb[0].mxu0
    %v1798 = vadd.f32 0.0, %v1797
    %v1799 = vpop.f32.mrb[0].mxu0
    %1800 = vdwg.mxu0
    %v1801 = vadd.f32 %v1642, %v1758
    %v1802 = vadd.f32 %v1643, %v1763
    %v1803 = vadd.f32 %v1644, %v1768
    %v1804 = vadd.f32 %v1645, %v1773
    %v1805 = vadd.f32 %v1646, %v1778
    %v1806 = vadd.f32 %v1647, %v1783
    %v1807 = vadd.f32 %v1648, %v1788
    %v1808 = vadd.f32 %v1649, %v1793
    %v1809 = vadd.f32 %v1650, %v1798
    %v1810 = vld [vmem:[%s2 + $0x60] sm:$0xff]
    %v1811 = vld [vmem:[%s2 + $0x68] sm:$0xff]
    %v1812 = vld [vmem:[%s2 + $0x70] sm:$0xff]
    %v1813 = vld [vmem:[%s2 + $0x78] sm:$0xff]
    %vm1814 = vcmask 1044480
    %v1815 = vrot.slane %v1333, 3
    %v1816 = vrot.slane %v1334, 3
    %v1817 = vsel %vm1814, %v1815, %v1816
    %v1818 = vrot.slane %v1335, 3
    %v1819 = vsel %vm1814, %v1816, %v1818
    %v1820 = vrot.slane %v1336, 3
    %v1821 = vsel %vm1814, %v1818, %v1820
    %v1822 = vrot.slane %v1337, 3
    %v1823 = vsel %vm1814, %v1820, %v1822
    %v1824 = vrot.slane %v1338, 3
    %v1825 = vsel %vm1814, %v1822, %v1824
    %v1826 = vrot.slane %v1339, 3
    %v1827 = vsel %vm1814, %v1824, %v1826
    %v1828 = vrot.slane %v1340, 3
    %v1829 = vsel %vm1814, %v1826, %v1828
    %v1830 = vrot.slane %v1341, 3
    %v1831 = vsel %vm1814, %v1828, %v1830
    %v1832 = vsel %vm1354, %v1817, 0
    %v1834 = vsel %vm1354, %v1819, 0
    %v1836 = vsel %vm1354, %v1821, 0
    %v1838 = vsel %vm1354, %v1823, 0
    %v1840 = vsel %vm1354, %v1825, 0
    %v1842 = vsel %vm1354, %v1827, 0
    %v1844 = vsel %vm1354, %v1829, 0
    %v1846 = vsel %vm1354, %v1831, 0
    %v1848 = vsel %vm1354, %v1830, 0
    %1850 = vmatprep.subr.mxu0 0.0
    %1851 = vmatpush1.msra.mxu0 %v1810
    %1852 = vmatprep.subr.mxu0 0.0
    %1853 = vmatpush1.msra.mxu0 %v1811
    %1854 = vmatprep.subr.mxu0 0.0
    %1855 = vmatpush1.msra.mxu0 %v1812
    %1856 = vmatprep.subr.mxu0 0.0
    %1857 = vmatpush1.msra.mxu0 %v1813
    %1858 = vmatprep.subr.mxu0 0.0
    %1859 = vmatpush1.msra.mxu0 0.0
    %1860 = vmatprep.subr.mxu0 0.0
    %1861 = vmatpush1.msra.mxu0 0.0
    %1862 = vmatprep.subr.mxu0 0.0
    %1863 = vmatpush1.msra.mxu0 0.0
    %1864 = vmatprep.subr.mxu0 0.0
    %1865 = vmatpush1.msra.mxu0 0.0
    %1866 = vmatprep.subr.mxu0 0.0
    %1867 = vmatpush1.msra.mxu0 0.0
    %1868 = vmatprep.subr.mxu0 0.0
    %1869 = vmatpush1.msra.mxu0 0.0
    %1870 = vmatprep.subr.mxu0 0.0
    %1871 = vmatpush1.msra.mxu0 0.0
    %1872 = vmatprep.subr.mxu0 0.0
    %1873 = vmatpush1.msra.mxu0 0.0
    %1874 = vmatprep.subr.mxu0 0.0
    %1875 = vmatpush1.msra.mxu0 0.0
    %1876 = vmatprep.subr.mxu0 0.0
    %1877 = vmatpush1.msra.mxu0 0.0
    %1878 = vmatprep.subr.mxu0 0.0
    %1879 = vmatpush1.msra.mxu0 0.0
    %1880 = vmatprep.subr.mxu0 0.0
    %1881 = vmatpush1.msra.mxu0 0.0
    %1882 = vmatprep.subr.mxu0 0.0
    %1883 = vmatpush1.msra.mxu0 0.0
    %1884 = vmatprep.subr.mxu0 0.0
    %1885 = vmatpush1.msra.mxu0 0.0
    %1886 = vmatprep.subr.mxu0 0.0
    %1887 = vmatpush1.msra.mxu0 0.0
    %1888 = vmatprep.subr.mxu0 0.0
    %1889 = vmatpush1.msra.mxu0 0.0
    %1890 = vmatprep.subr.mxu0 0.0
    %1891 = vmatpush1.msra.mxu0 0.0
    %1892 = vmatprep.subr.mxu0 0.0
    %1893 = vmatpush1.msra.mxu0 0.0
    %1894 = vmatprep.subr.mxu0 0.0
    %1895 = vmatpush1.msra.mxu0 0.0
    %1896 = vmatprep.subr.mxu0 0.0
    %1897 = vmatpush1.msra.mxu0 0.0
    %1898 = vmatprep.subr.mxu0 0.0
    %1899 = vmatpush1.msra.mxu0 0.0
    %1900 = vmatprep.subr.mxu0 0.0
    %1901 = vmatpush1.msra.mxu0 0.0
    %1902 = vmatprep.subr.mxu0 0.0
    %1903 = vmatpush1.msra.mxu0 0.0
    %1904 = vmatprep.subr.mxu0 0.0
    %1905 = vmatpush1.msra.mxu0 0.0
    %1906 = vmatprep.subr.mxu0 0.0
    %1907 = vmatpush1.msra.mxu0 0.0
    %1908 = vmatprep.subr.mxu0 0.0
    %1909 = vmatpush1.msra.mxu0 0.0
    %1910 = vmatprep.subr.mxu0 0.0
    %1911 = vmatpush1.msra.mxu0 0.0
    %1912 = vmatprep.subr.mxu0 0.0
    %1913 = vmatpush1.msra.mxu0 0.0
    %1914 = vmatprep.mubr.f32.mxu0 0.0
    %1915 = vmatmul.mubr.f32.gmra.mrb[0].mxu0 %v1832
    %v1916 = vpop.f32.mrb[0].mxu0
    %v1917 = vadd.f32 0.0, %v1916
    %v1918 = vpop.f32.mrb[0].mxu0
    %1919 = vmatprep.mubr.f32.mxu0 0.0
    %1920 = vmatmul.mubr.f32.gmra.mrb[0].mxu0 %v1834
    %v1921 = vpop.f32.mrb[0].mxu0
    %v1922 = vadd.f32 0.0, %v1921
    %v1923 = vpop.f32.mrb[0].mxu0
    %1924 = vmatprep.mubr.f32.mxu0 0.0
    %1925 = vmatmul.mubr.f32.gmra.mrb[0].mxu0 %v1836
    %v1926 = vpop.f32.mrb[0].mxu0
    %v1927 = vadd.f32 0.0, %v1926
    %v1928 = vpop.f32.mrb[0].mxu0
    %1929 = vmatprep.mubr.f32.mxu0 0.0
    %1930 = vmatmul.mubr.f32.gmra.mrb[0].mxu0 %v1838
    %v1931 = vpop.f32.mrb[0].mxu0
    %v1932 = vadd.f32 0.0, %v1931
    %v1933 = vpop.f32.mrb[0].mxu0
    %1934 = vmatprep.mubr.f32.mxu0 0.0
    %1935 = vmatmul.mubr.f32.gmra.mrb[0].mxu0 %v1840
    %v1936 = vpop.f32.mrb[0].mxu0
    %v1937 = vadd.f32 0.0, %v1936
    %v1938 = vpop.f32.mrb[0].mxu0
    %1939 = vmatprep.mubr.f32.mxu0 0.0
    %1940 = vmatmul.mubr.f32.gmra.mrb[0].mxu0 %v1842
    %v1941 = vpop.f32.mrb[0].mxu0
    %v1942 = vadd.f32 0.0, %v1941
    %v1943 = vpop.f32.mrb[0].mxu0
    %1944 = vmatprep.mubr.f32.mxu0 0.0
    %1945 = vmatmul.mubr.f32.gmra.mrb[0].mxu0 %v1844
    %v1946 = vpop.f32.mrb[0].mxu0
    %v1947 = vadd.f32 0.0, %v1946
    %v1948 = vpop.f32.mrb[0].mxu0
    %1949 = vmatprep.mubr.f32.mxu0 0.0
    %1950 = vmatmul.mubr.f32.gmra.mrb[0].mxu0 %v1846
    %v1951 = vpop.f32.mrb[0].mxu0
    %v1952 = vadd.f32 0.0, %v1951
    %v1953 = vpop.f32.mrb[0].mxu0
    %1954 = vmatprep.mubr.f32.mxu0 0.0
    %1955 = vmatmul.mubr.f32.gmra.mrb[0].mxu0 %v1848
    %v1956 = vpop.f32.mrb[0].mxu0
    %v1957 = vadd.f32 0.0, %v1956
    %v1958 = vpop.f32.mrb[0].mxu0
    %1959 = vdwg.mxu0
    %v1960 = vadd.f32 %v1801, %v1917
    %v1961 = vadd.f32 %v1802, %v1922
    %v1962 = vadd.f32 %v1803, %v1927
    %v1963 = vadd.f32 %v1804, %v1932
    %v1964 = vadd.f32 %v1805, %v1937
    %v1965 = vadd.f32 %v1806, %v1942
    %v1966 = vadd.f32 %v1807, %v1947
    %v1967 = vadd.f32 %v1808, %v1952
    %v1968 = vadd.f32 %v1809, %v1957
    %v1969 = vld [vmem:[%s2 + $0x80] sm:$0xff]
    %v1970 = vld [vmem:[%s2 + $0x88] sm:$0xff]
    %v1971 = vld [vmem:[%s2 + $0x90] sm:$0xff]
    %v1972 = vld [vmem:[%s2 + $0x98] sm:$0xff]
    %vm1973 = vcmask 1043456
    %v1974 = vrot.slane %v1333, 4
    %v1975 = vrot.slane %v1334, 4
    %v1976 = vsel %vm1973, %v1974, %v1975
    %v1977 = vrot.slane %v1335, 4
    %v1978 = vsel %vm1973, %v1975, %v1977
    %v1979 = vrot.slane %v1336, 4
    %v1980 = vsel %vm1973, %v1977, %v1979
    %v1981 = vrot.slane %v1337, 4
    %v1982 = vsel %vm1973, %v1979, %v1981
    %v1983 = vrot.slane %v1338, 4
    %v1984 = vsel %vm1973, %v1981, %v1983
    %v1985 = vrot.slane %v1339, 4
    %v1986 = vsel %vm1973, %v1983, %v1985
    %v1987 = vrot.slane %v1340, 4
    %v1988 = vsel %vm1973, %v1985, %v1987
    %v1989 = vrot.slane %v1341, 4
    %v1990 = vsel %vm1973, %v1987, %v1989
    %v1991 = vsel %vm1354, %v1976, 0
    %v1993 = vsel %vm1354, %v1978, 0
    %v1995 = vsel %vm1354, %v1980, 0
    %v1997 = vsel %vm1354, %v1982, 0
    %v1999 = vsel %vm1354, %v1984, 0
    %v2001 = vsel %vm1354, %v1986, 0
    %v2003 = vsel %vm1354, %v1988, 0
    %v2005 = vsel %vm1354, %v1990, 0
    %v2007 = vsel %vm1354, %v1989, 0
    %2009 = vmatprep.subr.mxu0 0.0
    %2010 = vmatpush1.msra.mxu0 %v1969
    %2011 = vmatprep.subr.mxu0 0.0
    %2012 = vmatpush1.msra.mxu0 %v1970
    %2013 = vmatprep.subr.mxu0 0.0
    %2014 = vmatpush1.msra.mxu0 %v1971
    %2015 = vmatprep.subr.mxu0 0.0
    %2016 = vmatpush1.msra.mxu0 %v1972
    %2017 = vmatprep.subr.mxu0 0.0
    %2018 = vmatpush1.msra.mxu0 0.0
    %2019 = vmatprep.subr.mxu0 0.0
    %2020 = vmatpush1.msra.mxu0 0.0
    %2021 = vmatprep.subr.mxu0 0.0
    %2022 = vmatpush1.msra.mxu0 0.0
    %2023 = vmatprep.subr.mxu0 0.0
    %2024 = vmatpush1.msra.mxu0 0.0
    %2025 = vmatprep.subr.mxu0 0.0
    %2026 = vmatpush1.msra.mxu0 0.0
    %2027 = vmatprep.subr.mxu0 0.0
    %2028 = vmatpush1.msra.mxu0 0.0
    %2029 = vmatprep.subr.mxu0 0.0
    %2030 = vmatpush1.msra.mxu0 0.0
    %2031 = vmatprep.subr.mxu0 0.0
    %2032 = vmatpush1.msra.mxu0 0.0
    %2033 = vmatprep.subr.mxu0 0.0
    %2034 = vmatpush1.msra.mxu0 0.0
    %2035 = vmatprep.subr.mxu0 0.0
    %2036 = vmatpush1.msra.mxu0 0.0
    %2037 = vmatprep.subr.mxu0 0.0
    %2038 = vmatpush1.msra.mxu0 0.0
    %2039 = vmatprep.subr.mxu0 0.0
    %2040 = vmatpush1.msra.mxu0 0.0
    %2041 = vmatprep.subr.mxu0 0.0
    %2042 = vmatpush1.msra.mxu0 0.0
    %2043 = vmatprep.subr.mxu0 0.0
    %2044 = vmatpush1.msra.mxu0 0.0
    %2045 = vmatprep.subr.mxu0 0.0
    %2046 = vmatpush1.msra.mxu0 0.0
    %2047 = vmatprep.subr.mxu0 0.0
    %2048 = vmatpush1.msra.mxu0 0.0
    %2049 = vmatprep.subr.mxu0 0.0
    %2050 = vmatpush1.msra.mxu0 0.0
    %2051 = vmatprep.subr.mxu0 0.0
    %2052 = vmatpush1.msra.mxu0 0.0
    %2053 = vmatprep.subr.mxu0 0.0
    %2054 = vmatpush1.msra.mxu0 0.0
    %2055 = vmatprep.subr.mxu0 0.0
    %2056 = vmatpush1.msra.mxu0 0.0
    %2057 = vmatprep.subr.mxu0 0.0
    %2058 = vmatpush1.msra.mxu0 0.0
    %2059 = vmatprep.subr.mxu0 0.0
    %2060 = vmatpush1.msra.mxu0 0.0
    %2061 = vmatprep.subr.mxu0 0.0
    %2062 = vmatpush1.msra.mxu0 0.0
    %2063 = vmatprep.subr.mxu0 0.0
    %2064 = vmatpush1.msra.mxu0 0.0
    %2065 = vmatprep.subr.mxu0 0.0
    %2066 = vmatpush1.msra.mxu0 0.0
    %2067 = vmatprep.subr.mxu0 0.0
    %2068 = vmatpush1.msra.mxu0 0.0
    %2069 = vmatprep.subr.mxu0 0.0
    %2070 = vmatpush1.msra.mxu0 0.0
    %2071 = vmatprep.subr.mxu0 0.0
    %2072 = vmatpush1.msra.mxu0 0.0
    %2073 = vmatprep.mubr.f32.mxu0 0.0
    %2074 = vmatmul.mubr.f32.gmra.mrb[0].mxu0 %v1991
    %v2075 = vpop.f32.mrb[0].mxu0
    %v2076 = vadd.f32 0.0, %v2075
    %v2077 = vpop.f32.mrb[0].mxu0
    %2078 = vmatprep.mubr.f32.mxu0 0.0
    %2079 = vmatmul.mubr.f32.gmra.mrb[0].mxu0 %v1993
    %v2080 = vpop.f32.mrb[0].mxu0
    %v2081 = vadd.f32 0.0, %v2080
    %v2082 = vpop.f32.mrb[0].mxu0
    %2083 = vmatprep.mubr.f32.mxu0 0.0
    %2084 = vmatmul.mubr.f32.gmra.mrb[0].mxu0 %v1995
    %v2085 = vpop.f32.mrb[0].mxu0
    %v2086 = vadd.f32 0.0, %v2085
    %v2087 = vpop.f32.mrb[0].mxu0
    %2088 = vmatprep.mubr.f32.mxu0 0.0
    %2089 = vmatmul.mubr.f32.gmra.mrb[0].mxu0 %v1997
    %v2090 = vpop.f32.mrb[0].mxu0
    %v2091 = vadd.f32 0.0, %v2090
    %v2092 = vpop.f32.mrb[0].mxu0
    %2093 = vmatprep.mubr.f32.mxu0 0.0
    %2094 = vmatmul.mubr.f32.gmra.mrb[0].mxu0 %v1999
    %v2095 = vpop.f32.mrb[0].mxu0
    %v2096 = vadd.f32 0.0, %v2095
    %v2097 = vpop.f32.mrb[0].mxu0
    %2098 = vmatprep.mubr.f32.mxu0 0.0
    %2099 = vmatmul.mubr.f32.gmra.mrb[0].mxu0 %v2001
    %v2100 = vpop.f32.mrb[0].mxu0
    %v2101 = vadd.f32 0.0, %v2100
    %v2102 = vpop.f32.mrb[0].mxu0
    %2103 = vmatprep.mubr.f32.mxu0 0.0
    %2104 = vmatmul.mubr.f32.gmra.mrb[0].mxu0 %v2003
    %v2105 = vpop.f32.mrb[0].mxu0
    %v2106 = vadd.f32 0.0, %v2105
    %v2107 = vpop.f32.mrb[0].mxu0
    %2108 = vmatprep.mubr.f32.mxu0 0.0
    %2109 = vmatmul.mubr.f32.gmra.mrb[0].mxu0 %v2005
    %v2110 = vpop.f32.mrb[0].mxu0
    %v2111 = vadd.f32 0.0, %v2110
    %v2112 = vpop.f32.mrb[0].mxu0
    %2113 = vmatprep.mubr.f32.mxu0 0.0
    %2114 = vmatmul.mubr.f32.gmra.mrb[0].mxu0 %v2007
    %v2115 = vpop.f32.mrb[0].mxu0
    %v2116 = vadd.f32 0.0, %v2115
    %v2117 = vpop.f32.mrb[0].mxu0
    %2118 = vdwg.mxu0
    %v2119 = vadd.f32 %v1960, %v2076
    %v2120 = vadd.f32 %v1961, %v2081
    %v2121 = vadd.f32 %v1962, %v2086
    %v2122 = vadd.f32 %v1963, %v2091
    %v2123 = vadd.f32 %v1964, %v2096
    %v2124 = vadd.f32 %v1965, %v2101
    %v2125 = vadd.f32 %v1966, %v2106
    %v2126 = vadd.f32 %v1967, %v2111
    %v2127 = vadd.f32 %v1968, %v2116
    %v2128 = vld [vmem:[%s2 + $0xa0] sm:$0xff]
    %v2129 = vld [vmem:[%s2 + $0xa8] sm:$0xff]
    %v2130 = vld [vmem:[%s2 + $0xb0] sm:$0xff]
    %v2131 = vld [vmem:[%s2 + $0xb8] sm:$0xff]
    %vm2132 = vcmask 1042432
    %v2133 = vrot.slane %v1333, 5
    %v2134 = vrot.slane %v1334, 5
    %v2135 = vsel %vm2132, %v2133, %v2134
    %v2136 = vrot.slane %v1335, 5
    %v2137 = vsel %vm2132, %v2134, %v2136
    %v2138 = vrot.slane %v1336, 5
    %v2139 = vsel %vm2132, %v2136, %v2138
    %v2140 = vrot.slane %v1337, 5
    %v2141 = vsel %vm2132, %v2138, %v2140
    %v2142 = vrot.slane %v1338, 5
    %v2143 = vsel %vm2132, %v2140, %v2142
    %v2144 = vrot.slane %v1339, 5
    %v2145 = vsel %vm2132, %v2142, %v2144
    %v2146 = vrot.slane %v1340, 5
    %v2147 = vsel %vm2132, %v2144, %v2146
    %v2148 = vrot.slane %v1341, 5
    %v2149 = vsel %vm2132, %v2146, %v2148
    %v2150 = vsel %vm1354, %v2135, 0
    %v2152 = vsel %vm1354, %v2137, 0
    %v2154 = vsel %vm1354, %v2139, 0
    %v2156 = vsel %vm1354, %v2141, 0
    %v2158 = vsel %vm1354, %v2143, 0
    %v2160 = vsel %vm1354, %v2145, 0
    %v2162 = vsel %vm1354, %v2147, 0
    %v2164 = vsel %vm1354, %v2149, 0
    %v2166 = vsel %vm1354, %v2148, 0
    %2168 = vmatprep.subr.mxu0 0.0
    %2169 = vmatpush1.msra.mxu0 %v2128
    %2170 = vmatprep.subr.mxu0 0.0
    %2171 = vmatpush1.msra.mxu0 %v2129
    %2172 = vmatprep.subr.mxu0 0.0
    %2173 = vmatpush1.msra.mxu0 %v2130
    %2174 = vmatprep.subr.mxu0 0.0
    %2175 = vmatpush1.msra.mxu0 %v2131
    %2176 = vmatprep.subr.mxu0 0.0
    %2177 = vmatpush1.msra.mxu0 0.0
    %2178 = vmatprep.subr.mxu0 0.0
    %2179 = vmatpush1.msra.mxu0 0.0
    %2180 = vmatprep.subr.mxu0 0.0
    %2181 = vmatpush1.msra.mxu0 0.0
    %2182 = vmatprep.subr.mxu0 0.0
    %2183 = vmatpush1.msra.mxu0 0.0
    %2184 = vmatprep.subr.mxu0 0.0
    %2185 = vmatpush1.msra.mxu0 0.0
    %2186 = vmatprep.subr.mxu0 0.0
    %2187 = vmatpush1.msra.mxu0 0.0
    %2188 = vmatprep.subr.mxu0 0.0
    %2189 = vmatpush1.msra.mxu0 0.0
    %2190 = vmatprep.subr.mxu0 0.0
    %2191 = vmatpush1.msra.mxu0 0.0
    %2192 = vmatprep.subr.mxu0 0.0
    %2193 = vmatpush1.msra.mxu0 0.0
    %2194 = vmatprep.subr.mxu0 0.0
    %2195 = vmatpush1.msra.mxu0 0.0
    %2196 = vmatprep.subr.mxu0 0.0
    %2197 = vmatpush1.msra.mxu0 0.0
    %2198 = vmatprep.subr.mxu0 0.0
    %2199 = vmatpush1.msra.mxu0 0.0
    %2200 = vmatprep.subr.mxu0 0.0
    %2201 = vmatpush1.msra.mxu0 0.0
    %2202 = vmatprep.subr.mxu0 0.0
    %2203 = vmatpush1.msra.mxu0 0.0
    %2204 = vmatprep.subr.mxu0 0.0
    %2205 = vmatpush1.msra.mxu0 0.0
    %2206 = vmatprep.subr.mxu0 0.0
    %2207 = vmatpush1.msra.mxu0 0.0
    %2208 = vmatprep.subr.mxu0 0.0
    %2209 = vmatpush1.msra.mxu0 0.0
    %2210 = vmatprep.subr.mxu0 0.0
    %2211 = vmatpush1.msra.mxu0 0.0
    %2212 = vmatprep.subr.mxu0 0.0
    %2213 = vmatpush1.msra.mxu0 0.0
    %2214 = vmatprep.subr.mxu0 0.0
    %2215 = vmatpush1.msra.mxu0 0.0
    %2216 = vmatprep.subr.mxu0 0.0
    %2217 = vmatpush1.msra.mxu0 0.0
    %2218 = vmatprep.subr.mxu0 0.0
    %2219 = vmatpush1.msra.mxu0 0.0
    %2220 = vmatprep.subr.mxu0 0.0
    %2221 = vmatpush1.msra.mxu0 0.0
    %2222 = vmatprep.subr.mxu0 0.0
    %2223 = vmatpush1.msra.mxu0 0.0
    %2224 = vmatprep.subr.mxu0 0.0
    %2225 = vmatpush1.msra.mxu0 0.0
    %2226 = vmatprep.subr.mxu0 0.0
    %2227 = vmatpush1.msra.mxu0 0.0
    %2228 = vmatprep.subr.mxu0 0.0
    %2229 = vmatpush1.msra.mxu0 0.0
    %2230 = vmatprep.subr.mxu0 0.0
    %2231 = vmatpush1.msra.mxu0 0.0
    %2232 = vmatprep.mubr.f32.mxu0 0.0
    %2233 = vmatmul.mubr.f32.gmra.mrb[0].mxu0 %v2150
    %v2234 = vpop.f32.mrb[0].mxu0
    %v2235 = vadd.f32 0.0, %v2234
    %v2236 = vpop.f32.mrb[0].mxu0
    %2237 = vmatprep.mubr.f32.mxu0 0.0
    %2238 = vmatmul.mubr.f32.gmra.mrb[0].mxu0 %v2152
    %v2239 = vpop.f32.mrb[0].mxu0
    %v2240 = vadd.f32 0.0, %v2239
    %v2241 = vpop.f32.mrb[0].mxu0
    %2242 = vmatprep.mubr.f32.mxu0 0.0
    %2243 = vmatmul.mubr.f32.gmra.mrb[0].mxu0 %v2154
    %v2244 = vpop.f32.mrb[0].mxu0
    %v2245 = vadd.f32 0.0, %v2244
    %v2246 = vpop.f32.mrb[0].mxu0
    %2247 = vmatprep.mubr.f32.mxu0 0.0
    %2248 = vmatmul.mubr.f32.gmra.mrb[0].mxu0 %v2156
    %v2249 = vpop.f32.mrb[0].mxu0
    %v2250 = vadd.f32 0.0, %v2249
    %v2251 = vpop.f32.mrb[0].mxu0
    %2252 = vmatprep.mubr.f32.mxu0 0.0
    %2253 = vmatmul.mubr.f32.gmra.mrb[0].mxu0 %v2158
    %v2254 = vpop.f32.mrb[0].mxu0
    %v2255 = vadd.f32 0.0, %v2254
    %v2256 = vpop.f32.mrb[0].mxu0
    %2257 = vmatprep.mubr.f32.mxu0 0.0
    %2258 = vmatmul.mubr.f32.gmra.mrb[0].mxu0 %v2160
    %v2259 = vpop.f32.mrb[0].mxu0
    %v2260 = vadd.f32 0.0, %v2259
    %v2261 = vpop.f32.mrb[0].mxu0
    %2262 = vmatprep.mubr.f32.mxu0 0.0
    %2263 = vmatmul.mubr.f32.gmra.mrb[0].mxu0 %v2162
    %v2264 = vpop.f32.mrb[0].mxu0
    %v2265 = vadd.f32 0.0, %v2264
    %v2266 = vpop.f32.mrb[0].mxu0
    %2267 = vmatprep.mubr.f32.mxu0 0.0
    %2268 = vmatmul.mubr.f32.gmra.mrb[0].mxu0 %v2164
    %v2269 = vpop.f32.mrb[0].mxu0
    %v2270 = vadd.f32 0.0, %v2269
    %v2271 = vpop.f32.mrb[0].mxu0
    %2272 = vmatprep.mubr.f32.mxu0 0.0
    %2273 = vmatmul.mubr.f32.gmra.mrb[0].mxu0 %v2166
    %v2274 = vpop.f32.mrb[0].mxu0
    %v2275 = vadd.f32 0.0, %v2274
    %v2276 = vpop.f32.mrb[0].mxu0
    %2277 = vdwg.mxu0
    %v2278 = vadd.f32 %v2119, %v2235
    %v2279 = vadd.f32 %v2120, %v2240
    %v2280 = vadd.f32 %v2121, %v2245
    %v2281 = vadd.f32 %v2122, %v2250
    %v2282 = vadd.f32 %v2123, %v2255
    %v2283 = vadd.f32 %v2124, %v2260
    %v2284 = vadd.f32 %v2125, %v2265
    %v2285 = vadd.f32 %v2126, %v2270
    %v2286 = vadd.f32 %v2127, %v2275
    %v2287 = vld [vmem:[%s2 + $0xc0] sm:$0xff]
    %v2288 = vld [vmem:[%s2 + $0xc8] sm:$0xff]
    %v2289 = vld [vmem:[%s2 + $0xd0] sm:$0xff]
    %v2290 = vld [vmem:[%s2 + $0xd8] sm:$0xff]
    %vm2292 = vcmask 1041408
    %v2293 = vrot.slane %v1333, 6
    %v2294 = vrot.slane %v1334, 6
    %v2295 = vsel %vm2292, %v2293, %v2294
    %v2296 = vrot.slane %v1335, 6
    %v2297 = vsel %vm2292, %v2294, %v2296
    %v2298 = vrot.slane %v1336, 6
    %v2299 = vsel %vm2292, %v2296, %v2298
    %v2300 = vrot.slane %v1337, 6
    %v2301 = vsel %vm2292, %v2298, %v2300
    %v2302 = vrot.slane %v1338, 6
    %v2303 = vsel %vm2292, %v2300, %v2302
    %v2304 = vrot.slane %v1339, 6
    %v2305 = vsel %vm2292, %v2302, %v2304
    %v2306 = vrot.slane %v1340, 6
    %v2307 = vsel %vm2292, %v2304, %v2306
    %v2308 = vrot.slane %v1341, 6
    %v2309 = vsel %vm2292, %v2306, %v2308
    %v2310 = vrot.slane %v1342, 6
    %v2311 = vsel %vm2292, %v2308, %v2310
    %v2312 = vsel %vm1354, %v2295, 0
    %v2314 = vsel %vm1354, %v2297, 0
    %v2316 = vsel %vm1354, %v2299, 0
    %v2318 = vsel %vm1354, %v2301, 0
    %v2320 = vsel %vm1354, %v2303, 0
    %v2322 = vsel %vm1354, %v2305, 0
    %v2324 = vsel %vm1354, %v2307, 0
    %v2326 = vsel %vm1354, %v2309, 0
    %v2328 = vsel %vm1354, %v2311, 0
    %2330 = vmatprep.subr.mxu0 0.0
    %2331 = vmatpush1.msra.mxu0 %v2287
    %2332 = vmatprep.subr.mxu0 0.0
    %2333 = vmatpush1.msra.mxu0 %v2288
    %2334 = vmatprep.subr.mxu0 0.0
    %2335 = vmatpush1.msra.mxu0 %v2289
    %2336 = vmatprep.subr.mxu0 0.0
    %2337 = vmatpush1.msra.mxu0 %v2290
    %2338 = vmatprep.subr.mxu0 0.0
    %2339 = vmatpush1.msra.mxu0 0.0
    %2340 = vmatprep.subr.mxu0 0.0
    %2341 = vmatpush1.msra.mxu0 0.0
    %2342 = vmatprep.subr.mxu0 0.0
    %2343 = vmatpush1.msra.mxu0 0.0
    %2344 = vmatprep.subr.mxu0 0.0
    %2345 = vmatpush1.msra.mxu0 0.0
    %2346 = vmatprep.subr.mxu0 0.0
    %2347 = vmatpush1.msra.mxu0 0.0
    %2348 = vmatprep.subr.mxu0 0.0
    %2349 = vmatpush1.msra.mxu0 0.0
    %2350 = vmatprep.subr.mxu0 0.0
    %2351 = vmatpush1.msra.mxu0 0.0
    %2352 = vmatprep.subr.mxu0 0.0
    %2353 = vmatpush1.msra.mxu0 0.0
    %2354 = vmatprep.subr.mxu0 0.0
    %2355 = vmatpush1.msra.mxu0 0.0
    %2356 = vmatprep.subr.mxu0 0.0
    %2357 = vmatpush1.msra.mxu0 0.0
    %2358 = vmatprep.subr.mxu0 0.0
    %2359 = vmatpush1.msra.mxu0 0.0
    %2360 = vmatprep.subr.mxu0 0.0
    %2361 = vmatpush1.msra.mxu0 0.0
    %2362 = vmatprep.subr.mxu0 0.0
    %2363 = vmatpush1.msra.mxu0 0.0
    %2364 = vmatprep.subr.mxu0 0.0
    %2365 = vmatpush1.msra.mxu0 0.0
    %2366 = vmatprep.subr.mxu0 0.0
    %2367 = vmatpush1.msra.mxu0 0.0
    %2368 = vmatprep.subr.mxu0 0.0
    %2369 = vmatpush1.msra.mxu0 0.0
    %2370 = vmatprep.subr.mxu0 0.0
    %2371 = vmatpush1.msra.mxu0 0.0
    %2372 = vmatprep.subr.mxu0 0.0
    %2373 = vmatpush1.msra.mxu0 0.0
    %2374 = vmatprep.subr.mxu0 0.0
    %2375 = vmatpush1.msra.mxu0 0.0
    %2376 = vmatprep.subr.mxu0 0.0
    %2377 = vmatpush1.msra.mxu0 0.0
    %2378 = vmatprep.subr.mxu0 0.0
    %2379 = vmatpush1.msra.mxu0 0.0
    %2380 = vmatprep.subr.mxu0 0.0
    %2381 = vmatpush1.msra.mxu0 0.0
    %2382 = vmatprep.subr.mxu0 0.0
    %2383 = vmatpush1.msra.mxu0 0.0
    %2384 = vmatprep.subr.mxu0 0.0
    %2385 = vmatpush1.msra.mxu0 0.0
    %2386 = vmatprep.subr.mxu0 0.0
    %2387 = vmatpush1.msra.mxu0 0.0
    %2388 = vmatprep.subr.mxu0 0.0
    %2389 = vmatpush1.msra.mxu0 0.0
    %2390 = vmatprep.subr.mxu0 0.0
    %2391 = vmatpush1.msra.mxu0 0.0
    %2392 = vmatprep.subr.mxu0 0.0
    %2393 = vmatpush1.msra.mxu0 0.0
    %2394 = vmatprep.mubr.f32.mxu0 0.0
    %2395 = vmatmul.mubr.f32.gmra.mrb[0].mxu0 %v2312
    %v2396 = vpop.f32.mrb[0].mxu0
    %v2397 = vadd.f32 0.0, %v2396
    %v2398 = vpop.f32.mrb[0].mxu0
    %2399 = vmatprep.mubr.f32.mxu0 0.0
    %2400 = vmatmul.mubr.f32.gmra.mrb[0].mxu0 %v2314
    %v2401 = vpop.f32.mrb[0].mxu0
    %v2402 = vadd.f32 0.0, %v2401
    %v2403 = vpop.f32.mrb[0].mxu0
    %2404 = vmatprep.mubr.f32.mxu0 0.0
    %2405 = vmatmul.mubr.f32.gmra.mrb[0].mxu0 %v2316
    %v2406 = vpop.f32.mrb[0].mxu0
    %v2407 = vadd.f32 0.0, %v2406
    %v2408 = vpop.f32.mrb[0].mxu0
    %2409 = vmatprep.mubr.f32.mxu0 0.0
    %2410 = vmatmul.mubr.f32.gmra.mrb[0].mxu0 %v2318
    %v2411 = vpop.f32.mrb[0].mxu0
    %v2412 = vadd.f32 0.0, %v2411
    %v2413 = vpop.f32.mrb[0].mxu0
    %2414 = vmatprep.mubr.f32.mxu0 0.0
    %2415 = vmatmul.mubr.f32.gmra.mrb[0].mxu0 %v2320
    %v2416 = vpop.f32.mrb[0].mxu0
    %v2417 = vadd.f32 0.0, %v2416
    %v2418 = vpop.f32.mrb[0].mxu0
    %2419 = vmatprep.mubr.f32.mxu0 0.0
    %2420 = vmatmul.mubr.f32.gmra.mrb[0].mxu0 %v2322
    %v2421 = vpop.f32.mrb[0].mxu0
    %v2422 = vadd.f32 0.0, %v2421
    %v2423 = vpop.f32.mrb[0].mxu0
    %2424 = vmatprep.mubr.f32.mxu0 0.0
    %2425 = vmatmul.mubr.f32.gmra.mrb[0].mxu0 %v2324
    %v2426 = vpop.f32.mrb[0].mxu0
    %v2427 = vadd.f32 0.0, %v2426
    %v2428 = vpop.f32.mrb[0].mxu0
    %2429 = vmatprep.mubr.f32.mxu0 0.0
    %2430 = vmatmul.mubr.f32.gmra.mrb[0].mxu0 %v2326
    %v2431 = vpop.f32.mrb[0].mxu0
    %v2432 = vadd.f32 0.0, %v2431
    %v2433 = vpop.f32.mrb[0].mxu0
    %2434 = vmatprep.mubr.f32.mxu0 0.0
    %2435 = vmatmul.mubr.f32.gmra.mrb[0].mxu0 %v2328
    %v2436 = vpop.f32.mrb[0].mxu0
    %v2437 = vadd.f32 0.0, %v2436
    %v2438 = vpop.f32.mrb[0].mxu0
    %2439 = vdwg.mxu0
    %v2440 = vadd.f32 %v2278, %v2397
    %v2441 = vadd.f32 %v2279, %v2402
    %v2442 = vadd.f32 %v2280, %v2407
    %v2443 = vadd.f32 %v2281, %v2412
    %v2444 = vadd.f32 %v2282, %v2417
    %v2445 = vadd.f32 %v2283, %v2422
    %v2446 = vadd.f32 %v2284, %v2427
    %v2447 = vadd.f32 %v2285, %v2432
    %v2448 = vadd.f32 %v2286, %v2437
    %v2449 = vld [vmem:[%s2 + $0xe0] sm:$0xff]
    %v2450 = vld [vmem:[%s2 + $0xe8] sm:$0xff]
    %v2451 = vld [vmem:[%s2 + $0xf0] sm:$0xff]
    %v2452 = vld [vmem:[%s2 + $0xf8] sm:$0xff]
    %vm2453 = vcmask 1040384
    %v2454 = vrot.slane %v1333, 7
    %v2455 = vrot.slane %v1334, 7
    %v2456 = vsel %vm2453, %v2454, %v2455
    %v2457 = vrot.slane %v1335, 7
    %v2458 = vsel %vm2453, %v2455, %v2457
    %v2459 = vrot.slane %v1336, 7
    %v2460 = vsel %vm2453, %v2457, %v2459
    %v2461 = vrot.slane %v1337, 7
    %v2462 = vsel %vm2453, %v2459, %v2461
    %v2463 = vrot.slane %v1338, 7
    %v2464 = vsel %vm2453, %v2461, %v2463
    %v2465 = vrot.slane %v1339, 7
    %v2466 = vsel %vm2453, %v2463, %v2465
    %v2467 = vrot.slane %v1340, 7
    %v2468 = vsel %vm2453, %v2465, %v2467
    %v2469 = vrot.slane %v1341, 7
    %v2470 = vsel %vm2453, %v2467, %v2469
    %v2471 = vrot.slane %v1342, 7
    %v2472 = vsel %vm2453, %v2469, %v2471
    %v2473 = vsel %vm1354, %v2456, 0
    %v2475 = vsel %vm1354, %v2458, 0
    %v2477 = vsel %vm1354, %v2460, 0
    %v2479 = vsel %vm1354, %v2462, 0
    %v2481 = vsel %vm1354, %v2464, 0
    %v2483 = vsel %vm1354, %v2466, 0
    %v2485 = vsel %vm1354, %v2468, 0
    %v2487 = vsel %vm1354, %v2470, 0
    %v2489 = vsel %vm1354, %v2472, 0
    %2491 = vmatprep.subr.mxu0 0.0
    %2492 = vmatpush1.msra.mxu0 %v2449
    %2493 = vmatprep.subr.mxu0 0.0
    %2494 = vmatpush1.msra.mxu0 %v2450
    %2495 = vmatprep.subr.mxu0 0.0
    %2496 = vmatpush1.msra.mxu0 %v2451
    %2497 = vmatprep.subr.mxu0 0.0
    %2498 = vmatpush1.msra.mxu0 %v2452
    %2499 = vmatprep.subr.mxu0 0.0
    %2500 = vmatpush1.msra.mxu0 0.0
    %2501 = vmatprep.subr.mxu0 0.0
    %2502 = vmatpush1.msra.mxu0 0.0
    %2503 = vmatprep.subr.mxu0 0.0
    %2504 = vmatpush1.msra.mxu0 0.0
    %2505 = vmatprep.subr.mxu0 0.0
    %2506 = vmatpush1.msra.mxu0 0.0
    %2507 = vmatprep.subr.mxu0 0.0
    %2508 = vmatpush1.msra.mxu0 0.0
    %2509 = vmatprep.subr.mxu0 0.0
    %2510 = vmatpush1.msra.mxu0 0.0
    %2511 = vmatprep.subr.mxu0 0.0
    %2512 = vmatpush1.msra.mxu0 0.0
    %2513 = vmatprep.subr.mxu0 0.0
    %2514 = vmatpush1.msra.mxu0 0.0
    %2515 = vmatprep.subr.mxu0 0.0
    %2516 = vmatpush1.msra.mxu0 0.0
    %2517 = vmatprep.subr.mxu0 0.0
    %2518 = vmatpush1.msra.mxu0 0.0
    %2519 = vmatprep.subr.mxu0 0.0
    %2520 = vmatpush1.msra.mxu0 0.0
    %2521 = vmatprep.subr.mxu0 0.0
    %2522 = vmatpush1.msra.mxu0 0.0
    %2523 = vmatprep.subr.mxu0 0.0
    %2524 = vmatpush1.msra.mxu0 0.0
    %2525 = vmatprep.subr.mxu0 0.0
    %2526 = vmatpush1.msra.mxu0 0.0
    %2527 = vmatprep.subr.mxu0 0.0
    %2528 = vmatpush1.msra.mxu0 0.0
    %2529 = vmatprep.subr.mxu0 0.0
    %2530 = vmatpush1.msra.mxu0 0.0
    %2531 = vmatprep.subr.mxu0 0.0
    %2532 = vmatpush1.msra.mxu0 0.0
    %2533 = vmatprep.subr.mxu0 0.0
    %2534 = vmatpush1.msra.mxu0 0.0
    %2535 = vmatprep.subr.mxu0 0.0
    %2536 = vmatpush1.msra.mxu0 0.0
    %2537 = vmatprep.subr.mxu0 0.0
    %2538 = vmatpush1.msra.mxu0 0.0
    %2539 = vmatprep.subr.mxu0 0.0
    %2540 = vmatpush1.msra.mxu0 0.0
    %2541 = vmatprep.subr.mxu0 0.0
    %2542 = vmatpush1.msra.mxu0 0.0
    %2543 = vmatprep.subr.mxu0 0.0
    %2544 = vmatpush1.msra.mxu0 0.0
    %2545 = vmatprep.subr.mxu0 0.0
    %2546 = vmatpush1.msra.mxu0 0.0
    %2547 = vmatprep.subr.mxu0 0.0
    %2548 = vmatpush1.msra.mxu0 0.0
    %2549 = vmatprep.subr.mxu0 0.0
    %2550 = vmatpush1.msra.mxu0 0.0
    %2551 = vmatprep.subr.mxu0 0.0
    %2552 = vmatpush1.msra.mxu0 0.0
    %2553 = vmatprep.subr.mxu0 0.0
    %2554 = vmatpush1.msra.mxu0 0.0
    %2555 = vmatprep.mubr.f32.mxu0 0.0
    %2556 = vmatmul.mubr.f32.gmra.mrb[0].mxu0 %v2473
    %v2557 = vpop.f32.mrb[0].mxu0
    %v2558 = vadd.f32 0.0, %v2557
    %v2559 = vpop.f32.mrb[0].mxu0
    %2560 = vmatprep.mubr.f32.mxu0 0.0
    %2561 = vmatmul.mubr.f32.gmra.mrb[0].mxu0 %v2475
    %v2562 = vpop.f32.mrb[0].mxu0
    %v2563 = vadd.f32 0.0, %v2562
    %v2564 = vpop.f32.mrb[0].mxu0
    %2565 = vmatprep.mubr.f32.mxu0 0.0
    %2566 = vmatmul.mubr.f32.gmra.mrb[0].mxu0 %v2477
    %v2567 = vpop.f32.mrb[0].mxu0
    %v2568 = vadd.f32 0.0, %v2567
    %v2569 = vpop.f32.mrb[0].mxu0
    %2570 = vmatprep.mubr.f32.mxu0 0.0
    %2571 = vmatmul.mubr.f32.gmra.mrb[0].mxu0 %v2479
    %v2572 = vpop.f32.mrb[0].mxu0
    %v2573 = vadd.f32 0.0, %v2572
    %v2574 = vpop.f32.mrb[0].mxu0
    %2575 = vmatprep.mubr.f32.mxu0 0.0
    %2576 = vmatmul.mubr.f32.gmra.mrb[0].mxu0 %v2481
    %v2577 = vpop.f32.mrb[0].mxu0
    %v2578 = vadd.f32 0.0, %v2577
    %v2579 = vpop.f32.mrb[0].mxu0
    %2580 = vmatprep.mubr.f32.mxu0 0.0
    %2581 = vmatmul.mubr.f32.gmra.mrb[0].mxu0 %v2483
    %v2582 = vpop.f32.mrb[0].mxu0
    %v2583 = vadd.f32 0.0, %v2582
    %v2584 = vpop.f32.mrb[0].mxu0
    %2585 = vmatprep.mubr.f32.mxu0 0.0
    %2586 = vmatmul.mubr.f32.gmra.mrb[0].mxu0 %v2485
    %v2587 = vpop.f32.mrb[0].mxu0
    %v2588 = vadd.f32 0.0, %v2587
    %v2589 = vpop.f32.mrb[0].mxu0
    %2590 = vmatprep.mubr.f32.mxu0 0.0
    %2591 = vmatmul.mubr.f32.gmra.mrb[0].mxu0 %v2487
    %v2592 = vpop.f32.mrb[0].mxu0
    %v2593 = vadd.f32 0.0, %v2592
    %v2594 = vpop.f32.mrb[0].mxu0
    %2595 = vmatprep.mubr.f32.mxu0 0.0
    %2596 = vmatmul.mubr.f32.gmra.mrb[0].mxu0 %v2489
    %v2597 = vpop.f32.mrb[0].mxu0
    %v2598 = vadd.f32 0.0, %v2597
    %v2599 = vpop.f32.mrb[0].mxu0
    %2600 = vdwg.mxu0
    %v2601 = vadd.f32 %v2440, %v2558
    %v2602 = vadd.f32 %v2441, %v2563
    %v2603 = vadd.f32 %v2442, %v2568
    %v2604 = vadd.f32 %v2443, %v2573
    %v2605 = vadd.f32 %v2444, %v2578
    %v2606 = vadd.f32 %v2445, %v2583
    %v2607 = vadd.f32 %v2446, %v2588
    %v2608 = vadd.f32 %v2447, %v2593
    %v2609 = vadd.f32 %v2448, %v2598
    %v2610 = vld [vmem:[%s2 + $0x100] sm:$0xff]
    %v2611 = vld [vmem:[%s2 + $0x108] sm:$0xff]
    %v2612 = vld [vmem:[%s2 + $0x110] sm:$0xff]
    %v2613 = vld [vmem:[%s2 + $0x118] sm:$0xff]
    %v2614 = vsel %vm1354, %v1342, 0
    %2616 = vmatprep.subr.mxu0 0.0
    %2617 = vmatpush1.msra.mxu0 %v2610
    %2618 = vmatprep.subr.mxu0 0.0
    %2619 = vmatpush1.msra.mxu0 %v2611
    %2620 = vmatprep.subr.mxu0 0.0
    %2621 = vmatpush1.msra.mxu0 %v2612
    %2622 = vmatprep.subr.mxu0 0.0
    %2623 = vmatpush1.msra.mxu0 %v2613
    %2624 = vmatprep.subr.mxu0 0.0
    %2625 = vmatpush1.msra.mxu0 0.0
    %2626 = vmatprep.subr.mxu0 0.0
    %2627 = vmatpush1.msra.mxu0 0.0
    %2628 = vmatprep.subr.mxu0 0.0
    %2629 = vmatpush1.msra.mxu0 0.0
    %2630 = vmatprep.subr.mxu0 0.0
    %2631 = vmatpush1.msra.mxu0 0.0
    %2632 = vmatprep.subr.mxu0 0.0
    %2633 = vmatpush1.msra.mxu0 0.0
    %2634 = vmatprep.subr.mxu0 0.0
    %2635 = vmatpush1.msra.mxu0 0.0
    %2636 = vmatprep.subr.mxu0 0.0
    %2637 = vmatpush1.msra.mxu0 0.0
    %2638 = vmatprep.subr.mxu0 0.0
    %2639 = vmatpush1.msra.mxu0 0.0
    %2640 = vmatprep.subr.mxu0 0.0
    %2641 = vmatpush1.msra.mxu0 0.0
    %2642 = vmatprep.subr.mxu0 0.0
    %2643 = vmatpush1.msra.mxu0 0.0
    %2644 = vmatprep.subr.mxu0 0.0
    %2645 = vmatpush1.msra.mxu0 0.0
    %2646 = vmatprep.subr.mxu0 0.0
    %2647 = vmatpush1.msra.mxu0 0.0
    %2648 = vmatprep.subr.mxu0 0.0
    %2649 = vmatpush1.msra.mxu0 0.0
    %2650 = vmatprep.subr.mxu0 0.0
    %2651 = vmatpush1.msra.mxu0 0.0
    %2652 = vmatprep.subr.mxu0 0.0
    %2653 = vmatpush1.msra.mxu0 0.0
    %2654 = vmatprep.subr.mxu0 0.0
    %2655 = vmatpush1.msra.mxu0 0.0
    %2656 = vmatprep.subr.mxu0 0.0
    %2657 = vmatpush1.msra.mxu0 0.0
    %2658 = vmatprep.subr.mxu0 0.0
    %2659 = vmatpush1.msra.mxu0 0.0
    %2660 = vmatprep.subr.mxu0 0.0
    %2661 = vmatpush1.msra.mxu0 0.0
    %2662 = vmatprep.subr.mxu0 0.0
    %2663 = vmatpush1.msra.mxu0 0.0
    %2664 = vmatprep.subr.mxu0 0.0
    %2665 = vmatpush1.msra.mxu0 0.0
    %2666 = vmatprep.subr.mxu0 0.0
    %2667 = vmatpush1.msra.mxu0 0.0
    %2668 = vmatprep.subr.mxu0 0.0
    %2669 = vmatpush1.msra.mxu0 0.0
    %2670 = vmatprep.subr.mxu0 0.0
    %2671 = vmatpush1.msra.mxu0 0.0
    %2672 = vmatprep.subr.mxu0 0.0
    %2673 = vmatpush1.msra.mxu0 0.0
    %2674 = vmatprep.subr.mxu0 0.0
    %2675 = vmatpush1.msra.mxu0 0.0
    %2676 = vmatprep.subr.mxu0 0.0
    %2677 = vmatpush1.msra.mxu0 0.0
    %2678 = vmatprep.subr.mxu0 0.0
    %2679 = vmatpush1.msra.mxu0 0.0
    %2680 = vmatprep.mubr.f32.mxu0 0.0
    %2681 = vmatmul.mubr.f32.gmra.mrb[0].mxu0 %v1359
    %v2682 = vpop.f32.mrb[0].mxu0
    %v2683 = vadd.f32 0.0, %v2682
    %v2684 = vpop.f32.mrb[0].mxu0
    %2685 = vmatprep.mubr.f32.mxu0 0.0
    %2686 = vmatmul.mubr.f32.gmra.mrb[0].mxu0 %v1362
    %v2687 = vpop.f32.mrb[0].mxu0
    %v2688 = vadd.f32 0.0, %v2687
    %v2689 = vpop.f32.mrb[0].mxu0
    %2690 = vmatprep.mubr.f32.mxu0 0.0
    %2691 = vmatmul.mubr.f32.gmra.mrb[0].mxu0 %v1365
    %v2692 = vpop.f32.mrb[0].mxu0
    %v2693 = vadd.f32 0.0, %v2692
    %v2694 = vpop.f32.mrb[0].mxu0
    %2695 = vmatprep.mubr.f32.mxu0 0.0
    %2696 = vmatmul.mubr.f32.gmra.mrb[0].mxu0 %v1368
    %v2697 = vpop.f32.mrb[0].mxu0
    %v2698 = vadd.f32 0.0, %v2697
    %v2699 = vpop.f32.mrb[0].mxu0
    %2700 = vmatprep.mubr.f32.mxu0 0.0
    %2701 = vmatmul.mubr.f32.gmra.mrb[0].mxu0 %v1371
    %v2702 = vpop.f32.mrb[0].mxu0
    %v2703 = vadd.f32 0.0, %v2702
    %v2704 = vpop.f32.mrb[0].mxu0
    %2705 = vmatprep.mubr.f32.mxu0 0.0
    %2706 = vmatmul.mubr.f32.gmra.mrb[0].mxu0 %v1374
    %v2707 = vpop.f32.mrb[0].mxu0
    %v2708 = vadd.f32 0.0, %v2707
    %v2709 = vpop.f32.mrb[0].mxu0
    %2710 = vmatprep.mubr.f32.mxu0 0.0
    %2711 = vmatmul.mubr.f32.gmra.mrb[0].mxu0 %v1377
    %v2712 = vpop.f32.mrb[0].mxu0
    %v2713 = vadd.f32 0.0, %v2712
    %v2714 = vpop.f32.mrb[0].mxu0
    %2715 = vmatprep.mubr.f32.mxu0 0.0
    %2716 = vmatmul.mubr.f32.gmra.mrb[0].mxu0 %v1380
    %v2717 = vpop.f32.mrb[0].mxu0
    %v2718 = vadd.f32 0.0, %v2717
    %v2719 = vpop.f32.mrb[0].mxu0
    %2720 = vmatprep.mubr.f32.mxu0 0.0
    %2721 = vmatmul.mubr.f32.gmra.mrb[0].mxu0 %v2614
    %v2722 = vpop.f32.mrb[0].mxu0
    %v2723 = vadd.f32 0.0, %v2722
    %v2724 = vpop.f32.mrb[0].mxu0
    %2725 = vdwg.mxu0
    %v2726 = vadd.f32 %v2601, %v2683
    %v2727 = vadd.f32 %v2602, %v2688
    %v2728 = vadd.f32 %v2603, %v2693
    %v2729 = vadd.f32 %v2604, %v2698
    %v2730 = vadd.f32 %v2605, %v2703
    %v2731 = vadd.f32 %v2606, %v2708
    %v2732 = vadd.f32 %v2607, %v2713
    %v2733 = vadd.f32 %v2608, %v2718
    %v2734 = vadd.f32 %v2609, %v2723
    %v2735 = vld [vmem:[%s2 + $0x120] sm:$0xff]
    %v2736 = vld [vmem:[%s2 + $0x128] sm:$0xff]
    %v2737 = vld [vmem:[%s2 + $0x130] sm:$0xff]
    %v2738 = vld [vmem:[%s2 + $0x138] sm:$0xff]
    %v2739 = vrot.slane %v1342, 1
    %v2740 = vsel %vm1496, %v1512, %v2739
    %v2741 = vsel %vm1354, %v2740, 0
    %v2743 = vsel %vm1354, %v2739, 0
    %2745 = vmatprep.subr.mxu0 0.0
    %2746 = vmatpush1.msra.mxu0 %v2735
    %2747 = vmatprep.subr.mxu0 0.0
    %2748 = vmatpush1.msra.mxu0 %v2736
    %2749 = vmatprep.subr.mxu0 0.0
    %2750 = vmatpush1.msra.mxu0 %v2737
    %2751 = vmatprep.subr.mxu0 0.0
    %2752 = vmatpush1.msra.mxu0 %v2738
    %2753 = vmatprep.subr.mxu0 0.0
    %2754 = vmatpush1.msra.mxu0 0.0
    %2755 = vmatprep.subr.mxu0 0.0
    %2756 = vmatpush1.msra.mxu0 0.0
    %2757 = vmatprep.subr.mxu0 0.0
    %2758 = vmatpush1.msra.mxu0 0.0
    %2759 = vmatprep.subr.mxu0 0.0
    %2760 = vmatpush1.msra.mxu0 0.0
    %2761 = vmatprep.subr.mxu0 0.0
    %2762 = vmatpush1.msra.mxu0 0.0
    %2763 = vmatprep.subr.mxu0 0.0
    %2764 = vmatpush1.msra.mxu0 0.0
    %2765 = vmatprep.subr.mxu0 0.0
    %2766 = vmatpush1.msra.mxu0 0.0
    %2767 = vmatprep.subr.mxu0 0.0
    %2768 = vmatpush1.msra.mxu0 0.0
    %2769 = vmatprep.subr.mxu0 0.0
    %2770 = vmatpush1.msra.mxu0 0.0
    %2771 = vmatprep.subr.mxu0 0.0
    %2772 = vmatpush1.msra.mxu0 0.0
    %2773 = vmatprep.subr.mxu0 0.0
    %2774 = vmatpush1.msra.mxu0 0.0
    %2775 = vmatprep.subr.mxu0 0.0
    %2776 = vmatpush1.msra.mxu0 0.0
    %2777 = vmatprep.subr.mxu0 0.0
    %2778 = vmatpush1.msra.mxu0 0.0
    %2779 = vmatprep.subr.mxu0 0.0
    %2780 = vmatpush1.msra.mxu0 0.0
    %2781 = vmatprep.subr.mxu0 0.0
    %2782 = vmatpush1.msra.mxu0 0.0
    %2783 = vmatprep.subr.mxu0 0.0
    %2784 = vmatpush1.msra.mxu0 0.0
    %2785 = vmatprep.subr.mxu0 0.0
    %2786 = vmatpush1.msra.mxu0 0.0
    %2787 = vmatprep.subr.mxu0 0.0
    %2788 = vmatpush1.msra.mxu0 0.0
    %2789 = vmatprep.subr.mxu0 0.0
    %2790 = vmatpush1.msra.mxu0 0.0
    %2791 = vmatprep.subr.mxu0 0.0
    %2792 = vmatpush1.msra.mxu0 0.0
    %2793 = vmatprep.subr.mxu0 0.0
    %2794 = vmatpush1.msra.mxu0 0.0
    %2795 = vmatprep.subr.mxu0 0.0
    %2796 = vmatpush1.msra.mxu0 0.0
    %2797 = vmatprep.subr.mxu0 0.0
    %2798 = vmatpush1.msra.mxu0 0.0
    %2799 = vmatprep.subr.mxu0 0.0
    %2800 = vmatpush1.msra.mxu0 0.0
    %2801 = vmatprep.subr.mxu0 0.0
    %2802 = vmatpush1.msra.mxu0 0.0
    %2803 = vmatprep.subr.mxu0 0.0
    %2804 = vmatpush1.msra.mxu0 0.0
    %2805 = vmatprep.subr.mxu0 0.0
    %2806 = vmatpush1.msra.mxu0 0.0
    %2807 = vmatprep.subr.mxu0 0.0
    %2808 = vmatpush1.msra.mxu0 0.0
    %2809 = vmatprep.mubr.f32.mxu0 0.0
    %2810 = vmatmul.mubr.f32.gmra.mrb[0].mxu0 %v1516
    %v2811 = vpop.f32.mrb[0].mxu0
    %v2812 = vadd.f32 0.0, %v2811
    %v2813 = vpop.f32.mrb[0].mxu0
    %2814 = vmatprep.mubr.f32.mxu0 0.0
    %2815 = vmatmul.mubr.f32.gmra.mrb[0].mxu0 %v1518
    %v2816 = vpop.f32.mrb[0].mxu0
    %v2817 = vadd.f32 0.0, %v2816
    %v2818 = vpop.f32.mrb[0].mxu0
    %2819 = vmatprep.mubr.f32.mxu0 0.0
    %2820 = vmatmul.mubr.f32.gmra.mrb[0].mxu0 %v1520
    %v2821 = vpop.f32.mrb[0].mxu0
    %v2822 = vadd.f32 0.0, %v2821
    %v2823 = vpop.f32.mrb[0].mxu0
    %2824 = vmatprep.mubr.f32.mxu0 0.0
    %2825 = vmatmul.mubr.f32.gmra.mrb[0].mxu0 %v1522
    %v2826 = vpop.f32.mrb[0].mxu0
    %v2827 = vadd.f32 0.0, %v2826
    %v2828 = vpop.f32.mrb[0].mxu0
    %2829 = vmatprep.mubr.f32.mxu0 0.0
    %2830 = vmatmul.mubr.f32.gmra.mrb[0].mxu0 %v1524
    %v2831 = vpop.f32.mrb[0].mxu0
    %v2832 = vadd.f32 0.0, %v2831
    %v2833 = vpop.f32.mrb[0].mxu0
    %2834 = vmatprep.mubr.f32.mxu0 0.0
    %2835 = vmatmul.mubr.f32.gmra.mrb[0].mxu0 %v1526
    %v2836 = vpop.f32.mrb[0].mxu0
    %v2837 = vadd.f32 0.0, %v2836
    %v2838 = vpop.f32.mrb[0].mxu0
    %2839 = vmatprep.mubr.f32.mxu0 0.0
    %2840 = vmatmul.mubr.f32.gmra.mrb[0].mxu0 %v1528
    %v2841 = vpop.f32.mrb[0].mxu0
    %v2842 = vadd.f32 0.0, %v2841
    %v2843 = vpop.f32.mrb[0].mxu0
    %2844 = vmatprep.mubr.f32.mxu0 0.0
    %2845 = vmatmul.mubr.f32.gmra.mrb[0].mxu0 %v2741
    %v2846 = vpop.f32.mrb[0].mxu0
    %v2847 = vadd.f32 0.0, %v2846
    %v2848 = vpop.f32.mrb[0].mxu0
    %2849 = vmatprep.mubr.f32.mxu0 0.0
    %2850 = vmatmul.mubr.f32.gmra.mrb[0].mxu0 %v2743
    %v2851 = vpop.f32.mrb[0].mxu0
    %v2852 = vadd.f32 0.0, %v2851
    %v2853 = vpop.f32.mrb[0].mxu0
    %2854 = vdwg.mxu0
    %v2855 = vadd.f32 %v2726, %v2812
    %v2856 = vadd.f32 %v2727, %v2817
    %v2857 = vadd.f32 %v2728, %v2822
    %v2858 = vadd.f32 %v2729, %v2827
    %v2859 = vadd.f32 %v2730, %v2832
    %v2860 = vadd.f32 %v2731, %v2837
    %v2861 = vadd.f32 %v2732, %v2842
    %v2862 = vadd.f32 %v2733, %v2847
    %v2863 = vadd.f32 %v2734, %v2852
    %v2864 = vld [vmem:[%s2 + $0x140] sm:$0xff]
    %v2865 = vld [vmem:[%s2 + $0x148] sm:$0xff]
    %v2866 = vld [vmem:[%s2 + $0x150] sm:$0xff]
    %v2867 = vld [vmem:[%s2 + $0x158] sm:$0xff]
    %v2868 = vrot.slane %v1342, 2
    %v2869 = vsel %vm1655, %v1671, %v2868
    %v2870 = vsel %vm1354, %v2869, 0
    %v2872 = vsel %vm1354, %v2868, 0
    %2874 = vmatprep.subr.mxu0 0.0
    %2875 = vmatpush1.msra.mxu0 %v2864
    %2876 = vmatprep.subr.mxu0 0.0
    %2877 = vmatpush1.msra.mxu0 %v2865
    %2878 = vmatprep.subr.mxu0 0.0
    %2879 = vmatpush1.msra.mxu0 %v2866
    %2880 = vmatprep.subr.mxu0 0.0
    %2881 = vmatpush1.msra.mxu0 %v2867
    %2882 = vmatprep.subr.mxu0 0.0
    %2883 = vmatpush1.msra.mxu0 0.0
    %2884 = vmatprep.subr.mxu0 0.0
    %2885 = vmatpush1.msra.mxu0 0.0
    %2886 = vmatprep.subr.mxu0 0.0
    %2887 = vmatpush1.msra.mxu0 0.0
    %2888 = vmatprep.subr.mxu0 0.0
    %2889 = vmatpush1.msra.mxu0 0.0
    %2890 = vmatprep.subr.mxu0 0.0
    %2891 = vmatpush1.msra.mxu0 0.0
    %2892 = vmatprep.subr.mxu0 0.0
    %2893 = vmatpush1.msra.mxu0 0.0
    %2894 = vmatprep.subr.mxu0 0.0
    %2895 = vmatpush1.msra.mxu0 0.0
    %2896 = vmatprep.subr.mxu0 0.0
    %2897 = vmatpush1.msra.mxu0 0.0
    %2898 = vmatprep.subr.mxu0 0.0
    %2899 = vmatpush1.msra.mxu0 0.0
    %2900 = vmatprep.subr.mxu0 0.0
    %2901 = vmatpush1.msra.mxu0 0.0
    %2902 = vmatprep.subr.mxu0 0.0
    %2903 = vmatpush1.msra.mxu0 0.0
    %2904 = vmatprep.subr.mxu0 0.0
    %2905 = vmatpush1.msra.mxu0 0.0
    %2906 = vmatprep.subr.mxu0 0.0
    %2907 = vmatpush1.msra.mxu0 0.0
    %2908 = vmatprep.subr.mxu0 0.0
    %2909 = vmatpush1.msra.mxu0 0.0
    %2910 = vmatprep.subr.mxu0 0.0
    %2911 = vmatpush1.msra.mxu0 0.0
    %2912 = vmatprep.subr.mxu0 0.0
    %2913 = vmatpush1.msra.mxu0 0.0
    %2914 = vmatprep.subr.mxu0 0.0
    %2915 = vmatpush1.msra.mxu0 0.0
    %2916 = vmatprep.subr.mxu0 0.0
    %2917 = vmatpush1.msra.mxu0 0.0
    %2918 = vmatprep.subr.mxu0 0.0
    %2919 = vmatpush1.msra.mxu0 0.0
    %2920 = vmatprep.subr.mxu0 0.0
    %2921 = vmatpush1.msra.mxu0 0.0
    %2922 = vmatprep.subr.mxu0 0.0
    %2923 = vmatpush1.msra.mxu0 0.0
    %2924 = vmatprep.subr.mxu0 0.0
    %2925 = vmatpush1.msra.mxu0 0.0
    %2926 = vmatprep.subr.mxu0 0.0
    %2927 = vmatpush1.msra.mxu0 0.0
    %2928 = vmatprep.subr.mxu0 0.0
    %2929 = vmatpush1.msra.mxu0 0.0
    %2930 = vmatprep.subr.mxu0 0.0
    %2931 = vmatpush1.msra.mxu0 0.0
    %2932 = vmatprep.subr.mxu0 0.0
    %2933 = vmatpush1.msra.mxu0 0.0
    %2934 = vmatprep.subr.mxu0 0.0
    %2935 = vmatpush1.msra.mxu0 0.0
    %2936 = vmatprep.subr.mxu0 0.0
    %2937 = vmatpush1.msra.mxu0 0.0
    %2938 = vmatprep.mubr.f32.mxu0 0.0
    %2939 = vmatmul.mubr.f32.gmra.mrb[0].mxu0 %v1675
    %v2940 = vpop.f32.mrb[0].mxu0
    %v2941 = vadd.f32 0.0, %v2940
    %v2942 = vpop.f32.mrb[0].mxu0
    %2943 = vmatprep.mubr.f32.mxu0 0.0
    %2944 = vmatmul.mubr.f32.gmra.mrb[0].mxu0 %v1677
    %v2945 = vpop.f32.mrb[0].mxu0
    %v2946 = vadd.f32 0.0, %v2945
    %v2947 = vpop.f32.mrb[0].mxu0
    %2948 = vmatprep.mubr.f32.mxu0 0.0
    %2949 = vmatmul.mubr.f32.gmra.mrb[0].mxu0 %v1679
    %v2950 = vpop.f32.mrb[0].mxu0
    %v2951 = vadd.f32 0.0, %v2950
    %v2952 = vpop.f32.mrb[0].mxu0
    %2953 = vmatprep.mubr.f32.mxu0 0.0
    %2954 = vmatmul.mubr.f32.gmra.mrb[0].mxu0 %v1681
    %v2955 = vpop.f32.mrb[0].mxu0
    %v2956 = vadd.f32 0.0, %v2955
    %v2957 = vpop.f32.mrb[0].mxu0
    %2958 = vmatprep.mubr.f32.mxu0 0.0
    %2959 = vmatmul.mubr.f32.gmra.mrb[0].mxu0 %v1683
    %v2960 = vpop.f32.mrb[0].mxu0
    %v2961 = vadd.f32 0.0, %v2960
    %v2962 = vpop.f32.mrb[0].mxu0
    %2963 = vmatprep.mubr.f32.mxu0 0.0
    %2964 = vmatmul.mubr.f32.gmra.mrb[0].mxu0 %v1685
    %v2965 = vpop.f32.mrb[0].mxu0
    %v2966 = vadd.f32 0.0, %v2965
    %v2967 = vpop.f32.mrb[0].mxu0
    %2968 = vmatprep.mubr.f32.mxu0 0.0
    %2969 = vmatmul.mubr.f32.gmra.mrb[0].mxu0 %v1687
    %v2970 = vpop.f32.mrb[0].mxu0
    %v2971 = vadd.f32 0.0, %v2970
    %v2972 = vpop.f32.mrb[0].mxu0
    %2973 = vmatprep.mubr.f32.mxu0 0.0
    %2974 = vmatmul.mubr.f32.gmra.mrb[0].mxu0 %v2870
    %v2975 = vpop.f32.mrb[0].mxu0
    %v2976 = vadd.f32 0.0, %v2975
    %v2977 = vpop.f32.mrb[0].mxu0
    %2978 = vmatprep.mubr.f32.mxu0 0.0
    %2979 = vmatmul.mubr.f32.gmra.mrb[0].mxu0 %v2872
    %v2980 = vpop.f32.mrb[0].mxu0
    %v2981 = vadd.f32 0.0, %v2980
    %v2982 = vpop.f32.mrb[0].mxu0
    %2983 = vdwg.mxu0
    %v2984 = vadd.f32 %v2855, %v2941
    %v2985 = vadd.f32 %v2856, %v2946
    %v2986 = vadd.f32 %v2857, %v2951
    %v2987 = vadd.f32 %v2858, %v2956
    %v2988 = vadd.f32 %v2859, %v2961
    %v2989 = vadd.f32 %v2860, %v2966
    %v2990 = vadd.f32 %v2861, %v2971
    %v2991 = vadd.f32 %v2862, %v2976
    %v2992 = vadd.f32 %v2863, %v2981
    %v2993 = vld [vmem:[%s2 + $0x160] sm:$0xff]
    %v2994 = vld [vmem:[%s2 + $0x168] sm:$0xff]
    %v2995 = vld [vmem:[%s2 + $0x170] sm:$0xff]
    %v2996 = vld [vmem:[%s2 + $0x178] sm:$0xff]
    %v2997 = vrot.slane %v1342, 3
    %v2998 = vsel %vm1814, %v1830, %v2997
    %v2999 = vsel %vm1354, %v2998, 0
    %v3001 = vsel %vm1354, %v2997, 0
    %3003 = vmatprep.subr.mxu0 0.0
    %3004 = vmatpush1.msra.mxu0 %v2993
    %3005 = vmatprep.subr.mxu0 0.0
    %3006 = vmatpush1.msra.mxu0 %v2994
    %3007 = vmatprep.subr.mxu0 0.0
    %3008 = vmatpush1.msra.mxu0 %v2995
    %3009 = vmatprep.subr.mxu0 0.0
    %3010 = vmatpush1.msra.mxu0 %v2996
    %3011 = vmatprep.subr.mxu0 0.0
    %3012 = vmatpush1.msra.mxu0 0.0
    %3013 = vmatprep.subr.mxu0 0.0
    %3014 = vmatpush1.msra.mxu0 0.0
    %3015 = vmatprep.subr.mxu0 0.0
    %3016 = vmatpush1.msra.mxu0 0.0
    %3017 = vmatprep.subr.mxu0 0.0
    %3018 = vmatpush1.msra.mxu0 0.0
    %3019 = vmatprep.subr.mxu0 0.0
    %3020 = vmatpush1.msra.mxu0 0.0
    %3021 = vmatprep.subr.mxu0 0.0
    %3022 = vmatpush1.msra.mxu0 0.0
    %3023 = vmatprep.subr.mxu0 0.0
    %3024 = vmatpush1.msra.mxu0 0.0
    %3025 = vmatprep.subr.mxu0 0.0
    %3026 = vmatpush1.msra.mxu0 0.0
    %3027 = vmatprep.subr.mxu0 0.0
    %3028 = vmatpush1.msra.mxu0 0.0
    %3029 = vmatprep.subr.mxu0 0.0
    %3030 = vmatpush1.msra.mxu0 0.0
    %3031 = vmatprep.subr.mxu0 0.0
    %3032 = vmatpush1.msra.mxu0 0.0
    %3033 = vmatprep.subr.mxu0 0.0
    %3034 = vmatpush1.msra.mxu0 0.0
    %3035 = vmatprep.subr.mxu0 0.0
    %3036 = vmatpush1.msra.mxu0 0.0
    %3037 = vmatprep.subr.mxu0 0.0
    %3038 = vmatpush1.msra.mxu0 0.0
    %3039 = vmatprep.subr.mxu0 0.0
    %3040 = vmatpush1.msra.mxu0 0.0
    %3041 = vmatprep.subr.mxu0 0.0
    %3042 = vmatpush1.msra.mxu0 0.0
    %3043 = vmatprep.subr.mxu0 0.0
    %3044 = vmatpush1.msra.mxu0 0.0
    %3045 = vmatprep.subr.mxu0 0.0
    %3046 = vmatpush1.msra.mxu0 0.0
    %3047 = vmatprep.subr.mxu0 0.0
    %3048 = vmatpush1.msra.mxu0 0.0
    %3049 = vmatprep.subr.mxu0 0.0
    %3050 = vmatpush1.msra.mxu0 0.0
    %3051 = vmatprep.subr.mxu0 0.0
    %3052 = vmatpush1.msra.mxu0 0.0
    %3053 = vmatprep.subr.mxu0 0.0
    %3054 = vmatpush1.msra.mxu0 0.0
    %3055 = vmatprep.subr.mxu0 0.0
    %3056 = vmatpush1.msra.mxu0 0.0
    %3057 = vmatprep.subr.mxu0 0.0
    %3058 = vmatpush1.msra.mxu0 0.0
    %3059 = vmatprep.subr.mxu0 0.0
    %3060 = vmatpush1.msra.mxu0 0.0
    %3061 = vmatprep.subr.mxu0 0.0
    %3062 = vmatpush1.msra.mxu0 0.0
    %3063 = vmatprep.subr.mxu0 0.0
    %3064 = vmatpush1.msra.mxu0 0.0
    %3065 = vmatprep.subr.mxu0 0.0
    %3066 = vmatpush1.msra.mxu0 0.0
    %3067 = vmatprep.mubr.f32.mxu0 0.0
    %3068 = vmatmul.mubr.f32.gmra.mrb[0].mxu0 %v1834
    %v3069 = vpop.f32.mrb[0].mxu0
    %v3070 = vadd.f32 0.0, %v3069
    %v3071 = vpop.f32.mrb[0].mxu0
    %3072 = vmatprep.mubr.f32.mxu0 0.0
    %3073 = vmatmul.mubr.f32.gmra.mrb[0].mxu0 %v1836
    %v3074 = vpop.f32.mrb[0].mxu0
    %v3075 = vadd.f32 0.0, %v3074
    %v3076 = vpop.f32.mrb[0].mxu0
    %3077 = vmatprep.mubr.f32.mxu0 0.0
    %3078 = vmatmul.mubr.f32.gmra.mrb[0].mxu0 %v1838
    %v3079 = vpop.f32.mrb[0].mxu0
    %v3080 = vadd.f32 0.0, %v3079
    %v3081 = vpop.f32.mrb[0].mxu0
    %3082 = vmatprep.mubr.f32.mxu0 0.0
    %3083 = vmatmul.mubr.f32.gmra.mrb[0].mxu0 %v1840
    %v3084 = vpop.f32.mrb[0].mxu0
    %v3085 = vadd.f32 0.0, %v3084
    %v3086 = vpop.f32.mrb[0].mxu0
    %3087 = vmatprep.mubr.f32.mxu0 0.0
    %3088 = vmatmul.mubr.f32.gmra.mrb[0].mxu0 %v1842
    %v3089 = vpop.f32.mrb[0].mxu0
    %v3090 = vadd.f32 0.0, %v3089
    %v3091 = vpop.f32.mrb[0].mxu0
    %3092 = vmatprep.mubr.f32.mxu0 0.0
    %3093 = vmatmul.mubr.f32.gmra.mrb[0].mxu0 %v1844
    %v3094 = vpop.f32.mrb[0].mxu0
    %v3095 = vadd.f32 0.0, %v3094
    %v3096 = vpop.f32.mrb[0].mxu0
    %3097 = vmatprep.mubr.f32.mxu0 0.0
    %3098 = vmatmul.mubr.f32.gmra.mrb[0].mxu0 %v1846
    %v3099 = vpop.f32.mrb[0].mxu0
    %v3100 = vadd.f32 0.0, %v3099
    %v3101 = vpop.f32.mrb[0].mxu0
    %3102 = vmatprep.mubr.f32.mxu0 0.0
    %3103 = vmatmul.mubr.f32.gmra.mrb[0].mxu0 %v2999
    %v3104 = vpop.f32.mrb[0].mxu0
    %v3105 = vadd.f32 0.0, %v3104
    %v3106 = vpop.f32.mrb[0].mxu0
    %3107 = vmatprep.mubr.f32.mxu0 0.0
    %3108 = vmatmul.mubr.f32.gmra.mrb[0].mxu0 %v3001
    %v3109 = vpop.f32.mrb[0].mxu0
    %v3110 = vadd.f32 0.0, %v3109
    %v3111 = vpop.f32.mrb[0].mxu0
    %3112 = vdwg.mxu0
    %v3113 = vadd.f32 %v2984, %v3070
    %v3114 = vadd.f32 %v2985, %v3075
    %v3115 = vadd.f32 %v2986, %v3080
    %v3116 = vadd.f32 %v2987, %v3085
    %v3117 = vadd.f32 %v2988, %v3090
    %v3118 = vadd.f32 %v2989, %v3095
    %v3119 = vadd.f32 %v2990, %v3100
    %v3120 = vadd.f32 %v2991, %v3105
    %v3121 = vadd.f32 %v2992, %v3110
    %v3122 = vld [vmem:[%s2 + $0x180] sm:$0xff]
    %v3123 = vld [vmem:[%s2 + $0x188] sm:$0xff]
    %v3124 = vld [vmem:[%s2 + $0x190] sm:$0xff]
    %v3125 = vld [vmem:[%s2 + $0x198] sm:$0xff]
    %v3126 = vrot.slane %v1342, 4
    %v3127 = vsel %vm1973, %v1989, %v3126
    %v3128 = vsel %vm1354, %v3127, 0
    %v3130 = vsel %vm1354, %v3126, 0
    %3132 = vmatprep.subr.mxu0 0.0
    %3133 = vmatpush1.msra.mxu0 %v3122
    %3134 = vmatprep.subr.mxu0 0.0
    %3135 = vmatpush1.msra.mxu0 %v3123
    %3136 = vmatprep.subr.mxu0 0.0
    %3137 = vmatpush1.msra.mxu0 %v3124
    %3138 = vmatprep.subr.mxu0 0.0
    %3139 = vmatpush1.msra.mxu0 %v3125
    %3140 = vmatprep.subr.mxu0 0.0
    %3141 = vmatpush1.msra.mxu0 0.0
    %3142 = vmatprep.subr.mxu0 0.0
    %3143 = vmatpush1.msra.mxu0 0.0
    %3144 = vmatprep.subr.mxu0 0.0
    %3145 = vmatpush1.msra.mxu0 0.0
    %3146 = vmatprep.subr.mxu0 0.0
    %3147 = vmatpush1.msra.mxu0 0.0
    %3148 = vmatprep.subr.mxu0 0.0
    %3149 = vmatpush1.msra.mxu0 0.0
    %3150 = vmatprep.subr.mxu0 0.0
    %3151 = vmatpush1.msra.mxu0 0.0
    %3152 = vmatprep.subr.mxu0 0.0
    %3153 = vmatpush1.msra.mxu0 0.0
    %3154 = vmatprep.subr.mxu0 0.0
    %3155 = vmatpush1.msra.mxu0 0.0
    %3156 = vmatprep.subr.mxu0 0.0
    %3157 = vmatpush1.msra.mxu0 0.0
    %3158 = vmatprep.subr.mxu0 0.0
    %3159 = vmatpush1.msra.mxu0 0.0
    %3160 = vmatprep.subr.mxu0 0.0
    %3161 = vmatpush1.msra.mxu0 0.0
    %3162 = vmatprep.subr.mxu0 0.0
    %3163 = vmatpush1.msra.mxu0 0.0
    %3164 = vmatprep.subr.mxu0 0.0
    %3165 = vmatpush1.msra.mxu0 0.0
    %3166 = vmatprep.subr.mxu0 0.0
    %3167 = vmatpush1.msra.mxu0 0.0
    %3168 = vmatprep.subr.mxu0 0.0
    %3169 = vmatpush1.msra.mxu0 0.0
    %3170 = vmatprep.subr.mxu0 0.0
    %3171 = vmatpush1.msra.mxu0 0.0
    %3172 = vmatprep.subr.mxu0 0.0
    %3173 = vmatpush1.msra.mxu0 0.0
    %3174 = vmatprep.subr.mxu0 0.0
    %3175 = vmatpush1.msra.mxu0 0.0
    %3176 = vmatprep.subr.mxu0 0.0
    %3177 = vmatpush1.msra.mxu0 0.0
    %3178 = vmatprep.subr.mxu0 0.0
    %3179 = vmatpush1.msra.mxu0 0.0
    %3180 = vmatprep.subr.mxu0 0.0
    %3181 = vmatpush1.msra.mxu0 0.0
    %3182 = vmatprep.subr.mxu0 0.0
    %3183 = vmatpush1.msra.mxu0 0.0
    %3184 = vmatprep.subr.mxu0 0.0
    %3185 = vmatpush1.msra.mxu0 0.0
    %3186 = vmatprep.subr.mxu0 0.0
    %3187 = vmatpush1.msra.mxu0 0.0
    %3188 = vmatprep.subr.mxu0 0.0
    %3189 = vmatpush1.msra.mxu0 0.0
    %3190 = vmatprep.subr.mxu0 0.0
    %3191 = vmatpush1.msra.mxu0 0.0
    %3192 = vmatprep.subr.mxu0 0.0
    %3193 = vmatpush1.msra.mxu0 0.0
    %3194 = vmatprep.subr.mxu0 0.0
    %3195 = vmatpush1.msra.mxu0 0.0
    %3196 = vmatprep.mubr.f32.mxu0 0.0
    %3197 = vmatmul.mubr.f32.gmra.mrb[0].mxu0 %v1993
    %v3198 = vpop.f32.mrb[0].mxu0
    %v3199 = vadd.f32 0.0, %v3198
    %v3200 = vpop.f32.mrb[0].mxu0
    %3201 = vmatprep.mubr.f32.mxu0 0.0
    %3202 = vmatmul.mubr.f32.gmra.mrb[0].mxu0 %v1995
    %v3203 = vpop.f32.mrb[0].mxu0
    %v3204 = vadd.f32 0.0, %v3203
    %v3205 = vpop.f32.mrb[0].mxu0
    %3206 = vmatprep.mubr.f32.mxu0 0.0
    %3207 = vmatmul.mubr.f32.gmra.mrb[0].mxu0 %v1997
    %v3208 = vpop.f32.mrb[0].mxu0
    %v3209 = vadd.f32 0.0, %v3208
    %v3210 = vpop.f32.mrb[0].mxu0
    %3211 = vmatprep.mubr.f32.mxu0 0.0
    %3212 = vmatmul.mubr.f32.gmra.mrb[0].mxu0 %v1999
    %v3213 = vpop.f32.mrb[0].mxu0
    %v3214 = vadd.f32 0.0, %v3213
    %v3215 = vpop.f32.mrb[0].mxu0
    %3216 = vmatprep.mubr.f32.mxu0 0.0
    %3217 = vmatmul.mubr.f32.gmra.mrb[0].mxu0 %v2001
    %v3218 = vpop.f32.mrb[0].mxu0
    %v3219 = vadd.f32 0.0, %v3218
    %v3220 = vpop.f32.mrb[0].mxu0
    %3221 = vmatprep.mubr.f32.mxu0 0.0
    %3222 = vmatmul.mubr.f32.gmra.mrb[0].mxu0 %v2003
    %v3223 = vpop.f32.mrb[0].mxu0
    %v3224 = vadd.f32 0.0, %v3223
    %v3225 = vpop.f32.mrb[0].mxu0
    %3226 = vmatprep.mubr.f32.mxu0 0.0
    %3227 = vmatmul.mubr.f32.gmra.mrb[0].mxu0 %v2005
    %v3228 = vpop.f32.mrb[0].mxu0
    %v3229 = vadd.f32 0.0, %v3228
    %v3230 = vpop.f32.mrb[0].mxu0
    %3231 = vmatprep.mubr.f32.mxu0 0.0
    %3232 = vmatmul.mubr.f32.gmra.mrb[0].mxu0 %v3128
    %v3233 = vpop.f32.mrb[0].mxu0
    %v3234 = vadd.f32 0.0, %v3233
    %v3235 = vpop.f32.mrb[0].mxu0
    %3236 = vmatprep.mubr.f32.mxu0 0.0
    %3237 = vmatmul.mubr.f32.gmra.mrb[0].mxu0 %v3130
    %v3238 = vpop.f32.mrb[0].mxu0
    %v3239 = vadd.f32 0.0, %v3238
    %v3240 = vpop.f32.mrb[0].mxu0
    %3241 = vdwg.mxu0
    %v3242 = vadd.f32 %v3113, %v3199
    %v3243 = vadd.f32 %v3114, %v3204
    %v3244 = vadd.f32 %v3115, %v3209
    %v3245 = vadd.f32 %v3116, %v3214
    %v3246 = vadd.f32 %v3117, %v3219
    %v3247 = vadd.f32 %v3118, %v3224
    %v3248 = vadd.f32 %v3119, %v3229
    %v3249 = vadd.f32 %v3120, %v3234
    %v3250 = vadd.f32 %v3121, %v3239
    %v3251 = vld [vmem:[%s2 + $0x1a0] sm:$0xff]
    %v3252 = vld [vmem:[%s2 + $0x1a8] sm:$0xff]
    %v3253 = vld [vmem:[%s2 + $0x1b0] sm:$0xff]
    %v3254 = vld [vmem:[%s2 + $0x1b8] sm:$0xff]
    %v3255 = vrot.slane %v1342, 5
    %v3256 = vsel %vm2132, %v2148, %v3255
    %v3257 = vsel %vm1354, %v3256, 0
    %v3259 = vsel %vm1354, %v3255, 0
    %3261 = vmatprep.subr.mxu0 0.0
    %3262 = vmatpush1.msra.mxu0 %v3251
    %3263 = vmatprep.subr.mxu0 0.0
    %3264 = vmatpush1.msra.mxu0 %v3252
    %3265 = vmatprep.subr.mxu0 0.0
    %3266 = vmatpush1.msra.mxu0 %v3253
    %3267 = vmatprep.subr.mxu0 0.0
    %3268 = vmatpush1.msra.mxu0 %v3254
    %3269 = vmatprep.subr.mxu0 0.0
    %3270 = vmatpush1.msra.mxu0 0.0
    %3271 = vmatprep.subr.mxu0 0.0
    %3272 = vmatpush1.msra.mxu0 0.0
    %3273 = vmatprep.subr.mxu0 0.0
    %3274 = vmatpush1.msra.mxu0 0.0
    %3275 = vmatprep.subr.mxu0 0.0
    %3276 = vmatpush1.msra.mxu0 0.0
    %3277 = vmatprep.subr.mxu0 0.0
    %3278 = vmatpush1.msra.mxu0 0.0
    %3279 = vmatprep.subr.mxu0 0.0
    %3280 = vmatpush1.msra.mxu0 0.0
    %3281 = vmatprep.subr.mxu0 0.0
    %3282 = vmatpush1.msra.mxu0 0.0
    %3283 = vmatprep.subr.mxu0 0.0
    %3284 = vmatpush1.msra.mxu0 0.0
    %3285 = vmatprep.subr.mxu0 0.0
    %3286 = vmatpush1.msra.mxu0 0.0
    %3287 = vmatprep.subr.mxu0 0.0
    %3288 = vmatpush1.msra.mxu0 0.0
    %3289 = vmatprep.subr.mxu0 0.0
    %3290 = vmatpush1.msra.mxu0 0.0
    %3291 = vmatprep.subr.mxu0 0.0
    %3292 = vmatpush1.msra.mxu0 0.0
    %3293 = vmatprep.subr.mxu0 0.0
    %3294 = vmatpush1.msra.mxu0 0.0
    %3295 = vmatprep.subr.mxu0 0.0
    %3296 = vmatpush1.msra.mxu0 0.0
    %3297 = vmatprep.subr.mxu0 0.0
    %3298 = vmatpush1.msra.mxu0 0.0
    %3299 = vmatprep.subr.mxu0 0.0
    %3300 = vmatpush1.msra.mxu0 0.0
    %3301 = vmatprep.subr.mxu0 0.0
    %3302 = vmatpush1.msra.mxu0 0.0
    %3303 = vmatprep.subr.mxu0 0.0
    %3304 = vmatpush1.msra.mxu0 0.0
    %3305 = vmatprep.subr.mxu0 0.0
    %3306 = vmatpush1.msra.mxu0 0.0
    %3307 = vmatprep.subr.mxu0 0.0
    %3308 = vmatpush1.msra.mxu0 0.0
    %3309 = vmatprep.subr.mxu0 0.0
    %3310 = vmatpush1.msra.mxu0 0.0
    %3311 = vmatprep.subr.mxu0 0.0
    %3312 = vmatpush1.msra.mxu0 0.0
    %3313 = vmatprep.subr.mxu0 0.0
    %3314 = vmatpush1.msra.mxu0 0.0
    %3315 = vmatprep.subr.mxu0 0.0
    %3316 = vmatpush1.msra.mxu0 0.0
    %3317 = vmatprep.subr.mxu0 0.0
    %3318 = vmatpush1.msra.mxu0 0.0
    %3319 = vmatprep.subr.mxu0 0.0
    %3320 = vmatpush1.msra.mxu0 0.0
    %3321 = vmatprep.subr.mxu0 0.0
    %3322 = vmatpush1.msra.mxu0 0.0
    %3323 = vmatprep.subr.mxu0 0.0
    %3324 = vmatpush1.msra.mxu0 0.0
    %3325 = vmatprep.mubr.f32.mxu0 0.0
    %3326 = vmatmul.mubr.f32.gmra.mrb[0].mxu0 %v2152
    %v3327 = vpop.f32.mrb[0].mxu0
    %v3328 = vadd.f32 0.0, %v3327
    %v3329 = vpop.f32.mrb[0].mxu0
    %3330 = vmatprep.mubr.f32.mxu0 0.0
    %3331 = vmatmul.mubr.f32.gmra.mrb[0].mxu0 %v2154
    %v3332 = vpop.f32.mrb[0].mxu0
    %v3333 = vadd.f32 0.0, %v3332
    %v3334 = vpop.f32.mrb[0].mxu0
    %3335 = vmatprep.mubr.f32.mxu0 0.0
    %3336 = vmatmul.mubr.f32.gmra.mrb[0].mxu0 %v2156
    %v3337 = vpop.f32.mrb[0].mxu0
    %v3338 = vadd.f32 0.0, %v3337
    %v3339 = vpop.f32.mrb[0].mxu0
    %3340 = vmatprep.mubr.f32.mxu0 0.0
    %3341 = vmatmul.mubr.f32.gmra.mrb[0].mxu0 %v2158
    %v3342 = vpop.f32.mrb[0].mxu0
    %v3343 = vadd.f32 0.0, %v3342
    %v3344 = vpop.f32.mrb[0].mxu0
    %3345 = vmatprep.mubr.f32.mxu0 0.0
    %3346 = vmatmul.mubr.f32.gmra.mrb[0].mxu0 %v2160
    %v3347 = vpop.f32.mrb[0].mxu0
    %v3348 = vadd.f32 0.0, %v3347
    %v3349 = vpop.f32.mrb[0].mxu0
    %3350 = vmatprep.mubr.f32.mxu0 0.0
    %3351 = vmatmul.mubr.f32.gmra.mrb[0].mxu0 %v2162
    %v3352 = vpop.f32.mrb[0].mxu0
    %v3353 = vadd.f32 0.0, %v3352
    %v3354 = vpop.f32.mrb[0].mxu0
    %3355 = vmatprep.mubr.f32.mxu0 0.0
    %3356 = vmatmul.mubr.f32.gmra.mrb[0].mxu0 %v2164
    %v3357 = vpop.f32.mrb[0].mxu0
    %v3358 = vadd.f32 0.0, %v3357
    %v3359 = vpop.f32.mrb[0].mxu0
    %3360 = vmatprep.mubr.f32.mxu0 0.0
    %3361 = vmatmul.mubr.f32.gmra.mrb[0].mxu0 %v3257
    %v3362 = vpop.f32.mrb[0].mxu0
    %v3363 = vadd.f32 0.0, %v3362
    %v3364 = vpop.f32.mrb[0].mxu0
    %3365 = vmatprep.mubr.f32.mxu0 0.0
    %3366 = vmatmul.mubr.f32.gmra.mrb[0].mxu0 %v3259
    %v3367 = vpop.f32.mrb[0].mxu0
    %v3368 = vadd.f32 0.0, %v3367
    %v3369 = vpop.f32.mrb[0].mxu0
    %3370 = vdwg.mxu0
    %v3371 = vadd.f32 %v3242, %v3328
    %v3372 = vadd.f32 %v3243, %v3333
    %v3373 = vadd.f32 %v3244, %v3338
    %v3374 = vadd.f32 %v3245, %v3343
    %v3375 = vadd.f32 %v3246, %v3348
    %v3376 = vadd.f32 %v3247, %v3353
    %v3377 = vadd.f32 %v3248, %v3358
    %v3378 = vadd.f32 %v3249, %v3363
    %v3379 = vadd.f32 %v3250, %v3368
    %v3380 = vld [vmem:[%s2 + $0x1c0] sm:$0xff]
    %v3381 = vld [vmem:[%s2 + $0x1c8] sm:$0xff]
    %v3382 = vld [vmem:[%s2 + $0x1d0] sm:$0xff]
    %v3383 = vld [vmem:[%s2 + $0x1d8] sm:$0xff]
    %v3385 = vrot.slane %v1343, 6
    %v3386 = vsel %vm2292, %v2310, %v3385
    %v3387 = vsel %vm1354, %v3386, 0
    %3389 = vmatprep.subr.mxu0 0.0
    %3390 = vmatpush1.msra.mxu0 %v3380
    %3391 = vmatprep.subr.mxu0 0.0
    %3392 = vmatpush1.msra.mxu0 %v3381
    %3393 = vmatprep.subr.mxu0 0.0
    %3394 = vmatpush1.msra.mxu0 %v3382
    %3395 = vmatprep.subr.mxu0 0.0
    %3396 = vmatpush1.msra.mxu0 %v3383
    %3397 = vmatprep.subr.mxu0 0.0
    %3398 = vmatpush1.msra.mxu0 0.0
    %3399 = vmatprep.subr.mxu0 0.0
    %3400 = vmatpush1.msra.mxu0 0.0
    %3401 = vmatprep.subr.mxu0 0.0
    %3402 = vmatpush1.msra.mxu0 0.0
    %3403 = vmatprep.subr.mxu0 0.0
    %3404 = vmatpush1.msra.mxu0 0.0
    %3405 = vmatprep.subr.mxu0 0.0
    %3406 = vmatpush1.msra.mxu0 0.0
    %3407 = vmatprep.subr.mxu0 0.0
    %3408 = vmatpush1.msra.mxu0 0.0
    %3409 = vmatprep.subr.mxu0 0.0
    %3410 = vmatpush1.msra.mxu0 0.0
    %3411 = vmatprep.subr.mxu0 0.0
    %3412 = vmatpush1.msra.mxu0 0.0
    %3413 = vmatprep.subr.mxu0 0.0
    %3414 = vmatpush1.msra.mxu0 0.0
    %3415 = vmatprep.subr.mxu0 0.0
    %3416 = vmatpush1.msra.mxu0 0.0
    %3417 = vmatprep.subr.mxu0 0.0
    %3418 = vmatpush1.msra.mxu0 0.0
    %3419 = vmatprep.subr.mxu0 0.0
    %3420 = vmatpush1.msra.mxu0 0.0
    %3421 = vmatprep.subr.mxu0 0.0
    %3422 = vmatpush1.msra.mxu0 0.0
    %3423 = vmatprep.subr.mxu0 0.0
    %3424 = vmatpush1.msra.mxu0 0.0
    %3425 = vmatprep.subr.mxu0 0.0
    %3426 = vmatpush1.msra.mxu0 0.0
    %3427 = vmatprep.subr.mxu0 0.0
    %3428 = vmatpush1.msra.mxu0 0.0
    %3429 = vmatprep.subr.mxu0 0.0
    %3430 = vmatpush1.msra.mxu0 0.0
    %3431 = vmatprep.subr.mxu0 0.0
    %3432 = vmatpush1.msra.mxu0 0.0
    %3433 = vmatprep.subr.mxu0 0.0
    %3434 = vmatpush1.msra.mxu0 0.0
    %3435 = vmatprep.subr.mxu0 0.0
    %3436 = vmatpush1.msra.mxu0 0.0
    %3437 = vmatprep.subr.mxu0 0.0
    %3438 = vmatpush1.msra.mxu0 0.0
    %3439 = vmatprep.subr.mxu0 0.0
    %3440 = vmatpush1.msra.mxu0 0.0
    %3441 = vmatprep.subr.mxu0 0.0
    %3442 = vmatpush1.msra.mxu0 0.0
    %3443 = vmatprep.subr.mxu0 0.0
    %3444 = vmatpush1.msra.mxu0 0.0
    %3445 = vmatprep.subr.mxu0 0.0
    %3446 = vmatpush1.msra.mxu0 0.0
    %3447 = vmatprep.subr.mxu0 0.0
    %3448 = vmatpush1.msra.mxu0 0.0
    %3449 = vmatprep.subr.mxu0 0.0
    %3450 = vmatpush1.msra.mxu0 0.0
    %3451 = vmatprep.subr.mxu0 0.0
    %3452 = vmatpush1.msra.mxu0 0.0
    %3453 = vmatprep.mubr.f32.mxu0 0.0
    %3454 = vmatmul.mubr.f32.gmra.mrb[0].mxu0 %v2314
    %v3455 = vpop.f32.mrb[0].mxu0
    %v3456 = vadd.f32 0.0, %v3455
    %v3457 = vpop.f32.mrb[0].mxu0
    %3458 = vmatprep.mubr.f32.mxu0 0.0
    %3459 = vmatmul.mubr.f32.gmra.mrb[0].mxu0 %v2316
    %v3460 = vpop.f32.mrb[0].mxu0
    %v3461 = vadd.f32 0.0, %v3460
    %v3462 = vpop.f32.mrb[0].mxu0
    %3463 = vmatprep.mubr.f32.mxu0 0.0
    %3464 = vmatmul.mubr.f32.gmra.mrb[0].mxu0 %v2318
    %v3465 = vpop.f32.mrb[0].mxu0
    %v3466 = vadd.f32 0.0, %v3465
    %v3467 = vpop.f32.mrb[0].mxu0
    %3468 = vmatprep.mubr.f32.mxu0 0.0
    %3469 = vmatmul.mubr.f32.gmra.mrb[0].mxu0 %v2320
    %v3470 = vpop.f32.mrb[0].mxu0
    %v3471 = vadd.f32 0.0, %v3470
    %v3472 = vpop.f32.mrb[0].mxu0
    %3473 = vmatprep.mubr.f32.mxu0 0.0
    %3474 = vmatmul.mubr.f32.gmra.mrb[0].mxu0 %v2322
    %v3475 = vpop.f32.mrb[0].mxu0
    %v3476 = vadd.f32 0.0, %v3475
    %v3477 = vpop.f32.mrb[0].mxu0
    %3478 = vmatprep.mubr.f32.mxu0 0.0
    %3479 = vmatmul.mubr.f32.gmra.mrb[0].mxu0 %v2324
    %v3480 = vpop.f32.mrb[0].mxu0
    %v3481 = vadd.f32 0.0, %v3480
    %v3482 = vpop.f32.mrb[0].mxu0
    %3483 = vmatprep.mubr.f32.mxu0 0.0
    %3484 = vmatmul.mubr.f32.gmra.mrb[0].mxu0 %v2326
    %v3485 = vpop.f32.mrb[0].mxu0
    %v3486 = vadd.f32 0.0, %v3485
    %v3487 = vpop.f32.mrb[0].mxu0
    %3488 = vmatprep.mubr.f32.mxu0 0.0
    %3489 = vmatmul.mubr.f32.gmra.mrb[0].mxu0 %v2328
    %v3490 = vpop.f32.mrb[0].mxu0
    %v3491 = vadd.f32 0.0, %v3490
    %v3492 = vpop.f32.mrb[0].mxu0
    %3493 = vmatprep.mubr.f32.mxu0 0.0
    %3494 = vmatmul.mubr.f32.gmra.mrb[0].mxu0 %v3387
    %v3495 = vpop.f32.mrb[0].mxu0
    %v3496 = vadd.f32 0.0, %v3495
    %v3497 = vpop.f32.mrb[0].mxu0
    %3498 = vdwg.mxu0
    %v3499 = vadd.f32 %v3371, %v3456
    %v3500 = vadd.f32 %v3372, %v3461
    %v3501 = vadd.f32 %v3373, %v3466
    %v3502 = vadd.f32 %v3374, %v3471
    %v3503 = vadd.f32 %v3375, %v3476
    %v3504 = vadd.f32 %v3376, %v3481
    %v3505 = vadd.f32 %v3377, %v3486
    %v3506 = vadd.f32 %v3378, %v3491
    %v3507 = vadd.f32 %v3379, %v3496
    %v3508 = vld [vmem:[%s2 + $0x1e0] sm:$0xff]
    %v3509 = vld [vmem:[%s2 + $0x1e8] sm:$0xff]
    %v3510 = vld [vmem:[%s2 + $0x1f0] sm:$0xff]
    %v3511 = vld [vmem:[%s2 + $0x1f8] sm:$0xff]
    %v3512 = vrot.slane %v1343, 7
    %v3513 = vsel %vm2453, %v2471, %v3512
    %v3514 = vsel %vm1354, %v3513, 0
    %3516 = vmatprep.subr.mxu0 0.0
    %3517 = vmatpush1.msra.mxu0 %v3508
    %3518 = vmatprep.subr.mxu0 0.0
    %3519 = vmatpush1.msra.mxu0 %v3509
    %3520 = vmatprep.subr.mxu0 0.0
    %3521 = vmatpush1.msra.mxu0 %v3510
    %3522 = vmatprep.subr.mxu0 0.0
    %3523 = vmatpush1.msra.mxu0 %v3511
    %3524 = vmatprep.subr.mxu0 0.0
    %3525 = vmatpush1.msra.mxu0 0.0
    %3526 = vmatprep.subr.mxu0 0.0
    %3527 = vmatpush1.msra.mxu0 0.0
    %3528 = vmatprep.subr.mxu0 0.0
    %3529 = vmatpush1.msra.mxu0 0.0
    %3530 = vmatprep.subr.mxu0 0.0
    %3531 = vmatpush1.msra.mxu0 0.0
    %3532 = vmatprep.subr.mxu0 0.0
    %3533 = vmatpush1.msra.mxu0 0.0
    %3534 = vmatprep.subr.mxu0 0.0
    %3535 = vmatpush1.msra.mxu0 0.0
    %3536 = vmatprep.subr.mxu0 0.0
    %3537 = vmatpush1.msra.mxu0 0.0
    %3538 = vmatprep.subr.mxu0 0.0
    %3539 = vmatpush1.msra.mxu0 0.0
    %3540 = vmatprep.subr.mxu0 0.0
    %3541 = vmatpush1.msra.mxu0 0.0
    %3542 = vmatprep.subr.mxu0 0.0
    %3543 = vmatpush1.msra.mxu0 0.0
    %3544 = vmatprep.subr.mxu0 0.0
    %3545 = vmatpush1.msra.mxu0 0.0
    %3546 = vmatprep.subr.mxu0 0.0
    %3547 = vmatpush1.msra.mxu0 0.0
    %3548 = vmatprep.subr.mxu0 0.0
    %3549 = vmatpush1.msra.mxu0 0.0
    %3550 = vmatprep.subr.mxu0 0.0
    %3551 = vmatpush1.msra.mxu0 0.0
    %3552 = vmatprep.subr.mxu0 0.0
    %3553 = vmatpush1.msra.mxu0 0.0
    %3554 = vmatprep.subr.mxu0 0.0
    %3555 = vmatpush1.msra.mxu0 0.0
    %3556 = vmatprep.subr.mxu0 0.0
    %3557 = vmatpush1.msra.mxu0 0.0
    %3558 = vmatprep.subr.mxu0 0.0
    %3559 = vmatpush1.msra.mxu0 0.0
    %3560 = vmatprep.subr.mxu0 0.0
    %3561 = vmatpush1.msra.mxu0 0.0
    %3562 = vmatprep.subr.mxu0 0.0
    %3563 = vmatpush1.msra.mxu0 0.0
    %3564 = vmatprep.subr.mxu0 0.0
    %3565 = vmatpush1.msra.mxu0 0.0
    %3566 = vmatprep.subr.mxu0 0.0
    %3567 = vmatpush1.msra.mxu0 0.0
    %3568 = vmatprep.subr.mxu0 0.0
    %3569 = vmatpush1.msra.mxu0 0.0
    %3570 = vmatprep.subr.mxu0 0.0
    %3571 = vmatpush1.msra.mxu0 0.0
    %3572 = vmatprep.subr.mxu0 0.0
    %3573 = vmatpush1.msra.mxu0 0.0
    %3574 = vmatprep.subr.mxu0 0.0
    %3575 = vmatpush1.msra.mxu0 0.0
    %3576 = vmatprep.subr.mxu0 0.0
    %3577 = vmatpush1.msra.mxu0 0.0
    %3578 = vmatprep.subr.mxu0 0.0
    %3579 = vmatpush1.msra.mxu0 0.0
    %3580 = vmatprep.mubr.f32.mxu0 0.0
    %3581 = vmatmul.mubr.f32.gmra.mrb[0].mxu0 %v2475
    %v3582 = vpop.f32.mrb[0].mxu0
    %v3583 = vadd.f32 0.0, %v3582
    %v3584 = vpop.f32.mrb[0].mxu0
    %3585 = vmatprep.mubr.f32.mxu0 0.0
    %3586 = vmatmul.mubr.f32.gmra.mrb[0].mxu0 %v2477
    %v3587 = vpop.f32.mrb[0].mxu0
    %v3588 = vadd.f32 0.0, %v3587
    %v3589 = vpop.f32.mrb[0].mxu0
    %3590 = vmatprep.mubr.f32.mxu0 0.0
    %3591 = vmatmul.mubr.f32.gmra.mrb[0].mxu0 %v2479
    %v3592 = vpop.f32.mrb[0].mxu0
    %v3593 = vadd.f32 0.0, %v3592
    %v3594 = vpop.f32.mrb[0].mxu0
    %3595 = vmatprep.mubr.f32.mxu0 0.0
    %3596 = vmatmul.mubr.f32.gmra.mrb[0].mxu0 %v2481
    %v3597 = vpop.f32.mrb[0].mxu0
    %v3598 = vadd.f32 0.0, %v3597
    %v3599 = vpop.f32.mrb[0].mxu0
    %3600 = vmatprep.mubr.f32.mxu0 0.0
    %3601 = vmatmul.mubr.f32.gmra.mrb[0].mxu0 %v2483
    %v3602 = vpop.f32.mrb[0].mxu0
    %v3603 = vadd.f32 0.0, %v3602
    %v3604 = vpop.f32.mrb[0].mxu0
    %3605 = vmatprep.mubr.f32.mxu0 0.0
    %3606 = vmatmul.mubr.f32.gmra.mrb[0].mxu0 %v2485
    %v3607 = vpop.f32.mrb[0].mxu0
    %v3608 = vadd.f32 0.0, %v3607
    %v3609 = vpop.f32.mrb[0].mxu0
    %3610 = vmatprep.mubr.f32.mxu0 0.0
    %3611 = vmatmul.mubr.f32.gmra.mrb[0].mxu0 %v2487
    %v3612 = vpop.f32.mrb[0].mxu0
    %v3613 = vadd.f32 0.0, %v3612
    %v3614 = vpop.f32.mrb[0].mxu0
    %3615 = vmatprep.mubr.f32.mxu0 0.0
    %3616 = vmatmul.mubr.f32.gmra.mrb[0].mxu0 %v2489
    %v3617 = vpop.f32.mrb[0].mxu0
    %v3618 = vadd.f32 0.0, %v3617
    %v3619 = vpop.f32.mrb[0].mxu0
    %3620 = vmatprep.mubr.f32.mxu0 0.0
    %3621 = vmatmul.mubr.f32.gmra.mrb[0].mxu0 %v3514
    %v3622 = vpop.f32.mrb[0].mxu0
    %v3623 = vadd.f32 0.0, %v3622
    %v3624 = vpop.f32.mrb[0].mxu0
    %3625 = vdwg.mxu0
    %v3626 = vadd.f32 %v3499, %v3583
    %v3627 = vadd.f32 %v3500, %v3588
    %v3628 = vadd.f32 %v3501, %v3593
    %v3629 = vadd.f32 %v3502, %v3598
    %v3630 = vadd.f32 %v3503, %v3603
    %v3631 = vadd.f32 %v3504, %v3608
    %v3632 = vadd.f32 %v3505, %v3613
    %v3633 = vadd.f32 %v3506, %v3618
    %v3634 = vadd.f32 %v3507, %v3623
    %v3635 = vmax.f32 %v3626, 0.0
    %v3636 = vmax.f32 %v3627, 0.0
    %v3637 = vmax.f32 %v3628, 0.0
    %v3638 = vmax.f32 %v3629, 0.0
    %v3639 = vmax.f32 %v3630, 0.0
    %v3640 = vmax.f32 %v3631, 0.0
    %v3641 = vmax.f32 %v3632, 0.0
    %v3642 = vmax.f32 %v3633, 0.0
    %v3643 = vmax.f32 %v3634, 0.0
    %v3644 = vld [vmem:[%s3] sm:$0xff]
    %v3645 = vld [vmem:[%s3 + $0x8] sm:$0xff]
    %v3646 = vld [vmem:[%s3 + $0x10] sm:$0xff]
    %v3647 = vld [vmem:[%s3 + $0x18] sm:$0xff]
    %v3648 = vld [vmem:[%s3 + $0x20] sm:$0xff]
    %v3649 = vld [vmem:[%s3 + $0x28] sm:$0xff]
    %v3650 = vld [vmem:[%s3 + $0x30] sm:$0xff]
    %v3651 = vld [vmem:[%s3 + $0x38] sm:$0xff]
    %v3653 = vlaneseq
    %v3654 = vshrl.u32 %v3653, 7
    %v3655 = vsub.s32 0, %v3654
    %v3656 = vrot.slane %v1140, %v3655
    %vm3658 = vcmask 523264
    %v3660 = vsel %vm3658, %v3635, 0
    %v3663 = vsel %vm3658, %v3636, 0
    %v3666 = vsel %vm3658, %v3637, 0
    %v3669 = vsel %vm3658, %v3638, 0
    %v3672 = vsel %vm3658, %v3639, 0
    %v3675 = vsel %vm3658, %v3640, 0
    %v3678 = vsel %vm3658, %v3641, 0
    %v3681 = vsel %vm3658, %v3642, 0
    %3683 = vmatprep.subr.mxu0 0.0
    %3684 = vmatpush1.msra.mxu0 %v3644
    %3685 = vmatprep.subr.mxu0 0.0
    %3686 = vmatpush1.msra.mxu0 %v3645
    %3687 = vmatprep.subr.mxu0 0.0
    %3688 = vmatpush1.msra.mxu0 %v3646
    %3689 = vmatprep.subr.mxu0 0.0
    %3690 = vmatpush1.msra.mxu0 %v3647
    %3691 = vmatprep.subr.mxu0 0.0
    %3692 = vmatpush1.msra.mxu0 %v3648
    %3693 = vmatprep.subr.mxu0 0.0
    %3694 = vmatpush1.msra.mxu0 %v3649
    %3695 = vmatprep.subr.mxu0 0.0
    %3696 = vmatpush1.msra.mxu0 %v3650
    %3697 = vmatprep.subr.mxu0 0.0
    %3698 = vmatpush1.msra.mxu0 %v3651
    %3699 = vmatprep.subr.mxu0 0.0
    %3700 = vmatpush1.msra.mxu0 0.0
    %3701 = vmatprep.subr.mxu0 0.0
    %3702 = vmatpush1.msra.mxu0 0.0
    %3703 = vmatprep.subr.mxu0 0.0
    %3704 = vmatpush1.msra.mxu0 0.0
    %3705 = vmatprep.subr.mxu0 0.0
    %3706 = vmatpush1.msra.mxu0 0.0
    %3707 = vmatprep.subr.mxu0 0.0
    %3708 = vmatpush1.msra.mxu0 0.0
    %3709 = vmatprep.subr.mxu0 0.0
    %3710 = vmatpush1.msra.mxu0 0.0
    %3711 = vmatprep.subr.mxu0 0.0
    %3712 = vmatpush1.msra.mxu0 0.0
    %3713 = vmatprep.subr.mxu0 0.0
    %3714 = vmatpush1.msra.mxu0 0.0
    %3715 = vmatprep.subr.mxu0 0.0
    %3716 = vmatpush1.msra.mxu0 0.0
    %3717 = vmatprep.subr.mxu0 0.0
    %3718 = vmatpush1.msra.mxu0 0.0
    %3719 = vmatprep.subr.mxu0 0.0
    %3720 = vmatpush1.msra.mxu0 0.0
    %3721 = vmatprep.subr.mxu0 0.0
    %3722 = vmatpush1.msra.mxu0 0.0
    %3723 = vmatprep.subr.mxu0 0.0
    %3724 = vmatpush1.msra.mxu0 0.0
    %3725 = vmatprep.subr.mxu0 0.0
    %3726 = vmatpush1.msra.mxu0 0.0
    %3727 = vmatprep.subr.mxu0 0.0
    %3728 = vmatpush1.msra.mxu0 0.0
    %3729 = vmatprep.subr.mxu0 0.0
    %3730 = vmatpush1.msra.mxu0 0.0
    %3731 = vmatprep.subr.mxu0 0.0
    %3732 = vmatpush1.msra.mxu0 0.0
    %3733 = vmatprep.subr.mxu0 0.0
    %3734 = vmatpush1.msra.mxu0 0.0
    %3735 = vmatprep.subr.mxu0 0.0
    %3736 = vmatpush1.msra.mxu0 0.0
    %3737 = vmatprep.subr.mxu0 0.0
    %3738 = vmatpush1.msra.mxu0 0.0
    %3739 = vmatprep.subr.mxu0 0.0
    %3740 = vmatpush1.msra.mxu0 0.0
    %3741 = vmatprep.subr.mxu0 0.0
    %3742 = vmatpush1.msra.mxu0 0.0
    %3743 = vmatprep.subr.mxu0 0.0
    %3744 = vmatpush1.msra.mxu0 0.0
    %3745 = vmatprep.subr.mxu0 0.0
    %3746 = vmatpush1.msra.mxu0 0.0
    %3747 = vmatprep.mubr.f32.mxu0 0.0
    %3748 = vmatmul.mubr.f32.gmra.mrb[0].mxu0 %v3660
    %v3749 = vpop.f32.mrb[0].mxu0
    %v3750 = vadd.f32 %v3656, %v3749
    %v3751 = vpop.f32.mrb[0].mxu0
    %3752 = vmatprep.mubr.f32.mxu0 0.0
    %3753 = vmatmul.mubr.f32.gmra.mrb[0].mxu0 %v3663
    %v3754 = vpop.f32.mrb[0].mxu0
    %v3755 = vadd.f32 %v3656, %v3754
    %v3756 = vpop.f32.mrb[0].mxu0
    %3757 = vmatprep.mubr.f32.mxu0 0.0
    %3758 = vmatmul.mubr.f32.gmra.mrb[0].mxu0 %v3666
    %v3759 = vpop.f32.mrb[0].mxu0
    %v3760 = vadd.f32 %v3656, %v3759
    %v3761 = vpop.f32.mrb[0].mxu0
    %3762 = vmatprep.mubr.f32.mxu0 0.0
    %3763 = vmatmul.mubr.f32.gmra.mrb[0].mxu0 %v3669
    %v3764 = vpop.f32.mrb[0].mxu0
    %v3765 = vpop.f32.mrb[0].mxu0
    %3766 = vmatprep.mubr.f32.mxu0 0.0
    %3767 = vmatmul.mubr.f32.gmra.mrb[0].mxu0 %v3672
    %v3768 = vpop.f32.mrb[0].mxu0
    %v3769 = vpop.f32.mrb[0].mxu0
    %3770 = vmatprep.mubr.f32.mxu0 0.0
    %3771 = vmatmul.mubr.f32.gmra.mrb[0].mxu0 %v3675
    %v3772 = vpop.f32.mrb[0].mxu0
    %v3773 = vadd.f32 %v3656, %v3772
    %v3774 = vpop.f32.mrb[0].mxu0
    %3775 = vmatprep.mubr.f32.mxu0 0.0
    %3776 = vmatmul.mubr.f32.gmra.mrb[0].mxu0 %v3678
    %v3777 = vpop.f32.mrb[0].mxu0
    %v3778 = vadd.f32 %v3656, %v3777
    %v3779 = vpop.f32.mrb[0].mxu0
    %3780 = vmatprep.mubr.f32.mxu0 0.0
    %3781 = vmatmul.mubr.f32.gmra.mrb[0].mxu0 %v3681
    %v3782 = vpop.f32.mrb[0].mxu0
    %v3783 = vadd.f32 %v3656, %v3782
    %v3784 = vpop.f32.mrb[0].mxu0
    %3785 = vdwg.mxu0
    %v3786 = vld [vmem:[%s3 + $0x40] sm:$0xff]
    %v3787 = vld [vmem:[%s3 + $0x48] sm:$0xff]
    %v3788 = vld [vmem:[%s3 + $0x50] sm:$0xff]
    %v3789 = vld [vmem:[%s3 + $0x58] sm:$0xff]
    %v3790 = vld [vmem:[%s3 + $0x60] sm:$0xff]
    %v3791 = vld [vmem:[%s3 + $0x68] sm:$0xff]
    %v3792 = vld [vmem:[%s3 + $0x70] sm:$0xff]
    %v3793 = vld [vmem:[%s3 + $0x78] sm:$0xff]
    %v3794 = vrot.slane %v3635, 1
    %v3795 = vrot.slane %v3636, 1
    %v3796 = vsel %vm1496, %v3794, %v3795
    %v3797 = vrot.slane %v3637, 1
    %v3798 = vsel %vm1496, %v3795, %v3797
    %v3799 = vrot.slane %v3638, 1
    %v3800 = vsel %vm1496, %v3797, %v3799
    %v3801 = vrot.slane %v3639, 1
    %v3802 = vsel %vm1496, %v3799, %v3801
    %v3803 = vrot.slane %v3640, 1
    %v3804 = vsel %vm1496, %v3801, %v3803
    %v3805 = vrot.slane %v3641, 1
    %v3806 = vsel %vm1496, %v3803, %v3805
    %v3807 = vrot.slane %v3642, 1
    %v3808 = vsel %vm1496, %v3805, %v3807
    %v3809 = vsel %vm3658, %v3796, 0
    %v3811 = vsel %vm3658, %v3798, 0
    %v3813 = vsel %vm3658, %v3800, 0
    %v3815 = vsel %vm3658, %v3802, 0
    %v3817 = vsel %vm3658, %v3804, 0
    %v3819 = vsel %vm3658, %v3806, 0
    %v3821 = vsel %vm3658, %v3808, 0
    %v3823 = vsel %vm3658, %v3807, 0
    %3825 = vmatprep.subr.mxu0 0.0
    %3826 = vmatpush1.msra.mxu0 %v3786
    %3827 = vmatprep.subr.mxu0 0.0
    %3828 = vmatpush1.msra.mxu0 %v3787
    %3829 = vmatprep.subr.mxu0 0.0
    %3830 = vmatpush1.msra.mxu0 %v3788
    %3831 = vmatprep.subr.mxu0 0.0
    %3832 = vmatpush1.msra.mxu0 %v3789
    %3833 = vmatprep.subr.mxu0 0.0
    %3834 = vmatpush1.msra.mxu0 %v3790
    %3835 = vmatprep.subr.mxu0 0.0
    %3836 = vmatpush1.msra.mxu0 %v3791
    %3837 = vmatprep.subr.mxu0 0.0
    %3838 = vmatpush1.msra.mxu0 %v3792
    %3839 = vmatprep.subr.mxu0 0.0
    %3840 = vmatpush1.msra.mxu0 %v3793
    %3841 = vmatprep.subr.mxu0 0.0
    %3842 = vmatpush1.msra.mxu0 0.0
    %3843 = vmatprep.subr.mxu0 0.0
    %3844 = vmatpush1.msra.mxu0 0.0
    %3845 = vmatprep.subr.mxu0 0.0
    %3846 = vmatpush1.msra.mxu0 0.0
    %3847 = vmatprep.subr.mxu0 0.0
    %3848 = vmatpush1.msra.mxu0 0.0
    %3849 = vmatprep.subr.mxu0 0.0
    %3850 = vmatpush1.msra.mxu0 0.0
    %3851 = vmatprep.subr.mxu0 0.0
    %3852 = vmatpush1.msra.mxu0 0.0
    %3853 = vmatprep.subr.mxu0 0.0
    %3854 = vmatpush1.msra.mxu0 0.0
    %3855 = vmatprep.subr.mxu0 0.0
    %3856 = vmatpush1.msra.mxu0 0.0
    %3857 = vmatprep.subr.mxu0 0.0
    %3858 = vmatpush1.msra.mxu0 0.0
    %3859 = vmatprep.subr.mxu0 0.0
    %3860 = vmatpush1.msra.mxu0 0.0
    %3861 = vmatprep.subr.mxu0 0.0
    %3862 = vmatpush1.msra.mxu0 0.0
    %3863 = vmatprep.subr.mxu0 0.0
    %3864 = vmatpush1.msra.mxu0 0.0
    %3865 = vmatprep.subr.mxu0 0.0
    %3866 = vmatpush1.msra.mxu0 0.0
    %3867 = vmatprep.subr.mxu0 0.0
    %3868 = vmatpush1.msra.mxu0 0.0
    %3869 = vmatprep.subr.mxu0 0.0
    %3870 = vmatpush1.msra.mxu0 0.0
    %3871 = vmatprep.subr.mxu0 0.0
    %3872 = vmatpush1.msra.mxu0 0.0
    %3873 = vmatprep.subr.mxu0 0.0
    %3874 = vmatpush1.msra.mxu0 0.0
    %3875 = vmatprep.subr.mxu0 0.0
    %3876 = vmatpush1.msra.mxu0 0.0
    %3877 = vmatprep.subr.mxu0 0.0
    %3878 = vmatpush1.msra.mxu0 0.0
    %3879 = vmatprep.subr.mxu0 0.0
    %3880 = vmatpush1.msra.mxu0 0.0
    %3881 = vmatprep.subr.mxu0 0.0
    %3882 = vmatpush1.msra.mxu0 0.0
    %3883 = vmatprep.subr.mxu0 0.0
    %3884 = vmatpush1.msra.mxu0 0.0
    %3885 = vmatprep.subr.mxu0 0.0
    %3886 = vmatpush1.msra.mxu0 0.0
    %3887 = vmatprep.subr.mxu0 0.0
    %3888 = vmatpush1.msra.mxu0 0.0
    %3889 = vmatprep.mubr.f32.mxu0 0.0
    %3890 = vmatmul.mubr.f32.gmra.mrb[0].mxu0 %v3809
    %v3891 = vpop.f32.mrb[0].mxu0
    %v3892 = vadd.f32 0.0, %v3891
    %v3893 = vpop.f32.mrb[0].mxu0
    %3894 = vmatprep.mubr.f32.mxu0 0.0
    %3895 = vmatmul.mubr.f32.gmra.mrb[0].mxu0 %v3811
    %v3896 = vpop.f32.mrb[0].mxu0
    %v3897 = vadd.f32 0.0, %v3896
    %v3898 = vpop.f32.mrb[0].mxu0
    %3899 = vmatprep.mubr.f32.mxu0 0.0
    %3900 = vmatmul.mubr.f32.gmra.mrb[0].mxu0 %v3813
    %v3901 = vpop.f32.mrb[0].mxu0
    %v3902 = vadd.f32 0.0, %v3901
    %v3903 = vpop.f32.mrb[0].mxu0
    %3904 = vmatprep.mubr.f32.mxu0 0.0
    %3905 = vmatmul.mubr.f32.gmra.mrb[0].mxu0 %v3815
    %v3906 = vpop.f32.mrb[0].mxu0
    %v3907 = vpop.f32.mrb[0].mxu0
    %3908 = vmatprep.mubr.f32.mxu0 0.0
    %3909 = vmatmul.mubr.f32.gmra.mrb[0].mxu0 %v3817
    %v3910 = vpop.f32.mrb[0].mxu0
    %v3911 = vpop.f32.mrb[0].mxu0
    %3912 = vmatprep.mubr.f32.mxu0 0.0
    %3913 = vmatmul.mubr.f32.gmra.mrb[0].mxu0 %v3819
    %v3914 = vpop.f32.mrb[0].mxu0
    %v3915 = vadd.f32 0.0, %v3914
    %v3916 = vpop.f32.mrb[0].mxu0
    %3917 = vmatprep.mubr.f32.mxu0 0.0
    %3918 = vmatmul.mubr.f32.gmra.mrb[0].mxu0 %v3821
    %v3919 = vpop.f32.mrb[0].mxu0
    %v3920 = vadd.f32 0.0, %v3919
    %v3921 = vpop.f32.mrb[0].mxu0
    %3922 = vmatprep.mubr.f32.mxu0 0.0
    %3923 = vmatmul.mubr.f32.gmra.mrb[0].mxu0 %v3823
    %v3924 = vpop.f32.mrb[0].mxu0
    %v3925 = vadd.f32 0.0, %v3924
    %v3926 = vpop.f32.mrb[0].mxu0
    %3927 = vdwg.mxu0
    %v3928 = vadd.f32 %v3750, %v3892
    %v3929 = vadd.f32 %v3755, %v3897
    %v3930 = vadd.f32 %v3760, %v3902
    %v3931 = vadd.f32 %v3773, %v3915
    %v3932 = vadd.f32 %v3778, %v3920
    %v3933 = vadd.f32 %v3783, %v3925
    %v3934 = vld [vmem:[%s3 + $0x80] sm:$0xff]
    %v3935 = vld [vmem:[%s3 + $0x88] sm:$0xff]
    %v3936 = vld [vmem:[%s3 + $0x90] sm:$0xff]
    %v3937 = vld [vmem:[%s3 + $0x98] sm:$0xff]
    %v3938 = vld [vmem:[%s3 + $0xa0] sm:$0xff]
    %v3939 = vld [vmem:[%s3 + $0xa8] sm:$0xff]
    %v3940 = vld [vmem:[%s3 + $0xb0] sm:$0xff]
    %v3941 = vld [vmem:[%s3 + $0xb8] sm:$0xff]
    %v3942 = vrot.slane %v3635, 2
    %v3943 = vrot.slane %v3636, 2
    %v3944 = vsel %vm1655, %v3942, %v3943
    %v3945 = vrot.slane %v3637, 2
    %v3946 = vsel %vm1655, %v3943, %v3945
    %v3947 = vrot.slane %v3638, 2
    %v3948 = vsel %vm1655, %v3945, %v3947
    %v3949 = vrot.slane %v3639, 2
    %v3950 = vsel %vm1655, %v3947, %v3949
    %v3951 = vrot.slane %v3640, 2
    %v3952 = vsel %vm1655, %v3949, %v3951
    %v3953 = vrot.slane %v3641, 2
    %v3954 = vsel %vm1655, %v3951, %v3953
    %v3955 = vrot.slane %v3642, 2
    %v3956 = vsel %vm1655, %v3953, %v3955
    %v3957 = vsel %vm3658, %v3944, 0
    %v3959 = vsel %vm3658, %v3946, 0
    %v3961 = vsel %vm3658, %v3948, 0
    %v3963 = vsel %vm3658, %v3950, 0
    %v3965 = vsel %vm3658, %v3952, 0
    %v3967 = vsel %vm3658, %v3954, 0
    %v3969 = vsel %vm3658, %v3956, 0
    %v3971 = vsel %vm3658, %v3955, 0
    %3973 = vmatprep.subr.mxu0 0.0
    %3974 = vmatpush1.msra.mxu0 %v3934
    %3975 = vmatprep.subr.mxu0 0.0
    %3976 = vmatpush1.msra.mxu0 %v3935
    %3977 = vmatprep.subr.mxu0 0.0
    %3978 = vmatpush1.msra.mxu0 %v3936
    %3979 = vmatprep.subr.mxu0 0.0
    %3980 = vmatpush1.msra.mxu0 %v3937
    %3981 = vmatprep.subr.mxu0 0.0
    %3982 = vmatpush1.msra.mxu0 %v3938
    %3983 = vmatprep.subr.mxu0 0.0
    %3984 = vmatpush1.msra.mxu0 %v3939
    %3985 = vmatprep.subr.mxu0 0.0
    %3986 = vmatpush1.msra.mxu0 %v3940
    %3987 = vmatprep.subr.mxu0 0.0
    %3988 = vmatpush1.msra.mxu0 %v3941
    %3989 = vmatprep.subr.mxu0 0.0
    %3990 = vmatpush1.msra.mxu0 0.0
    %3991 = vmatprep.subr.mxu0 0.0
    %3992 = vmatpush1.msra.mxu0 0.0
    %3993 = vmatprep.subr.mxu0 0.0
    %3994 = vmatpush1.msra.mxu0 0.0
    %3995 = vmatprep.subr.mxu0 0.0
    %3996 = vmatpush1.msra.mxu0 0.0
    %3997 = vmatprep.subr.mxu0 0.0
    %3998 = vmatpush1.msra.mxu0 0.0
    %3999 = vmatprep.subr.mxu0 0.0
    %4000 = vmatpush1.msra.mxu0 0.0
    %4001 = vmatprep.subr.mxu0 0.0
    %4002 = vmatpush1.msra.mxu0 0.0
    %4003 = vmatprep.subr.mxu0 0.0
    %4004 = vmatpush1.msra.mxu0 0.0
    %4005 = vmatprep.subr.mxu0 0.0
    %4006 = vmatpush1.msra.mxu0 0.0
    %4007 = vmatprep.subr.mxu0 0.0
    %4008 = vmatpush1.msra.mxu0 0.0
    %4009 = vmatprep.subr.mxu0 0.0
    %4010 = vmatpush1.msra.mxu0 0.0
    %4011 = vmatprep.subr.mxu0 0.0
    %4012 = vmatpush1.msra.mxu0 0.0
    %4013 = vmatprep.subr.mxu0 0.0
    %4014 = vmatpush1.msra.mxu0 0.0
    %4015 = vmatprep.subr.mxu0 0.0
    %4016 = vmatpush1.msra.mxu0 0.0
    %4017 = vmatprep.subr.mxu0 0.0
    %4018 = vmatpush1.msra.mxu0 0.0
    %4019 = vmatprep.subr.mxu0 0.0
    %4020 = vmatpush1.msra.mxu0 0.0
    %4021 = vmatprep.subr.mxu0 0.0
    %4022 = vmatpush1.msra.mxu0 0.0
    %4023 = vmatprep.subr.mxu0 0.0
    %4024 = vmatpush1.msra.mxu0 0.0
    %4025 = vmatprep.subr.mxu0 0.0
    %4026 = vmatpush1.msra.mxu0 0.0
    %4027 = vmatprep.subr.mxu0 0.0
    %4028 = vmatpush1.msra.mxu0 0.0
    %4029 = vmatprep.subr.mxu0 0.0
    %4030 = vmatpush1.msra.mxu0 0.0
    %4031 = vmatprep.subr.mxu0 0.0
    %4032 = vmatpush1.msra.mxu0 0.0
    %4033 = vmatprep.subr.mxu0 0.0
    %4034 = vmatpush1.msra.mxu0 0.0
    %4035 = vmatprep.subr.mxu0 0.0
    %4036 = vmatpush1.msra.mxu0 0.0
    %4037 = vmatprep.mubr.f32.mxu0 0.0
    %4038 = vmatmul.mubr.f32.gmra.mrb[0].mxu0 %v3957
    %v4039 = vpop.f32.mrb[0].mxu0
    %v4040 = vadd.f32 0.0, %v4039
    %v4041 = vpop.f32.mrb[0].mxu0
    %4042 = vmatprep.mubr.f32.mxu0 0.0
    %4043 = vmatmul.mubr.f32.gmra.mrb[0].mxu0 %v3959
    %v4044 = vpop.f32.mrb[0].mxu0
    %v4045 = vadd.f32 0.0, %v4044
    %v4046 = vpop.f32.mrb[0].mxu0
    %4047 = vmatprep.mubr.f32.mxu0 0.0
    %4048 = vmatmul.mubr.f32.gmra.mrb[0].mxu0 %v3961
    %v4049 = vpop.f32.mrb[0].mxu0
    %v4050 = vadd.f32 0.0, %v4049
    %v4051 = vpop.f32.mrb[0].mxu0
    %4052 = vmatprep.mubr.f32.mxu0 0.0
    %4053 = vmatmul.mubr.f32.gmra.mrb[0].mxu0 %v3963
    %v4054 = vpop.f32.mrb[0].mxu0
    %v4055 = vpop.f32.mrb[0].mxu0
    %4056 = vmatprep.mubr.f32.mxu0 0.0
    %4057 = vmatmul.mubr.f32.gmra.mrb[0].mxu0 %v3965
    %v4058 = vpop.f32.mrb[0].mxu0
    %v4059 = vpop.f32.mrb[0].mxu0
    %4060 = vmatprep.mubr.f32.mxu0 0.0
    %4061 = vmatmul.mubr.f32.gmra.mrb[0].mxu0 %v3967
    %v4062 = vpop.f32.mrb[0].mxu0
    %v4063 = vadd.f32 0.0, %v4062
    %v4064 = vpop.f32.mrb[0].mxu0
    %4065 = vmatprep.mubr.f32.mxu0 0.0
    %4066 = vmatmul.mubr.f32.gmra.mrb[0].mxu0 %v3969
    %v4067 = vpop.f32.mrb[0].mxu0
    %v4068 = vadd.f32 0.0, %v4067
    %v4069 = vpop.f32.mrb[0].mxu0
    %4070 = vmatprep.mubr.f32.mxu0 0.0
    %4071 = vmatmul.mubr.f32.gmra.mrb[0].mxu0 %v3971
    %v4072 = vpop.f32.mrb[0].mxu0
    %v4073 = vadd.f32 0.0, %v4072
    %v4074 = vpop.f32.mrb[0].mxu0
    %4075 = vdwg.mxu0
    %v4076 = vadd.f32 %v3928, %v4040
    %v4077 = vadd.f32 %v3929, %v4045
    %v4078 = vadd.f32 %v3930, %v4050
    %v4079 = vadd.f32 %v3931, %v4063
    %v4080 = vadd.f32 %v3932, %v4068
    %v4081 = vadd.f32 %v3933, %v4073
    %v4082 = vld [vmem:[%s3 + $0xc0] sm:$0xff]
    %v4083 = vld [vmem:[%s3 + $0xc8] sm:$0xff]
    %v4084 = vld [vmem:[%s3 + $0xd0] sm:$0xff]
    %v4085 = vld [vmem:[%s3 + $0xd8] sm:$0xff]
    %v4086 = vld [vmem:[%s3 + $0xe0] sm:$0xff]
    %v4087 = vld [vmem:[%s3 + $0xe8] sm:$0xff]
    %v4088 = vld [vmem:[%s3 + $0xf0] sm:$0xff]
    %v4089 = vld [vmem:[%s3 + $0xf8] sm:$0xff]
    %v4090 = vrot.slane %v3635, 3
    %v4091 = vrot.slane %v3636, 3
    %v4092 = vsel %vm1814, %v4090, %v4091
    %v4093 = vrot.slane %v3637, 3
    %v4094 = vsel %vm1814, %v4091, %v4093
    %v4095 = vrot.slane %v3638, 3
    %v4096 = vsel %vm1814, %v4093, %v4095
    %v4097 = vrot.slane %v3639, 3
    %v4098 = vsel %vm1814, %v4095, %v4097
    %v4099 = vrot.slane %v3640, 3
    %v4100 = vsel %vm1814, %v4097, %v4099
    %v4101 = vrot.slane %v3641, 3
    %v4102 = vsel %vm1814, %v4099, %v4101
    %v4103 = vrot.slane %v3642, 3
    %v4104 = vsel %vm1814, %v4101, %v4103
    %v4105 = vsel %vm3658, %v4092, 0
    %v4107 = vsel %vm3658, %v4094, 0
    %v4109 = vsel %vm3658, %v4096, 0
    %v4111 = vsel %vm3658, %v4098, 0
    %v4113 = vsel %vm3658, %v4100, 0
    %v4115 = vsel %vm3658, %v4102, 0
    %v4117 = vsel %vm3658, %v4104, 0
    %v4119 = vsel %vm3658, %v4103, 0
    %4121 = vmatprep.subr.mxu0 0.0
    %4122 = vmatpush1.msra.mxu0 %v4082
    %4123 = vmatprep.subr.mxu0 0.0
    %4124 = vmatpush1.msra.mxu0 %v4083
    %4125 = vmatprep.subr.mxu0 0.0
    %4126 = vmatpush1.msra.mxu0 %v4084
    %4127 = vmatprep.subr.mxu0 0.0
    %4128 = vmatpush1.msra.mxu0 %v4085
    %4129 = vmatprep.subr.mxu0 0.0
    %4130 = vmatpush1.msra.mxu0 %v4086
    %4131 = vmatprep.subr.mxu0 0.0
    %4132 = vmatpush1.msra.mxu0 %v4087
    %4133 = vmatprep.subr.mxu0 0.0
    %4134 = vmatpush1.msra.mxu0 %v4088
    %4135 = vmatprep.subr.mxu0 0.0
    %4136 = vmatpush1.msra.mxu0 %v4089
    %4137 = vmatprep.subr.mxu0 0.0
    %4138 = vmatpush1.msra.mxu0 0.0
    %4139 = vmatprep.subr.mxu0 0.0
    %4140 = vmatpush1.msra.mxu0 0.0
    %4141 = vmatprep.subr.mxu0 0.0
    %4142 = vmatpush1.msra.mxu0 0.0
    %4143 = vmatprep.subr.mxu0 0.0
    %4144 = vmatpush1.msra.mxu0 0.0
    %4145 = vmatprep.subr.mxu0 0.0
    %4146 = vmatpush1.msra.mxu0 0.0
    %4147 = vmatprep.subr.mxu0 0.0
    %4148 = vmatpush1.msra.mxu0 0.0
    %4149 = vmatprep.subr.mxu0 0.0
    %4150 = vmatpush1.msra.mxu0 0.0
    %4151 = vmatprep.subr.mxu0 0.0
    %4152 = vmatpush1.msra.mxu0 0.0
    %4153 = vmatprep.subr.mxu0 0.0
    %4154 = vmatpush1.msra.mxu0 0.0
    %4155 = vmatprep.subr.mxu0 0.0
    %4156 = vmatpush1.msra.mxu0 0.0
    %4157 = vmatprep.subr.mxu0 0.0
    %4158 = vmatpush1.msra.mxu0 0.0
    %4159 = vmatprep.subr.mxu0 0.0
    %4160 = vmatpush1.msra.mxu0 0.0
    %4161 = vmatprep.subr.mxu0 0.0
    %4162 = vmatpush1.msra.mxu0 0.0
    %4163 = vmatprep.subr.mxu0 0.0
    %4164 = vmatpush1.msra.mxu0 0.0
    %4165 = vmatprep.subr.mxu0 0.0
    %4166 = vmatpush1.msra.mxu0 0.0
    %4167 = vmatprep.subr.mxu0 0.0
    %4168 = vmatpush1.msra.mxu0 0.0
    %4169 = vmatprep.subr.mxu0 0.0
    %4170 = vmatpush1.msra.mxu0 0.0
    %4171 = vmatprep.subr.mxu0 0.0
    %4172 = vmatpush1.msra.mxu0 0.0
    %4173 = vmatprep.subr.mxu0 0.0
    %4174 = vmatpush1.msra.mxu0 0.0
    %4175 = vmatprep.subr.mxu0 0.0
    %4176 = vmatpush1.msra.mxu0 0.0
    %4177 = vmatprep.subr.mxu0 0.0
    %4178 = vmatpush1.msra.mxu0 0.0
    %4179 = vmatprep.subr.mxu0 0.0
    %4180 = vmatpush1.msra.mxu0 0.0
    %4181 = vmatprep.subr.mxu0 0.0
    %4182 = vmatpush1.msra.mxu0 0.0
    %4183 = vmatprep.subr.mxu0 0.0
    %4184 = vmatpush1.msra.mxu0 0.0
    %4185 = vmatprep.mubr.f32.mxu0 0.0
    %4186 = vmatmul.mubr.f32.gmra.mrb[0].mxu0 %v4105
    %v4187 = vpop.f32.mrb[0].mxu0
    %v4188 = vadd.f32 0.0, %v4187
    %v4189 = vpop.f32.mrb[0].mxu0
    %4190 = vmatprep.mubr.f32.mxu0 0.0
    %4191 = vmatmul.mubr.f32.gmra.mrb[0].mxu0 %v4107
    %v4192 = vpop.f32.mrb[0].mxu0
    %v4193 = vadd.f32 0.0, %v4192
    %v4194 = vpop.f32.mrb[0].mxu0
    %4195 = vmatprep.mubr.f32.mxu0 0.0
    %4196 = vmatmul.mubr.f32.gmra.mrb[0].mxu0 %v4109
    %v4197 = vpop.f32.mrb[0].mxu0
    %v4198 = vadd.f32 0.0, %v4197
    %v4199 = vpop.f32.mrb[0].mxu0
    %4200 = vmatprep.mubr.f32.mxu0 0.0
    %4201 = vmatmul.mubr.f32.gmra.mrb[0].mxu0 %v4111
    %v4202 = vpop.f32.mrb[0].mxu0
    %v4203 = vpop.f32.mrb[0].mxu0
    %4204 = vmatprep.mubr.f32.mxu0 0.0
    %4205 = vmatmul.mubr.f32.gmra.mrb[0].mxu0 %v4113
    %v4206 = vpop.f32.mrb[0].mxu0
    %v4207 = vpop.f32.mrb[0].mxu0
    %4208 = vmatprep.mubr.f32.mxu0 0.0
    %4209 = vmatmul.mubr.f32.gmra.mrb[0].mxu0 %v4115
    %v4210 = vpop.f32.mrb[0].mxu0
    %v4211 = vadd.f32 0.0, %v4210
    %v4212 = vpop.f32.mrb[0].mxu0
    %4213 = vmatprep.mubr.f32.mxu0 0.0
    %4214 = vmatmul.mubr.f32.gmra.mrb[0].mxu0 %v4117
    %v4215 = vpop.f32.mrb[0].mxu0
    %v4216 = vadd.f32 0.0, %v4215
    %v4217 = vpop.f32.mrb[0].mxu0
    %4218 = vmatprep.mubr.f32.mxu0 0.0
    %4219 = vmatmul.mubr.f32.gmra.mrb[0].mxu0 %v4119
    %v4220 = vpop.f32.mrb[0].mxu0
    %v4221 = vadd.f32 0.0, %v4220
    %v4222 = vpop.f32.mrb[0].mxu0
    %4223 = vdwg.mxu0
    %v4224 = vadd.f32 %v4076, %v4188
    %v4225 = vadd.f32 %v4077, %v4193
    %v4226 = vadd.f32 %v4078, %v4198
    %v4227 = vadd.f32 %v4079, %v4211
    %v4228 = vadd.f32 %v4080, %v4216
    %v4229 = vadd.f32 %v4081, %v4221
    %v4230 = vld [vmem:[%s3 + $0x100] sm:$0xff]
    %v4231 = vld [vmem:[%s3 + $0x108] sm:$0xff]
    %v4232 = vld [vmem:[%s3 + $0x110] sm:$0xff]
    %v4233 = vld [vmem:[%s3 + $0x118] sm:$0xff]
    %v4234 = vld [vmem:[%s3 + $0x120] sm:$0xff]
    %v4235 = vld [vmem:[%s3 + $0x128] sm:$0xff]
    %v4236 = vld [vmem:[%s3 + $0x130] sm:$0xff]
    %v4237 = vld [vmem:[%s3 + $0x138] sm:$0xff]
    %v4238 = vrot.slane %v3635, 4
    %v4239 = vrot.slane %v3636, 4
    %v4240 = vsel %vm1973, %v4238, %v4239
    %v4241 = vrot.slane %v3637, 4
    %v4242 = vsel %vm1973, %v4239, %v4241
    %v4243 = vrot.slane %v3638, 4
    %v4244 = vsel %vm1973, %v4241, %v4243
    %v4245 = vrot.slane %v3639, 4
    %v4246 = vsel %vm1973, %v4243, %v4245
    %v4247 = vrot.slane %v3640, 4
    %v4248 = vsel %vm1973, %v4245, %v4247
    %v4249 = vrot.slane %v3641, 4
    %v4250 = vsel %vm1973, %v4247, %v4249
    %v4251 = vrot.slane %v3642, 4
    %v4252 = vsel %vm1973, %v4249, %v4251
    %v4253 = vsel %vm3658, %v4240, 0
    %v4255 = vsel %vm3658, %v4242, 0
    %v4257 = vsel %vm3658, %v4244, 0
    %v4259 = vsel %vm3658, %v4246, 0
    %v4261 = vsel %vm3658, %v4248, 0
    %v4263 = vsel %vm3658, %v4250, 0
    %v4265 = vsel %vm3658, %v4252, 0
    %v4267 = vsel %vm3658, %v4251, 0
    %4269 = vmatprep.subr.mxu0 0.0
    %4270 = vmatpush1.msra.mxu0 %v4230
    %4271 = vmatprep.subr.mxu0 0.0
    %4272 = vmatpush1.msra.mxu0 %v4231
    %4273 = vmatprep.subr.mxu0 0.0
    %4274 = vmatpush1.msra.mxu0 %v4232
    %4275 = vmatprep.subr.mxu0 0.0
    %4276 = vmatpush1.msra.mxu0 %v4233
    %4277 = vmatprep.subr.mxu0 0.0
    %4278 = vmatpush1.msra.mxu0 %v4234
    %4279 = vmatprep.subr.mxu0 0.0
    %4280 = vmatpush1.msra.mxu0 %v4235
    %4281 = vmatprep.subr.mxu0 0.0
    %4282 = vmatpush1.msra.mxu0 %v4236
    %4283 = vmatprep.subr.mxu0 0.0
    %4284 = vmatpush1.msra.mxu0 %v4237
    %4285 = vmatprep.subr.mxu0 0.0
    %4286 = vmatpush1.msra.mxu0 0.0
    %4287 = vmatprep.subr.mxu0 0.0
    %4288 = vmatpush1.msra.mxu0 0.0
    %4289 = vmatprep.subr.mxu0 0.0
    %4290 = vmatpush1.msra.mxu0 0.0
    %4291 = vmatprep.subr.mxu0 0.0
    %4292 = vmatpush1.msra.mxu0 0.0
    %4293 = vmatprep.subr.mxu0 0.0
    %4294 = vmatpush1.msra.mxu0 0.0
    %4295 = vmatprep.subr.mxu0 0.0
    %4296 = vmatpush1.msra.mxu0 0.0
    %4297 = vmatprep.subr.mxu0 0.0
    %4298 = vmatpush1.msra.mxu0 0.0
    %4299 = vmatprep.subr.mxu0 0.0
    %4300 = vmatpush1.msra.mxu0 0.0
    %4301 = vmatprep.subr.mxu0 0.0
    %4302 = vmatpush1.msra.mxu0 0.0
    %4303 = vmatprep.subr.mxu0 0.0
    %4304 = vmatpush1.msra.mxu0 0.0
    %4305 = vmatprep.subr.mxu0 0.0
    %4306 = vmatpush1.msra.mxu0 0.0
    %4307 = vmatprep.subr.mxu0 0.0
    %4308 = vmatpush1.msra.mxu0 0.0
    %4309 = vmatprep.subr.mxu0 0.0
    %4310 = vmatpush1.msra.mxu0 0.0
    %4311 = vmatprep.subr.mxu0 0.0
    %4312 = vmatpush1.msra.mxu0 0.0
    %4313 = vmatprep.subr.mxu0 0.0
    %4314 = vmatpush1.msra.mxu0 0.0
    %4315 = vmatprep.subr.mxu0 0.0
    %4316 = vmatpush1.msra.mxu0 0.0
    %4317 = vmatprep.subr.mxu0 0.0
    %4318 = vmatpush1.msra.mxu0 0.0
    %4319 = vmatprep.subr.mxu0 0.0
    %4320 = vmatpush1.msra.mxu0 0.0
    %4321 = vmatprep.subr.mxu0 0.0
    %4322 = vmatpush1.msra.mxu0 0.0
    %4323 = vmatprep.subr.mxu0 0.0
    %4324 = vmatpush1.msra.mxu0 0.0
    %4325 = vmatprep.subr.mxu0 0.0
    %4326 = vmatpush1.msra.mxu0 0.0
    %4327 = vmatprep.subr.mxu0 0.0
    %4328 = vmatpush1.msra.mxu0 0.0
    %4329 = vmatprep.subr.mxu0 0.0
    %4330 = vmatpush1.msra.mxu0 0.0
    %4331 = vmatprep.subr.mxu0 0.0
    %4332 = vmatpush1.msra.mxu0 0.0
    %4333 = vmatprep.mubr.f32.mxu0 0.0
    %4334 = vmatmul.mubr.f32.gmra.mrb[0].mxu0 %v4253
    %v4335 = vpop.f32.mrb[0].mxu0
    %v4336 = vadd.f32 0.0, %v4335
    %v4337 = vpop.f32.mrb[0].mxu0
    %4338 = vmatprep.mubr.f32.mxu0 0.0
    %4339 = vmatmul.mubr.f32.gmra.mrb[0].mxu0 %v4255
    %v4340 = vpop.f32.mrb[0].mxu0
    %v4341 = vadd.f32 0.0, %v4340
    %v4342 = vpop.f32.mrb[0].mxu0
    %4343 = vmatprep.mubr.f32.mxu0 0.0
    %4344 = vmatmul.mubr.f32.gmra.mrb[0].mxu0 %v4257
    %v4345 = vpop.f32.mrb[0].mxu0
    %v4346 = vadd.f32 0.0, %v4345
    %v4347 = vpop.f32.mrb[0].mxu0
    %4348 = vmatprep.mubr.f32.mxu0 0.0
    %4349 = vmatmul.mubr.f32.gmra.mrb[0].mxu0 %v4259
    %v4350 = vpop.f32.mrb[0].mxu0
    %v4351 = vpop.f32.mrb[0].mxu0
    %4352 = vmatprep.mubr.f32.mxu0 0.0
    %4353 = vmatmul.mubr.f32.gmra.mrb[0].mxu0 %v4261
    %v4354 = vpop.f32.mrb[0].mxu0
    %v4355 = vpop.f32.mrb[0].mxu0
    %4356 = vmatprep.mubr.f32.mxu0 0.0
    %4357 = vmatmul.mubr.f32.gmra.mrb[0].mxu0 %v4263
    %v4358 = vpop.f32.mrb[0].mxu0
    %v4359 = vadd.f32 0.0, %v4358
    %v4360 = vpop.f32.mrb[0].mxu0
    %4361 = vmatprep.mubr.f32.mxu0 0.0
    %4362 = vmatmul.mubr.f32.gmra.mrb[0].mxu0 %v4265
    %v4363 = vpop.f32.mrb[0].mxu0
    %v4364 = vadd.f32 0.0, %v4363
    %v4365 = vpop.f32.mrb[0].mxu0
    %4366 = vmatprep.mubr.f32.mxu0 0.0
    %4367 = vmatmul.mubr.f32.gmra.mrb[0].mxu0 %v4267
    %v4368 = vpop.f32.mrb[0].mxu0
    %v4369 = vadd.f32 0.0, %v4368
    %v4370 = vpop.f32.mrb[0].mxu0
    %4371 = vdwg.mxu0
    %v4372 = vadd.f32 %v4224, %v4336
    %v4373 = vadd.f32 %v4225, %v4341
    %v4374 = vadd.f32 %v4226, %v4346
    %v4375 = vadd.f32 %v4227, %v4359
    %v4376 = vadd.f32 %v4228, %v4364
    %v4377 = vadd.f32 %v4229, %v4369
    %v4378 = vld [vmem:[%s3 + $0x140] sm:$0xff]
    %v4379 = vld [vmem:[%s3 + $0x148] sm:$0xff]
    %v4380 = vld [vmem:[%s3 + $0x150] sm:$0xff]
    %v4381 = vld [vmem:[%s3 + $0x158] sm:$0xff]
    %v4382 = vld [vmem:[%s3 + $0x160] sm:$0xff]
    %v4383 = vld [vmem:[%s3 + $0x168] sm:$0xff]
    %v4384 = vld [vmem:[%s3 + $0x170] sm:$0xff]
    %v4385 = vld [vmem:[%s3 + $0x178] sm:$0xff]
    %v4387 = vrot.slane %v3635, 5
    %v4388 = vrot.slane %v3636, 5
    %v4389 = vsel %vm2132, %v4387, %v4388
    %v4390 = vrot.slane %v3637, 5
    %v4391 = vsel %vm2132, %v4388, %v4390
    %v4392 = vrot.slane %v3638, 5
    %v4393 = vsel %vm2132, %v4390, %v4392
    %v4394 = vrot.slane %v3639, 5
    %v4395 = vsel %vm2132, %v4392, %v4394
    %v4396 = vrot.slane %v3640, 5
    %v4397 = vsel %vm2132, %v4394, %v4396
    %v4398 = vrot.slane %v3641, 5
    %v4399 = vsel %vm2132, %v4396, %v4398
    %v4400 = vrot.slane %v3642, 5
    %v4401 = vsel %vm2132, %v4398, %v4400
    %v4402 = vrot.slane %v3643, 5
    %v4403 = vsel %vm2132, %v4400, %v4402
    %v4404 = vsel %vm3658, %v4389, 0
    %v4406 = vsel %vm3658, %v4391, 0
    %v4408 = vsel %vm3658, %v4393, 0
    %v4410 = vsel %vm3658, %v4395, 0
    %v4412 = vsel %vm3658, %v4397, 0
    %v4414 = vsel %vm3658, %v4399, 0
    %v4416 = vsel %vm3658, %v4401, 0
    %v4418 = vsel %vm3658, %v4403, 0
    %4420 = vmatprep.subr.mxu0 0.0
    %4421 = vmatpush1.msra.mxu0 %v4378
    %4422 = vmatprep.subr.mxu0 0.0
    %4423 = vmatpush1.msra.mxu0 %v4379
    %4424 = vmatprep.subr.mxu0 0.0
    %4425 = vmatpush1.msra.mxu0 %v4380
    %4426 = vmatprep.subr.mxu0 0.0
    %4427 = vmatpush1.msra.mxu0 %v4381
    %4428 = vmatprep.subr.mxu0 0.0
    %4429 = vmatpush1.msra.mxu0 %v4382
    %4430 = vmatprep.subr.mxu0 0.0
    %4431 = vmatpush1.msra.mxu0 %v4383
    %4432 = vmatprep.subr.mxu0 0.0
    %4433 = vmatpush1.msra.mxu0 %v4384
    %4434 = vmatprep.subr.mxu0 0.0
    %4435 = vmatpush1.msra.mxu0 %v4385
    %4436 = vmatprep.subr.mxu0 0.0
    %4437 = vmatpush1.msra.mxu0 0.0
    %4438 = vmatprep.subr.mxu0 0.0
    %4439 = vmatpush1.msra.mxu0 0.0
    %4440 = vmatprep.subr.mxu0 0.0
    %4441 = vmatpush1.msra.mxu0 0.0
    %4442 = vmatprep.subr.mxu0 0.0
    %4443 = vmatpush1.msra.mxu0 0.0
    %4444 = vmatprep.subr.mxu0 0.0
    %4445 = vmatpush1.msra.mxu0 0.0
    %4446 = vmatprep.subr.mxu0 0.0
    %4447 = vmatpush1.msra.mxu0 0.0
    %4448 = vmatprep.subr.mxu0 0.0
    %4449 = vmatpush1.msra.mxu0 0.0
    %4450 = vmatprep.subr.mxu0 0.0
    %4451 = vmatpush1.msra.mxu0 0.0
    %4452 = vmatprep.subr.mxu0 0.0
    %4453 = vmatpush1.msra.mxu0 0.0
    %4454 = vmatprep.subr.mxu0 0.0
    %4455 = vmatpush1.msra.mxu0 0.0
    %4456 = vmatprep.subr.mxu0 0.0
    %4457 = vmatpush1.msra.mxu0 0.0
    %4458 = vmatprep.subr.mxu0 0.0
    %4459 = vmatpush1.msra.mxu0 0.0
    %4460 = vmatprep.subr.mxu0 0.0
    %4461 = vmatpush1.msra.mxu0 0.0
    %4462 = vmatprep.subr.mxu0 0.0
    %4463 = vmatpush1.msra.mxu0 0.0
    %4464 = vmatprep.subr.mxu0 0.0
    %4465 = vmatpush1.msra.mxu0 0.0
    %4466 = vmatprep.subr.mxu0 0.0
    %4467 = vmatpush1.msra.mxu0 0.0
    %4468 = vmatprep.subr.mxu0 0.0
    %4469 = vmatpush1.msra.mxu0 0.0
    %4470 = vmatprep.subr.mxu0 0.0
    %4471 = vmatpush1.msra.mxu0 0.0
    %4472 = vmatprep.subr.mxu0 0.0
    %4473 = vmatpush1.msra.mxu0 0.0
    %4474 = vmatprep.subr.mxu0 0.0
    %4475 = vmatpush1.msra.mxu0 0.0
    %4476 = vmatprep.subr.mxu0 0.0
    %4477 = vmatpush1.msra.mxu0 0.0
    %4478 = vmatprep.subr.mxu0 0.0
    %4479 = vmatpush1.msra.mxu0 0.0
    %4480 = vmatprep.subr.mxu0 0.0
    %4481 = vmatpush1.msra.mxu0 0.0
    %4482 = vmatprep.subr.mxu0 0.0
    %4483 = vmatpush1.msra.mxu0 0.0
    %4484 = vmatprep.mubr.f32.mxu0 0.0
    %4485 = vmatmul.mubr.f32.gmra.mrb[0].mxu0 %v4404
    %v4486 = vpop.f32.mrb[0].mxu0
    %v4487 = vadd.f32 0.0, %v4486
    %v4488 = vpop.f32.mrb[0].mxu0
    %4489 = vmatprep.mubr.f32.mxu0 0.0
    %4490 = vmatmul.mubr.f32.gmra.mrb[0].mxu0 %v4406
    %v4491 = vpop.f32.mrb[0].mxu0
    %v4492 = vadd.f32 0.0, %v4491
    %v4493 = vpop.f32.mrb[0].mxu0
    %4494 = vmatprep.mubr.f32.mxu0 0.0
    %4495 = vmatmul.mubr.f32.gmra.mrb[0].mxu0 %v4408
    %v4496 = vpop.f32.mrb[0].mxu0
    %v4497 = vadd.f32 0.0, %v4496
    %v4498 = vpop.f32.mrb[0].mxu0
    %4499 = vmatprep.mubr.f32.mxu0 0.0
    %4500 = vmatmul.mubr.f32.gmra.mrb[0].mxu0 %v4410
    %v4501 = vpop.f32.mrb[0].mxu0
    %v4502 = vpop.f32.mrb[0].mxu0
    %4503 = vmatprep.mubr.f32.mxu0 0.0
    %4504 = vmatmul.mubr.f32.gmra.mrb[0].mxu0 %v4412
    %v4505 = vpop.f32.mrb[0].mxu0
    %v4506 = vpop.f32.mrb[0].mxu0
    %4507 = vmatprep.mubr.f32.mxu0 0.0
    %4508 = vmatmul.mubr.f32.gmra.mrb[0].mxu0 %v4414
    %v4509 = vpop.f32.mrb[0].mxu0
    %v4510 = vadd.f32 0.0, %v4509
    %v4511 = vpop.f32.mrb[0].mxu0
    %4512 = vmatprep.mubr.f32.mxu0 0.0
    %4513 = vmatmul.mubr.f32.gmra.mrb[0].mxu0 %v4416
    %v4514 = vpop.f32.mrb[0].mxu0
    %v4515 = vadd.f32 0.0, %v4514
    %v4516 = vpop.f32.mrb[0].mxu0
    %4517 = vmatprep.mubr.f32.mxu0 0.0
    %4518 = vmatmul.mubr.f32.gmra.mrb[0].mxu0 %v4418
    %v4519 = vpop.f32.mrb[0].mxu0
    %v4520 = vadd.f32 0.0, %v4519
    %v4521 = vpop.f32.mrb[0].mxu0
    %4522 = vdwg.mxu0
    %v4523 = vadd.f32 %v4372, %v4487
    %v4524 = vadd.f32 %v4373, %v4492
    %v4525 = vadd.f32 %v4374, %v4497
    %v4526 = vadd.f32 %v4375, %v4510
    %v4527 = vadd.f32 %v4376, %v4515
    %v4528 = vadd.f32 %v4377, %v4520
    %v4529 = vld [vmem:[%s3 + $0x180] sm:$0xff]
    %v4530 = vld [vmem:[%s3 + $0x188] sm:$0xff]
    %v4531 = vld [vmem:[%s3 + $0x190] sm:$0xff]
    %v4532 = vld [vmem:[%s3 + $0x198] sm:$0xff]
    %v4533 = vld [vmem:[%s3 + $0x1a0] sm:$0xff]
    %v4534 = vld [vmem:[%s3 + $0x1a8] sm:$0xff]
    %v4535 = vld [vmem:[%s3 + $0x1b0] sm:$0xff]
    %v4536 = vld [vmem:[%s3 + $0x1b8] sm:$0xff]
    %v4537 = vrot.slane %v3635, 6
    %v4538 = vrot.slane %v3636, 6
    %v4539 = vsel %vm2292, %v4537, %v4538
    %v4540 = vrot.slane %v3637, 6
    %v4541 = vsel %vm2292, %v4538, %v4540
    %v4542 = vrot.slane %v3638, 6
    %v4543 = vsel %vm2292, %v4540, %v4542
    %v4544 = vrot.slane %v3639, 6
    %v4545 = vsel %vm2292, %v4542, %v4544
    %v4546 = vrot.slane %v3640, 6
    %v4547 = vsel %vm2292, %v4544, %v4546
    %v4548 = vrot.slane %v3641, 6
    %v4549 = vsel %vm2292, %v4546, %v4548
    %v4550 = vrot.slane %v3642, 6
    %v4551 = vsel %vm2292, %v4548, %v4550
    %v4552 = vrot.slane %v3643, 6
    %v4553 = vsel %vm2292, %v4550, %v4552
    %v4554 = vsel %vm3658, %v4539, 0
    %v4556 = vsel %vm3658, %v4541, 0
    %v4558 = vsel %vm3658, %v4543, 0
    %v4560 = vsel %vm3658, %v4545, 0
    %v4562 = vsel %vm3658, %v4547, 0
    %v4564 = vsel %vm3658, %v4549, 0
    %v4566 = vsel %vm3658, %v4551, 0
    %v4568 = vsel %vm3658, %v4553, 0
    %4570 = vmatprep.subr.mxu0 0.0
    %4571 = vmatpush1.msra.mxu0 %v4529
    %4572 = vmatprep.subr.mxu0 0.0
    %4573 = vmatpush1.msra.mxu0 %v4530
    %4574 = vmatprep.subr.mxu0 0.0
    %4575 = vmatpush1.msra.mxu0 %v4531
    %4576 = vmatprep.subr.mxu0 0.0
    %4577 = vmatpush1.msra.mxu0 %v4532
    %4578 = vmatprep.subr.mxu0 0.0
    %4579 = vmatpush1.msra.mxu0 %v4533
    %4580 = vmatprep.subr.mxu0 0.0
    %4581 = vmatpush1.msra.mxu0 %v4534
    %4582 = vmatprep.subr.mxu0 0.0
    %4583 = vmatpush1.msra.mxu0 %v4535
    %4584 = vmatprep.subr.mxu0 0.0
    %4585 = vmatpush1.msra.mxu0 %v4536
    %4586 = vmatprep.subr.mxu0 0.0
    %4587 = vmatpush1.msra.mxu0 0.0
    %4588 = vmatprep.subr.mxu0 0.0
    %4589 = vmatpush1.msra.mxu0 0.0
    %4590 = vmatprep.subr.mxu0 0.0
    %4591 = vmatpush1.msra.mxu0 0.0
    %4592 = vmatprep.subr.mxu0 0.0
    %4593 = vmatpush1.msra.mxu0 0.0
    %4594 = vmatprep.subr.mxu0 0.0
    %4595 = vmatpush1.msra.mxu0 0.0
    %4596 = vmatprep.subr.mxu0 0.0
    %4597 = vmatpush1.msra.mxu0 0.0
    %4598 = vmatprep.subr.mxu0 0.0
    %4599 = vmatpush1.msra.mxu0 0.0
    %4600 = vmatprep.subr.mxu0 0.0
    %4601 = vmatpush1.msra.mxu0 0.0
    %4602 = vmatprep.subr.mxu0 0.0
    %4603 = vmatpush1.msra.mxu0 0.0
    %4604 = vmatprep.subr.mxu0 0.0
    %4605 = vmatpush1.msra.mxu0 0.0
    %4606 = vmatprep.subr.mxu0 0.0
    %4607 = vmatpush1.msra.mxu0 0.0
    %4608 = vmatprep.subr.mxu0 0.0
    %4609 = vmatpush1.msra.mxu0 0.0
    %4610 = vmatprep.subr.mxu0 0.0
    %4611 = vmatpush1.msra.mxu0 0.0
    %4612 = vmatprep.subr.mxu0 0.0
    %4613 = vmatpush1.msra.mxu0 0.0
    %4614 = vmatprep.subr.mxu0 0.0
    %4615 = vmatpush1.msra.mxu0 0.0
    %4616 = vmatprep.subr.mxu0 0.0
    %4617 = vmatpush1.msra.mxu0 0.0
    %4618 = vmatprep.subr.mxu0 0.0
    %4619 = vmatpush1.msra.mxu0 0.0
    %4620 = vmatprep.subr.mxu0 0.0
    %4621 = vmatpush1.msra.mxu0 0.0
    %4622 = vmatprep.subr.mxu0 0.0
    %4623 = vmatpush1.msra.mxu0 0.0
    %4624 = vmatprep.subr.mxu0 0.0
    %4625 = vmatpush1.msra.mxu0 0.0
    %4626 = vmatprep.subr.mxu0 0.0
    %4627 = vmatpush1.msra.mxu0 0.0
    %4628 = vmatprep.subr.mxu0 0.0
    %4629 = vmatpush1.msra.mxu0 0.0
    %4630 = vmatprep.subr.mxu0 0.0
    %4631 = vmatpush1.msra.mxu0 0.0
    %4632 = vmatprep.subr.mxu0 0.0
    %4633 = vmatpush1.msra.mxu0 0.0
    %4634 = vmatprep.mubr.f32.mxu0 0.0
    %4635 = vmatmul.mubr.f32.gmra.mrb[0].mxu0 %v4554
    %v4636 = vpop.f32.mrb[0].mxu0
    %v4637 = vadd.f32 0.0, %v4636
    %v4638 = vpop.f32.mrb[0].mxu0
    %4639 = vmatprep.mubr.f32.mxu0 0.0
    %4640 = vmatmul.mubr.f32.gmra.mrb[0].mxu0 %v4556
    %v4641 = vpop.f32.mrb[0].mxu0
    %v4642 = vadd.f32 0.0, %v4641
    %v4643 = vpop.f32.mrb[0].mxu0
    %4644 = vmatprep.mubr.f32.mxu0 0.0
    %4645 = vmatmul.mubr.f32.gmra.mrb[0].mxu0 %v4558
    %v4646 = vpop.f32.mrb[0].mxu0
    %v4647 = vadd.f32 0.0, %v4646
    %v4648 = vpop.f32.mrb[0].mxu0
    %4649 = vmatprep.mubr.f32.mxu0 0.0
    %4650 = vmatmul.mubr.f32.gmra.mrb[0].mxu0 %v4560
    %v4651 = vpop.f32.mrb[0].mxu0
    %v4652 = vpop.f32.mrb[0].mxu0
    %4653 = vmatprep.mubr.f32.mxu0 0.0
    %4654 = vmatmul.mubr.f32.gmra.mrb[0].mxu0 %v4562
    %v4655 = vpop.f32.mrb[0].mxu0
    %v4656 = vpop.f32.mrb[0].mxu0
    %4657 = vmatprep.mubr.f32.mxu0 0.0
    %4658 = vmatmul.mubr.f32.gmra.mrb[0].mxu0 %v4564
    %v4659 = vpop.f32.mrb[0].mxu0
    %v4660 = vadd.f32 0.0, %v4659
    %v4661 = vpop.f32.mrb[0].mxu0
    %4662 = vmatprep.mubr.f32.mxu0 0.0
    %4663 = vmatmul.mubr.f32.gmra.mrb[0].mxu0 %v4566
    %v4664 = vpop.f32.mrb[0].mxu0
    %v4665 = vadd.f32 0.0, %v4664
    %v4666 = vpop.f32.mrb[0].mxu0
    %4667 = vmatprep.mubr.f32.mxu0 0.0
    %4668 = vmatmul.mubr.f32.gmra.mrb[0].mxu0 %v4568
    %v4669 = vpop.f32.mrb[0].mxu0
    %v4670 = vadd.f32 0.0, %v4669
    %v4671 = vpop.f32.mrb[0].mxu0
    %4672 = vdwg.mxu0
    %v4673 = vadd.f32 %v4523, %v4637
    %v4674 = vadd.f32 %v4524, %v4642
    %v4675 = vadd.f32 %v4525, %v4647
    %v4676 = vadd.f32 %v4526, %v4660
    %v4677 = vadd.f32 %v4527, %v4665
    %v4678 = vadd.f32 %v4528, %v4670
    %v4679 = vld [vmem:[%s3 + $0x1c0] sm:$0xff]
    %v4680 = vld [vmem:[%s3 + $0x1c8] sm:$0xff]
    %v4681 = vld [vmem:[%s3 + $0x1d0] sm:$0xff]
    %v4682 = vld [vmem:[%s3 + $0x1d8] sm:$0xff]
    %v4683 = vld [vmem:[%s3 + $0x1e0] sm:$0xff]
    %v4684 = vld [vmem:[%s3 + $0x1e8] sm:$0xff]
    %v4685 = vld [vmem:[%s3 + $0x1f0] sm:$0xff]
    %v4686 = vld [vmem:[%s3 + $0x1f8] sm:$0xff]
    %v4687 = vrot.slane %v3635, 7
    %v4688 = vrot.slane %v3636, 7
    %v4689 = vsel %vm2453, %v4687, %v4688
    %v4690 = vrot.slane %v3637, 7
    %v4691 = vsel %vm2453, %v4688, %v4690
    %v4692 = vrot.slane %v3638, 7
    %v4693 = vsel %vm2453, %v4690, %v4692
    %v4694 = vrot.slane %v3639, 7
    %v4695 = vsel %vm2453, %v4692, %v4694
    %v4696 = vrot.slane %v3640, 7
    %v4697 = vsel %vm2453, %v4694, %v4696
    %v4698 = vrot.slane %v3641, 7
    %v4699 = vsel %vm2453, %v4696, %v4698
    %v4700 = vrot.slane %v3642, 7
    %v4701 = vsel %vm2453, %v4698, %v4700
    %v4702 = vrot.slane %v3643, 7
    %v4703 = vsel %vm2453, %v4700, %v4702
    %v4704 = vsel %vm3658, %v4689, 0
    %v4706 = vsel %vm3658, %v4691, 0
    %v4708 = vsel %vm3658, %v4693, 0
    %v4710 = vsel %vm3658, %v4695, 0
    %v4712 = vsel %vm3658, %v4697, 0
    %v4714 = vsel %vm3658, %v4699, 0
    %v4716 = vsel %vm3658, %v4701, 0
    %v4718 = vsel %vm3658, %v4703, 0
    %4720 = vmatprep.subr.mxu0 0.0
    %4721 = vmatpush1.msra.mxu0 %v4679
    %4722 = vmatprep.subr.mxu0 0.0
    %4723 = vmatpush1.msra.mxu0 %v4680
    %4724 = vmatprep.subr.mxu0 0.0
    %4725 = vmatpush1.msra.mxu0 %v4681
    %4726 = vmatprep.subr.mxu0 0.0
    %4727 = vmatpush1.msra.mxu0 %v4682
    %4728 = vmatprep.subr.mxu0 0.0
    %4729 = vmatpush1.msra.mxu0 %v4683
    %4730 = vmatprep.subr.mxu0 0.0
    %4731 = vmatpush1.msra.mxu0 %v4684
    %4732 = vmatprep.subr.mxu0 0.0
    %4733 = vmatpush1.msra.mxu0 %v4685
    %4734 = vmatprep.subr.mxu0 0.0
    %4735 = vmatpush1.msra.mxu0 %v4686
    %4736 = vmatprep.subr.mxu0 0.0
    %4737 = vmatpush1.msra.mxu0 0.0
    %4738 = vmatprep.subr.mxu0 0.0
    %4739 = vmatpush1.msra.mxu0 0.0
    %4740 = vmatprep.subr.mxu0 0.0
    %4741 = vmatpush1.msra.mxu0 0.0
    %4742 = vmatprep.subr.mxu0 0.0
    %4743 = vmatpush1.msra.mxu0 0.0
    %4744 = vmatprep.subr.mxu0 0.0
    %4745 = vmatpush1.msra.mxu0 0.0
    %4746 = vmatprep.subr.mxu0 0.0
    %4747 = vmatpush1.msra.mxu0 0.0
    %4748 = vmatprep.subr.mxu0 0.0
    %4749 = vmatpush1.msra.mxu0 0.0
    %4750 = vmatprep.subr.mxu0 0.0
    %4751 = vmatpush1.msra.mxu0 0.0
    %4752 = vmatprep.subr.mxu0 0.0
    %4753 = vmatpush1.msra.mxu0 0.0
    %4754 = vmatprep.subr.mxu0 0.0
    %4755 = vmatpush1.msra.mxu0 0.0
    %4756 = vmatprep.subr.mxu0 0.0
    %4757 = vmatpush1.msra.mxu0 0.0
    %4758 = vmatprep.subr.mxu0 0.0
    %4759 = vmatpush1.msra.mxu0 0.0
    %4760 = vmatprep.subr.mxu0 0.0
    %4761 = vmatpush1.msra.mxu0 0.0
    %4762 = vmatprep.subr.mxu0 0.0
    %4763 = vmatpush1.msra.mxu0 0.0
    %4764 = vmatprep.subr.mxu0 0.0
    %4765 = vmatpush1.msra.mxu0 0.0
    %4766 = vmatprep.subr.mxu0 0.0
    %4767 = vmatpush1.msra.mxu0 0.0
    %4768 = vmatprep.subr.mxu0 0.0
    %4769 = vmatpush1.msra.mxu0 0.0
    %4770 = vmatprep.subr.mxu0 0.0
    %4771 = vmatpush1.msra.mxu0 0.0
    %4772 = vmatprep.subr.mxu0 0.0
    %4773 = vmatpush1.msra.mxu0 0.0
    %4774 = vmatprep.subr.mxu0 0.0
    %4775 = vmatpush1.msra.mxu0 0.0
    %4776 = vmatprep.subr.mxu0 0.0
    %4777 = vmatpush1.msra.mxu0 0.0
    %4778 = vmatprep.subr.mxu0 0.0
    %4779 = vmatpush1.msra.mxu0 0.0
    %4780 = vmatprep.subr.mxu0 0.0
    %4781 = vmatpush1.msra.mxu0 0.0
    %4782 = vmatprep.subr.mxu0 0.0
    %4783 = vmatpush1.msra.mxu0 0.0
    %4784 = vmatprep.mubr.f32.mxu0 0.0
    %4785 = vmatmul.mubr.f32.gmra.mrb[0].mxu0 %v4704
    %v4786 = vpop.f32.mrb[0].mxu0
    %v4787 = vadd.f32 0.0, %v4786
    %v4788 = vpop.f32.mrb[0].mxu0
    %4789 = vmatprep.mubr.f32.mxu0 0.0
    %4790 = vmatmul.mubr.f32.gmra.mrb[0].mxu0 %v4706
    %v4791 = vpop.f32.mrb[0].mxu0
    %v4792 = vadd.f32 0.0, %v4791
    %v4793 = vpop.f32.mrb[0].mxu0
    %4794 = vmatprep.mubr.f32.mxu0 0.0
    %4795 = vmatmul.mubr.f32.gmra.mrb[0].mxu0 %v4708
    %v4796 = vpop.f32.mrb[0].mxu0
    %v4797 = vadd.f32 0.0, %v4796
    %v4798 = vpop.f32.mrb[0].mxu0
    %4799 = vmatprep.mubr.f32.mxu0 0.0
    %4800 = vmatmul.mubr.f32.gmra.mrb[0].mxu0 %v4710
    %v4801 = vpop.f32.mrb[0].mxu0
    %v4802 = vpop.f32.mrb[0].mxu0
    %4803 = vmatprep.mubr.f32.mxu0 0.0
    %4804 = vmatmul.mubr.f32.gmra.mrb[0].mxu0 %v4712
    %v4805 = vpop.f32.mrb[0].mxu0
    %v4806 = vpop.f32.mrb[0].mxu0
    %4807 = vmatprep.mubr.f32.mxu0 0.0
    %4808 = vmatmul.mubr.f32.gmra.mrb[0].mxu0 %v4714
    %v4809 = vpop.f32.mrb[0].mxu0
    %v4810 = vadd.f32 0.0, %v4809
    %v4811 = vpop.f32.mrb[0].mxu0
    %4812 = vmatprep.mubr.f32.mxu0 0.0
    %4813 = vmatmul.mubr.f32.gmra.mrb[0].mxu0 %v4716
    %v4814 = vpop.f32.mrb[0].mxu0
    %v4815 = vadd.f32 0.0, %v4814
    %v4816 = vpop.f32.mrb[0].mxu0
    %4817 = vmatprep.mubr.f32.mxu0 0.0
    %4818 = vmatmul.mubr.f32.gmra.mrb[0].mxu0 %v4718
    %v4819 = vpop.f32.mrb[0].mxu0
    %v4820 = vadd.f32 0.0, %v4819
    %v4821 = vpop.f32.mrb[0].mxu0
    %4822 = vdwg.mxu0
    %v4823 = vadd.f32 %v4673, %v4787
    %v4824 = vadd.f32 %v4674, %v4792
    %v4825 = vadd.f32 %v4675, %v4797
    %v4826 = vadd.f32 %v4676, %v4810
    %v4827 = vadd.f32 %v4677, %v4815
    %v4828 = vadd.f32 %v4678, %v4820
    %v4829 = vmax.f32 %v4823, 0.0
    %v4830 = vmax.f32 %v4824, 0.0
    %v4831 = vmax.f32 %v4825, 0.0
    %v4832 = vmax.f32 %v4826, 0.0
    %v4833 = vmax.f32 %v4827, 0.0
    %v4834 = vmax.f32 %v4828, 0.0
    %v4835 = vsel %vm2132, %v4831, -inf
    %v4836 = vmax.f32 %v4829, %v4830
    %v4837 = vmax.f32 %v4836, %v4835
    %v4838 = vrot.slane %v4837, 4
    %v4839 = vmax.f32 %v4837, %v4838
    %v4840 = vrot.slane %v4839, 2
    %v4841 = vmax.f32 %v4839, %v4840
    %v4842 = vrot.slane %v4841, 1
    %v4843 = vmax.f32 %v4841, %v4842
    %vm4844 = vcmask 1047553
    %v4845 = vsel %vm4844, %v4832, -inf
    %v4846 = vsel %vm1973, %v4834, -inf
    %v4847 = vmax.f32 %v4845, %v4833
    %v4848 = vmax.f32 %v4847, %v4846
    %v4849 = vrot.slane %v4848, 4
    %v4850 = vmax.f32 %v4848, %v4849
    %v4851 = vrot.slane %v4850, 2
    %v4852 = vmax.f32 %v4850, %v4851
    %v4853 = vrot.slane %v4852, 1
    %v4854 = vmax.f32 %v4852, %v4853
    %v4855 = vsel %vm2453, %v4843, %v4854
    %s4856 = smul.u32 8, 16
    %s4857 = smul.u32 %s4856, 8
    %s4858 = sshll.u32 %s4857, 4
    %4859 = dma.done [#allocation4], %s4858
    %v4860 = vld [vmem:[#allocation2] sm:$0xff]
    %v4861 = vld [vmem:[#allocation2 + $0x8] sm:$0xff]
    %v4862 = vld [vmem:[#allocation2 + $0x10] sm:$0xff]
    %v4863 = vld [vmem:[#allocation2 + $0x18] sm:$0xff]
    %v4864 = vld [vmem:[#allocation2 + $0x20] sm:$0xff]
    %v4865 = vld [vmem:[#allocation2 + $0x28] sm:$0xff]
    %v4866 = vld [vmem:[#allocation2 + $0x30] sm:$0xff]
    %v4867 = vld [vmem:[#allocation2 + $0x38] sm:$0xff]
    %v4868 = vld [vmem:[#allocation2 + $0x40] sm:$0xff]
    %v4869 = vld [vmem:[#allocation2 + $0x48] sm:$0xff]
    %v4870 = vld [vmem:[#allocation2 + $0x50] sm:$0xff]
    %v4871 = vld [vmem:[#allocation2 + $0x58] sm:$0xff]
    %v4872 = vld [vmem:[#allocation2 + $0x60] sm:$0xff]
    %v4873 = vld [vmem:[#allocation2 + $0x68] sm:$0xff]
    %v4874 = vld [vmem:[#allocation2 + $0x70] sm:$0xff]
    %v4875 = vld [vmem:[#allocation2 + $0x78] sm:$0xff]
    %v4876 = vld [vmem:[#allocation2 + $0x80] sm:$0xff]
    %v4877 = vld [vmem:[#allocation2 + $0x88] sm:$0xff]
    %v4878 = vld [vmem:[#allocation2 + $0x90] sm:$0xff]
    %v4879 = vld [vmem:[#allocation2 + $0x98] sm:$0xff]
    %v4880 = vld [vmem:[#allocation2 + $0xa0] sm:$0xff]
    %v4881 = vld [vmem:[#allocation2 + $0xa8] sm:$0xff]
    %v4882 = vld [vmem:[#allocation2 + $0xb0] sm:$0xff]
    %v4883 = vld [vmem:[#allocation2 + $0xb8] sm:$0xff]
    %v4884 = vld [vmem:[#allocation2 + $0xc0] sm:$0xff]
    %v4885 = vld [vmem:[#allocation2 + $0xc8] sm:$0xff]
    %v4886 = vld [vmem:[#allocation2 + $0xd0] sm:$0xff]
    %v4887 = vld [vmem:[#allocation2 + $0xd8] sm:$0xff]
    %v4888 = vld [vmem:[#allocation2 + $0xe0] sm:$0xff]
    %v4889 = vld [vmem:[#allocation2 + $0xe8] sm:$0xff]
    %v4890 = vld [vmem:[#allocation2 + $0xf0] sm:$0xff]
    %v4891 = vld [vmem:[#allocation2 + $0xf8] sm:$0xff]
    %v4892 = vld [vmem:[#allocation2 + $0x100] sm:$0xff]
    %v4893 = vld [vmem:[#allocation2 + $0x108] sm:$0xff]
    %v4894 = vld [vmem:[#allocation2 + $0x110] sm:$0xff]
    %v4895 = vld [vmem:[#allocation2 + $0x118] sm:$0xff]
    %v4896 = vld [vmem:[#allocation2 + $0x120] sm:$0xff]
    %v4897 = vld [vmem:[#allocation2 + $0x128] sm:$0xff]
    %v4898 = vld [vmem:[#allocation2 + $0x130] sm:$0xff]
    %v4899 = vld [vmem:[#allocation2 + $0x138] sm:$0xff]
    %v4900 = vld [vmem:[#allocation2 + $0x140] sm:$0xff]
    %v4901 = vld [vmem:[#allocation2 + $0x148] sm:$0xff]
    %v4902 = vld [vmem:[#allocation2 + $0x150] sm:$0xff]
    %v4903 = vld [vmem:[#allocation2 + $0x158] sm:$0xff]
    %v4904 = vld [vmem:[#allocation2 + $0x160] sm:$0xff]
    %v4905 = vld [vmem:[#allocation2 + $0x168] sm:$0xff]
    %v4906 = vld [vmem:[#allocation2 + $0x170] sm:$0xff]
    %v4907 = vld [vmem:[#allocation2 + $0x178] sm:$0xff]
    %v4908 = vld [vmem:[#allocation2 + $0x180] sm:$0xff]
    %v4909 = vld [vmem:[#allocation2 + $0x188] sm:$0xff]
    %v4910 = vld [vmem:[#allocation2 + $0x190] sm:$0xff]
    %v4911 = vld [vmem:[#allocation2 + $0x198] sm:$0xff]
    %v4912 = vld [vmem:[#allocation2 + $0x1a0] sm:$0xff]
    %v4913 = vld [vmem:[#allocation2 + $0x1a8] sm:$0xff]
    %v4914 = vld [vmem:[#allocation2 + $0x1b0] sm:$0xff]
    %v4915 = vld [vmem:[#allocation2 + $0x1b8] sm:$0xff]
    %v4916 = vld [vmem:[#allocation2 + $0x1c0] sm:$0xff]
    %v4917 = vld [vmem:[#allocation2 + $0x1c8] sm:$0xff]
    %v4918 = vld [vmem:[#allocation2 + $0x1d0] sm:$0xff]
    %v4919 = vld [vmem:[#allocation2 + $0x1d8] sm:$0xff]
    %v4920 = vld [vmem:[#allocation2 + $0x1e0] sm:$0xff]
    %v4921 = vld [vmem:[#allocation2 + $0x1e8] sm:$0xff]
    %v4922 = vld [vmem:[#allocation2 + $0x1f0] sm:$0xff]
    %v4923 = vld [vmem:[#allocation2 + $0x1f8] sm:$0xff]
    %v4924 = vld [vmem:[#allocation2 + $0x200] sm:$0xff]
    %v4925 = vld [vmem:[#allocation2 + $0x208] sm:$0xff]
    %v4926 = vld [vmem:[#allocation2 + $0x210] sm:$0xff]
    %v4927 = vld [vmem:[#allocation2 + $0x218] sm:$0xff]
    %v4928 = vld [vmem:[#allocation2 + $0x220] sm:$0xff]
    %v4929 = vld [vmem:[#allocation2 + $0x228] sm:$0xff]
    %v4930 = vld [vmem:[#allocation2 + $0x230] sm:$0xff]
    %v4931 = vld [vmem:[#allocation2 + $0x238] sm:$0xff]
    %v4932 = vld [vmem:[#allocation2 + $0x240] sm:$0xff]
    %v4933 = vld [vmem:[#allocation2 + $0x248] sm:$0xff]
    %v4934 = vld [vmem:[#allocation2 + $0x250] sm:$0xff]
    %v4935 = vld [vmem:[#allocation2 + $0x258] sm:$0xff]
    %v4936 = vld [vmem:[#allocation2 + $0x260] sm:$0xff]
    %v4937 = vld [vmem:[#allocation2 + $0x268] sm:$0xff]
    %v4938 = vld [vmem:[#allocation2 + $0x270] sm:$0xff]
    %v4939 = vld [vmem:[#allocation2 + $0x278] sm:$0xff]
    %v4940 = vld [vmem:[#allocation2 + $0x280] sm:$0xff]
    %v4941 = vld [vmem:[#allocation2 + $0x288] sm:$0xff]
    %v4942 = vld [vmem:[#allocation2 + $0x290] sm:$0xff]
    %v4943 = vld [vmem:[#allocation2 + $0x298] sm:$0xff]
    %v4944 = vld [vmem:[#allocation2 + $0x2a0] sm:$0xff]
    %v4945 = vld [vmem:[#allocation2 + $0x2a8] sm:$0xff]
    %v4946 = vld [vmem:[#allocation2 + $0x2b0] sm:$0xff]
    %v4947 = vld [vmem:[#allocation2 + $0x2b8] sm:$0xff]
    %v4948 = vld [vmem:[#allocation2 + $0x2c0] sm:$0xff]
    %v4949 = vld [vmem:[#allocation2 + $0x2c8] sm:$0xff]
    %v4950 = vld [vmem:[#allocation2 + $0x2d0] sm:$0xff]
    %v4951 = vld [vmem:[#allocation2 + $0x2d8] sm:$0xff]
    %v4952 = vld [vmem:[#allocation2 + $0x2e0] sm:$0xff]
    %v4953 = vld [vmem:[#allocation2 + $0x2e8] sm:$0xff]
    %v4954 = vld [vmem:[#allocation2 + $0x2f0] sm:$0xff]
    %v4955 = vld [vmem:[#allocation2 + $0x2f8] sm:$0xff]
    %v4956 = vld [vmem:[#allocation2 + $0x300] sm:$0xff]
    %v4957 = vld [vmem:[#allocation2 + $0x308] sm:$0xff]
    %v4958 = vld [vmem:[#allocation2 + $0x310] sm:$0xff]
    %v4959 = vld [vmem:[#allocation2 + $0x318] sm:$0xff]
    %v4960 = vld [vmem:[#allocation2 + $0x320] sm:$0xff]
    %v4961 = vld [vmem:[#allocation2 + $0x328] sm:$0xff]
    %v4962 = vld [vmem:[#allocation2 + $0x330] sm:$0xff]
    %v4963 = vld [vmem:[#allocation2 + $0x338] sm:$0xff]
    %v4964 = vld [vmem:[#allocation2 + $0x340] sm:$0xff]
    %v4965 = vld [vmem:[#allocation2 + $0x348] sm:$0xff]
    %v4966 = vld [vmem:[#allocation2 + $0x350] sm:$0xff]
    %v4967 = vld [vmem:[#allocation2 + $0x358] sm:$0xff]
    %v4968 = vld [vmem:[#allocation2 + $0x360] sm:$0xff]
    %v4969 = vld [vmem:[#allocation2 + $0x368] sm:$0xff]
    %v4970 = vld [vmem:[#allocation2 + $0x370] sm:$0xff]
    %v4971 = vld [vmem:[#allocation2 + $0x378] sm:$0xff]
    %v4972 = vld [vmem:[#allocation2 + $0x380] sm:$0xff]
    %v4973 = vld [vmem:[#allocation2 + $0x388] sm:$0xff]
    %v4974 = vld [vmem:[#allocation2 + $0x390] sm:$0xff]
    %v4975 = vld [vmem:[#allocation2 + $0x398] sm:$0xff]
    %v4976 = vld [vmem:[#allocation2 + $0x3a0] sm:$0xff]
    %v4977 = vld [vmem:[#allocation2 + $0x3a8] sm:$0xff]
    %v4978 = vld [vmem:[#allocation2 + $0x3b0] sm:$0xff]
    %v4979 = vld [vmem:[#allocation2 + $0x3b8] sm:$0xff]
    %v4980 = vld [vmem:[#allocation2 + $0x3c0] sm:$0xff]
    %v4981 = vld [vmem:[#allocation2 + $0x3c8] sm:$0xff]
    %v4982 = vld [vmem:[#allocation2 + $0x3d0] sm:$0xff]
    %v4983 = vld [vmem:[#allocation2 + $0x3d8] sm:$0xff]
    %v4984 = vld [vmem:[#allocation2 + $0x3e0] sm:$0xff]
    %v4985 = vld [vmem:[#allocation2 + $0x3e8] sm:$0xff]
    %v4986 = vld [vmem:[#allocation2 + $0x3f0] sm:$0xff]
    %v4987 = vld [vmem:[#allocation2 + $0x3f8] sm:$0xff]
    %v4989 = vlaneseq
    %v4990 = vshrl.u32 %v4989, 7
    %v4991 = vsub.s32 0, %v4990
    %v4992 = vrot.slane %v1141, %v4991
    %v4993 = vlaneseq
    %v4994 = vshrl.u32 %v4993, 7
    %v4995 = vsub.s32 1, %v4994
    %v4996 = vrot.slane %v1141, %v4995
    %v4997 = vlaneseq
    %v4998 = vshrl.u32 %v4997, 7
    %v4999 = vsub.s32 2, %v4998
    %v5000 = vrot.slane %v1141, %v4999
    %v5001 = vlaneseq
    %v5002 = vshrl.u32 %v5001, 7
    %v5003 = vsub.s32 3, %v5002
    %v5004 = vrot.slane %v1141, %v5003
    %v5005 = vlaneseq
    %v5006 = vshrl.u32 %v5005, 7
    %v5007 = vsub.s32 4, %v5006
    %v5008 = vrot.slane %v1141, %v5007
    %v5009 = vlaneseq
    %v5010 = vshrl.u32 %v5009, 7
    %v5011 = vsub.s32 5, %v5010
    %v5012 = vrot.slane %v1141, %v5011
    %v5013 = vlaneseq
    %v5014 = vshrl.u32 %v5013, 7
    %v5015 = vsub.s32 6, %v5014
    %v5016 = vrot.slane %v1141, %v5015
    %v5017 = vlaneseq
    %v5018 = vshrl.u32 %v5017, 7
    %v5019 = vsub.s32 7, %v5018
    %v5020 = vrot.slane %v1141, %v5019
    %5029 = vmatprep.subr.mxu0 %v4861
    %5030 = vmatpush1.msra.mxu0 %v4860
    %5031 = vmatprep.subr.mxu0 %v4869
    %5032 = vmatpush1.msra.mxu0 %v4868
    %5033 = vmatprep.subr.mxu0 %v4877
    %5034 = vmatpush1.msra.mxu0 %v4876
    %5035 = vmatprep.subr.mxu0 %v4885
    %5036 = vmatpush1.msra.mxu0 %v4884
    %5037 = vmatprep.subr.mxu0 %v4893
    %5038 = vmatpush1.msra.mxu0 %v4892
    %5039 = vmatprep.subr.mxu0 %v4901
    %5040 = vmatpush1.msra.mxu0 %v4900
    %5041 = vmatprep.subr.mxu0 %v4909
    %5042 = vmatpush1.msra.mxu0 %v4908
    %5043 = vmatprep.subr.mxu0 %v4917
    %5044 = vmatpush1.msra.mxu0 %v4916
    %5045 = vmatprep.subr.mxu0 %v4925
    %5046 = vmatpush1.msra.mxu0 %v4924
    %5047 = vmatprep.subr.mxu0 %v4933
    %5048 = vmatpush1.msra.mxu0 %v4932
    %5049 = vmatprep.subr.mxu0 %v4941
    %5050 = vmatpush1.msra.mxu0 %v4940
    %5051 = vmatprep.subr.mxu0 %v4949
    %5052 = vmatpush1.msra.mxu0 %v4948
    %5053 = vmatprep.subr.mxu0 %v4957
    %5054 = vmatpush1.msra.mxu0 %v4956
    %5055 = vmatprep.subr.mxu0 %v4965
    %5056 = vmatpush1.msra.mxu0 %v4964
    %5057 = vmatprep.subr.mxu0 %v4973
    %5058 = vmatpush1.msra.mxu0 %v4972
    %5059 = vmatprep.subr.mxu0 %v4981
    %5060 = vmatpush1.msra.mxu0 %v4980
    %5061 = vmatprep.subr.mxu0 0.0
    %5062 = vmatpush1.msra.mxu0 0.0
    %5063 = vmatprep.subr.mxu0 0.0
    %5064 = vmatpush1.msra.mxu0 0.0
    %5065 = vmatprep.subr.mxu0 0.0
    %5066 = vmatpush1.msra.mxu0 0.0
    %5067 = vmatprep.subr.mxu0 0.0
    %5068 = vmatpush1.msra.mxu0 0.0
    %5069 = vmatprep.subr.mxu0 0.0
    %5070 = vmatpush1.msra.mxu0 0.0
    %5071 = vmatprep.subr.mxu0 0.0
    %5072 = vmatpush1.msra.mxu0 0.0
    %5073 = vmatprep.subr.mxu0 0.0
    %5074 = vmatpush1.msra.mxu0 0.0
    %5075 = vmatprep.subr.mxu0 0.0
    %5076 = vmatpush1.msra.mxu0 0.0
    %5077 = vmatprep.subr.mxu0 0.0
    %5078 = vmatpush1.msra.mxu0 0.0
    %5079 = vmatprep.subr.mxu0 0.0
    %5080 = vmatpush1.msra.mxu0 0.0
    %5081 = vmatprep.subr.mxu0 0.0
    %5082 = vmatpush1.msra.mxu0 0.0
    %5083 = vmatprep.subr.mxu0 0.0
    %5084 = vmatpush1.msra.mxu0 0.0
    %5085 = vmatprep.subr.mxu0 0.0
    %5086 = vmatpush1.msra.mxu0 0.0
    %5087 = vmatprep.subr.mxu0 0.0
    %5088 = vmatpush1.msra.mxu0 0.0
    %5089 = vmatprep.subr.mxu0 0.0
    %5090 = vmatpush1.msra.mxu0 0.0
    %5091 = vmatprep.subr.mxu0 0.0
    %5092 = vmatpush1.msra.mxu0 0.0
    %5093 = vmatprep.mubr.f32.mxu0 0.0
    %5094 = vmatmul.mubr.f32.gmra.mrb[0].mxu0 %v4855
    %v5095 = vpop.f32.mrb[0].mxu0
    %v5096 = vadd.f32 %v4992, %v5095
    %v5097 = vpop.f32.mrb[0].mxu0
    %v5098 = vadd.f32 %v4996, %v5097
    %5099 = vdwg.mxu0
    %5100 = vmatprep.subr.mxu0 %v4863
    %5101 = vmatpush1.msra.mxu0 %v4862
    %5102 = vmatprep.subr.mxu0 %v4871
    %5103 = vmatpush1.msra.mxu0 %v4870
    %5104 = vmatprep.subr.mxu0 %v4879
    %5105 = vmatpush1.msra.mxu0 %v4878
    %5106 = vmatprep.subr.mxu0 %v4887
    %5107 = vmatpush1.msra.mxu0 %v4886
    %5108 = vmatprep.subr.mxu0 %v4895
    %5109 = vmatpush1.msra.mxu0 %v4894
    %5110 = vmatprep.subr.mxu0 %v4903
    %5111 = vmatpush1.msra.mxu0 %v4902
    %5112 = vmatprep.subr.mxu0 %v4911
    %5113 = vmatpush1.msra.mxu0 %v4910
    %5114 = vmatprep.subr.mxu0 %v4919
    %5115 = vmatpush1.msra.mxu0 %v4918
    %5116 = vmatprep.subr.mxu0 %v4927
    %5117 = vmatpush1.msra.mxu0 %v4926
    %5118 = vmatprep.subr.mxu0 %v4935
    %5119 = vmatpush1.msra.mxu0 %v4934
    %5120 = vmatprep.subr.mxu0 %v4943
    %5121 = vmatpush1.msra.mxu0 %v4942
    %5122 = vmatprep.subr.mxu0 %v4951
    %5123 = vmatpush1.msra.mxu0 %v4950
    %5124 = vmatprep.subr.mxu0 %v4959
    %5125 = vmatpush1.msra.mxu0 %v4958
    %5126 = vmatprep.subr.mxu0 %v4967
    %5127 = vmatpush1.msra.mxu0 %v4966
    %5128 = vmatprep.subr.mxu0 %v4975
    %5129 = vmatpush1.msra.mxu0 %v4974
    %5130 = vmatprep.subr.mxu0 %v4983
    %5131 = vmatpush1.msra.mxu0 %v4982
    %5132 = vmatprep.subr.mxu0 0.0
    %5133 = vmatpush1.msra.mxu0 0.0
    %5134 = vmatprep.subr.mxu0 0.0
    %5135 = vmatpush1.msra.mxu0 0.0
    %5136 = vmatprep.subr.mxu0 0.0
    %5137 = vmatpush1.msra.mxu0 0.0
    %5138 = vmatprep.subr.mxu0 0.0
    %5139 = vmatpush1.msra.mxu0 0.0
    %5140 = vmatprep.subr.mxu0 0.0
    %5141 = vmatpush1.msra.mxu0 0.0
    %5142 = vmatprep.subr.mxu0 0.0
    %5143 = vmatpush1.msra.mxu0 0.0
    %5144 = vmatprep.subr.mxu0 0.0
    %5145 = vmatpush1.msra.mxu0 0.0
    %5146 = vmatprep.subr.mxu0 0.0
    %5147 = vmatpush1.msra.mxu0 0.0
    %5148 = vmatprep.subr.mxu0 0.0
    %5149 = vmatpush1.msra.mxu0 0.0
    %5150 = vmatprep.subr.mxu0 0.0
    %5151 = vmatpush1.msra.mxu0 0.0
    %5152 = vmatprep.subr.mxu0 0.0
    %5153 = vmatpush1.msra.mxu0 0.0
    %5154 = vmatprep.subr.mxu0 0.0
    %5155 = vmatpush1.msra.mxu0 0.0
    %5156 = vmatprep.subr.mxu0 0.0
    %5157 = vmatpush1.msra.mxu0 0.0
    %5158 = vmatprep.subr.mxu0 0.0
    %5159 = vmatpush1.msra.mxu0 0.0
    %5160 = vmatprep.subr.mxu0 0.0
    %5161 = vmatpush1.msra.mxu0 0.0
    %5162 = vmatprep.subr.mxu0 0.0
    %5163 = vmatpush1.msra.mxu0 0.0
    %5164 = vmatprep.mubr.f32.mxu0 0.0
    %5165 = vmatmul.mubr.f32.gmra.mrb[0].mxu0 %v4855
    %v5166 = vpop.f32.mrb[0].mxu0
    %v5167 = vadd.f32 %v5000, %v5166
    %v5168 = vpop.f32.mrb[0].mxu0
    %v5169 = vadd.f32 %v5004, %v5168
    %5170 = vdwg.mxu0
    %5171 = vmatprep.subr.mxu0 %v4865
    %5172 = vmatpush1.msra.mxu0 %v4864
    %5173 = vmatprep.subr.mxu0 %v4873
    %5174 = vmatpush1.msra.mxu0 %v4872
    %5175 = vmatprep.subr.mxu0 %v4881
    %5176 = vmatpush1.msra.mxu0 %v4880
    %5177 = vmatprep.subr.mxu0 %v4889
    %5178 = vmatpush1.msra.mxu0 %v4888
    %5179 = vmatprep.subr.mxu0 %v4897
    %5180 = vmatpush1.msra.mxu0 %v4896
    %5181 = vmatprep.subr.mxu0 %v4905
    %5182 = vmatpush1.msra.mxu0 %v4904
    %5183 = vmatprep.subr.mxu0 %v4913
    %5184 = vmatpush1.msra.mxu0 %v4912
    %5185 = vmatprep.subr.mxu0 %v4921
    %5186 = vmatpush1.msra.mxu0 %v4920
    %5187 = vmatprep.subr.mxu0 %v4929
    %5188 = vmatpush1.msra.mxu0 %v4928
    %5189 = vmatprep.subr.mxu0 %v4937
    %5190 = vmatpush1.msra.mxu0 %v4936
    %5191 = vmatprep.subr.mxu0 %v4945
    %5192 = vmatpush1.msra.mxu0 %v4944
    %5193 = vmatprep.subr.mxu0 %v4953
    %5194 = vmatpush1.msra.mxu0 %v4952
    %5195 = vmatprep.subr.mxu0 %v4961
    %5196 = vmatpush1.msra.mxu0 %v4960
    %5197 = vmatprep.subr.mxu0 %v4969
    %5198 = vmatpush1.msra.mxu0 %v4968
    %5199 = vmatprep.subr.mxu0 %v4977
    %5200 = vmatpush1.msra.mxu0 %v4976
    %5201 = vmatprep.subr.mxu0 %v4985
    %5202 = vmatpush1.msra.mxu0 %v4984
    %5203 = vmatprep.subr.mxu0 0.0
    %5204 = vmatpush1.msra.mxu0 0.0
    %5205 = vmatprep.subr.mxu0 0.0
    %5206 = vmatpush1.msra.mxu0 0.0
    %5207 = vmatprep.subr.mxu0 0.0
    %5208 = vmatpush1.msra.mxu0 0.0
    %5209 = vmatprep.subr.mxu0 0.0
    %5210 = vmatpush1.msra.mxu0 0.0
    %5211 = vmatprep.subr.mxu0 0.0
    %5212 = vmatpush1.msra.mxu0 0.0
    %5213 = vmatprep.subr.mxu0 0.0
    %5214 = vmatpush1.msra.mxu0 0.0
    %5215 = vmatprep.subr.mxu0 0.0
    %5216 = vmatpush1.msra.mxu0 0.0
    %5217 = vmatprep.subr.mxu0 0.0
    %5218 = vmatpush1.msra.mxu0 0.0
    %5219 = vmatprep.subr.mxu0 0.0
    %5220 = vmatpush1.msra.mxu0 0.0
    %5221 = vmatprep.subr.mxu0 0.0
    %5222 = vmatpush1.msra.mxu0 0.0
    %5223 = vmatprep.subr.mxu0 0.0
    %5224 = vmatpush1.msra.mxu0 0.0
    %5225 = vmatprep.subr.mxu0 0.0
    %5226 = vmatpush1.msra.mxu0 0.0
    %5227 = vmatprep.subr.mxu0 0.0
    %5228 = vmatpush1.msra.mxu0 0.0
    %5229 = vmatprep.subr.mxu0 0.0
    %5230 = vmatpush1.msra.mxu0 0.0
    %5231 = vmatprep.subr.mxu0 0.0
    %5232 = vmatpush1.msra.mxu0 0.0
    %5233 = vmatprep.subr.mxu0 0.0
    %5234 = vmatpush1.msra.mxu0 0.0
    %5235 = vmatprep.mubr.f32.mxu0 0.0
    %5236 = vmatmul.mubr.f32.gmra.mrb[0].mxu0 %v4855
    %v5237 = vpop.f32.mrb[0].mxu0
    %v5238 = vadd.f32 %v5008, %v5237
    %v5239 = vpop.f32.mrb[0].mxu0
    %v5240 = vadd.f32 %v5012, %v5239
    %5241 = vdwg.mxu0
    %5242 = vmatprep.subr.mxu0 %v4867
    %5243 = vmatpush1.msra.mxu0 %v4866
    %5244 = vmatprep.subr.mxu0 %v4875
    %5245 = vmatpush1.msra.mxu0 %v4874
    %5246 = vmatprep.subr.mxu0 %v4883
    %5247 = vmatpush1.msra.mxu0 %v4882
    %5248 = vmatprep.subr.mxu0 %v4891
    %5249 = vmatpush1.msra.mxu0 %v4890
    %5250 = vmatprep.subr.mxu0 %v4899
    %5251 = vmatpush1.msra.mxu0 %v4898
    %5252 = vmatprep.subr.mxu0 %v4907
    %5253 = vmatpush1.msra.mxu0 %v4906
    %5254 = vmatprep.subr.mxu0 %v4915
    %5255 = vmatpush1.msra.mxu0 %v4914
    %5256 = vmatprep.subr.mxu0 %v4923
    %5257 = vmatpush1.msra.mxu0 %v4922
    %5258 = vmatprep.subr.mxu0 %v4931
    %5259 = vmatpush1.msra.mxu0 %v4930
    %5260 = vmatprep.subr.mxu0 %v4939
    %5261 = vmatpush1.msra.mxu0 %v4938
    %5262 = vmatprep.subr.mxu0 %v4947
    %5263 = vmatpush1.msra.mxu0 %v4946
    %5264 = vmatprep.subr.mxu0 %v4955
    %5265 = vmatpush1.msra.mxu0 %v4954
    %5266 = vmatprep.subr.mxu0 %v4963
    %5267 = vmatpush1.msra.mxu0 %v4962
    %5268 = vmatprep.subr.mxu0 %v4971
    %5269 = vmatpush1.msra.mxu0 %v4970
    %5270 = vmatprep.subr.mxu0 %v4979
    %5271 = vmatpush1.msra.mxu0 %v4978
    %5272 = vmatprep.subr.mxu0 %v4987
    %5273 = vmatpush1.msra.mxu0 %v4986
    %5274 = vmatprep.subr.mxu0 0.0
    %5275 = vmatpush1.msra.mxu0 0.0
    %5276 = vmatprep.subr.mxu0 0.0
    %5277 = vmatpush1.msra.mxu0 0.0
    %5278 = vmatprep.subr.mxu0 0.0
    %5279 = vmatpush1.msra.mxu0 0.0
    %5280 = vmatprep.subr.mxu0 0.0
    %5281 = vmatpush1.msra.mxu0 0.0
    %5282 = vmatprep.subr.mxu0 0.0
    %5283 = vmatpush1.msra.mxu0 0.0
    %5284 = vmatprep.subr.mxu0 0.0
    %5285 = vmatpush1.msra.mxu0 0.0
    %5286 = vmatprep.subr.mxu0 0.0
    %5287 = vmatpush1.msra.mxu0 0.0
    %5288 = vmatprep.subr.mxu0 0.0
    %5289 = vmatpush1.msra.mxu0 0.0
    %5290 = vmatprep.subr.mxu0 0.0
    %5291 = vmatpush1.msra.mxu0 0.0
    %5292 = vmatprep.subr.mxu0 0.0
    %5293 = vmatpush1.msra.mxu0 0.0
    %5294 = vmatprep.subr.mxu0 0.0
    %5295 = vmatpush1.msra.mxu0 0.0
    %5296 = vmatprep.subr.mxu0 0.0
    %5297 = vmatpush1.msra.mxu0 0.0
    %5298 = vmatprep.subr.mxu0 0.0
    %5299 = vmatpush1.msra.mxu0 0.0
    %5300 = vmatprep.subr.mxu0 0.0
    %5301 = vmatpush1.msra.mxu0 0.0
    %5302 = vmatprep.subr.mxu0 0.0
    %5303 = vmatpush1.msra.mxu0 0.0
    %5304 = vmatprep.subr.mxu0 0.0
    %5305 = vmatpush1.msra.mxu0 0.0
    %5306 = vmatprep.mubr.f32.mxu0 0.0
    %5307 = vmatmul.mubr.f32.gmra.mrb[0].mxu0 %v4855
    %v5308 = vpop.f32.mrb[0].mxu0
    %v5309 = vadd.f32 %v5016, %v5308
    %v5310 = vpop.f32.mrb[0].mxu0
    %v5311 = vadd.f32 %v5020, %v5310
    %5312 = vdwg.mxu0
    %v5313 = vmax.f32 %v5096, 0.0
    %v5314 = vmax.f32 %v5098, 0.0
    %v5315 = vmax.f32 %v5167, 0.0
    %v5316 = vmax.f32 %v5169, 0.0
    %v5317 = vmax.f32 %v5238, 0.0
    %v5318 = vmax.f32 %v5240, 0.0
    %v5319 = vmax.f32 %v5309, 0.0
    %v5320 = vmax.f32 %v5311, 0.0
    %v5329 = vcombine.low %v5313, %v5314
    %v5330 = vcombine.low %v5315, %v5316
    %v5332 = vunpack.c.l.s4 1983009808
    %v5333 = vunpack.c.0.s8 %v5332
    %v5334 = vlaneseq
    %v5335 = vshrl.u32 %v5334, 7
    %v5336 = vsub.s32 %v5333, %v5335
    %v5337 = vrot.slane %v5329, %v5336
    %v5339 = vunpack.c.l.s4 1983009808
    %v5340 = vunpack.c.0.s8 %v5339
    %v5341 = vlaneseq
    %v5342 = vshrl.u32 %v5341, 7
    %v5343 = vsub.s32 %v5340, %v5342
    %v5344 = vrot.slane %v5330, %v5343
    %v5345 = vcombine.low %v5337, %v5344
    %v5346 = vcombine.low %v5317, %v5318
    %v5347 = vcombine.low %v5319, %v5320
    %v5349 = vunpack.c.l.s4 1983009808
    %v5350 = vunpack.c.0.s8 %v5349
    %v5351 = vlaneseq
    %v5352 = vshrl.u32 %v5351, 7
    %v5353 = vsub.s32 %v5350, %v5352
    %v5354 = vrot.slane %v5346, %v5353
    %v5356 = vunpack.c.l.s4 1983009808
    %v5357 = vunpack.c.0.s8 %v5356
    %v5358 = vlaneseq
    %v5359 = vshrl.u32 %v5358, 7
    %v5360 = vsub.s32 %v5357, %v5359
    %v5361 = vrot.slane %v5347, %v5360
    %v5362 = vcombine.low %v5354, %v5361
    %5365 = vst [vmem:[#allocation9] sm:$0xff] %v5345
    %5366 = vst [vmem:[#allocation9 + $0x8] sm:$0xff] %v5362
    %v5367 = vsel %vm2292, %v5313, 0.0
    %v5368 = vsel %vm2292, %v5314, 0.0
    %v5369 = vadd.f32 %v5367, %v5368
    %v5370 = vsel %vm2292, %v5315, 0.0
    %v5371 = vadd.f32 %v5369, %v5370
    %v5372 = vsel %vm2292, %v5316, 0.0
    %v5373 = vadd.f32 %v5371, %v5372
    %v5374 = vsel %vm2292, %v5317, 0.0
    %v5375 = vadd.f32 %v5373, %v5374
    %v5376 = vsel %vm2292, %v5318, 0.0
    %v5377 = vadd.f32 %v5375, %v5376
    %v5378 = vsel %vm2292, %v5319, 0.0
    %v5379 = vadd.f32 %v5377, %v5378
    %v5380 = vsel %vm2292, %v5320, 0.0
    %v5381 = vadd.f32 %v5379, %v5380
    %5382 = vadd.xlane.f32.xlu0 %v5381
    %v5383 = vpop.xlane.xlu0 %5382
    %v5384 = vrot.slane %v5383, 4
    %v5385 = vadd.f32 %v5383, %v5384
    %v5386 = vrot.slane %v5385, 2
    %v5387 = vadd.f32 %v5385, %v5386
    %v5388 = vrot.slane %v5387, 1
    %v5389 = vadd.f32 %v5387, %v5388
    %s5390 = vtos %v5389
    %v5391 = vrcp.pop 2048.0
    %s5392 = vtos %v5391
    %s5393 = smul.f32 %s5390, %s5392
    %v5394 = vstv %s5393
    %v5395 = vsub.f32 %v5313, %v5394
    %v5396 = vsub.f32 %v5314, %v5394
    %v5397 = vsub.f32 %v5315, %v5394
    %v5398 = vsub.f32 %v5316, %v5394
    %v5399 = vsub.f32 %v5317, %v5394
    %v5400 = vsub.f32 %v5318, %v5394
    %v5401 = vsub.f32 %v5319, %v5394
    %v5402 = vsub.f32 %v5320, %v5394
    %v5403 = vmul.f32 %v5395, %v5395
    %v5404 = vmul.f32 %v5396, %v5396
    %v5405 = vmul.f32 %v5397, %v5397
    %v5406 = vmul.f32 %v5398, %v5398
    %v5407 = vmul.f32 %v5399, %v5399
    %v5408 = vmul.f32 %v5400, %v5400
    %v5409 = vmul.f32 %v5401, %v5401
    %v5410 = vmul.f32 %v5402, %v5402
    %v5411 = vsel %vm2292, %v5403, 0.0
    %v5412 = vsel %vm2292, %v5404, 0.0
    %v5413 = vadd.f32 %v5411, %v5412
    %v5414 = vsel %vm2292, %v5405, 0.0
    %v5415 = vadd.f32 %v5413, %v5414
    %v5416 = vsel %vm2292, %v5406, 0.0
    %v5417 = vadd.f32 %v5415, %v5416
    %v5418 = vsel %vm2292, %v5407, 0.0
    %v5419 = vadd.f32 %v5417, %v5418
    %v5420 = vsel %vm2292, %v5408, 0.0
    %v5421 = vadd.f32 %v5419, %v5420
    %v5422 = vsel %vm2292, %v5409, 0.0
    %v5423 = vadd.f32 %v5421, %v5422
    %v5424 = vsel %vm2292, %v5410, 0.0
    %v5425 = vadd.f32 %v5423, %v5424
    %5426 = vadd.xlane.f32.xlu0 %v5425
    %v5427 = vpop.xlane.xlu0 %5426
    %v5428 = vrot.slane %v5427, 4
    %v5429 = vadd.f32 %v5427, %v5428
    %v5430 = vrot.slane %v5429, 2
    %v5431 = vadd.f32 %v5429, %v5430
    %v5432 = vrot.slane %v5431, 1
    %v5433 = vadd.f32 %v5431, %v5432
    %s5434 = vtos %v5433
    %v5435 = vrcp.pop 2047.0
    %s5436 = vtos %v5435
    %s5437 = smul.f32 %s5434, %s5436
    %v5438 = vstv %s5437
    %v5439 = vrsqrt.pop %v5438
    %v5440 = vmul.f32 %v5438, %v5439
    %vm5441 = vcmp.eq.f32.partialorder %v5438, inf
    %v5442 = vsel %vm5441, %v5438, %v5440
    %vm5443 = vcmp.eq.f32.partialorder %v5438, 0.0
    %v5444 = vand.u32 %v5438, 2147483648
    %v5445 = vsel %vm5443, %v5444, %v5442
    %s5446 = vtos %v5445
    %s5447 = smul.u32 8, 128
    %s5448 = smul.u32 %s5447, 3
    %s5449 = sshll.u32 %s5448, 4
    %5450 = dma.done %s329, %s5449
    %v5451 = vld [vmem:[#allocation3] sm:$0xff]
    %v5452 = vld [vmem:[#allocation3 + $0x8] sm:$0xff]
    %v5453 = vld [vmem:[#allocation3 + $0x10] sm:$0xff]
    %v5454 = vld [vmem:[#allocation3 + $0x18] sm:$0xff]
    %v5455 = vld [vmem:[#allocation3 + $0x20] sm:$0xff]
    %v5456 = vld [vmem:[#allocation3 + $0x28] sm:$0xff]
    %v5457 = vld [vmem:[#allocation3 + $0x30] sm:$0xff]
    %v5458 = vld [vmem:[#allocation3 + $0x38] sm:$0xff]
    %v5459 = vld [vmem:[#allocation3 + $0x40] sm:$0xff]
    %v5460 = vld [vmem:[#allocation3 + $0x48] sm:$0xff]
    %v5461 = vld [vmem:[#allocation3 + $0x50] sm:$0xff]
    %v5462 = vld [vmem:[#allocation3 + $0x58] sm:$0xff]
    %v5463 = vld [vmem:[#allocation3 + $0x60] sm:$0xff]
    %v5464 = vld [vmem:[#allocation3 + $0x68] sm:$0xff]
    %v5465 = vld [vmem:[#allocation3 + $0x70] sm:$0xff]
    %v5466 = vld [vmem:[#allocation3 + $0x78] sm:$0xff]
    %v5467 = vld [vmem:[#allocation3 + $0x80] sm:$0xff]
    %v5468 = vld [vmem:[#allocation3 + $0x88] sm:$0xff]
    %v5469 = vld [vmem:[#allocation3 + $0x90] sm:$0xff]
    %v5470 = vld [vmem:[#allocation3 + $0x98] sm:$0xff]
    %v5471 = vld [vmem:[#allocation3 + $0xa0] sm:$0xff]
    %v5472 = vld [vmem:[#allocation3 + $0xa8] sm:$0xff]
    %v5473 = vld [vmem:[#allocation3 + $0xb0] sm:$0xff]
    %v5474 = vld [vmem:[#allocation3 + $0xb8] sm:$0xff]
    %v5475 = vld [vmem:[#allocation3 + $0xc0] sm:$0xff]
    %v5476 = vld [vmem:[#allocation3 + $0xc8] sm:$0xff]
    %v5477 = vld [vmem:[#allocation3 + $0xd0] sm:$0xff]
    %v5478 = vld [vmem:[#allocation3 + $0xd8] sm:$0xff]
    %v5479 = vld [vmem:[#allocation3 + $0xe0] sm:$0xff]
    %v5480 = vld [vmem:[#allocation3 + $0xe8] sm:$0xff]
    %v5481 = vld [vmem:[#allocation3 + $0xf0] sm:$0xff]
    %v5482 = vld [vmem:[#allocation3 + $0xf8] sm:$0xff]
    %v5483 = vld [vmem:[#allocation3 + $0x100] sm:$0xff]
    %v5484 = vld [vmem:[#allocation3 + $0x108] sm:$0xff]
    %v5485 = vld [vmem:[#allocation3 + $0x110] sm:$0xff]
    %v5486 = vld [vmem:[#allocation3 + $0x118] sm:$0xff]
    %v5487 = vld [vmem:[#allocation3 + $0x120] sm:$0xff]
    %v5488 = vld [vmem:[#allocation3 + $0x128] sm:$0xff]
    %v5489 = vld [vmem:[#allocation3 + $0x130] sm:$0xff]
    %v5490 = vld [vmem:[#allocation3 + $0x138] sm:$0xff]
    %v5491 = vld [vmem:[#allocation3 + $0x140] sm:$0xff]
    %v5492 = vld [vmem:[#allocation3 + $0x148] sm:$0xff]
    %v5493 = vld [vmem:[#allocation3 + $0x150] sm:$0xff]
    %v5494 = vld [vmem:[#allocation3 + $0x158] sm:$0xff]
    %v5495 = vld [vmem:[#allocation3 + $0x160] sm:$0xff]
    %v5496 = vld [vmem:[#allocation3 + $0x168] sm:$0xff]
    %v5497 = vld [vmem:[#allocation3 + $0x170] sm:$0xff]
    %v5498 = vld [vmem:[#allocation3 + $0x178] sm:$0xff]
    %v5499 = vld [vmem:[#allocation3 + $0x180] sm:$0xff]
    %v5500 = vld [vmem:[#allocation3 + $0x188] sm:$0xff]
    %v5501 = vld [vmem:[#allocation3 + $0x190] sm:$0xff]
    %v5502 = vld [vmem:[#allocation3 + $0x198] sm:$0xff]
    %v5503 = vld [vmem:[#allocation3 + $0x1a0] sm:$0xff]
    %v5504 = vld [vmem:[#allocation3 + $0x1a8] sm:$0xff]
    %v5505 = vld [vmem:[#allocation3 + $0x1b0] sm:$0xff]
    %v5506 = vld [vmem:[#allocation3 + $0x1b8] sm:$0xff]
    %v5507 = vld [vmem:[#allocation3 + $0x1c0] sm:$0xff]
    %v5508 = vld [vmem:[#allocation3 + $0x1c8] sm:$0xff]
    %v5509 = vld [vmem:[#allocation3 + $0x1d0] sm:$0xff]
    %v5510 = vld [vmem:[#allocation3 + $0x1d8] sm:$0xff]
    %v5511 = vld [vmem:[#allocation3 + $0x1e0] sm:$0xff]
    %v5512 = vld [vmem:[#allocation3 + $0x1e8] sm:$0xff]
    %v5513 = vld [vmem:[#allocation3 + $0x1f0] sm:$0xff]
    %v5514 = vld [vmem:[#allocation3 + $0x1f8] sm:$0xff]
    %v5515 = vld [vmem:[#allocation3 + $0x200] sm:$0xff]
    %v5516 = vld [vmem:[#allocation3 + $0x208] sm:$0xff]
    %v5517 = vld [vmem:[#allocation3 + $0x210] sm:$0xff]
    %v5518 = vld [vmem:[#allocation3 + $0x218] sm:$0xff]
    %v5519 = vld [vmem:[#allocation3 + $0x220] sm:$0xff]
    %v5520 = vld [vmem:[#allocation3 + $0x228] sm:$0xff]
    %v5521 = vld [vmem:[#allocation3 + $0x230] sm:$0xff]
    %v5522 = vld [vmem:[#allocation3 + $0x238] sm:$0xff]
    %v5523 = vld [vmem:[#allocation3 + $0x240] sm:$0xff]
    %v5524 = vld [vmem:[#allocation3 + $0x248] sm:$0xff]
    %v5525 = vld [vmem:[#allocation3 + $0x250] sm:$0xff]
    %v5526 = vld [vmem:[#allocation3 + $0x258] sm:$0xff]
    %v5527 = vld [vmem:[#allocation3 + $0x260] sm:$0xff]
    %v5528 = vld [vmem:[#allocation3 + $0x268] sm:$0xff]
    %v5529 = vld [vmem:[#allocation3 + $0x270] sm:$0xff]
    %v5530 = vld [vmem:[#allocation3 + $0x278] sm:$0xff]
    %v5531 = vld [vmem:[#allocation3 + $0x280] sm:$0xff]
    %v5532 = vld [vmem:[#allocation3 + $0x288] sm:$0xff]
    %v5533 = vld [vmem:[#allocation3 + $0x290] sm:$0xff]
    %v5534 = vld [vmem:[#allocation3 + $0x298] sm:$0xff]
    %v5535 = vld [vmem:[#allocation3 + $0x2a0] sm:$0xff]
    %v5536 = vld [vmem:[#allocation3 + $0x2a8] sm:$0xff]
    %v5537 = vld [vmem:[#allocation3 + $0x2b0] sm:$0xff]
    %v5538 = vld [vmem:[#allocation3 + $0x2b8] sm:$0xff]
    %v5539 = vld [vmem:[#allocation3 + $0x2c0] sm:$0xff]
    %v5540 = vld [vmem:[#allocation3 + $0x2c8] sm:$0xff]
    %v5541 = vld [vmem:[#allocation3 + $0x2d0] sm:$0xff]
    %v5542 = vld [vmem:[#allocation3 + $0x2d8] sm:$0xff]
    %v5543 = vld [vmem:[#allocation3 + $0x2e0] sm:$0xff]
    %v5544 = vld [vmem:[#allocation3 + $0x2e8] sm:$0xff]
    %v5545 = vld [vmem:[#allocation3 + $0x2f0] sm:$0xff]
    %v5546 = vld [vmem:[#allocation3 + $0x2f8] sm:$0xff]
    %v5547 = vld [vmem:[#allocation3 + $0x300] sm:$0xff]
    %v5548 = vld [vmem:[#allocation3 + $0x308] sm:$0xff]
    %v5549 = vld [vmem:[#allocation3 + $0x310] sm:$0xff]
    %v5550 = vld [vmem:[#allocation3 + $0x318] sm:$0xff]
    %v5551 = vld [vmem:[#allocation3 + $0x320] sm:$0xff]
    %v5552 = vld [vmem:[#allocation3 + $0x328] sm:$0xff]
    %v5553 = vld [vmem:[#allocation3 + $0x330] sm:$0xff]
    %v5554 = vld [vmem:[#allocation3 + $0x338] sm:$0xff]
    %v5555 = vld [vmem:[#allocation3 + $0x340] sm:$0xff]
    %v5556 = vld [vmem:[#allocation3 + $0x348] sm:$0xff]
    %v5557 = vld [vmem:[#allocation3 + $0x350] sm:$0xff]
    %v5558 = vld [vmem:[#allocation3 + $0x358] sm:$0xff]
    %v5559 = vld [vmem:[#allocation3 + $0x360] sm:$0xff]
    %v5560 = vld [vmem:[#allocation3 + $0x368] sm:$0xff]
    %v5561 = vld [vmem:[#allocation3 + $0x370] sm:$0xff]
    %v5562 = vld [vmem:[#allocation3 + $0x378] sm:$0xff]
    %v5563 = vld [vmem:[#allocation3 + $0x380] sm:$0xff]
    %v5564 = vld [vmem:[#allocation3 + $0x388] sm:$0xff]
    %v5565 = vld [vmem:[#allocation3 + $0x390] sm:$0xff]
    %v5566 = vld [vmem:[#allocation3 + $0x398] sm:$0xff]
    %v5567 = vld [vmem:[#allocation3 + $0x3a0] sm:$0xff]
    %v5568 = vld [vmem:[#allocation3 + $0x3a8] sm:$0xff]
    %v5569 = vld [vmem:[#allocation3 + $0x3b0] sm:$0xff]
    %v5570 = vld [vmem:[#allocation3 + $0x3b8] sm:$0xff]
    %v5571 = vld [vmem:[#allocation3 + $0x3c0] sm:$0xff]
    %v5572 = vld [vmem:[#allocation3 + $0x3c8] sm:$0xff]
    %v5573 = vld [vmem:[#allocation3 + $0x3d0] sm:$0xff]
    %v5574 = vld [vmem:[#allocation3 + $0x3d8] sm:$0xff]
    %v5575 = vld [vmem:[#allocation3 + $0x3e0] sm:$0xff]
    %v5576 = vld [vmem:[#allocation3 + $0x3e8] sm:$0xff]
    %v5577 = vld [vmem:[#allocation3 + $0x3f0] sm:$0xff]
    %v5578 = vld [vmem:[#allocation3 + $0x3f8] sm:$0xff]
    %v5579 = vld [vmem:[#allocation3 + $0x400] sm:$0xff]
    %v5580 = vld [vmem:[#allocation3 + $0x408] sm:$0xff]
    %v5581 = vld [vmem:[#allocation3 + $0x410] sm:$0xff]
    %v5582 = vld [vmem:[#allocation3 + $0x418] sm:$0xff]
    %v5583 = vld [vmem:[#allocation3 + $0x420] sm:$0xff]
    %v5584 = vld [vmem:[#allocation3 + $0x428] sm:$0xff]
    %v5585 = vld [vmem:[#allocation3 + $0x430] sm:$0xff]
    %v5586 = vld [vmem:[#allocation3 + $0x438] sm:$0xff]
    %v5587 = vld [vmem:[#allocation3 + $0x440] sm:$0xff]
    %v5588 = vld [vmem:[#allocation3 + $0x448] sm:$0xff]
    %v5589 = vld [vmem:[#allocation3 + $0x450] sm:$0xff]
    %v5590 = vld [vmem:[#allocation3 + $0x458] sm:$0xff]
    %v5591 = vld [vmem:[#allocation3 + $0x460] sm:$0xff]
    %v5592 = vld [vmem:[#allocation3 + $0x468] sm:$0xff]
    %v5593 = vld [vmem:[#allocation3 + $0x470] sm:$0xff]
    %v5594 = vld [vmem:[#allocation3 + $0x478] sm:$0xff]
    %v5595 = vld [vmem:[#allocation3 + $0x480] sm:$0xff]
    %v5596 = vld [vmem:[#allocation3 + $0x488] sm:$0xff]
    %v5597 = vld [vmem:[#allocation3 + $0x490] sm:$0xff]
    %v5598 = vld [vmem:[#allocation3 + $0x498] sm:$0xff]
    %v5599 = vld [vmem:[#allocation3 + $0x4a0] sm:$0xff]
    %v5600 = vld [vmem:[#allocation3 + $0x4a8] sm:$0xff]
    %v5601 = vld [vmem:[#allocation3 + $0x4b0] sm:$0xff]
    %v5602 = vld [vmem:[#allocation3 + $0x4b8] sm:$0xff]
    %v5603 = vld [vmem:[#allocation3 + $0x4c0] sm:$0xff]
    %v5604 = vld [vmem:[#allocation3 + $0x4c8] sm:$0xff]
    %v5605 = vld [vmem:[#allocation3 + $0x4d0] sm:$0xff]
    %v5606 = vld [vmem:[#allocation3 + $0x4d8] sm:$0xff]
    %v5607 = vld [vmem:[#allocation3 + $0x4e0] sm:$0xff]
    %v5608 = vld [vmem:[#allocation3 + $0x4e8] sm:$0xff]
    %v5609 = vld [vmem:[#allocation3 + $0x4f0] sm:$0xff]
    %v5610 = vld [vmem:[#allocation3 + $0x4f8] sm:$0xff]
    %v5611 = vld [vmem:[#allocation3 + $0x500] sm:$0xff]
    %v5612 = vld [vmem:[#allocation3 + $0x508] sm:$0xff]
    %v5613 = vld [vmem:[#allocation3 + $0x510] sm:$0xff]
    %v5614 = vld [vmem:[#allocation3 + $0x518] sm:$0xff]
    %v5615 = vld [vmem:[#allocation3 + $0x520] sm:$0xff]
    %v5616 = vld [vmem:[#allocation3 + $0x528] sm:$0xff]
    %v5617 = vld [vmem:[#allocation3 + $0x530] sm:$0xff]
    %v5618 = vld [vmem:[#allocation3 + $0x538] sm:$0xff]
    %v5619 = vld [vmem:[#allocation3 + $0x540] sm:$0xff]
    %v5620 = vld [vmem:[#allocation3 + $0x548] sm:$0xff]
    %v5621 = vld [vmem:[#allocation3 + $0x550] sm:$0xff]
    %v5622 = vld [vmem:[#allocation3 + $0x558] sm:$0xff]
    %v5623 = vld [vmem:[#allocation3 + $0x560] sm:$0xff]
    %v5624 = vld [vmem:[#allocation3 + $0x568] sm:$0xff]
    %v5625 = vld [vmem:[#allocation3 + $0x570] sm:$0xff]
    %v5626 = vld [vmem:[#allocation3 + $0x578] sm:$0xff]
    %v5627 = vld [vmem:[#allocation3 + $0x580] sm:$0xff]
    %v5628 = vld [vmem:[#allocation3 + $0x588] sm:$0xff]
    %v5629 = vld [vmem:[#allocation3 + $0x590] sm:$0xff]
    %v5630 = vld [vmem:[#allocation3 + $0x598] sm:$0xff]
    %v5631 = vld [vmem:[#allocation3 + $0x5a0] sm:$0xff]
    %v5632 = vld [vmem:[#allocation3 + $0x5a8] sm:$0xff]
    %v5633 = vld [vmem:[#allocation3 + $0x5b0] sm:$0xff]
    %v5634 = vld [vmem:[#allocation3 + $0x5b8] sm:$0xff]
    %v5635 = vld [vmem:[#allocation3 + $0x5c0] sm:$0xff]
    %v5636 = vld [vmem:[#allocation3 + $0x5c8] sm:$0xff]
    %v5637 = vld [vmem:[#allocation3 + $0x5d0] sm:$0xff]
    %v5638 = vld [vmem:[#allocation3 + $0x5d8] sm:$0xff]
    %v5639 = vld [vmem:[#allocation3 + $0x5e0] sm:$0xff]
    %v5640 = vld [vmem:[#allocation3 + $0x5e8] sm:$0xff]
    %v5641 = vld [vmem:[#allocation3 + $0x5f0] sm:$0xff]
    %v5642 = vld [vmem:[#allocation3 + $0x5f8] sm:$0xff]
    %v5643 = vld [vmem:[#allocation3 + $0x600] sm:$0xff]
    %v5644 = vld [vmem:[#allocation3 + $0x608] sm:$0xff]
    %v5645 = vld [vmem:[#allocation3 + $0x610] sm:$0xff]
    %v5646 = vld [vmem:[#allocation3 + $0x618] sm:$0xff]
    %v5647 = vld [vmem:[#allocation3 + $0x620] sm:$0xff]
    %v5648 = vld [vmem:[#allocation3 + $0x628] sm:$0xff]
    %v5649 = vld [vmem:[#allocation3 + $0x630] sm:$0xff]
    %v5650 = vld [vmem:[#allocation3 + $0x638] sm:$0xff]
    %v5651 = vld [vmem:[#allocation3 + $0x640] sm:$0xff]
    %v5652 = vld [vmem:[#allocation3 + $0x648] sm:$0xff]
    %v5653 = vld [vmem:[#allocation3 + $0x650] sm:$0xff]
    %v5654 = vld [vmem:[#allocation3 + $0x658] sm:$0xff]
    %v5655 = vld [vmem:[#allocation3 + $0x660] sm:$0xff]
    %v5656 = vld [vmem:[#allocation3 + $0x668] sm:$0xff]
    %v5657 = vld [vmem:[#allocation3 + $0x670] sm:$0xff]
    %v5658 = vld [vmem:[#allocation3 + $0x678] sm:$0xff]
    %v5659 = vld [vmem:[#allocation3 + $0x680] sm:$0xff]
    %v5660 = vld [vmem:[#allocation3 + $0x688] sm:$0xff]
    %v5661 = vld [vmem:[#allocation3 + $0x690] sm:$0xff]
    %v5662 = vld [vmem:[#allocation3 + $0x698] sm:$0xff]
    %v5663 = vld [vmem:[#allocation3 + $0x6a0] sm:$0xff]
    %v5664 = vld [vmem:[#allocation3 + $0x6a8] sm:$0xff]
    %v5665 = vld [vmem:[#allocation3 + $0x6b0] sm:$0xff]
    %v5666 = vld [vmem:[#allocation3 + $0x6b8] sm:$0xff]
    %v5667 = vld [vmem:[#allocation3 + $0x6c0] sm:$0xff]
    %v5668 = vld [vmem:[#allocation3 + $0x6c8] sm:$0xff]
    %v5669 = vld [vmem:[#allocation3 + $0x6d0] sm:$0xff]
    %v5670 = vld [vmem:[#allocation3 + $0x6d8] sm:$0xff]
    %v5671 = vld [vmem:[#allocation3 + $0x6e0] sm:$0xff]
    %v5672 = vld [vmem:[#allocation3 + $0x6e8] sm:$0xff]
    %v5673 = vld [vmem:[#allocation3 + $0x6f0] sm:$0xff]
    %v5674 = vld [vmem:[#allocation3 + $0x6f8] sm:$0xff]
    %v5675 = vld [vmem:[#allocation3 + $0x700] sm:$0xff]
    %v5676 = vld [vmem:[#allocation3 + $0x708] sm:$0xff]
    %v5677 = vld [vmem:[#allocation3 + $0x710] sm:$0xff]
    %v5678 = vld [vmem:[#allocation3 + $0x718] sm:$0xff]
    %v5679 = vld [vmem:[#allocation3 + $0x720] sm:$0xff]
    %v5680 = vld [vmem:[#allocation3 + $0x728] sm:$0xff]
    %v5681 = vld [vmem:[#allocation3 + $0x730] sm:$0xff]
    %v5682 = vld [vmem:[#allocation3 + $0x738] sm:$0xff]
    %v5683 = vld [vmem:[#allocation3 + $0x740] sm:$0xff]
    %v5684 = vld [vmem:[#allocation3 + $0x748] sm:$0xff]
    %v5685 = vld [vmem:[#allocation3 + $0x750] sm:$0xff]
    %v5686 = vld [vmem:[#allocation3 + $0x758] sm:$0xff]
    %v5687 = vld [vmem:[#allocation3 + $0x760] sm:$0xff]
    %v5688 = vld [vmem:[#allocation3 + $0x768] sm:$0xff]
    %v5689 = vld [vmem:[#allocation3 + $0x770] sm:$0xff]
    %v5690 = vld [vmem:[#allocation3 + $0x778] sm:$0xff]
    %v5691 = vld [vmem:[#allocation3 + $0x780] sm:$0xff]
    %v5692 = vld [vmem:[#allocation3 + $0x788] sm:$0xff]
    %v5693 = vld [vmem:[#allocation3 + $0x790] sm:$0xff]
    %v5694 = vld [vmem:[#allocation3 + $0x798] sm:$0xff]
    %v5695 = vld [vmem:[#allocation3 + $0x7a0] sm:$0xff]
    %v5696 = vld [vmem:[#allocation3 + $0x7a8] sm:$0xff]
    %v5697 = vld [vmem:[#allocation3 + $0x7b0] sm:$0xff]
    %v5698 = vld [vmem:[#allocation3 + $0x7b8] sm:$0xff]
    %v5699 = vld [vmem:[#allocation3 + $0x7c0] sm:$0xff]
    %v5700 = vld [vmem:[#allocation3 + $0x7c8] sm:$0xff]
    %v5701 = vld [vmem:[#allocation3 + $0x7d0] sm:$0xff]
    %v5702 = vld [vmem:[#allocation3 + $0x7d8] sm:$0xff]
    %v5703 = vld [vmem:[#allocation3 + $0x7e0] sm:$0xff]
    %v5704 = vld [vmem:[#allocation3 + $0x7e8] sm:$0xff]
    %v5705 = vld [vmem:[#allocation3 + $0x7f0] sm:$0xff]
    %v5706 = vld [vmem:[#allocation3 + $0x7f8] sm:$0xff]
    %v5707 = vld [vmem:[#allocation3 + $0x800] sm:$0xff]
    %v5708 = vld [vmem:[#allocation3 + $0x808] sm:$0xff]
    %v5709 = vld [vmem:[#allocation3 + $0x810] sm:$0xff]
    %v5710 = vld [vmem:[#allocation3 + $0x818] sm:$0xff]
    %v5711 = vld [vmem:[#allocation3 + $0x820] sm:$0xff]
    %v5712 = vld [vmem:[#allocation3 + $0x828] sm:$0xff]
    %v5713 = vld [vmem:[#allocation3 + $0x830] sm:$0xff]
    %v5714 = vld [vmem:[#allocation3 + $0x838] sm:$0xff]
    %v5715 = vld [vmem:[#allocation3 + $0x840] sm:$0xff]
    %v5716 = vld [vmem:[#allocation3 + $0x848] sm:$0xff]
    %v5717 = vld [vmem:[#allocation3 + $0x850] sm:$0xff]
    %v5718 = vld [vmem:[#allocation3 + $0x858] sm:$0xff]
    %v5719 = vld [vmem:[#allocation3 + $0x860] sm:$0xff]
    %v5720 = vld [vmem:[#allocation3 + $0x868] sm:$0xff]
    %v5721 = vld [vmem:[#allocation3 + $0x870] sm:$0xff]
    %v5722 = vld [vmem:[#allocation3 + $0x878] sm:$0xff]
    %v5723 = vld [vmem:[#allocation3 + $0x880] sm:$0xff]
    %v5724 = vld [vmem:[#allocation3 + $0x888] sm:$0xff]
    %v5725 = vld [vmem:[#allocation3 + $0x890] sm:$0xff]
    %v5726 = vld [vmem:[#allocation3 + $0x898] sm:$0xff]
    %v5727 = vld [vmem:[#allocation3 + $0x8a0] sm:$0xff]
    %v5728 = vld [vmem:[#allocation3 + $0x8a8] sm:$0xff]
    %v5729 = vld [vmem:[#allocation3 + $0x8b0] sm:$0xff]
    %v5730 = vld [vmem:[#allocation3 + $0x8b8] sm:$0xff]
    %v5731 = vld [vmem:[#allocation3 + $0x8c0] sm:$0xff]
    %v5732 = vld [vmem:[#allocation3 + $0x8c8] sm:$0xff]
    %v5733 = vld [vmem:[#allocation3 + $0x8d0] sm:$0xff]
    %v5734 = vld [vmem:[#allocation3 + $0x8d8] sm:$0xff]
    %v5735 = vld [vmem:[#allocation3 + $0x8e0] sm:$0xff]
    %v5736 = vld [vmem:[#allocation3 + $0x8e8] sm:$0xff]
    %v5737 = vld [vmem:[#allocation3 + $0x8f0] sm:$0xff]
    %v5738 = vld [vmem:[#allocation3 + $0x8f8] sm:$0xff]
    %v5739 = vld [vmem:[#allocation3 + $0x900] sm:$0xff]
    %v5740 = vld [vmem:[#allocation3 + $0x908] sm:$0xff]
    %v5741 = vld [vmem:[#allocation3 + $0x910] sm:$0xff]
    %v5742 = vld [vmem:[#allocation3 + $0x918] sm:$0xff]
    %v5743 = vld [vmem:[#allocation3 + $0x920] sm:$0xff]
    %v5744 = vld [vmem:[#allocation3 + $0x928] sm:$0xff]
    %v5745 = vld [vmem:[#allocation3 + $0x930] sm:$0xff]
    %v5746 = vld [vmem:[#allocation3 + $0x938] sm:$0xff]
    %v5747 = vld [vmem:[#allocation3 + $0x940] sm:$0xff]
    %v5748 = vld [vmem:[#allocation3 + $0x948] sm:$0xff]
    %v5749 = vld [vmem:[#allocation3 + $0x950] sm:$0xff]
    %v5750 = vld [vmem:[#allocation3 + $0x958] sm:$0xff]
    %v5751 = vld [vmem:[#allocation3 + $0x960] sm:$0xff]
    %v5752 = vld [vmem:[#allocation3 + $0x968] sm:$0xff]
    %v5753 = vld [vmem:[#allocation3 + $0x970] sm:$0xff]
    %v5754 = vld [vmem:[#allocation3 + $0x978] sm:$0xff]
    %v5755 = vld [vmem:[#allocation3 + $0x980] sm:$0xff]
    %v5756 = vld [vmem:[#allocation3 + $0x988] sm:$0xff]
    %v5757 = vld [vmem:[#allocation3 + $0x990] sm:$0xff]
    %v5758 = vld [vmem:[#allocation3 + $0x998] sm:$0xff]
    %v5759 = vld [vmem:[#allocation3 + $0x9a0] sm:$0xff]
    %v5760 = vld [vmem:[#allocation3 + $0x9a8] sm:$0xff]
    %v5761 = vld [vmem:[#allocation3 + $0x9b0] sm:$0xff]
    %v5762 = vld [vmem:[#allocation3 + $0x9b8] sm:$0xff]
    %v5763 = vld [vmem:[#allocation3 + $0x9c0] sm:$0xff]
    %v5764 = vld [vmem:[#allocation3 + $0x9c8] sm:$0xff]
    %v5765 = vld [vmem:[#allocation3 + $0x9d0] sm:$0xff]
    %v5766 = vld [vmem:[#allocation3 + $0x9d8] sm:$0xff]
    %v5767 = vld [vmem:[#allocation3 + $0x9e0] sm:$0xff]
    %v5768 = vld [vmem:[#allocation3 + $0x9e8] sm:$0xff]
    %v5769 = vld [vmem:[#allocation3 + $0x9f0] sm:$0xff]
    %v5770 = vld [vmem:[#allocation3 + $0x9f8] sm:$0xff]
    %v5771 = vld [vmem:[#allocation3 + $0xa00] sm:$0xff]
    %v5772 = vld [vmem:[#allocation3 + $0xa08] sm:$0xff]
    %v5773 = vld [vmem:[#allocation3 + $0xa10] sm:$0xff]
    %v5774 = vld [vmem:[#allocation3 + $0xa18] sm:$0xff]
    %v5775 = vld [vmem:[#allocation3 + $0xa20] sm:$0xff]
    %v5776 = vld [vmem:[#allocation3 + $0xa28] sm:$0xff]
    %v5777 = vld [vmem:[#allocation3 + $0xa30] sm:$0xff]
    %v5778 = vld [vmem:[#allocation3 + $0xa38] sm:$0xff]
    %v5779 = vld [vmem:[#allocation3 + $0xa40] sm:$0xff]
    %v5780 = vld [vmem:[#allocation3 + $0xa48] sm:$0xff]
    %v5781 = vld [vmem:[#allocation3 + $0xa50] sm:$0xff]
    %v5782 = vld [vmem:[#allocation3 + $0xa58] sm:$0xff]
    %v5783 = vld [vmem:[#allocation3 + $0xa60] sm:$0xff]
    %v5784 = vld [vmem:[#allocation3 + $0xa68] sm:$0xff]
    %v5785 = vld [vmem:[#allocation3 + $0xa70] sm:$0xff]
    %v5786 = vld [vmem:[#allocation3 + $0xa78] sm:$0xff]
    %v5787 = vld [vmem:[#allocation3 + $0xa80] sm:$0xff]
    %v5788 = vld [vmem:[#allocation3 + $0xa88] sm:$0xff]
    %v5789 = vld [vmem:[#allocation3 + $0xa90] sm:$0xff]
    %v5790 = vld [vmem:[#allocation3 + $0xa98] sm:$0xff]
    %v5791 = vld [vmem:[#allocation3 + $0xaa0] sm:$0xff]
    %v5792 = vld [vmem:[#allocation3 + $0xaa8] sm:$0xff]
    %v5793 = vld [vmem:[#allocation3 + $0xab0] sm:$0xff]
    %v5794 = vld [vmem:[#allocation3 + $0xab8] sm:$0xff]
    %v5795 = vld [vmem:[#allocation3 + $0xac0] sm:$0xff]
    %v5796 = vld [vmem:[#allocation3 + $0xac8] sm:$0xff]
    %v5797 = vld [vmem:[#allocation3 + $0xad0] sm:$0xff]
    %v5798 = vld [vmem:[#allocation3 + $0xad8] sm:$0xff]
    %v5799 = vld [vmem:[#allocation3 + $0xae0] sm:$0xff]
    %v5800 = vld [vmem:[#allocation3 + $0xae8] sm:$0xff]
    %v5801 = vld [vmem:[#allocation3 + $0xaf0] sm:$0xff]
    %v5802 = vld [vmem:[#allocation3 + $0xaf8] sm:$0xff]
    %v5803 = vld [vmem:[#allocation3 + $0xb00] sm:$0xff]
    %v5804 = vld [vmem:[#allocation3 + $0xb08] sm:$0xff]
    %v5805 = vld [vmem:[#allocation3 + $0xb10] sm:$0xff]
    %v5806 = vld [vmem:[#allocation3 + $0xb18] sm:$0xff]
    %v5807 = vld [vmem:[#allocation3 + $0xb20] sm:$0xff]
    %v5808 = vld [vmem:[#allocation3 + $0xb28] sm:$0xff]
    %v5809 = vld [vmem:[#allocation3 + $0xb30] sm:$0xff]
    %v5810 = vld [vmem:[#allocation3 + $0xb38] sm:$0xff]
    %v5811 = vld [vmem:[#allocation3 + $0xb40] sm:$0xff]
    %v5812 = vld [vmem:[#allocation3 + $0xb48] sm:$0xff]
    %v5813 = vld [vmem:[#allocation3 + $0xb50] sm:$0xff]
    %v5814 = vld [vmem:[#allocation3 + $0xb58] sm:$0xff]
    %v5815 = vld [vmem:[#allocation3 + $0xb60] sm:$0xff]
    %v5816 = vld [vmem:[#allocation3 + $0xb68] sm:$0xff]
    %v5817 = vld [vmem:[#allocation3 + $0xb70] sm:$0xff]
    %v5818 = vld [vmem:[#allocation3 + $0xb78] sm:$0xff]
    %v5819 = vld [vmem:[#allocation3 + $0xb80] sm:$0xff]
    %v5820 = vld [vmem:[#allocation3 + $0xb88] sm:$0xff]
    %v5821 = vld [vmem:[#allocation3 + $0xb90] sm:$0xff]
    %v5822 = vld [vmem:[#allocation3 + $0xb98] sm:$0xff]
    %v5823 = vld [vmem:[#allocation3 + $0xba0] sm:$0xff]
    %v5824 = vld [vmem:[#allocation3 + $0xba8] sm:$0xff]
    %v5825 = vld [vmem:[#allocation3 + $0xbb0] sm:$0xff]
    %v5826 = vld [vmem:[#allocation3 + $0xbb8] sm:$0xff]
    %v5827 = vld [vmem:[#allocation3 + $0xbc0] sm:$0xff]
    %v5828 = vld [vmem:[#allocation3 + $0xbc8] sm:$0xff]
    %v5829 = vld [vmem:[#allocation3 + $0xbd0] sm:$0xff]
    %v5830 = vld [vmem:[#allocation3 + $0xbd8] sm:$0xff]
    %v5831 = vld [vmem:[#allocation3 + $0xbe0] sm:$0xff]
    %v5832 = vld [vmem:[#allocation3 + $0xbe8] sm:$0xff]
    %v5833 = vld [vmem:[#allocation3 + $0xbf0] sm:$0xff]
    %v5834 = vld [vmem:[#allocation3 + $0xbf8] sm:$0xff]
    %5835 = vmatprep.subr.mxu0 %v5452
    %5836 = vmatpush1.msra.mxu0 %v5451
    %5837 = vmatprep.subr.mxu0 %v5455
    %5838 = vmatpush1.msra.mxu0 %v5454
    %5839 = vmatprep.subr.mxu0 %v5458
    %5840 = vmatpush1.msra.mxu0 %v5457
    %5841 = vmatprep.subr.mxu0 %v5461
    %5842 = vmatpush1.msra.mxu0 %v5460
    %5843 = vmatprep.subr.mxu0 %v5464
    %5844 = vmatpush1.msra.mxu0 %v5463
    %5845 = vmatprep.subr.mxu0 %v5467
    %5846 = vmatpush1.msra.mxu0 %v5466
    %5847 = vmatprep.subr.mxu0 %v5470
    %5848 = vmatpush1.msra.mxu0 %v5469
    %5849 = vmatprep.subr.mxu0 %v5473
    %5850 = vmatpush1.msra.mxu0 %v5472
    %5851 = vmatprep.subr.mxu0 %v5476
    %5852 = vmatpush1.msra.mxu0 %v5475
    %5853 = vmatprep.subr.mxu0 %v5479
    %5854 = vmatpush1.msra.mxu0 %v5478
    %5855 = vmatprep.subr.mxu0 %v5482
    %5856 = vmatpush1.msra.mxu0 %v5481
    %5857 = vmatprep.subr.mxu0 %v5485
    %5858 = vmatpush1.msra.mxu0 %v5484
    %5859 = vmatprep.subr.mxu0 %v5488
    %5860 = vmatpush1.msra.mxu0 %v5487
    %5861 = vmatprep.subr.mxu0 %v5491
    %5862 = vmatpush1.msra.mxu0 %v5490
    %5863 = vmatprep.subr.mxu0 %v5494
    %5864 = vmatpush1.msra.mxu0 %v5493
    %5865 = vmatprep.subr.mxu0 %v5497
    %5866 = vmatpush1.msra.mxu0 %v5496
    %5867 = vmatprep.subr.mxu0 %v5500
    %5868 = vmatpush1.msra.mxu0 %v5499
    %5869 = vmatprep.subr.mxu0 %v5503
    %5870 = vmatpush1.msra.mxu0 %v5502
    %5871 = vmatprep.subr.mxu0 %v5506
    %5872 = vmatpush1.msra.mxu0 %v5505
    %5873 = vmatprep.subr.mxu0 %v5509
    %5874 = vmatpush1.msra.mxu0 %v5508
    %5875 = vmatprep.subr.mxu0 %v5512
    %5876 = vmatpush1.msra.mxu0 %v5511
    %5877 = vmatprep.subr.mxu0 %v5515
    %5878 = vmatpush1.msra.mxu0 %v5514
    %5879 = vmatprep.subr.mxu0 %v5518
    %5880 = vmatpush1.msra.mxu0 %v5517
    %5881 = vmatprep.subr.mxu0 %v5521
    %5882 = vmatpush1.msra.mxu0 %v5520
    %5883 = vmatprep.subr.mxu0 %v5524
    %5884 = vmatpush1.msra.mxu0 %v5523
    %5885 = vmatprep.subr.mxu0 %v5527
    %5886 = vmatpush1.msra.mxu0 %v5526
    %5887 = vmatprep.subr.mxu0 %v5530
    %5888 = vmatpush1.msra.mxu0 %v5529
    %5889 = vmatprep.subr.mxu0 %v5533
    %5890 = vmatpush1.msra.mxu0 %v5532
    %5891 = vmatprep.subr.mxu0 %v5536
    %5892 = vmatpush1.msra.mxu0 %v5535
    %5893 = vmatprep.subr.mxu0 %v5539
    %5894 = vmatpush1.msra.mxu0 %v5538
    %5895 = vmatprep.subr.mxu0 %v5542
    %5896 = vmatpush1.msra.mxu0 %v5541
    %5897 = vmatprep.subr.mxu0 %v5545
    %5898 = vmatpush1.msra.mxu0 %v5544
    %5899 = vmatprep.mubr.f32.mxu0 %v5314
    %5900 = vmatmul.mubr.f32.gmra.mrb[0].mxu0 %v5313
    %v5901 = vpop.f32.mrb[0].mxu0
    %v5902 = vadd.f32 0.0, %v5901
    %v5903 = vpop.f32.mrb[0].mxu0
    %v5904 = vadd.f32 0.0, %v5903
    %5905 = vdwg.mxu0
    %5906 = vmatprep.subr.mxu0 %v5548
    %5907 = vmatpush1.msra.mxu0 %v5547
    %5908 = vmatprep.subr.mxu0 %v5551
    %5909 = vmatpush1.msra.mxu0 %v5550
    %5910 = vmatprep.subr.mxu0 %v5554
    %5911 = vmatpush1.msra.mxu0 %v5553
    %5912 = vmatprep.subr.mxu0 %v5557
    %5913 = vmatpush1.msra.mxu0 %v5556
    %5914 = vmatprep.subr.mxu0 %v5560
    %5915 = vmatpush1.msra.mxu0 %v5559
    %5916 = vmatprep.subr.mxu0 %v5563
    %5917 = vmatpush1.msra.mxu0 %v5562
    %5918 = vmatprep.subr.mxu0 %v5566
    %5919 = vmatpush1.msra.mxu0 %v5565
    %5920 = vmatprep.subr.mxu0 %v5569
    %5921 = vmatpush1.msra.mxu0 %v5568
    %5922 = vmatprep.subr.mxu0 %v5572
    %5923 = vmatpush1.msra.mxu0 %v5571
    %5924 = vmatprep.subr.mxu0 %v5575
    %5925 = vmatpush1.msra.mxu0 %v5574
    %5926 = vmatprep.subr.mxu0 %v5578
    %5927 = vmatpush1.msra.mxu0 %v5577
    %5928 = vmatprep.subr.mxu0 %v5581
    %5929 = vmatpush1.msra.mxu0 %v5580
    %5930 = vmatprep.subr.mxu0 %v5584
    %5931 = vmatpush1.msra.mxu0 %v5583
    %5932 = vmatprep.subr.mxu0 %v5587
    %5933 = vmatpush1.msra.mxu0 %v5586
    %5934 = vmatprep.subr.mxu0 %v5590
    %5935 = vmatpush1.msra.mxu0 %v5589
    %5936 = vmatprep.subr.mxu0 %v5593
    %5937 = vmatpush1.msra.mxu0 %v5592
    %5938 = vmatprep.subr.mxu0 %v5596
    %5939 = vmatpush1.msra.mxu0 %v5595
    %5940 = vmatprep.subr.mxu0 %v5599
    %5941 = vmatpush1.msra.mxu0 %v5598
    %5942 = vmatprep.subr.mxu0 %v5602
    %5943 = vmatpush1.msra.mxu0 %v5601
    %5944 = vmatprep.subr.mxu0 %v5605
    %5945 = vmatpush1.msra.mxu0 %v5604
    %5946 = vmatprep.subr.mxu0 %v5608
    %5947 = vmatpush1.msra.mxu0 %v5607
    %5948 = vmatprep.subr.mxu0 %v5611
    %5949 = vmatpush1.msra.mxu0 %v5610
    %5950 = vmatprep.subr.mxu0 %v5614
    %5951 = vmatpush1.msra.mxu0 %v5613
    %5952 = vmatprep.subr.mxu0 %v5617
    %5953 = vmatpush1.msra.mxu0 %v5616
    %5954 = vmatprep.subr.mxu0 %v5620
    %5955 = vmatpush1.msra.mxu0 %v5619
    %5956 = vmatprep.subr.mxu0 %v5623
    %5957 = vmatpush1.msra.mxu0 %v5622
    %5958 = vmatprep.subr.mxu0 %v5626
    %5959 = vmatpush1.msra.mxu0 %v5625
    %5960 = vmatprep.subr.mxu0 %v5629
    %5961 = vmatpush1.msra.mxu0 %v5628
    %5962 = vmatprep.subr.mxu0 %v5632
    %5963 = vmatpush1.msra.mxu0 %v5631
    %5964 = vmatprep.subr.mxu0 %v5635
    %5965 = vmatpush1.msra.mxu0 %v5634
    %5966 = vmatprep.subr.mxu0 %v5638
    %5967 = vmatpush1.msra.mxu0 %v5637
    %5968 = vmatprep.subr.mxu0 %v5641
    %5969 = vmatpush1.msra.mxu0 %v5640
    %5970 = vmatprep.mubr.f32.mxu0 %v5316
    %5971 = vmatmul.mubr.f32.gmra.mrb[0].mxu0 %v5315
    %v5972 = vpop.f32.mrb[0].mxu0
    %v5973 = vadd.f32 %v5902, %v5972
    %v5974 = vpop.f32.mrb[0].mxu0
    %v5975 = vadd.f32 %v5904, %v5974
    %5976 = vdwg.mxu0
    %5977 = vmatprep.subr.mxu0 %v5644
    %5978 = vmatpush1.msra.mxu0 %v5643
    %5979 = vmatprep.subr.mxu0 %v5647
    %5980 = vmatpush1.msra.mxu0 %v5646
    %5981 = vmatprep.subr.mxu0 %v5650
    %5982 = vmatpush1.msra.mxu0 %v5649
    %5983 = vmatprep.subr.mxu0 %v5653
    %5984 = vmatpush1.msra.mxu0 %v5652
    %5985 = vmatprep.subr.mxu0 %v5656
    %5986 = vmatpush1.msra.mxu0 %v5655
    %5987 = vmatprep.subr.mxu0 %v5659
    %5988 = vmatpush1.msra.mxu0 %v5658
    %5989 = vmatprep.subr.mxu0 %v5662
    %5990 = vmatpush1.msra.mxu0 %v5661
    %5991 = vmatprep.subr.mxu0 %v5665
    %5992 = vmatpush1.msra.mxu0 %v5664
    %5993 = vmatprep.subr.mxu0 %v5668
    %5994 = vmatpush1.msra.mxu0 %v5667
    %5995 = vmatprep.subr.mxu0 %v5671
    %5996 = vmatpush1.msra.mxu0 %v5670
    %5997 = vmatprep.subr.mxu0 %v5674
    %5998 = vmatpush1.msra.mxu0 %v5673
    %5999 = vmatprep.subr.mxu0 %v5677
    %6000 = vmatpush1.msra.mxu0 %v5676
    %6001 = vmatprep.subr.mxu0 %v5680
    %6002 = vmatpush1.msra.mxu0 %v5679
    %6003 = vmatprep.subr.mxu0 %v5683
    %6004 = vmatpush1.msra.mxu0 %v5682
    %6005 = vmatprep.subr.mxu0 %v5686
    %6006 = vmatpush1.msra.mxu0 %v5685
    %6007 = vmatprep.subr.mxu0 %v5689
    %6008 = vmatpush1.msra.mxu0 %v5688
    %6009 = vmatprep.subr.mxu0 %v5692
    %6010 = vmatpush1.msra.mxu0 %v5691
    %6011 = vmatprep.subr.mxu0 %v5695
    %6012 = vmatpush1.msra.mxu0 %v5694
    %6013 = vmatprep.subr.mxu0 %v5698
    %6014 = vmatpush1.msra.mxu0 %v5697
    %6015 = vmatprep.subr.mxu0 %v5701
    %6016 = vmatpush1.msra.mxu0 %v5700
    %6017 = vmatprep.subr.mxu0 %v5704
    %6018 = vmatpush1.msra.mxu0 %v5703
    %6019 = vmatprep.subr.mxu0 %v5707
    %6020 = vmatpush1.msra.mxu0 %v5706
    %6021 = vmatprep.subr.mxu0 %v5710
    %6022 = vmatpush1.msra.mxu0 %v5709
    %6023 = vmatprep.subr.mxu0 %v5713
    %6024 = vmatpush1.msra.mxu0 %v5712
    %6025 = vmatprep.subr.mxu0 %v5716
    %6026 = vmatpush1.msra.mxu0 %v5715
    %6027 = vmatprep.subr.mxu0 %v5719
    %6028 = vmatpush1.msra.mxu0 %v5718
    %6029 = vmatprep.subr.mxu0 %v5722
    %6030 = vmatpush1.msra.mxu0 %v5721
    %6031 = vmatprep.subr.mxu0 %v5725
    %6032 = vmatpush1.msra.mxu0 %v5724
    %6033 = vmatprep.subr.mxu0 %v5728
    %6034 = vmatpush1.msra.mxu0 %v5727
    %6035 = vmatprep.subr.mxu0 %v5731
    %6036 = vmatpush1.msra.mxu0 %v5730
    %6037 = vmatprep.subr.mxu0 %v5734
    %6038 = vmatpush1.msra.mxu0 %v5733
    %6039 = vmatprep.subr.mxu0 %v5737
    %6040 = vmatpush1.msra.mxu0 %v5736
    %6041 = vmatprep.mubr.f32.mxu0 %v5318
    %6042 = vmatmul.mubr.f32.gmra.mrb[0].mxu0 %v5317
    %v6043 = vpop.f32.mrb[0].mxu0
    %v6044 = vadd.f32 %v5973, %v6043
    %v6045 = vpop.f32.mrb[0].mxu0
    %v6046 = vadd.f32 %v5975, %v6045
    %6047 = vdwg.mxu0
    %6048 = vmatprep.subr.mxu0 %v5740
    %6049 = vmatpush1.msra.mxu0 %v5739
    %6050 = vmatprep.subr.mxu0 %v5743
    %6051 = vmatpush1.msra.mxu0 %v5742
    %6052 = vmatprep.subr.mxu0 %v5746
    %6053 = vmatpush1.msra.mxu0 %v5745
    %6054 = vmatprep.subr.mxu0 %v5749
    %6055 = vmatpush1.msra.mxu0 %v5748
    %6056 = vmatprep.subr.mxu0 %v5752
    %6057 = vmatpush1.msra.mxu0 %v5751
    %6058 = vmatprep.subr.mxu0 %v5755
    %6059 = vmatpush1.msra.mxu0 %v5754
    %6060 = vmatprep.subr.mxu0 %v5758
    %6061 = vmatpush1.msra.mxu0 %v5757
    %6062 = vmatprep.subr.mxu0 %v5761
    %6063 = vmatpush1.msra.mxu0 %v5760
    %6064 = vmatprep.subr.mxu0 %v5764
    %6065 = vmatpush1.msra.mxu0 %v5763
    %6066 = vmatprep.subr.mxu0 %v5767
    %6067 = vmatpush1.msra.mxu0 %v5766
    %6068 = vmatprep.subr.mxu0 %v5770
    %6069 = vmatpush1.msra.mxu0 %v5769
    %6070 = vmatprep.subr.mxu0 %v5773
    %6071 = vmatpush1.msra.mxu0 %v5772
    %6072 = vmatprep.subr.mxu0 %v5776
    %6073 = vmatpush1.msra.mxu0 %v5775
    %6074 = vmatprep.subr.mxu0 %v5779
    %6075 = vmatpush1.msra.mxu0 %v5778
    %6076 = vmatprep.subr.mxu0 %v5782
    %6077 = vmatpush1.msra.mxu0 %v5781
    %6078 = vmatprep.subr.mxu0 %v5785
    %6079 = vmatpush1.msra.mxu0 %v5784
    %6080 = vmatprep.subr.mxu0 %v5788
    %6081 = vmatpush1.msra.mxu0 %v5787
    %6082 = vmatprep.subr.mxu0 %v5791
    %6083 = vmatpush1.msra.mxu0 %v5790
    %6084 = vmatprep.subr.mxu0 %v5794
    %6085 = vmatpush1.msra.mxu0 %v5793
    %6086 = vmatprep.subr.mxu0 %v5797
    %6087 = vmatpush1.msra.mxu0 %v5796
    %6088 = vmatprep.subr.mxu0 %v5800
    %6089 = vmatpush1.msra.mxu0 %v5799
    %6090 = vmatprep.subr.mxu0 %v5803
    %6091 = vmatpush1.msra.mxu0 %v5802
    %6092 = vmatprep.subr.mxu0 %v5806
    %6093 = vmatpush1.msra.mxu0 %v5805
    %6094 = vmatprep.subr.mxu0 %v5809
    %6095 = vmatpush1.msra.mxu0 %v5808
    %6096 = vmatprep.subr.mxu0 %v5812
    %6097 = vmatpush1.msra.mxu0 %v5811
    %6098 = vmatprep.subr.mxu0 %v5815
    %6099 = vmatpush1.msra.mxu0 %v5814
    %6100 = vmatprep.subr.mxu0 %v5818
    %6101 = vmatpush1.msra.mxu0 %v5817
    %6102 = vmatprep.subr.mxu0 %v5821
    %6103 = vmatpush1.msra.mxu0 %v5820
    %6104 = vmatprep.subr.mxu0 %v5824
    %6105 = vmatpush1.msra.mxu0 %v5823
    %6106 = vmatprep.subr.mxu0 %v5827
    %6107 = vmatpush1.msra.mxu0 %v5826
    %6108 = vmatprep.subr.mxu0 %v5830
    %6109 = vmatpush1.msra.mxu0 %v5829
    %6110 = vmatprep.subr.mxu0 %v5833
    %6111 = vmatpush1.msra.mxu0 %v5832
    %6112 = vmatprep.mubr.f32.mxu0 %v5320
    %6113 = vmatmul.mubr.f32.gmra.mrb[0].mxu0 %v5319
    %v6114 = vpop.f32.mrb[0].mxu0
    %v6115 = vadd.f32 %v6044, %v6114
    %v6116 = vpop.f32.mrb[0].mxu0
    %v6117 = vadd.f32 %v6046, %v6116
    %6118 = vdwg.mxu0
    %6119 = vmatprep.subr.mxu0 0.0
    %6120 = vmatpush1.msra.mxu0 %v5453
    %6121 = vmatprep.subr.mxu0 0.0
    %6122 = vmatpush1.msra.mxu0 %v5456
    %6123 = vmatprep.subr.mxu0 0.0
    %6124 = vmatpush1.msra.mxu0 %v5459
    %6125 = vmatprep.subr.mxu0 0.0
    %6126 = vmatpush1.msra.mxu0 %v5462
    %6127 = vmatprep.subr.mxu0 0.0
    %6128 = vmatpush1.msra.mxu0 %v5465
    %6129 = vmatprep.subr.mxu0 0.0
    %6130 = vmatpush1.msra.mxu0 %v5468
    %6131 = vmatprep.subr.mxu0 0.0
    %6132 = vmatpush1.msra.mxu0 %v5471
    %6133 = vmatprep.subr.mxu0 0.0
    %6134 = vmatpush1.msra.mxu0 %v5474
    %6135 = vmatprep.subr.mxu0 0.0
    %6136 = vmatpush1.msra.mxu0 %v5477
    %6137 = vmatprep.subr.mxu0 0.0
    %6138 = vmatpush1.msra.mxu0 %v5480
    %6139 = vmatprep.subr.mxu0 0.0
    %6140 = vmatpush1.msra.mxu0 %v5483
    %6141 = vmatprep.subr.mxu0 0.0
    %6142 = vmatpush1.msra.mxu0 %v5486
    %6143 = vmatprep.subr.mxu0 0.0
    %6144 = vmatpush1.msra.mxu0 %v5489
    %6145 = vmatprep.subr.mxu0 0.0
    %6146 = vmatpush1.msra.mxu0 %v5492
    %6147 = vmatprep.subr.mxu0 0.0
    %6148 = vmatpush1.msra.mxu0 %v5495
    %6149 = vmatprep.subr.mxu0 0.0
    %6150 = vmatpush1.msra.mxu0 %v5498
    %6151 = vmatprep.subr.mxu0 0.0
    %6152 = vmatpush1.msra.mxu0 %v5501
    %6153 = vmatprep.subr.mxu0 0.0
    %6154 = vmatpush1.msra.mxu0 %v5504
    %6155 = vmatprep.subr.mxu0 0.0
    %6156 = vmatpush1.msra.mxu0 %v5507
    %6157 = vmatprep.subr.mxu0 0.0
    %6158 = vmatpush1.msra.mxu0 %v5510
    %6159 = vmatprep.subr.mxu0 0.0
    %6160 = vmatpush1.msra.mxu0 %v5513
    %6161 = vmatprep.subr.mxu0 0.0
    %6162 = vmatpush1.msra.mxu0 %v5516
    %6163 = vmatprep.subr.mxu0 0.0
    %6164 = vmatpush1.msra.mxu0 %v5519
    %6165 = vmatprep.subr.mxu0 0.0
    %6166 = vmatpush1.msra.mxu0 %v5522
    %6167 = vmatprep.subr.mxu0 0.0
    %6168 = vmatpush1.msra.mxu0 %v5525
    %6169 = vmatprep.subr.mxu0 0.0
    %6170 = vmatpush1.msra.mxu0 %v5528
    %6171 = vmatprep.subr.mxu0 0.0
    %6172 = vmatpush1.msra.mxu0 %v5531
    %6173 = vmatprep.subr.mxu0 0.0
    %6174 = vmatpush1.msra.mxu0 %v5534
    %6175 = vmatprep.subr.mxu0 0.0
    %6176 = vmatpush1.msra.mxu0 %v5537
    %6177 = vmatprep.subr.mxu0 0.0
    %6178 = vmatpush1.msra.mxu0 %v5540
    %6179 = vmatprep.subr.mxu0 0.0
    %6180 = vmatpush1.msra.mxu0 %v5543
    %6181 = vmatprep.subr.mxu0 0.0
    %6182 = vmatpush1.msra.mxu0 %v5546
    %6183 = vmatprep.mubr.f32.mxu0 %v5314
    %6184 = vmatmul.mubr.f32.gmra.mrb[0].mxu0 %v5313
    %v6185 = vpop.f32.mrb[0].mxu0
    %v6186 = vadd.f32 0.0, %v6185
    %v6187 = vpop.f32.mrb[0].mxu0
    %6188 = vdwg.mxu0
    %6189 = vmatprep.subr.mxu0 0.0
    %6190 = vmatpush1.msra.mxu0 %v5549
    %6191 = vmatprep.subr.mxu0 0.0
    %6192 = vmatpush1.msra.mxu0 %v5552
    %6193 = vmatprep.subr.mxu0 0.0
    %6194 = vmatpush1.msra.mxu0 %v5555
    %6195 = vmatprep.subr.mxu0 0.0
    %6196 = vmatpush1.msra.mxu0 %v5558
    %6197 = vmatprep.subr.mxu0 0.0
    %6198 = vmatpush1.msra.mxu0 %v5561
    %6199 = vmatprep.subr.mxu0 0.0
    %6200 = vmatpush1.msra.mxu0 %v5564
    %6201 = vmatprep.subr.mxu0 0.0
    %6202 = vmatpush1.msra.mxu0 %v5567
    %6203 = vmatprep.subr.mxu0 0.0
    %6204 = vmatpush1.msra.mxu0 %v5570
    %6205 = vmatprep.subr.mxu0 0.0
    %6206 = vmatpush1.msra.mxu0 %v5573
    %6207 = vmatprep.subr.mxu0 0.0
    %6208 = vmatpush1.msra.mxu0 %v5576
    %6209 = vmatprep.subr.mxu0 0.0
    %6210 = vmatpush1.msra.mxu0 %v5579
    %6211 = vmatprep.subr.mxu0 0.0
    %6212 = vmatpush1.msra.mxu0 %v5582
    %6213 = vmatprep.subr.mxu0 0.0
    %6214 = vmatpush1.msra.mxu0 %v5585
    %6215 = vmatprep.subr.mxu0 0.0
    %6216 = vmatpush1.msra.mxu0 %v5588
    %6217 = vmatprep.subr.mxu0 0.0
    %6218 = vmatpush1.msra.mxu0 %v5591
    %6219 = vmatprep.subr.mxu0 0.0
    %6220 = vmatpush1.msra.mxu0 %v5594
    %6221 = vmatprep.subr.mxu0 0.0
    %6222 = vmatpush1.msra.mxu0 %v5597
    %6223 = vmatprep.subr.mxu0 0.0
    %6224 = vmatpush1.msra.mxu0 %v5600
    %6225 = vmatprep.subr.mxu0 0.0
    %6226 = vmatpush1.msra.mxu0 %v5603
    %6227 = vmatprep.subr.mxu0 0.0
    %6228 = vmatpush1.msra.mxu0 %v5606
    %6229 = vmatprep.subr.mxu0 0.0
    %6230 = vmatpush1.msra.mxu0 %v5609
    %6231 = vmatprep.subr.mxu0 0.0
    %6232 = vmatpush1.msra.mxu0 %v5612
    %6233 = vmatprep.subr.mxu0 0.0
    %6234 = vmatpush1.msra.mxu0 %v5615
    %6235 = vmatprep.subr.mxu0 0.0
    %6236 = vmatpush1.msra.mxu0 %v5618
    %6237 = vmatprep.subr.mxu0 0.0
    %6238 = vmatpush1.msra.mxu0 %v5621
    %6239 = vmatprep.subr.mxu0 0.0
    %6240 = vmatpush1.msra.mxu0 %v5624
    %6241 = vmatprep.subr.mxu0 0.0
    %6242 = vmatpush1.msra.mxu0 %v5627
    %6243 = vmatprep.subr.mxu0 0.0
    %6244 = vmatpush1.msra.mxu0 %v5630
    %6245 = vmatprep.subr.mxu0 0.0
    %6246 = vmatpush1.msra.mxu0 %v5633
    %6247 = vmatprep.subr.mxu0 0.0
    %6248 = vmatpush1.msra.mxu0 %v5636
    %6249 = vmatprep.subr.mxu0 0.0
    %6250 = vmatpush1.msra.mxu0 %v5639
    %6251 = vmatprep.subr.mxu0 0.0
    %6252 = vmatpush1.msra.mxu0 %v5642
    %6253 = vmatprep.mubr.f32.mxu0 %v5316
    %6254 = vmatmul.mubr.f32.gmra.mrb[0].mxu0 %v5315
    %v6255 = vpop.f32.mrb[0].mxu0
    %v6256 = vadd.f32 %v6186, %v6255
    %v6257 = vpop.f32.mrb[0].mxu0
    %6258 = vdwg.mxu0
    %6259 = vmatprep.subr.mxu0 0.0
    %6260 = vmatpush1.msra.mxu0 %v5645
    %6261 = vmatprep.subr.mxu0 0.0
    %6262 = vmatpush1.msra.mxu0 %v5648
    %6263 = vmatprep.subr.mxu0 0.0
    %6264 = vmatpush1.msra.mxu0 %v5651
    %6265 = vmatprep.subr.mxu0 0.0
    %6266 = vmatpush1.msra.mxu0 %v5654
    %6267 = vmatprep.subr.mxu0 0.0
    %6268 = vmatpush1.msra.mxu0 %v5657
    %6269 = vmatprep.subr.mxu0 0.0
    %6270 = vmatpush1.msra.mxu0 %v5660
    %6271 = vmatprep.subr.mxu0 0.0
    %6272 = vmatpush1.msra.mxu0 %v5663
    %6273 = vmatprep.subr.mxu0 0.0
    %6274 = vmatpush1.msra.mxu0 %v5666
    %6275 = vmatprep.subr.mxu0 0.0
    %6276 = vmatpush1.msra.mxu0 %v5669
    %6277 = vmatprep.subr.mxu0 0.0
    %6278 = vmatpush1.msra.mxu0 %v5672
    %6279 = vmatprep.subr.mxu0 0.0
    %6280 = vmatpush1.msra.mxu0 %v5675
    %6281 = vmatprep.subr.mxu0 0.0
    %6282 = vmatpush1.msra.mxu0 %v5678
    %6283 = vmatprep.subr.mxu0 0.0
    %6284 = vmatpush1.msra.mxu0 %v5681
    %6285 = vmatprep.subr.mxu0 0.0
    %6286 = vmatpush1.msra.mxu0 %v5684
    %6287 = vmatprep.subr.mxu0 0.0
    %6288 = vmatpush1.msra.mxu0 %v5687
    %6289 = vmatprep.subr.mxu0 0.0
    %6290 = vmatpush1.msra.mxu0 %v5690
    %6291 = vmatprep.subr.mxu0 0.0
    %6292 = vmatpush1.msra.mxu0 %v5693
    %6293 = vmatprep.subr.mxu0 0.0
    %6294 = vmatpush1.msra.mxu0 %v5696
    %6295 = vmatprep.subr.mxu0 0.0
    %6296 = vmatpush1.msra.mxu0 %v5699
    %6297 = vmatprep.subr.mxu0 0.0
    %6298 = vmatpush1.msra.mxu0 %v5702
    %6299 = vmatprep.subr.mxu0 0.0
    %6300 = vmatpush1.msra.mxu0 %v5705
    %6301 = vmatprep.subr.mxu0 0.0
    %6302 = vmatpush1.msra.mxu0 %v5708
    %6303 = vmatprep.subr.mxu0 0.0
    %6304 = vmatpush1.msra.mxu0 %v5711
    %6305 = vmatprep.subr.mxu0 0.0
    %6306 = vmatpush1.msra.mxu0 %v5714
    %6307 = vmatprep.subr.mxu0 0.0
    %6308 = vmatpush1.msra.mxu0 %v5717
    %6309 = vmatprep.subr.mxu0 0.0
    %6310 = vmatpush1.msra.mxu0 %v5720
    %6311 = vmatprep.subr.mxu0 0.0
    %6312 = vmatpush1.msra.mxu0 %v5723
    %6313 = vmatprep.subr.mxu0 0.0
    %6314 = vmatpush1.msra.mxu0 %v5726
    %6315 = vmatprep.subr.mxu0 0.0
    %6316 = vmatpush1.msra.mxu0 %v5729
    %6317 = vmatprep.subr.mxu0 0.0
    %6318 = vmatpush1.msra.mxu0 %v5732
    %6319 = vmatprep.subr.mxu0 0.0
    %6320 = vmatpush1.msra.mxu0 %v5735
    %6321 = vmatprep.subr.mxu0 0.0
    %6322 = vmatpush1.msra.mxu0 %v5738
    %6323 = vmatprep.mubr.f32.mxu0 %v5318
    %6324 = vmatmul.mubr.f32.gmra.mrb[0].mxu0 %v5317
    %v6325 = vpop.f32.mrb[0].mxu0
    %v6326 = vadd.f32 %v6256, %v6325
    %v6327 = vpop.f32.mrb[0].mxu0
    %6328 = vdwg.mxu0
    %6329 = vmatprep.subr.mxu0 0.0
    %6330 = vmatpush1.msra.mxu0 %v5741
    %6331 = vmatprep.subr.mxu0 0.0
    %6332 = vmatpush1.msra.mxu0 %v5744
    %6333 = vmatprep.subr.mxu0 0.0
    %6334 = vmatpush1.msra.mxu0 %v5747
    %6335 = vmatprep.subr.mxu0 0.0
    %6336 = vmatpush1.msra.mxu0 %v5750
    %6337 = vmatprep.subr.mxu0 0.0
    %6338 = vmatpush1.msra.mxu0 %v5753
    %6339 = vmatprep.subr.mxu0 0.0
    %6340 = vmatpush1.msra.mxu0 %v5756
    %6341 = vmatprep.subr.mxu0 0.0
    %6342 = vmatpush1.msra.mxu0 %v5759
    %6343 = vmatprep.subr.mxu0 0.0
    %6344 = vmatpush1.msra.mxu0 %v5762
    %6345 = vmatprep.subr.mxu0 0.0
    %6346 = vmatpush1.msra.mxu0 %v5765
    %6347 = vmatprep.subr.mxu0 0.0
    %6348 = vmatpush1.msra.mxu0 %v5768
    %6349 = vmatprep.subr.mxu0 0.0
    %6350 = vmatpush1.msra.mxu0 %v5771
    %6351 = vmatprep.subr.mxu0 0.0
    %6352 = vmatpush1.msra.mxu0 %v5774
    %6353 = vmatprep.subr.mxu0 0.0
    %6354 = vmatpush1.msra.mxu0 %v5777
    %6355 = vmatprep.subr.mxu0 0.0
    %6356 = vmatpush1.msra.mxu0 %v5780
    %6357 = vmatprep.subr.mxu0 0.0
    %6358 = vmatpush1.msra.mxu0 %v5783
    %6359 = vmatprep.subr.mxu0 0.0
    %6360 = vmatpush1.msra.mxu0 %v5786
    %6361 = vmatprep.subr.mxu0 0.0
    %6362 = vmatpush1.msra.mxu0 %v5789
    %6363 = vmatprep.subr.mxu0 0.0
    %6364 = vmatpush1.msra.mxu0 %v5792
    %6365 = vmatprep.subr.mxu0 0.0
    %6366 = vmatpush1.msra.mxu0 %v5795
    %6367 = vmatprep.subr.mxu0 0.0
    %6368 = vmatpush1.msra.mxu0 %v5798
    %6369 = vmatprep.subr.mxu0 0.0
    %6370 = vmatpush1.msra.mxu0 %v5801
    %6371 = vmatprep.subr.mxu0 0.0
    %6372 = vmatpush1.msra.mxu0 %v5804
    %6373 = vmatprep.subr.mxu0 0.0
    %6374 = vmatpush1.msra.mxu0 %v5807
    %6375 = vmatprep.subr.mxu0 0.0
    %6376 = vmatpush1.msra.mxu0 %v5810
    %6377 = vmatprep.subr.mxu0 0.0
    %6378 = vmatpush1.msra.mxu0 %v5813
    %6379 = vmatprep.subr.mxu0 0.0
    %6380 = vmatpush1.msra.mxu0 %v5816
    %6381 = vmatprep.subr.mxu0 0.0
    %6382 = vmatpush1.msra.mxu0 %v5819
    %6383 = vmatprep.subr.mxu0 0.0
    %6384 = vmatpush1.msra.mxu0 %v5822
    %6385 = vmatprep.subr.mxu0 0.0
    %6386 = vmatpush1.msra.mxu0 %v5825
    %6387 = vmatprep.subr.mxu0 0.0
    %6388 = vmatpush1.msra.mxu0 %v5828
    %6389 = vmatprep.subr.mxu0 0.0
    %6390 = vmatpush1.msra.mxu0 %v5831
    %6391 = vmatprep.subr.mxu0 0.0
    %6392 = vmatpush1.msra.mxu0 %v5834
    %6393 = vmatprep.mubr.f32.mxu0 %v5320
    %6394 = vmatmul.mubr.f32.gmra.mrb[0].mxu0 %v5319
    %v6395 = vpop.f32.mrb[0].mxu0
    %v6396 = vadd.f32 %v6326, %v6395
    %v6397 = vpop.f32.mrb[0].mxu0
    %6398 = vdwg.mxu0
    %v6400 = vlaneseq
    %v6401 = vshrl.u32 %v6400, 7
    %v6402 = vsub.s32 0, %v6401
    %v6403 = vrot.slane %v1142, %v6402
    %v6405 = vadd.f32 %v6396, %v6403
    %6406 = vst [vmem:[#allocation5] sm:$0x3] %v6405
    %v6408 = vlaneseq
    %v6409 = vshrl.u32 %v6408, 7
    %v6410 = vsub.s32 0, %v6409
    %v6411 = vrot.slane %v1143, %v6410
    %v6412 = vlaneseq
    %v6413 = vshrl.u32 %v6412, 7
    %v6414 = vsub.s32 1, %v6413
    %v6415 = vrot.slane %v1143, %v6414
    %v6418 = vadd.f32 %v6115, %v6411
    %v6419 = vadd.f32 %v6117, %v6415
    %v6420 = vsel %vm2292, %v6418, 0.0
    %v6421 = vsel %vm2292, %v6419, 0.0
    %v6422 = vadd.f32 %v6420, %v6421
    %6423 = vadd.xlane.f32.xlu0 %v6422
    %v6424 = vpop.xlane.xlu0 %6423
    %v6425 = vrcp.pop 256.0
    %v6426 = vmul.f32 %v6424, %v6425
    %v6427 = vsub.f32 %v6418, %v6426
    %v6428 = vsub.f32 %v6419, %v6426
    %v6429 = vmul.f32 %v6427, %v6427
    %v6430 = vmul.f32 %v6428, %v6428
    %v6431 = vsel %vm2292, %v6429, 0.0
    %v6432 = vsel %vm2292, %v6430, 0.0
    %v6433 = vadd.f32 %v6431, %v6432
    %6434 = vadd.xlane.f32.xlu0 %v6433
    %v6435 = vpop.xlane.xlu0 %6434
    %v6436 = vmul.f32 %v6435, %v6425
    %v6437 = vadd.f32 %v6436, 1e-05
    %v6438 = vrsqrt.pop %v6437
    %v6439 = vmul.f32 %v6427, %v6438
    %v6440 = vmul.f32 %v6428, %v6438
    %v6442 = vlaneseq
    %v6443 = vshrl.u32 %v6442, 7
    %v6444 = vsub.s32 0, %v6443
    %v6445 = vrot.slane %v1144, %v6444
    %v6446 = vlaneseq
    %v6447 = vshrl.u32 %v6446, 7
    %v6448 = vsub.s32 1, %v6447
    %v6449 = vrot.slane %v1144, %v6448
    %v6452 = vmul.f32 %v6439, %v6445
    %v6453 = vmul.f32 %v6440, %v6449
    %v6455 = vlaneseq
    %v6456 = vshrl.u32 %v6455, 7
    %v6457 = vsub.s32 0, %v6456
    %v6458 = vrot.slane %v1145, %v6457
    %v6459 = vlaneseq
    %v6460 = vshrl.u32 %v6459, 7
    %v6461 = vsub.s32 1, %v6460
    %v6462 = vrot.slane %v1145, %v6461
    %v6465 = vadd.f32 %v6452, %v6458
    %v6466 = vadd.f32 %v6453, %v6462
    %v6467 = vmax.f32 %v6465, 0.0
    %v6468 = vmax.f32 %v6466, 0.0
    %v6469 = vld [vmem:[%s4] sm:$0xff]
    %v6470 = vld [vmem:[%s4 + $0x8] sm:$0xff]
    %v6471 = vld [vmem:[%s4 + $0x10] sm:$0xff]
    %v6472 = vld [vmem:[%s4 + $0x18] sm:$0xff]
    %v6473 = vld [vmem:[%s4 + $0x20] sm:$0xff]
    %v6474 = vld [vmem:[%s4 + $0x28] sm:$0xff]
    %v6475 = vld [vmem:[%s4 + $0x30] sm:$0xff]
    %v6476 = vld [vmem:[%s4 + $0x38] sm:$0xff]
    %v6477 = vld [vmem:[%s4 + $0x40] sm:$0xff]
    %v6478 = vld [vmem:[%s4 + $0x48] sm:$0xff]
    %v6479 = vld [vmem:[%s4 + $0x50] sm:$0xff]
    %v6480 = vld [vmem:[%s4 + $0x58] sm:$0xff]
    %v6481 = vld [vmem:[%s4 + $0x60] sm:$0xff]
    %v6482 = vld [vmem:[%s4 + $0x68] sm:$0xff]
    %v6483 = vld [vmem:[%s4 + $0x70] sm:$0xff]
    %v6484 = vld [vmem:[%s4 + $0x78] sm:$0xff]
    %v6485 = vld [vmem:[%s4 + $0x80] sm:$0xff]
    %v6486 = vld [vmem:[%s4 + $0x88] sm:$0xff]
    %v6487 = vld [vmem:[%s4 + $0x90] sm:$0xff]
    %v6488 = vld [vmem:[%s4 + $0x98] sm:$0xff]
    %v6489 = vld [vmem:[%s4 + $0xa0] sm:$0xff]
    %v6490 = vld [vmem:[%s4 + $0xa8] sm:$0xff]
    %v6491 = vld [vmem:[%s4 + $0xb0] sm:$0xff]
    %v6492 = vld [vmem:[%s4 + $0xb8] sm:$0xff]
    %v6493 = vld [vmem:[%s4 + $0xc0] sm:$0xff]
    %v6494 = vld [vmem:[%s4 + $0xc8] sm:$0xff]
    %v6495 = vld [vmem:[%s4 + $0xd0] sm:$0xff]
    %v6496 = vld [vmem:[%s4 + $0xd8] sm:$0xff]
    %v6497 = vld [vmem:[%s4 + $0xe0] sm:$0xff]
    %v6498 = vld [vmem:[%s4 + $0xe8] sm:$0xff]
    %v6499 = vld [vmem:[%s4 + $0xf0] sm:$0xff]
    %v6500 = vld [vmem:[%s4 + $0xf8] sm:$0xff]
    %v6502 = vlaneseq
    %v6503 = vshrl.u32 %v6502, 7
    %v6504 = vsub.s32 0, %v6503
    %v6505 = vrot.slane %v1146, %v6504
    %6507 = vmatprep.subr.mxu0 0.0
    %6508 = vmatpush1.msra.mxu0 %v6469
    %6509 = vmatprep.subr.mxu0 0.0
    %6510 = vmatpush1.msra.mxu0 %v6470
    %6511 = vmatprep.subr.mxu0 0.0
    %6512 = vmatpush1.msra.mxu0 %v6471
    %6513 = vmatprep.subr.mxu0 0.0
    %6514 = vmatpush1.msra.mxu0 %v6472
    %6515 = vmatprep.subr.mxu0 0.0
    %6516 = vmatpush1.msra.mxu0 %v6473
    %6517 = vmatprep.subr.mxu0 0.0
    %6518 = vmatpush1.msra.mxu0 %v6474
    %6519 = vmatprep.subr.mxu0 0.0
    %6520 = vmatpush1.msra.mxu0 %v6475
    %6521 = vmatprep.subr.mxu0 0.0
    %6522 = vmatpush1.msra.mxu0 %v6476
    %6523 = vmatprep.subr.mxu0 0.0
    %6524 = vmatpush1.msra.mxu0 %v6477
    %6525 = vmatprep.subr.mxu0 0.0
    %6526 = vmatpush1.msra.mxu0 %v6478
    %6527 = vmatprep.subr.mxu0 0.0
    %6528 = vmatpush1.msra.mxu0 %v6479
    %6529 = vmatprep.subr.mxu0 0.0
    %6530 = vmatpush1.msra.mxu0 %v6480
    %6531 = vmatprep.subr.mxu0 0.0
    %6532 = vmatpush1.msra.mxu0 %v6481
    %6533 = vmatprep.subr.mxu0 0.0
    %6534 = vmatpush1.msra.mxu0 %v6482
    %6535 = vmatprep.subr.mxu0 0.0
    %6536 = vmatpush1.msra.mxu0 %v6483
    %6537 = vmatprep.subr.mxu0 0.0
    %6538 = vmatpush1.msra.mxu0 %v6484
    %6539 = vmatprep.subr.mxu0 0.0
    %6540 = vmatpush1.msra.mxu0 %v6485
    %6541 = vmatprep.subr.mxu0 0.0
    %6542 = vmatpush1.msra.mxu0 %v6486
    %6543 = vmatprep.subr.mxu0 0.0
    %6544 = vmatpush1.msra.mxu0 %v6487
    %6545 = vmatprep.subr.mxu0 0.0
    %6546 = vmatpush1.msra.mxu0 %v6488
    %6547 = vmatprep.subr.mxu0 0.0
    %6548 = vmatpush1.msra.mxu0 %v6489
    %6549 = vmatprep.subr.mxu0 0.0
    %6550 = vmatpush1.msra.mxu0 %v6490
    %6551 = vmatprep.subr.mxu0 0.0
    %6552 = vmatpush1.msra.mxu0 %v6491
    %6553 = vmatprep.subr.mxu0 0.0
    %6554 = vmatpush1.msra.mxu0 %v6492
    %6555 = vmatprep.subr.mxu0 0.0
    %6556 = vmatpush1.msra.mxu0 %v6493
    %6557 = vmatprep.subr.mxu0 0.0
    %6558 = vmatpush1.msra.mxu0 %v6494
    %6559 = vmatprep.subr.mxu0 0.0
    %6560 = vmatpush1.msra.mxu0 %v6495
    %6561 = vmatprep.subr.mxu0 0.0
    %6562 = vmatpush1.msra.mxu0 %v6496
    %6563 = vmatprep.subr.mxu0 0.0
    %6564 = vmatpush1.msra.mxu0 %v6497
    %6565 = vmatprep.subr.mxu0 0.0
    %6566 = vmatpush1.msra.mxu0 %v6498
    %6567 = vmatprep.subr.mxu0 0.0
    %6568 = vmatpush1.msra.mxu0 %v6499
    %6569 = vmatprep.subr.mxu0 0.0
    %6570 = vmatpush1.msra.mxu0 %v6500
    %6571 = vmatprep.mubr.f32.mxu0 %v6468
    %6572 = vmatmul.mubr.f32.gmra.mrb[0].mxu0 %v6467
    %v6573 = vpop.f32.mrb[0].mxu0
    %v6574 = vadd.f32 %v6505, %v6573
    %v6575 = vpop.f32.mrb[0].mxu0
    %6576 = vdwg.mxu0
    %vm6577 = vcmask 517120
    %v6578 = vsel %vm6577, %v6574, 0.0
    %6579 = vadd.xlane.f32.xlu0 %v6578
    %v6580 = vpop.xlane.xlu0 %6579
    %v6581 = vrcp.pop 64.0
    %v6582 = vmul.f32 %v6580, %v6581
    %v6583 = vsub.f32 %v6574, %v6582
    %v6584 = vmul.f32 %v6583, %v6583
    %v6585 = vsel %vm6577, %v6584, 0.0
    %6586 = vadd.xlane.f32.xlu0 %v6585
    %v6587 = vpop.xlane.xlu0 %6586
    %v6588 = vmul.f32 %v6587, %v6581
    %v6589 = vadd.f32 %v6588, 1e-05
    %v6590 = vrsqrt.pop %v6589
    %v6591 = vmul.f32 %v6583, %v6590
    %v6593 = vlaneseq
    %v6594 = vshrl.u32 %v6593, 7
    %v6595 = vsub.s32 0, %v6594
    %v6596 = vrot.slane %v1147, %v6595
    %v6598 = vmul.f32 %v6591, %v6596
    %v6600 = vlaneseq
    %v6601 = vshrl.u32 %v6600, 7
    %v6602 = vsub.s32 0, %v6601
    %v6603 = vrot.slane %v1148, %v6602
    %v6605 = vadd.f32 %v6598, %v6603
    %v6606 = vmax.f32 %v6605, 0.0
    %v6607 = vld [vmem:[%s5] sm:$0xff]
    %v6608 = vld [vmem:[%s5 + $0x8] sm:$0xff]
    %v6609 = vld [vmem:[%s5 + $0x10] sm:$0xff]
    %v6610 = vld [vmem:[%s5 + $0x18] sm:$0xff]
    %v6611 = vld [vmem:[%s5 + $0x20] sm:$0xff]
    %v6612 = vld [vmem:[%s5 + $0x28] sm:$0xff]
    %v6613 = vld [vmem:[%s5 + $0x30] sm:$0xff]
    %v6614 = vld [vmem:[%s5 + $0x38] sm:$0xff]
    %v6616 = vlaneseq
    %v6617 = vshrl.u32 %v6616, 7
    %v6618 = vsub.s32 0, %v6617
    %v6619 = vrot.slane %v1149, %v6618
    %v6622 = vsel %vm3658, %v6606, 0
    %6624 = vmatprep.subr.mxu0 0.0
    %6625 = vmatpush1.msra.mxu0 %v6607
    %6626 = vmatprep.subr.mxu0 0.0
    %6627 = vmatpush1.msra.mxu0 %v6608
    %6628 = vmatprep.subr.mxu0 0.0
    %6629 = vmatpush1.msra.mxu0 %v6609
    %6630 = vmatprep.subr.mxu0 0.0
    %6631 = vmatpush1.msra.mxu0 %v6610
    %6632 = vmatprep.subr.mxu0 0.0
    %6633 = vmatpush1.msra.mxu0 %v6611
    %6634 = vmatprep.subr.mxu0 0.0
    %6635 = vmatpush1.msra.mxu0 %v6612
    %6636 = vmatprep.subr.mxu0 0.0
    %6637 = vmatpush1.msra.mxu0 %v6613
    %6638 = vmatprep.subr.mxu0 0.0
    %6639 = vmatpush1.msra.mxu0 %v6614
    %6640 = vmatprep.subr.mxu0 0.0
    %6641 = vmatpush1.msra.mxu0 0.0
    %6642 = vmatprep.subr.mxu0 0.0
    %6643 = vmatpush1.msra.mxu0 0.0
    %6644 = vmatprep.subr.mxu0 0.0
    %6645 = vmatpush1.msra.mxu0 0.0
    %6646 = vmatprep.subr.mxu0 0.0
    %6647 = vmatpush1.msra.mxu0 0.0
    %6648 = vmatprep.subr.mxu0 0.0
    %6649 = vmatpush1.msra.mxu0 0.0
    %6650 = vmatprep.subr.mxu0 0.0
    %6651 = vmatpush1.msra.mxu0 0.0
    %6652 = vmatprep.subr.mxu0 0.0
    %6653 = vmatpush1.msra.mxu0 0.0
    %6654 = vmatprep.subr.mxu0 0.0
    %6655 = vmatpush1.msra.mxu0 0.0
    %6656 = vmatprep.subr.mxu0 0.0
    %6657 = vmatpush1.msra.mxu0 0.0
    %6658 = vmatprep.subr.mxu0 0.0
    %6659 = vmatpush1.msra.mxu0 0.0
    %6660 = vmatprep.subr.mxu0 0.0
    %6661 = vmatpush1.msra.mxu0 0.0
    %6662 = vmatprep.subr.mxu0 0.0
    %6663 = vmatpush1.msra.mxu0 0.0
    %6664 = vmatprep.subr.mxu0 0.0
    %6665 = vmatpush1.msra.mxu0 0.0
    %6666 = vmatprep.subr.mxu0 0.0
    %6667 = vmatpush1.msra.mxu0 0.0
    %6668 = vmatprep.subr.mxu0 0.0
    %6669 = vmatpush1.msra.mxu0 0.0
    %6670 = vmatprep.subr.mxu0 0.0
    %6671 = vmatpush1.msra.mxu0 0.0
    %6672 = vmatprep.subr.mxu0 0.0
    %6673 = vmatpush1.msra.mxu0 0.0
    %6674 = vmatprep.subr.mxu0 0.0
    %6675 = vmatpush1.msra.mxu0 0.0
    %6676 = vmatprep.subr.mxu0 0.0
    %6677 = vmatpush1.msra.mxu0 0.0
    %6678 = vmatprep.subr.mxu0 0.0
    %6679 = vmatpush1.msra.mxu0 0.0
    %6680 = vmatprep.subr.mxu0 0.0
    %6681 = vmatpush1.msra.mxu0 0.0
    %6682 = vmatprep.subr.mxu0 0.0
    %6683 = vmatpush1.msra.mxu0 0.0
    %6684 = vmatprep.subr.mxu0 0.0
    %6685 = vmatpush1.msra.mxu0 0.0
    %6686 = vmatprep.subr.mxu0 0.0
    %6687 = vmatpush1.msra.mxu0 0.0
    %6688 = vmatprep.mubr.f32.mxu0 0.0
    %6689 = vmatmul.mubr.f32.gmra.mrb[0].mxu0 %v6622
    %v6690 = vpop.f32.mrb[0].mxu0
    %v6691 = vadd.f32 %v6619, %v6690
    %v6692 = vpop.f32.mrb[0].mxu0
    %6693 = vdwg.mxu0
    %vm6694 = vcmask 9216
    %v6695 = vsel %vm6694, %v6691, 0.0
    %6696 = vadd.xlane.f32.xlu0 %v6695
    %v6697 = vpop.xlane.xlu0 %6696
    %v6698 = vrot.slane %v6697, 4
    %v6699 = vadd.f32 %v6697, %v6698
    %v6700 = vrot.slane %v6699, 2
    %v6701 = vadd.f32 %v6699, %v6700
    %v6702 = vrot.slane %v6701, 1
    %v6703 = vadd.f32 %v6701, %v6702
    %s6704 = vtos %v6703
    %v6705 = vrcp.pop 4.0
    %s6706 = vtos %v6705
    %s6707 = smul.f32 %s6704, %s6706
    %v6708 = vstv %s6707
    %v6709 = vsub.f32 %v6691, %v6708
    %v6710 = vmul.f32 %v6709, %v6709
    %v6711 = vsel %vm6694, %v6710, 0.0
    %6712 = vadd.xlane.f32.xlu0 %v6711
    %v6713 = vpop.xlane.xlu0 %6712
    %v6714 = vrot.slane %v6713, 4
    %v6715 = vadd.f32 %v6713, %v6714
    %v6716 = vrot.slane %v6715, 2
    %v6717 = vadd.f32 %v6715, %v6716
    %v6718 = vrot.slane %v6717, 1
    %v6719 = vadd.f32 %v6717, %v6718
    %s6720 = vtos %v6719
    %v6721 = vrcp.pop 3.0
    %s6722 = vtos %v6721
    %s6723 = smul.f32 %s6720, %s6722
    %v6724 = vstv %s6723
    %v6725 = vrsqrt.pop %v6724
    %v6726 = vmul.f32 %v6724, %v6725
    %vm6727 = vcmp.eq.f32.partialorder %v6724, inf
    %v6728 = vsel %vm6727, %v6724, %v6726
    %vm6729 = vcmp.eq.f32.partialorder %v6724, 0.0
    %v6730 = vand.u32 %v6724, 2147483648
    %v6731 = vsel %vm6729, %v6730, %v6728
    %s6732 = vtos %v6731
    %s6733 = sadd.f32 %s6732, 1e-08
    %v6734 = vstv %s6733
    %v6735 = vrcp.pop %v6734
    %v6736 = vmul.f32 %v6709, %v6735
    %v6737 = vstv %s5446
    %v6738 = vmul.f32 %v6736, %v6737
    %v6739 = vadd.f32 %v6738, %v5394
    %6740 = vst.msk [vmem:[#allocation7] sm:$0x3] %vm6694, %v6739
    // Predicated region
    $region98: #{cnn_pamap2_forward.1} parent=1 // pred_check
      _
    $region99: #{cnn_pamap2_forward.1} parent=1 // pred_check_branch
      %6742 = sbr.rel (0) target = $region101
    $region100: #{cnn_pamap2_forward.1} parent=1 // pred_region
      %s6744 = ssub.s32 32, 32
      %6745 = vsyncadd [#allocation6], %s6744
      %s6747 = sshll.u32 [#allocation5], 4
      %s6748 = int_to_ptr.vmem [resolvable:$true] %s6747
      %6750 = dma.vmem_to_hbm [thread:$0]  %s6748, 32, %s9, [#allocation6]
    $region101: #{cnn_pamap2_forward.1} parent=1 // pred_fallthru
      _
    // Predicated region
    $region102: #{cnn_pamap2_forward.1} parent=1 // pred_check
      _
    $region103: #{cnn_pamap2_forward.1} parent=1 // pred_check_branch
      %6752 = sbr.rel (0) target = $region105
    $region104: #{cnn_pamap2_forward.1} parent=1 // pred_region
      %s6754 = ssub.s32 32, 32
      %6755 = vsyncadd [#allocation8], %s6754
      %s6757 = sshll.u32 [#allocation7], 4
      %s6758 = int_to_ptr.vmem [resolvable:$true] %s6757
      %6760 = dma.vmem_to_hbm [thread:$0]  %s6758, 32, %s10, [#allocation8]
    $region105: #{cnn_pamap2_forward.1} parent=1 // pred_fallthru
      _
    // Predicated region
    $region106: #{cnn_pamap2_forward.1} parent=1 // pred_check
      _
    $region107: #{cnn_pamap2_forward.1} parent=1 // pred_check_branch
      %6762 = sbr.rel (0) target = $region109
    $region108: #{cnn_pamap2_forward.1} parent=1 // pred_region
      %s6764 = ssub.s32 256, 256
      %6765 = vsyncadd [#allocation8], %s6764
      %s6767 = sshll.u32 [#allocation9], 4
      %s6768 = int_to_ptr.vmem [resolvable:$true] %s6767
      %6770 = dma.vmem_to_hbm [thread:$0]  %s6768, 256, %s11, [#allocation8]
    $region109: #{cnn_pamap2_forward.1} parent=1 // pred_fallthru
      _
    // Predicated region
    $region110: #{cnn_pamap2_forward.1} parent=1 // pred_check
      _
    $region111: #{cnn_pamap2_forward.1} parent=1 // pred_check_branch
      %6772 = sbr.rel (0) target = $region113
    $region112: #{cnn_pamap2_forward.1} parent=1 // pred_region
      %6773 = dma.done [#allocation6], 32
    $region113: #{cnn_pamap2_forward.1} parent=1 // pred_fallthru
      _
    // Predicated region
    $region114: #{cnn_pamap2_forward.1} parent=1 // pred_check
      _
    $region115: #{cnn_pamap2_forward.1} parent=1 // pred_check_branch
      %6775 = sbr.rel (0) target = $region117
    $region116: #{cnn_pamap2_forward.1} parent=1 // pred_region
      %6776 = dma.done [#allocation8], 32
    $region117: #{cnn_pamap2_forward.1} parent=1 // pred_fallthru
      _
    // Predicated region
    $region118: #{cnn_pamap2_forward.1} parent=1 // pred_check
      _
    $region119: #{cnn_pamap2_forward.1} parent=1 // pred_check_branch
      %6778 = sbr.rel (0) target = $region121
    $region120: #{cnn_pamap2_forward.1} parent=1 // pred_region
      %6779 = dma.done [#allocation8], 256
    $region121: #{cnn_pamap2_forward.1} parent=1 // pred_fallthru
      _
    %6780 = vsyncpa [#allocation6], 1
    %6781 = vsyncpa [#allocation8], 1
  %6782 = vsyncmov [#allocation4]
  %s6783 = vpop.sfrf %6782
  %p6784 = scmp.eq.s32.totalorder %s6783, 0
  %p6785 = pneg %p6784
  %6787 = shalt.err (%p6785)
  %s6788 = scalar_lea.sflag [#allocation4], 1
  %6789 = vsyncmov %s6788
  %s6790 = vpop.sfrf %6789
  %p6791 = scmp.eq.s32.totalorder %s6790, 0
  %p6792 = pneg %p6791
  %6794 = shalt.err (%p6792)

</llo_original>
